<compile_context>
chip_gen: v7x
topology: tpu7x:2x2x1
jax: 0.10.0
libtpu: 0.0.40
codegen_flags: <defaults>
</compile_context>

<pallas_src>
import math

import jax
import jax.numpy as jnp
import numpy as np
from jax import lax
from jax.experimental import pallas as pl
from jax.experimental.pallas import tpu as pltpu

# Hyper-parameters fixed by ConvEncoderClsFea's defaults.
C    = 128          # in_features = encoder_h = output_h
C2   = 64           # output_h // 2
T    = 84           # input length  (84 -> 28 -> 15 ; 64*15 = 960 classifier features)
T1   = 28           # after Conv1d(k=3, stride=3, pad=1)
T2   = 15           # after Conv1d(k=2, stride=2, pad=1)
NCLS = 3            # targets
EPS  = 1e-5


def _round_up(n, m):
    return ((n + m - 1) // m) * m


def _erf(v):
    # Abramowitz & Stegun 7.1.26 (|err| < 1.5e-7): only mul/add/div + one exp (EUP).
    sgn = jnp.where(v >= 0.0, 1.0, -1.0)
    av = jnp.abs(v)
    t = 1.0 / (1.0 + 0.3275911 * av)
    poly = ((((1.061405429 * t - 1.453152027) * t + 1.421413741) * t
             - 0.284496736) * t + 0.254829592) * t
    return sgn * (1.0 - poly * jnp.exp(-av * av))


def _gelu(v):
    # Exact (erf-based) GELU, matching torch.nn.GELU() default.
    return 0.5 * v * (1.0 + _erf(v * 0.7071067811865476))


def encoder_kernel(x_ref, w1_ref, w2_ref, w3_ref, w4_ref, bcol_ref, mask_ref,
                   sel34_ref, wlt_ref, seg_ref, blin_ref, feat_ref, logit_ref):
    x = x_ref[0]                                   # (C, L): channels x concat-time (padded)
    L = x.shape[1]
    m_left = mask_ref[0:1, :] > 0.5                # kill the t-1 tap at sample starts / padding
    m_right = mask_ref[1:2, :] > 0.5               # kill the t+1 tap at sample ends / padding

    def conv_k3(v, w_ref, bias):
        """'same' Conv1d(kernel=3, stride=1) over the lane (time) axis for all BT
        samples at once; BN/bias already folded into w_ref / bias host-side."""
        v_prev = jnp.where(m_left, pltpu.roll(v, 1, axis=1), 0.0)       # v[:, t-1]
        v_next = jnp.where(m_right, pltpu.roll(v, L - 1, axis=1), 0.0)  # v[:, t+1]
        acc = jnp.dot(w_ref[0], v_prev, preferred_element_type=jnp.float32)
        acc = acc + jnp.dot(w_ref[1], v, preferred_element_type=jnp.float32)
        acc = acc + jnp.dot(w_ref[2], v_next, preferred_element_type=jnp.float32)
        return acc + bias

    b1 = bcol_ref[:, 0:1]
    b2 = bcol_ref[:, 1:2]
    b3 = bcol_ref[:, 2:3]
    b4 = bcol_ref[0:C2, 3:4]

    # ---- Encoder_ResBlock0: x + GELU(BN2(Conv2(GELU(BN1(Conv1(x)))))) ----
    h = _gelu(conv_k3(x, w1_ref, b1))
    h = _gelu(conv_k3(h, w2_ref, b2))
    y = x + h

    # ---- Encoder_Output ----
    # Conv3 (128->128, k=3, stride=3, pad=1): stride-1 conv; the stride-3 column
    # selection and the Conv4 (k=2, stride=2, pad=1) tap gather are fused into one
    # 0/1 selection matmul (sel34).
    u3 = conv_k3(y, w3_ref, b3)                                            # (C, L)
    g4 = jnp.dot(u3, sel34_ref[...], preferred_element_type=jnp.float32)   # (C, 2*BT*T2)
    n2 = g4.shape[1] // 2
    c4 = jnp.dot(w4_ref[0], g4[:, :n2], preferred_element_type=jnp.float32)
    c4 = c4 + jnp.dot(w4_ref[1], g4[:, n2:], preferred_element_type=jnp.float32)
    feat = _gelu(c4 + b4)                                                  # (C2, BT*T2)
    feat_ref[0] = feat

    # ---- Encoder_Cls: Flatten + Linear(960 -> 3), batched over BT samples via a
    # per-sample segment-sum matmul on the lane axis; single lane-dense store ----
    rows = [jnp.sum(wlt_ref[n] * feat, axis=0, keepdims=True) for n in range(NCLS)]
    g = jnp.concatenate(rows, axis=0)                                      # (NCLS, BT*T2)
    logit_ref[0] = (jnp.dot(g, seg_ref[...], preferred_element_type=jnp.float32)
                    + blin_ref[...])                                       # (NCLS, BT)


def build_pallas_fn(nb, bt):
    ntl = bt * T
    L = _round_up(ntl, 128)
    nt2 = bt * T2

    def const(shape):
        n = len(shape)
        return pl.BlockSpec(shape, lambda b, n=n: (0,) * n)

    in_specs = [
        pl.BlockSpec((1, C, L), lambda b: (b, 0, 0)),       # x: BT samples, time-concat (padded)
        const((3, C, C)),                                   # Conv1 taps (BN1 folded)
        const((3, C, C)),                                   # Conv2 taps (BN2 folded)
        const((3, C, C)),                                   # Conv3 taps
        const((2, C2, C)),                                  # Conv4 taps (BN3 folded)
        const((C, 4)),                                      # packed folded biases
        const((2, L)),                                      # sample-seam / padding tap masks
        const((L, 2 * nt2)),                                # fused stride-3 + stride-2 selection
        const((NCLS, C2, nt2)),                             # classifier weights (tiled)
        const((nt2, bt)),                                   # per-sample segment sum
        const((NCLS, 1)),                                   # classifier bias
    ]
    out_specs = (
        pl.BlockSpec((1, C2, nt2), lambda b: (b, 0, 0)),    # features
        pl.BlockSpec((1, NCLS, bt), lambda b: (b, 0, 0)),   # logits (lane-dense batch)
    )
    out_shape = (
        jax.ShapeDtypeStruct((nb, C2, nt2), jnp.float32),
        jax.ShapeDtypeStruct((nb, NCLS, bt), jnp.float32),
    )
    return pl.pallas_call(
        encoder_kernel,
        out_shape=out_shape,
        grid_spec=pltpu.PrefetchScalarGridSpec(
            num_scalar_prefetch=0,
            grid=(nb,),
            in_specs=in_specs,
            out_specs=out_specs),
        compiler_params=pltpu.CompilerParams(
            dimension_semantics=("parallel",)),
    )


# ----------------------------- host-side packing --------------------------------

def _fold_bn(w, b, bn):
    a = bn['g'] / jnp.sqrt(bn['v'] + EPS)
    return w * a[:, None, None], a * (b - bn['m']) + bn['b']


def pack_kernel_args(p, bt):
    ntl = bt * T
    L = _round_up(ntl, 128)
    nt2 = bt * T2

    w1f, b1f = _fold_bn(p['w1'], p['b1'], p['bn1'])
    w2f, b2f = _fold_bn(p['w2'], p['b2'], p['bn2'])
    w4f, b4f = _fold_bn(p['w4'], p['b4'], p['bn3'])
    w3f, b3f = p['w3'], p['b3']

    w1t = jnp.transpose(w1f, (2, 0, 1))                       # (3, C, C) tap-major
    w2t = jnp.transpose(w2f, (2, 0, 1))
    w3t = jnp.transpose(w3f, (2, 0, 1))
    w4t = jnp.transpose(w4f, (2, 0, 1))                       # (2, C2, C)

    bcols = jnp.stack([b1f, b2f, b3f, jnp.pad(b4f, (0, C - C2))], axis=1)   # (C, 4)

    cols = np.arange(L)
    valid = cols < ntl
    masks = np.stack([valid & (cols % T != 0),
                      valid & (cols % T != T - 1)]).astype(np.float32)      # (2, L)

    # Fused stride-3 (Conv3) + stride-2 (Conv4) tap selection.
    # Conv4 output j, tap k reads Conv3 output index idx = 2j + k - 1 (pad -> zero col);
    # Conv3 (stride 3) output idx equals the stride-1 'same' conv column 3*idx.
    sel34 = np.zeros((L, 2 * nt2), np.float32)
    for s in range(bt):
        for j in range(T2):
            for k in range(2):
                idx = 2 * j + k - 1
                if 0 <= idx < T1:
                    sel34[s * T + 3 * idx, k * nt2 + s * T2 + j] = 1.0

    # Classifier: per-sample segment-sum over the concatenated time axis.
    seg = np.zeros((nt2, bt), np.float32)
    for s in range(bt):
        seg[s * T2:(s + 1) * T2, s] = 1.0

    wlt = jnp.tile(p['wlin'].reshape(NCLS, C2, T2), (1, 1, bt))   # (NCLS, C2, bt*T2)
    blin = p['blin'][:, None]                                     # (NCLS, 1)

    return (w1t, w2t, w3t, w4t, bcols, jnp.asarray(masks), jnp.asarray(sel34),
            wlt, jnp.asarray(seg), blin)


def conv_encoder_cls_fea_forward(x, params, bt=8):
    """x: (B, C, T) exactly as the PyTorch module consumes it.  Returns (logits, features)."""
    B = x.shape[0]
    bt = math.gcd(B, bt)                 # samples per grid step
    nb = B // bt
    ntl = bt * T
    L = _round_up(ntl, 128)
    kargs = pack_kernel_args(params, bt)

    # glue transpose: concatenate the BT samples' time axes on the lane axis, pad to 128.
    xc = x.reshape(nb, bt, C, T).transpose(0, 2, 1, 3).reshape(nb, C, ntl)
    xc = jnp.pad(xc, ((0, 0), (0, 0), (0, L - ntl)))
    feat_c, log_c = build_pallas_fn(nb, bt)(xc, *kargs)

    feats = feat_c.reshape(nb, C2, bt, T2).transpose(0, 2, 1, 3).reshape(B, C2, T2)
    logits = log_c.transpose(0, 2, 1).reshape(B, NCLS)
    return logits, feats


# ------------------------------ params & reference ------------------------------

def init_params(key):
    f32 = jnp.float32

    def conv_w(k, o, i, kk):
        return (jax.random.normal(k, (o, i, kk)) / np.sqrt(i * kk)).astype(f32)

    def conv_b(k, o):
        return (0.05 * jax.random.normal(k, (o,))).astype(f32)

    def bn_stats(k, n):
        k1, k2, k3, k4 = jax.random.split(k, 4)
        return dict(g=(1.0 + 0.1 * jax.random.normal(k1, (n,))).astype(f32),
                    b=(0.1 * jax.random.normal(k2, (n,))).astype(f32),
                    m=(0.1 * jax.random.normal(k3, (n,))).astype(f32),
                    v=(0.5 + jax.random.uniform(k4, (n,))).astype(f32))

    k = jax.random.split(key, 12)
    p = {}
    p['w1'], p['b1'], p['bn1'] = conv_w(k[0], C, C, 3), conv_b(k[1], C), bn_stats(k[2], C)
    p['w2'], p['b2'], p['bn2'] = conv_w(k[3], C, C, 3), conv_b(k[4], C), bn_stats(k[5], C)
    p['w3'], p['b3'] = conv_w(k[6], C, C, 3), conv_b(k[7], C)
    p['w4'], p['b4'], p['bn3'] = conv_w(k[8], C2, C, 2), conv_b(k[9], C2), bn_stats(k[10], C2)
    klin1, klin2 = jax.random.split(k[11])
    p['wlin'] = (jax.random.normal(klin1, (NCLS, C2 * T2)) / np.sqrt(C2 * T2)).astype(f32)
    p['blin'] = (0.1 * jax.random.normal(klin2, (NCLS,))).astype(f32)
    return p


def reference_forward(x, p):
    """Pure-JAX mirror of the PyTorch graph (eval mode)."""
    hi = lax.Precision.HIGHEST

    def conv1d(v, w, b, stride, pad):
        out = lax.conv_general_dilated(v, w, (stride,), [(pad, pad)],
                                       dimension_numbers=('NCH', 'OIH', 'NCH'),
                                       precision=hi)
        return out + b[None, :, None]

    def bn(v, s):
        a = s['g'] / jnp.sqrt(s['v'] + EPS)
        return (v - s['m'][None, :, None]) * a[None, :, None] + s['b'][None, :, None]

    gelu = lambda v: jax.nn.gelu(v, approximate=False)

    h = gelu(bn(conv1d(x, p['w1'], p['b1'], 1, 1), p['bn1']))
    h = gelu(bn(conv1d(h, p['w2'], p['b2'], 1, 1), p['bn2']))
    y = x + h
    z = conv1d(y, p['w3'], p['b3'], 3, 1)
    z = conv1d(z, p['w4'], p['b4'], 2, 1)
    feat = gelu(bn(z, p['bn3']))
    flat = feat.reshape(feat.shape[0], -1)
    logits = jnp.dot(flat, p['wlin'].T, precision=hi) + p['blin'][None, :]
    return logits, feat


if __name__ == "__main__":
    key = jax.random.PRNGKey(0)
    kx, kp = jax.random.split(key)
    B = 8
    x = jax.random.normal(kx, (B, C, T), jnp.float32)          # (B, 128, 84)
    params = init_params(kp)

    logits, feats = conv_encoder_cls_fea_forward(x, params, bt=4)   # 2 grid steps of 4 samples
    logits = jax.block_until_ready(logits)
    feats = jax.block_until_ready(feats)

    ref_logits, ref_feats = reference_forward(x, params)
    np.testing.assert_allclose(np.asarray(feats), np.asarray(ref_feats),
                               rtol=2e-3, atol=2e-3)
    np.testing.assert_allclose(np.asarray(logits), np.asarray(ref_logits),
                               rtol=2e-3, atol=2e-3)
    print("KERNEL_OK")
</pallas_src>

<mosaic_0001>
module attributes {stable_mosaic.version = 11 : i64} {
  func.func @encoder_kernel(%arg0: i32, %arg1: memref<1x128x384xf32, #tpu.memory_space<vmem>>, %arg2: memref<3x128x128xf32, #tpu.memory_space<vmem>>, %arg3: memref<3x128x128xf32, #tpu.memory_space<vmem>>, %arg4: memref<3x128x128xf32, #tpu.memory_space<vmem>>, %arg5: memref<2x64x128xf32, #tpu.memory_space<vmem>>, %arg6: memref<128x4xf32, #tpu.memory_space<vmem>>, %arg7: memref<2x384xf32, #tpu.memory_space<vmem>>, %arg8: memref<384x120xf32, #tpu.memory_space<vmem>>, %arg9: memref<3x64x60xf32, #tpu.memory_space<vmem>>, %arg10: memref<60x4xf32, #tpu.memory_space<vmem>>, %arg11: memref<3x1xf32, #tpu.memory_space<vmem>>, %arg12: memref<1x64x60xf32, #tpu.memory_space<vmem>>, %arg13: memref<1x3x4xf32, #tpu.memory_space<vmem>>) attributes {dimension_semantics = [#tpu.dimension_semantics<parallel>], iteration_bounds = array<i64: 2>, scalar_prefetch = 0 : i64, scratch_operands = 0 : i64, tpu.core_type = #tpu.core_type<tc>, window_params = [{transform_indices = @transform_0, window_bounds = array<i64: 1, 128, 384>}, {pipeline_mode = #tpu.pipeline_mode<synchronous>, transform_indices = @transform_1, window_bounds = array<i64: 3, 128, 128>}, {pipeline_mode = #tpu.pipeline_mode<synchronous>, transform_indices = @transform_2, window_bounds = array<i64: 3, 128, 128>}, {pipeline_mode = #tpu.pipeline_mode<synchronous>, transform_indices = @transform_3, window_bounds = array<i64: 3, 128, 128>}, {pipeline_mode = #tpu.pipeline_mode<synchronous>, transform_indices = @transform_4, window_bounds = array<i64: 2, 64, 128>}, {pipeline_mode = #tpu.pipeline_mode<synchronous>, transform_indices = @transform_5, window_bounds = array<i64: 128, 4>}, {pipeline_mode = #tpu.pipeline_mode<synchronous>, transform_indices = @transform_6, window_bounds = array<i64: 2, 384>}, {pipeline_mode = #tpu.pipeline_mode<synchronous>, transform_indices = @transform_7, window_bounds = array<i64: 384, 120>}, {pipeline_mode = #tpu.pipeline_mode<synchronous>, transform_indices = @transform_8, window_bounds = array<i64: 3, 64, 60>}, {pipeline_mode = #tpu.pipeline_mode<synchronous>, transform_indices = @transform_9, window_bounds = array<i64: 60, 4>}, {pipeline_mode = #tpu.pipeline_mode<synchronous>, transform_indices = @transform_10, window_bounds = array<i64: 3, 1>}, {transform_indices = @transform_11, window_bounds = array<i64: 1, 64, 60>}, {transform_indices = @transform_12, window_bounds = array<i64: 1, 3, 4>}]} {
    %c0 = arith.constant 0 : index
    %c0_0 = arith.constant 0 : index
    %c0_1 = arith.constant 0 : index
    %0 = vector.load %arg1[%c0, %c0_0, %c0_1] : memref<1x128x384xf32, #tpu.memory_space<vmem>>, vector<1x128x384xf32>
    %1 = vector.shape_cast %0 : vector<1x128x384xf32> to vector<128x384xf32>
    %c0_2 = arith.constant 0 : index
    %c0_3 = arith.constant 0 : index
    %2 = vector.load %arg7[%c0_2, %c0_3] : memref<2x384xf32, #tpu.memory_space<vmem>>, vector<1x384xf32>
    %cst = arith.constant 5.000000e-01 : f32
    %3 = vector.broadcast %cst : f32 to vector<1x384xf32>
    %4 = arith.cmpf ogt, %2, %3 : vector<1x384xf32>
    %c1 = arith.constant 1 : index
    %c0_4 = arith.constant 0 : index
    %5 = vector.load %arg7[%c1, %c0_4] : memref<2x384xf32, #tpu.memory_space<vmem>>, vector<1x384xf32>
    %cst_5 = arith.constant 5.000000e-01 : f32
    %6 = vector.broadcast %cst_5 : f32 to vector<1x384xf32>
    %7 = arith.cmpf ogt, %5, %6 : vector<1x384xf32>
    %c0_6 = arith.constant 0 : index
    %c0_7 = arith.constant 0 : index
    %8 = vector.load %arg6[%c0_6, %c0_7] : memref<128x4xf32, #tpu.memory_space<vmem>>, vector<128x1xf32>
    %c0_8 = arith.constant 0 : index
    %c1_9 = arith.constant 1 : index
    %9 = vector.load %arg6[%c0_8, %c1_9] : memref<128x4xf32, #tpu.memory_space<vmem>>, vector<128x1xf32>
    %c0_10 = arith.constant 0 : index
    %c2 = arith.constant 2 : index
    %10 = vector.load %arg6[%c0_10, %c2] : memref<128x4xf32, #tpu.memory_space<vmem>>, vector<128x1xf32>
    %c0_11 = arith.constant 0 : index
    %c3 = arith.constant 3 : index
    %11 = vector.load %arg6[%c0_11, %c3] : memref<128x4xf32, #tpu.memory_space<vmem>>, vector<64x1xf32>
    %c1_i32 = arith.constant 1 : i32
    %12 = tpu.dynamic_rotate %1 by %c1_i32 dim 1 : vector<128x384xf32>, i32 -> vector<128x384xf32>
    %cst_12 = arith.constant 0.000000e+00 : f32
    %13 = vector.shape_cast %4 : vector<1x384xi1> to vector<1x384xi1>
    %14 = vector.broadcast %13 : vector<1x384xi1> to vector<128x384xi1>
    %15 = vector.broadcast %cst_12 : f32 to vector<128x384xf32>
    %16 = arith.select %14, %12, %15 : vector<128x384xi1>, vector<128x384xf32>
    %c383_i32 = arith.constant 383 : i32
    %17 = tpu.dynamic_rotate %1 by %c383_i32 dim 1 : vector<128x384xf32>, i32 -> vector<128x384xf32>
    %cst_13 = arith.constant 0.000000e+00 : f32
    %18 = vector.shape_cast %7 : vector<1x384xi1> to vector<1x384xi1>
    %19 = vector.broadcast %18 : vector<1x384xi1> to vector<128x384xi1>
    %20 = vector.broadcast %cst_13 : f32 to vector<128x384xf32>
    %21 = arith.select %19, %17, %20 : vector<128x384xi1>, vector<128x384xf32>
    %c0_14 = arith.constant 0 : index
    %c0_15 = arith.constant 0 : index
    %c0_16 = arith.constant 0 : index
    %22 = vector.load %arg2[%c0_14, %c0_15, %c0_16] : memref<3x128x128xf32, #tpu.memory_space<vmem>>, vector<1x128x128xf32>
    %23 = vector.shape_cast %22 : vector<1x128x128xf32> to vector<128x128xf32>
    %cst_17 = arith.constant dense<0.000000e+00> : vector<128x384xf32>
    %24 = tpu.matmul %23, %16, %cst_17 {dimension_numbers = #tpu.dot_dimension_numbers<[1], [0], [0], [1], [0, 0, 1, 1], [], []>} : vector<128x128xf32>, vector<128x384xf32>, vector<128x384xf32> -> vector<128x384xf32>
    %c1_18 = arith.constant 1 : index
    %c0_19 = arith.constant 0 : index
    %c0_20 = arith.constant 0 : index
    %25 = vector.load %arg2[%c1_18, %c0_19, %c0_20] : memref<3x128x128xf32, #tpu.memory_space<vmem>>, vector<1x128x128xf32>
    %26 = vector.shape_cast %25 : vector<1x128x128xf32> to vector<128x128xf32>
    %cst_21 = arith.constant dense<0.000000e+00> : vector<128x384xf32>
    %27 = tpu.matmul %26, %1, %cst_21 {dimension_numbers = #tpu.dot_dimension_numbers<[1], [0], [0], [1], [0, 0, 1, 1], [], []>} : vector<128x128xf32>, vector<128x384xf32>, vector<128x384xf32> -> vector<128x384xf32>
    %28 = arith.addf %24, %27 : vector<128x384xf32>
    %c2_22 = arith.constant 2 : index
    %c0_23 = arith.constant 0 : index
    %c0_24 = arith.constant 0 : index
    %29 = vector.load %arg2[%c2_22, %c0_23, %c0_24] : memref<3x128x128xf32, #tpu.memory_space<vmem>>, vector<1x128x128xf32>
    %30 = vector.shape_cast %29 : vector<1x128x128xf32> to vector<128x128xf32>
    %cst_25 = arith.constant dense<0.000000e+00> : vector<128x384xf32>
    %31 = tpu.matmul %30, %21, %cst_25 {dimension_numbers = #tpu.dot_dimension_numbers<[1], [0], [0], [1], [0, 0, 1, 1], [], []>} : vector<128x128xf32>, vector<128x384xf32>, vector<128x384xf32> -> vector<128x384xf32>
    %32 = arith.addf %28, %31 : vector<128x384xf32>
    %33 = vector.broadcast %8 : vector<128x1xf32> to vector<128x384xf32>
    %34 = arith.addf %32, %33 : vector<128x384xf32>
    %cst_26 = arith.constant 5.000000e-01 : f32
    %35 = vector.broadcast %cst_26 : f32 to vector<128x384xf32>
    %36 = arith.mulf %35, %34 : vector<128x384xf32>
    %cst_27 = arith.constant 0.707106769 : f32
    %37 = vector.broadcast %cst_27 : f32 to vector<128x384xf32>
    %38 = arith.mulf %34, %37 : vector<128x384xf32>
    %cst_28 = arith.constant 0.000000e+00 : f32
    %39 = vector.broadcast %cst_28 : f32 to vector<128x384xf32>
    %40 = arith.cmpf oge, %38, %39 : vector<128x384xf32>
    %cst_29 = arith.constant 1.000000e+00 : f32
    %cst_30 = arith.constant -1.000000e+00 : f32
    %41 = vector.broadcast %cst_29 : f32 to vector<128x384xf32>
    %42 = vector.broadcast %cst_30 : f32 to vector<128x384xf32>
    %43 = arith.select %40, %41, %42 : vector<128x384xi1>, vector<128x384xf32>
    %44 = math.absf %38 : vector<128x384xf32>
    %cst_31 = arith.constant 0.327591091 : f32
    %45 = vector.broadcast %cst_31 : f32 to vector<128x384xf32>
    %46 = arith.mulf %45, %44 : vector<128x384xf32>
    %cst_32 = arith.constant 1.000000e+00 : f32
    %47 = vector.broadcast %cst_32 : f32 to vector<128x384xf32>
    %48 = arith.addf %47, %46 : vector<128x384xf32>
    %cst_33 = arith.constant 1.000000e+00 : f32
    %49 = vector.broadcast %cst_33 : f32 to vector<128x384xf32>
    %50 = arith.divf %49, %48 : vector<128x384xf32>
    %cst_34 = arith.constant 1.06140542 : f32
    %51 = vector.broadcast %cst_34 : f32 to vector<128x384xf32>
    %52 = arith.mulf %51, %50 : vector<128x384xf32>
    %cst_35 = arith.constant 1.45315206 : f32
    %53 = vector.broadcast %cst_35 : f32 to vector<128x384xf32>
    %54 = arith.subf %52, %53 : vector<128x384xf32>
    %55 = arith.mulf %54, %50 : vector<128x384xf32>
    %cst_36 = arith.constant 1.42141378 : f32
    %56 = vector.broadcast %cst_36 : f32 to vector<128x384xf32>
    %57 = arith.addf %55, %56 : vector<128x384xf32>
    %58 = arith.mulf %57, %50 : vector<128x384xf32>
    %cst_37 = arith.constant 0.284496725 : f32
    %59 = vector.broadcast %cst_37 : f32 to vector<128x384xf32>
    %60 = arith.subf %58, %59 : vector<128x384xf32>
    %61 = arith.mulf %60, %50 : vector<128x384xf32>
    %cst_38 = arith.constant 0.254829586 : f32
    %62 = vector.broadcast %cst_38 : f32 to vector<128x384xf32>
    %63 = arith.addf %61, %62 : vector<128x384xf32>
    %64 = arith.mulf %63, %50 : vector<128x384xf32>
    %cst_39 = arith.constant 0.000000e+00 : f32
    %65 = vector.broadcast %cst_39 : f32 to vector<128x384xf32>
    %66 = arith.subf %65, %44 : vector<128x384xf32>
    %67 = arith.mulf %66, %44 : vector<128x384xf32>
    %68 = math.exp %67 : vector<128x384xf32>
    %69 = arith.mulf %64, %68 : vector<128x384xf32>
    %cst_40 = arith.constant 1.000000e+00 : f32
    %70 = vector.broadcast %cst_40 : f32 to vector<128x384xf32>
    %71 = arith.subf %70, %69 : vector<128x384xf32>
    %72 = arith.mulf %43, %71 : vector<128x384xf32>
    %cst_41 = arith.constant 1.000000e+00 : f32
    %73 = vector.broadcast %cst_41 : f32 to vector<128x384xf32>
    %74 = arith.addf %73, %72 : vector<128x384xf32>
    %75 = arith.mulf %36, %74 : vector<128x384xf32>
    %c1_i32_42 = arith.constant 1 : i32
    %76 = tpu.dynamic_rotate %75 by %c1_i32_42 dim 1 : vector<128x384xf32>, i32 -> vector<128x384xf32>
    %cst_43 = arith.constant 0.000000e+00 : f32
    %77 = vector.shape_cast %4 : vector<1x384xi1> to vector<1x384xi1>
    %78 = vector.broadcast %77 : vector<1x384xi1> to vector<128x384xi1>
    %79 = vector.broadcast %cst_43 : f32 to vector<128x384xf32>
    %80 = arith.select %78, %76, %79 : vector<128x384xi1>, vector<128x384xf32>
    %c383_i32_44 = arith.constant 383 : i32
    %81 = tpu.dynamic_rotate %75 by %c383_i32_44 dim 1 : vector<128x384xf32>, i32 -> vector<128x384xf32>
    %cst_45 = arith.constant 0.000000e+00 : f32
    %82 = vector.shape_cast %7 : vector<1x384xi1> to vector<1x384xi1>
    %83 = vector.broadcast %82 : vector<1x384xi1> to vector<128x384xi1>
    %84 = vector.broadcast %cst_45 : f32 to vector<128x384xf32>
    %85 = arith.select %83, %81, %84 : vector<128x384xi1>, vector<128x384xf32>
    %c0_46 = arith.constant 0 : index
    %c0_47 = arith.constant 0 : index
    %c0_48 = arith.constant 0 : index
    %86 = vector.load %arg3[%c0_46, %c0_47, %c0_48] : memref<3x128x128xf32, #tpu.memory_space<vmem>>, vector<1x128x128xf32>
    %87 = vector.shape_cast %86 : vector<1x128x128xf32> to vector<128x128xf32>
    %cst_49 = arith.constant dense<0.000000e+00> : vector<128x384xf32>
    %88 = tpu.matmul %87, %80, %cst_49 {dimension_numbers = #tpu.dot_dimension_numbers<[1], [0], [0], [1], [0, 0, 1, 1], [], []>} : vector<128x128xf32>, vector<128x384xf32>, vector<128x384xf32> -> vector<128x384xf32>
    %c1_50 = arith.constant 1 : index
    %c0_51 = arith.constant 0 : index
    %c0_52 = arith.constant 0 : index
    %89 = vector.load %arg3[%c1_50, %c0_51, %c0_52] : memref<3x128x128xf32, #tpu.memory_space<vmem>>, vector<1x128x128xf32>
    %90 = vector.shape_cast %89 : vector<1x128x128xf32> to vector<128x128xf32>
    %cst_53 = arith.constant dense<0.000000e+00> : vector<128x384xf32>
    %91 = tpu.matmul %90, %75, %cst_53 {dimension_numbers = #tpu.dot_dimension_numbers<[1], [0], [0], [1], [0, 0, 1, 1], [], []>} : vector<128x128xf32>, vector<128x384xf32>, vector<128x384xf32> -> vector<128x384xf32>
    %92 = arith.addf %88, %91 : vector<128x384xf32>
    %c2_54 = arith.constant 2 : index
    %c0_55 = arith.constant 0 : index
    %c0_56 = arith.constant 0 : index
    %93 = vector.load %arg3[%c2_54, %c0_55, %c0_56] : memref<3x128x128xf32, #tpu.memory_space<vmem>>, vector<1x128x128xf32>
    %94 = vector.shape_cast %93 : vector<1x128x128xf32> to vector<128x128xf32>
    %cst_57 = arith.constant dense<0.000000e+00> : vector<128x384xf32>
    %95 = tpu.matmul %94, %85, %cst_57 {dimension_numbers = #tpu.dot_dimension_numbers<[1], [0], [0], [1], [0, 0, 1, 1], [], []>} : vector<128x128xf32>, vector<128x384xf32>, vector<128x384xf32> -> vector<128x384xf32>
    %96 = arith.addf %92, %95 : vector<128x384xf32>
    %97 = vector.broadcast %9 : vector<128x1xf32> to vector<128x384xf32>
    %98 = arith.addf %96, %97 : vector<128x384xf32>
    %cst_58 = arith.constant 5.000000e-01 : f32
    %99 = vector.broadcast %cst_58 : f32 to vector<128x384xf32>
    %100 = arith.mulf %99, %98 : vector<128x384xf32>
    %cst_59 = arith.constant 0.707106769 : f32
    %101 = vector.broadcast %cst_59 : f32 to vector<128x384xf32>
    %102 = arith.mulf %98, %101 : vector<128x384xf32>
    %cst_60 = arith.constant 0.000000e+00 : f32
    %103 = vector.broadcast %cst_60 : f32 to vector<128x384xf32>
    %104 = arith.cmpf oge, %102, %103 : vector<128x384xf32>
    %cst_61 = arith.constant 1.000000e+00 : f32
    %cst_62 = arith.constant -1.000000e+00 : f32
    %105 = vector.broadcast %cst_61 : f32 to vector<128x384xf32>
    %106 = vector.broadcast %cst_62 : f32 to vector<128x384xf32>
    %107 = arith.select %104, %105, %106 : vector<128x384xi1>, vector<128x384xf32>
    %108 = math.absf %102 : vector<128x384xf32>
    %cst_63 = arith.constant 0.327591091 : f32
    %109 = vector.broadcast %cst_63 : f32 to vector<128x384xf32>
    %110 = arith.mulf %109, %108 : vector<128x384xf32>
    %cst_64 = arith.constant 1.000000e+00 : f32
    %111 = vector.broadcast %cst_64 : f32 to vector<128x384xf32>
    %112 = arith.addf %111, %110 : vector<128x384xf32>
    %cst_65 = arith.constant 1.000000e+00 : f32
    %113 = vector.broadcast %cst_65 : f32 to vector<128x384xf32>
    %114 = arith.divf %113, %112 : vector<128x384xf32>
    %cst_66 = arith.constant 1.06140542 : f32
    %115 = vector.broadcast %cst_66 : f32 to vector<128x384xf32>
    %116 = arith.mulf %115, %114 : vector<128x384xf32>
    %cst_67 = arith.constant 1.45315206 : f32
    %117 = vector.broadcast %cst_67 : f32 to vector<128x384xf32>
    %118 = arith.subf %116, %117 : vector<128x384xf32>
    %119 = arith.mulf %118, %114 : vector<128x384xf32>
    %cst_68 = arith.constant 1.42141378 : f32
    %120 = vector.broadcast %cst_68 : f32 to vector<128x384xf32>
    %121 = arith.addf %119, %120 : vector<128x384xf32>
    %122 = arith.mulf %121, %114 : vector<128x384xf32>
    %cst_69 = arith.constant 0.284496725 : f32
    %123 = vector.broadcast %cst_69 : f32 to vector<128x384xf32>
    %124 = arith.subf %122, %123 : vector<128x384xf32>
    %125 = arith.mulf %124, %114 : vector<128x384xf32>
    %cst_70 = arith.constant 0.254829586 : f32
    %126 = vector.broadcast %cst_70 : f32 to vector<128x384xf32>
    %127 = arith.addf %125, %126 : vector<128x384xf32>
    %128 = arith.mulf %127, %114 : vector<128x384xf32>
    %cst_71 = arith.constant 0.000000e+00 : f32
    %129 = vector.broadcast %cst_71 : f32 to vector<128x384xf32>
    %130 = arith.subf %129, %108 : vector<128x384xf32>
    %131 = arith.mulf %130, %108 : vector<128x384xf32>
    %132 = math.exp %131 : vector<128x384xf32>
    %133 = arith.mulf %128, %132 : vector<128x384xf32>
    %cst_72 = arith.constant 1.000000e+00 : f32
    %134 = vector.broadcast %cst_72 : f32 to vector<128x384xf32>
    %135 = arith.subf %134, %133 : vector<128x384xf32>
    %136 = arith.mulf %107, %135 : vector<128x384xf32>
    %cst_73 = arith.constant 1.000000e+00 : f32
    %137 = vector.broadcast %cst_73 : f32 to vector<128x384xf32>
    %138 = arith.addf %137, %136 : vector<128x384xf32>
    %139 = arith.mulf %100, %138 : vector<128x384xf32>
    %140 = arith.addf %1, %139 : vector<128x384xf32>
    %c1_i32_74 = arith.constant 1 : i32
    %141 = tpu.dynamic_rotate %140 by %c1_i32_74 dim 1 : vector<128x384xf32>, i32 -> vector<128x384xf32>
    %cst_75 = arith.constant 0.000000e+00 : f32
    %142 = vector.shape_cast %4 : vector<1x384xi1> to vector<1x384xi1>
    %143 = vector.broadcast %142 : vector<1x384xi1> to vector<128x384xi1>
    %144 = vector.broadcast %cst_75 : f32 to vector<128x384xf32>
    %145 = arith.select %143, %141, %144 : vector<128x384xi1>, vector<128x384xf32>
    %c383_i32_76 = arith.constant 383 : i32
    %146 = tpu.dynamic_rotate %140 by %c383_i32_76 dim 1 : vector<128x384xf32>, i32 -> vector<128x384xf32>
    %cst_77 = arith.constant 0.000000e+00 : f32
    %147 = vector.shape_cast %7 : vector<1x384xi1> to vector<1x384xi1>
    %148 = vector.broadcast %147 : vector<1x384xi1> to vector<128x384xi1>
    %149 = vector.broadcast %cst_77 : f32 to vector<128x384xf32>
    %150 = arith.select %148, %146, %149 : vector<128x384xi1>, vector<128x384xf32>
    %c0_78 = arith.constant 0 : index
    %c0_79 = arith.constant 0 : index
    %c0_80 = arith.constant 0 : index
    %151 = vector.load %arg4[%c0_78, %c0_79, %c0_80] : memref<3x128x128xf32, #tpu.memory_space<vmem>>, vector<1x128x128xf32>
    %152 = vector.shape_cast %151 : vector<1x128x128xf32> to vector<128x128xf32>
    %cst_81 = arith.constant dense<0.000000e+00> : vector<128x384xf32>
    %153 = tpu.matmul %152, %145, %cst_81 {dimension_numbers = #tpu.dot_dimension_numbers<[1], [0], [0], [1], [0, 0, 1, 1], [], []>} : vector<128x128xf32>, vector<128x384xf32>, vector<128x384xf32> -> vector<128x384xf32>
    %c1_82 = arith.constant 1 : index
    %c0_83 = arith.constant 0 : index
    %c0_84 = arith.constant 0 : index
    %154 = vector.load %arg4[%c1_82, %c0_83, %c0_84] : memref<3x128x128xf32, #tpu.memory_space<vmem>>, vector<1x128x128xf32>
    %155 = vector.shape_cast %154 : vector<1x128x128xf32> to vector<128x128xf32>
    %cst_85 = arith.constant dense<0.000000e+00> : vector<128x384xf32>
    %156 = tpu.matmul %155, %140, %cst_85 {dimension_numbers = #tpu.dot_dimension_numbers<[1], [0], [0], [1], [0, 0, 1, 1], [], []>} : vector<128x128xf32>, vector<128x384xf32>, vector<128x384xf32> -> vector<128x384xf32>
    %157 = arith.addf %153, %156 : vector<128x384xf32>
    %c2_86 = arith.constant 2 : index
    %c0_87 = arith.constant 0 : index
    %c0_88 = arith.constant 0 : index
    %158 = vector.load %arg4[%c2_86, %c0_87, %c0_88] : memref<3x128x128xf32, #tpu.memory_space<vmem>>, vector<1x128x128xf32>
    %159 = vector.shape_cast %158 : vector<1x128x128xf32> to vector<128x128xf32>
    %cst_89 = arith.constant dense<0.000000e+00> : vector<128x384xf32>
    %160 = tpu.matmul %159, %150, %cst_89 {dimension_numbers = #tpu.dot_dimension_numbers<[1], [0], [0], [1], [0, 0, 1, 1], [], []>} : vector<128x128xf32>, vector<128x384xf32>, vector<128x384xf32> -> vector<128x384xf32>
    %161 = arith.addf %157, %160 : vector<128x384xf32>
    %162 = vector.broadcast %10 : vector<128x1xf32> to vector<128x384xf32>
    %163 = arith.addf %161, %162 : vector<128x384xf32>
    %c0_90 = arith.constant 0 : index
    %c0_91 = arith.constant 0 : index
    %164 = vector.load %arg8[%c0_90, %c0_91] : memref<384x120xf32, #tpu.memory_space<vmem>>, vector<384x120xf32>
    %cst_92 = arith.constant dense<0.000000e+00> : vector<128x120xf32>
    %165 = tpu.matmul %163, %164, %cst_92 {dimension_numbers = #tpu.dot_dimension_numbers<[1], [0], [0], [1], [0, 0, 1, 1], [], []>} : vector<128x384xf32>, vector<384x120xf32>, vector<128x120xf32> -> vector<128x120xf32>
    %c0_93 = arith.constant 0 : index
    %c0_94 = arith.constant 0 : index
    %c0_95 = arith.constant 0 : index
    %166 = vector.load %arg5[%c0_93, %c0_94, %c0_95] : memref<2x64x128xf32, #tpu.memory_space<vmem>>, vector<1x64x128xf32>
    %167 = vector.shape_cast %166 : vector<1x64x128xf32> to vector<64x128xf32>
    %168 = vector.extract_strided_slice %165 {offsets = [0, 0], sizes = [128, 60], strides = [1, 1]} : vector<128x120xf32> to vector<128x60xf32>
    %cst_96 = arith.constant dense<0.000000e+00> : vector<64x60xf32>
    %169 = tpu.matmul %167, %168, %cst_96 {dimension_numbers = #tpu.dot_dimension_numbers<[1], [0], [0], [1], [0, 0, 1, 1], [], []>} : vector<64x128xf32>, vector<128x60xf32>, vector<64x60xf32> -> vector<64x60xf32>
    %c1_97 = arith.constant 1 : index
    %c0_98 = arith.constant 0 : index
    %c0_99 = arith.constant 0 : index
    %170 = vector.load %arg5[%c1_97, %c0_98, %c0_99] : memref<2x64x128xf32, #tpu.memory_space<vmem>>, vector<1x64x128xf32>
    %171 = vector.shape_cast %170 : vector<1x64x128xf32> to vector<64x128xf32>
    %172 = vector.extract_strided_slice %165 {offsets = [0, 60], sizes = [128, 60], strides = [1, 1]} : vector<128x120xf32> to vector<128x60xf32>
    %cst_100 = arith.constant dense<0.000000e+00> : vector<64x60xf32>
    %173 = tpu.matmul %171, %172, %cst_100 {dimension_numbers = #tpu.dot_dimension_numbers<[1], [0], [0], [1], [0, 0, 1, 1], [], []>} : vector<64x128xf32>, vector<128x60xf32>, vector<64x60xf32> -> vector<64x60xf32>
    %174 = arith.addf %169, %173 : vector<64x60xf32>
    %175 = vector.broadcast %11 : vector<64x1xf32> to vector<64x60xf32>
    %176 = arith.addf %174, %175 : vector<64x60xf32>
    %cst_101 = arith.constant 5.000000e-01 : f32
    %177 = vector.broadcast %cst_101 : f32 to vector<64x60xf32>
    %178 = arith.mulf %177, %176 : vector<64x60xf32>
    %cst_102 = arith.constant 0.707106769 : f32
    %179 = vector.broadcast %cst_102 : f32 to vector<64x60xf32>
    %180 = arith.mulf %176, %179 : vector<64x60xf32>
    %cst_103 = arith.constant 0.000000e+00 : f32
    %181 = vector.broadcast %cst_103 : f32 to vector<64x60xf32>
    %182 = arith.cmpf oge, %180, %181 : vector<64x60xf32>
    %cst_104 = arith.constant 1.000000e+00 : f32
    %cst_105 = arith.constant -1.000000e+00 : f32
    %183 = vector.broadcast %cst_104 : f32 to vector<64x60xf32>
    %184 = vector.broadcast %cst_105 : f32 to vector<64x60xf32>
    %185 = arith.select %182, %183, %184 : vector<64x60xi1>, vector<64x60xf32>
    %186 = math.absf %180 : vector<64x60xf32>
    %cst_106 = arith.constant 0.327591091 : f32
    %187 = vector.broadcast %cst_106 : f32 to vector<64x60xf32>
    %188 = arith.mulf %187, %186 : vector<64x60xf32>
    %cst_107 = arith.constant 1.000000e+00 : f32
    %189 = vector.broadcast %cst_107 : f32 to vector<64x60xf32>
    %190 = arith.addf %189, %188 : vector<64x60xf32>
    %cst_108 = arith.constant 1.000000e+00 : f32
    %191 = vector.broadcast %cst_108 : f32 to vector<64x60xf32>
    %192 = arith.divf %191, %190 : vector<64x60xf32>
    %cst_109 = arith.constant 1.06140542 : f32
    %193 = vector.broadcast %cst_109 : f32 to vector<64x60xf32>
    %194 = arith.mulf %193, %192 : vector<64x60xf32>
    %cst_110 = arith.constant 1.45315206 : f32
    %195 = vector.broadcast %cst_110 : f32 to vector<64x60xf32>
    %196 = arith.subf %194, %195 : vector<64x60xf32>
    %197 = arith.mulf %196, %192 : vector<64x60xf32>
    %cst_111 = arith.constant 1.42141378 : f32
    %198 = vector.broadcast %cst_111 : f32 to vector<64x60xf32>
    %199 = arith.addf %197, %198 : vector<64x60xf32>
    %200 = arith.mulf %199, %192 : vector<64x60xf32>
    %cst_112 = arith.constant 0.284496725 : f32
    %201 = vector.broadcast %cst_112 : f32 to vector<64x60xf32>
    %202 = arith.subf %200, %201 : vector<64x60xf32>
    %203 = arith.mulf %202, %192 : vector<64x60xf32>
    %cst_113 = arith.constant 0.254829586 : f32
    %204 = vector.broadcast %cst_113 : f32 to vector<64x60xf32>
    %205 = arith.addf %203, %204 : vector<64x60xf32>
    %206 = arith.mulf %205, %192 : vector<64x60xf32>
    %cst_114 = arith.constant 0.000000e+00 : f32
    %207 = vector.broadcast %cst_114 : f32 to vector<64x60xf32>
    %208 = arith.subf %207, %186 : vector<64x60xf32>
    %209 = arith.mulf %208, %186 : vector<64x60xf32>
    %210 = math.exp %209 : vector<64x60xf32>
    %211 = arith.mulf %206, %210 : vector<64x60xf32>
    %cst_115 = arith.constant 1.000000e+00 : f32
    %212 = vector.broadcast %cst_115 : f32 to vector<64x60xf32>
    %213 = arith.subf %212, %211 : vector<64x60xf32>
    %214 = arith.mulf %185, %213 : vector<64x60xf32>
    %cst_116 = arith.constant 1.000000e+00 : f32
    %215 = vector.broadcast %cst_116 : f32 to vector<64x60xf32>
    %216 = arith.addf %215, %214 : vector<64x60xf32>
    %217 = arith.mulf %178, %216 : vector<64x60xf32>
    %c0_117 = arith.constant 0 : index
    %c0_118 = arith.constant 0 : index
    %c0_119 = arith.constant 0 : index
    %218 = vector.load %arg12[%c0_117, %c0_118, %c0_119] : memref<1x64x60xf32, #tpu.memory_space<vmem>>, vector<1x64x60xf32>
    %219 = vector.shape_cast %218 : vector<1x64x60xf32> to vector<64x60xf32>
    %220 = vector.shape_cast %217 : vector<64x60xf32> to vector<1x64x60xf32>
    tpu.vector_store %arg12[%c0_117, %c0_118, %c0_119], %220 {strides = array<i32>} : memref<1x64x60xf32, #tpu.memory_space<vmem>>, vector<1x64x60xf32>,
    %c0_120 = arith.constant 0 : index
    %c0_121 = arith.constant 0 : index
    %c0_122 = arith.constant 0 : index
    %221 = vector.load %arg9[%c0_120, %c0_121, %c0_122] : memref<3x64x60xf32, #tpu.memory_space<vmem>>, vector<1x64x60xf32>
    %222 = vector.shape_cast %221 : vector<1x64x60xf32> to vector<64x60xf32>
    %223 = arith.mulf %222, %217 : vector<64x60xf32>
    %cst_123 = arith.constant dense<0.000000e+00> : vector<60xf32>
    %224 = vector.multi_reduction <add>, %223, %cst_123 [0] : vector<64x60xf32> to vector<60xf32>
    %225 = vector.shape_cast %224 : vector<60xf32> to vector<1x60xf32>
    %c1_124 = arith.constant 1 : index
    %c0_125 = arith.constant 0 : index
    %c0_126 = arith.constant 0 : index
    %226 = vector.load %arg9[%c1_124, %c0_125, %c0_126] : memref<3x64x60xf32, #tpu.memory_space<vmem>>, vector<1x64x60xf32>
    %227 = vector.shape_cast %226 : vector<1x64x60xf32> to vector<64x60xf32>
    %228 = arith.mulf %227, %217 : vector<64x60xf32>
    %cst_127 = arith.constant dense<0.000000e+00> : vector<60xf32>
    %229 = vector.multi_reduction <add>, %228, %cst_127 [0] : vector<64x60xf32> to vector<60xf32>
    %230 = vector.shape_cast %229 : vector<60xf32> to vector<1x60xf32>
    %c2_128 = arith.constant 2 : index
    %c0_129 = arith.constant 0 : index
    %c0_130 = arith.constant 0 : index
    %231 = vector.load %arg9[%c2_128, %c0_129, %c0_130] : memref<3x64x60xf32, #tpu.memory_space<vmem>>, vector<1x64x60xf32>
    %232 = vector.shape_cast %231 : vector<1x64x60xf32> to vector<64x60xf32>
    %233 = arith.mulf %232, %217 : vector<64x60xf32>
    %cst_131 = arith.constant dense<0.000000e+00> : vector<60xf32>
    %234 = vector.multi_reduction <add>, %233, %cst_131 [0] : vector<64x60xf32> to vector<60xf32>
    %235 = vector.shape_cast %234 : vector<60xf32> to vector<1x60xf32>
    %236 = tpu.concatenate %225, %230, %235 in 0 : vector<1x60xf32>, vector<1x60xf32>, vector<1x60xf32> -> vector<3x60xf32>
    %c0_132 = arith.constant 0 : index
    %c0_133 = arith.constant 0 : index
    %237 = vector.load %arg10[%c0_132, %c0_133] : memref<60x4xf32, #tpu.memory_space<vmem>>, vector<60x4xf32>
    %cst_134 = arith.constant dense<0.000000e+00> : vector<3x4xf32>
    %238 = tpu.matmul %236, %237, %cst_134 {dimension_numbers = #tpu.dot_dimension_numbers<[1], [0], [0], [1], [0, 0, 1, 1], [], []>} : vector<3x60xf32>, vector<60x4xf32>, vector<3x4xf32> -> vector<3x4xf32>
    %c0_135 = arith.constant 0 : index
    %c0_136 = arith.constant 0 : index
    %239 = vector.load %arg11[%c0_135, %c0_136] : memref<3x1xf32, #tpu.memory_space<vmem>>, vector<3x1xf32>
    %240 = vector.broadcast %239 : vector<3x1xf32> to vector<3x4xf32>
    %241 = arith.addf %238, %240 : vector<3x4xf32>
    %c0_137 = arith.constant 0 : index
    %c0_138 = arith.constant 0 : index
    %c0_139 = arith.constant 0 : index
    %242 = vector.load %arg13[%c0_137, %c0_138, %c0_139] : memref<1x3x4xf32, #tpu.memory_space<vmem>>, vector<1x3x4xf32>
    %243 = vector.shape_cast %242 : vector<1x3x4xf32> to vector<3x4xf32>
    %244 = vector.shape_cast %241 : vector<3x4xf32> to vector<1x3x4xf32>
    tpu.vector_store %arg13[%c0_137, %c0_138, %c0_139], %244 {strides = array<i32>} : memref<1x3x4xf32, #tpu.memory_space<vmem>>, vector<1x3x4xf32>,
    return
  }
  func.func @transform_0(%arg0: i32) -> (i32, i32, i32) {
    %c0_i32 = arith.constant 0 : i32
    %c0_i32_0 = arith.constant 0 : i32
    %c0_i32_1 = arith.constant 0 : i32
    return %arg0, %c0_i32, %c0_i32_0 : i32, i32, i32
  }
  func.func @transform_1(%arg0: i32) -> (i32, i32, i32) {
    %c0_i32 = arith.constant 0 : i32
    %c0_i32_0 = arith.constant 0 : i32
    %c0_i32_1 = arith.constant 0 : i32
    %c0_i32_2 = arith.constant 0 : i32
    return %c0_i32, %c0_i32_0, %c0_i32_1 : i32, i32, i32
  }
  func.func @transform_2(%arg0: i32) -> (i32, i32, i32) {
    %c0_i32 = arith.constant 0 : i32
    %c0_i32_0 = arith.constant 0 : i32
    %c0_i32_1 = arith.constant 0 : i32
    %c0_i32_2 = arith.constant 0 : i32
    return %c0_i32, %c0_i32_0, %c0_i32_1 : i32, i32, i32
  }
  func.func @transform_3(%arg0: i32) -> (i32, i32, i32) {
    %c0_i32 = arith.constant 0 : i32
    %c0_i32_0 = arith.constant 0 : i32
    %c0_i32_1 = arith.constant 0 : i32
    %c0_i32_2 = arith.constant 0 : i32
    return %c0_i32, %c0_i32_0, %c0_i32_1 : i32, i32, i32
  }
  func.func @transform_4(%arg0: i32) -> (i32, i32, i32) {
    %c0_i32 = arith.constant 0 : i32
    %c0_i32_0 = arith.constant 0 : i32
    %c0_i32_1 = arith.constant 0 : i32
    %c0_i32_2 = arith.constant 0 : i32
    return %c0_i32, %c0_i32_0, %c0_i32_1 : i32, i32, i32
  }
  func.func @transform_5(%arg0: i32) -> (i32, i32) {
    %c0_i32 = arith.constant 0 : i32
    %c0_i32_0 = arith.constant 0 : i32
    %c0_i32_1 = arith.constant 0 : i32
    return %c0_i32, %c0_i32_0 : i32, i32
  }
  func.func @transform_6(%arg0: i32) -> (i32, i32) {
    %c0_i32 = arith.constant 0 : i32
    %c0_i32_0 = arith.constant 0 : i32
    %c0_i32_1 = arith.constant 0 : i32
    return %c0_i32, %c0_i32_0 : i32, i32
  }
  func.func @transform_7(%arg0: i32) -> (i32, i32) {
    %c0_i32 = arith.constant 0 : i32
    %c0_i32_0 = arith.constant 0 : i32
    %c0_i32_1 = arith.constant 0 : i32
    return %c0_i32, %c0_i32_0 : i32, i32
  }
  func.func @transform_8(%arg0: i32) -> (i32, i32, i32) {
    %c0_i32 = arith.constant 0 : i32
    %c0_i32_0 = arith.constant 0 : i32
    %c0_i32_1 = arith.constant 0 : i32
    %c0_i32_2 = arith.constant 0 : i32
    return %c0_i32, %c0_i32_0, %c0_i32_1 : i32, i32, i32
  }
  func.func @transform_9(%arg0: i32) -> (i32, i32) {
    %c0_i32 = arith.constant 0 : i32
    %c0_i32_0 = arith.constant 0 : i32
    %c0_i32_1 = arith.constant 0 : i32
    return %c0_i32, %c0_i32_0 : i32, i32
  }
  func.func @transform_10(%arg0: i32) -> (i32, i32) {
    %c0_i32 = arith.constant 0 : i32
    %c0_i32_0 = arith.constant 0 : i32
    %c0_i32_1 = arith.constant 0 : i32
    return %c0_i32, %c0_i32_0 : i32, i32
  }
  func.func @transform_11(%arg0: i32) -> (i32, i32, i32) {
    %c0_i32 = arith.constant 0 : i32
    %c0_i32_0 = arith.constant 0 : i32
    %c0_i32_1 = arith.constant 0 : i32
    return %arg0, %c0_i32, %c0_i32_0 : i32, i32, i32
  }
  func.func @transform_12(%arg0: i32) -> (i32, i32, i32) {
    %c0_i32 = arith.constant 0 : i32
    %c0_i32_0 = arith.constant 0 : i32
    %c0_i32_1 = arith.constant 0 : i32
    return %arg0, %c0_i32, %c0_i32_0 : i32, i32, i32
  }
}

</mosaic_0001>

<llo_original>
// kernel: tpu_custom_call.1
$region0: #{tpu_custom_call.1}
  #allocation0 [shape = 'u32[]', space=smem, size = 0x4, offset = 0x4, fixed_abs, tag = 'smem constant byte address 0x4 - core index']
  #allocation1 [shape = 'u32[144,128]{1,0:T(1,128)}', space=vmem, size = 0x12000, scoped, tag = 'internal scratch']
  %s0 = inlined_call_operand.vmem [shape: f32[2,128,384], index: 0, kind: input, shape index: {}]
  %s1 = inlined_call_operand.hbm [shape: f32[3,128,128], index: 1, kind: input, shape index: {}]
  %s2 = inlined_call_operand.hbm [shape: f32[3,128,128], index: 2, kind: input, shape index: {}]
  %s3 = inlined_call_operand.hbm [shape: f32[3,128,128], index: 3, kind: input, shape index: {}]
  %s4 = inlined_call_operand.hbm [shape: f32[2,64,128], index: 4, kind: input, shape index: {}]
  %s5 = inlined_call_operand.vmem [shape: f32[128,4], index: 5, kind: input, shape index: {}]
  %s6 = inlined_call_operand.vmem [shape: f32[2,384], index: 6, kind: input, shape index: {}]
  %s7 = inlined_call_operand.vmem [shape: f32[384,120], index: 7, kind: input, shape index: {}]
  %s8 = inlined_call_operand.vmem [shape: f32[3,64,60], index: 8, kind: input, shape index: {}]
  %s9 = inlined_call_operand.vmem [shape: f32[60,4], index: 9, kind: input, shape index: {}]
  %s10 = inlined_call_operand.vmem [shape: f32[3,1], index: 10, kind: input, shape index: {}]
  %s11 = inlined_call_operand.vmem [shape: f32[2,64,60], index: 11, kind: output, shape index: {0}]
  %s12 = inlined_call_operand.vmem [shape: f32[2,3,4], index: 12, kind: output, shape index: {1}]
  %13 = xla_tuple %s11, %s12
  %s14 = sld [smem:[#allocation0]]
  $region101: #{tpu_custom_call.1} parent=0
    _
  %s16 = ssub.s32 1, %s14
  %s17 = scalar_select 0, %s16, %s14
  $region1: #{tpu_custom_call.1} parent=0
    #allocation2 [shape = 'u8[196608]{0}', space=vmem, size = 0x30000, scoped, tag = 'input window, operand 1, single buffered']
    #allocation3 [shape = 's32[2]{0}', space=sflag, size = 0x8, scoped, tag = 'scoped memory for tpu_custom_call.1']
    #allocation4 [shape = 'u8[196608]{0}', space=vmem, size = 0x30000, scoped, tag = 'input window, operand 2, single buffered']
    #allocation5 [shape = 's32[1]{0}', space=sflag, size = 0x4, scoped, tag = 'scoped memory for tpu_custom_call.1']
    #allocation6 [shape = 'u8[196608]{0}', space=vmem, size = 0x30000, scoped, tag = 'input window, operand 3, single buffered']
    #allocation7 [shape = 'u8[65536]{0}', space=vmem, size = 0x10000, scoped, tag = 'input window, operand 4, single buffered']
    #allocation8 [shape = 's32[1]{0}', space=sflag, size = 0x4, scoped, tag = 'scoped memory for tpu_custom_call.1']
    %18 = vsyncpa [#allocation3], 0
    %19 = vsyncpa [#allocation5], 0
    %20 = vsyncpa [#allocation8], 0
    loop: start=0, step=1, limit=4
    $region2: #{tpu_custom_call.1} parent=1 // loop_pre_header
      _
    $region3: #{tpu_custom_call.1} parent=1 // loop_header
      %s22 = sphi 0, %s26
      %p23 = scmp.ge.s32.totalorder %s22, 4
      %s32 = sphi 0, %s34
      %s35 = sphi 0, %s32
      %s36 = sphi 0, %s35
      %s52 = sphi 0, %s36
      %s56 = sphi 0, %s56
      %s58 = sphi 0, %s56
      %s59 = sphi 0, %s58
      %s73 = sphi 0, %s59
      %s77 = sphi 0, %s77
      %s79 = sphi 0, %s77
      %s80 = sphi 0, %s79
      %s94 = sphi 0, %s80
      %s98 = sphi 0, %s98
      %s100 = sphi 0, %s98
      %s101 = sphi 0, %s100
      %s115 = sphi 0, %s101
      %s119 = sphi 0, %s119
      %s121 = sphi 0, %s119
      %s122 = sphi 0, %s121
      %s136 = sphi 0, %s122
      %s140 = sphi 0, %s140
      %s142 = sphi 0, %s140
      %s143 = sphi 0, %s142
      %s157 = sphi 0, %s143
      %s161 = sphi 0, %s161
      %s163 = sphi 0, %s161
      %s164 = sphi 0, %s163
      %s178 = sphi 0, %s164
      %s182 = sphi 0, %s182
      %s184 = sphi 0, %s182
      %s185 = sphi 0, %s184
      %s199 = sphi 0, %s185
      %s203 = sphi 0, %s203
      %s205 = sphi 0, %s203
      %s206 = sphi 0, %s205
      %s220 = sphi 0, %s206
      %s224 = sphi 0, %s224
      %s226 = sphi 0, %s224
      %s227 = sphi 0, %s226
      %s241 = sphi 0, %s227
      %s245 = sphi 0, %s245
      %s247 = sphi 0, %s245
      %s248 = sphi 0, %s247
      %s262 = sphi 0, %s248
      %s268 = sphi 0, %s270
      %s271 = sphi 0, %s268
      %s272 = sphi 0, %s271
      %s288 = sphi 0, %s272
      %s294 = sphi 0, %s296
      %s297 = sphi 0, %s294
      %s298 = sphi 0, %s297
      %s314 = sphi 0, %s298
    $region4: #{tpu_custom_call.1} parent=1 // loop_header_branch
      %25 = sbr.rel (%p23) target = $region8
    $region5: #{tpu_custom_call.1} parent=1 // loop_body
      %s27 = ssub.s32 %s22, 1
      %s28 = ssub.s32 %s22, 2
      %s29 = sadd.s32 %s22, 1
      %s30 = ssub.s32 %s22, %s29
      %p31 = scmp.eq.s32.totalorder %s30, 0
      %s33 = sadd.s32 %s32, 1
      %s34 = scalar_select %p31, %s32, %s33
      %p37 = pneg %p31
      %p38 = scmp.eq.s32.totalorder %s22, 1
      %p39 = por %p37, %p38
      %p40 = scmp.ne.s32.totalorder %s32, %s35
      %p41 = scmp.eq.s32.totalorder %s22, 0
      %p42 = por %p40, %p41
      %p43 = scmp.ne.s32.totalorder %s32, %s35
      %p44 = scmp.eq.s32.totalorder %s27, 1
      %p45 = por %p43, %p44
      %p46 = scmp.ne.s32.totalorder %s35, %s36
      %p47 = scmp.eq.s32.totalorder %s27, 0
      %p48 = por %p46, %p47
      %p49 = scmp.ne.s32.totalorder %s35, %s36
      %p50 = scmp.eq.s32.totalorder %s28, 1
      %p51 = por %p49, %p50
      %p53 = scmp.ne.s32.totalorder %s36, %s52
      %p54 = scmp.eq.s32.totalorder %s28, 0
      %p55 = por %p53, %p54
      %s57 = sadd.s32 %s56, 1
      %p60 = scmp.eq.s32.totalorder %s22, 1
      %p61 = scmp.ne.s32.totalorder %s56, %s58
      %p62 = scmp.eq.s32.totalorder %s22, 0
      %p63 = por %p61, %p62
      %p64 = scmp.ne.s32.totalorder %s56, %s58
      %p65 = scmp.eq.s32.totalorder %s27, 1
      %p66 = por %p64, %p65
      %p67 = scmp.ne.s32.totalorder %s58, %s59
      %p68 = scmp.eq.s32.totalorder %s27, 0
      %p69 = por %p67, %p68
      %p70 = scmp.ne.s32.totalorder %s58, %s59
      %p71 = scmp.eq.s32.totalorder %s28, 1
      %p72 = por %p70, %p71
      %p74 = scmp.ne.s32.totalorder %s59, %s73
      %p75 = scmp.eq.s32.totalorder %s28, 0
      %p76 = por %p74, %p75
      %s78 = sadd.s32 %s77, 1
      %p81 = scmp.eq.s32.totalorder %s22, 1
      %p82 = scmp.ne.s32.totalorder %s77, %s79
      %p83 = scmp.eq.s32.totalorder %s22, 0
      %p84 = por %p82, %p83
      %p85 = scmp.ne.s32.totalorder %s77, %s79
      %p86 = scmp.eq.s32.totalorder %s27, 1
      %p87 = por %p85, %p86
      %p88 = scmp.ne.s32.totalorder %s79, %s80
      %p89 = scmp.eq.s32.totalorder %s27, 0
      %p90 = por %p88, %p89
      %p91 = scmp.ne.s32.totalorder %s79, %s80
      %p92 = scmp.eq.s32.totalorder %s28, 1
      %p93 = por %p91, %p92
      %p95 = scmp.ne.s32.totalorder %s80, %s94
      %p96 = scmp.eq.s32.totalorder %s28, 0
      %p97 = por %p95, %p96
      %s99 = sadd.s32 %s98, 1
      %p102 = scmp.eq.s32.totalorder %s22, 1
      %p103 = scmp.ne.s32.totalorder %s98, %s100
      %p104 = scmp.eq.s32.totalorder %s22, 0
      %p105 = por %p103, %p104
      %p106 = scmp.ne.s32.totalorder %s98, %s100
      %p107 = scmp.eq.s32.totalorder %s27, 1
      %p108 = por %p106, %p107
      %p109 = scmp.ne.s32.totalorder %s100, %s101
      %p110 = scmp.eq.s32.totalorder %s27, 0
      %p111 = por %p109, %p110
      %p112 = scmp.ne.s32.totalorder %s100, %s101
      %p113 = scmp.eq.s32.totalorder %s28, 1
      %p114 = por %p112, %p113
      %p116 = scmp.ne.s32.totalorder %s101, %s115
      %p117 = scmp.eq.s32.totalorder %s28, 0
      %p118 = por %p116, %p117
      %s120 = sadd.s32 %s119, 1
      %p123 = scmp.eq.s32.totalorder %s22, 1
      %p124 = scmp.ne.s32.totalorder %s119, %s121
      %p125 = scmp.eq.s32.totalorder %s22, 0
      %p126 = por %p124, %p125
      %p127 = scmp.ne.s32.totalorder %s119, %s121
      %p128 = scmp.eq.s32.totalorder %s27, 1
      %p129 = por %p127, %p128
      %p130 = scmp.ne.s32.totalorder %s121, %s122
      %p131 = scmp.eq.s32.totalorder %s27, 0
      %p132 = por %p130, %p131
      %p133 = scmp.ne.s32.totalorder %s121, %s122
      %p134 = scmp.eq.s32.totalorder %s28, 1
      %p135 = por %p133, %p134
      %p137 = scmp.ne.s32.totalorder %s122, %s136
      %p138 = scmp.eq.s32.totalorder %s28, 0
      %p139 = por %p137, %p138
      %s141 = sadd.s32 %s140, 1
      %p144 = scmp.eq.s32.totalorder %s22, 1
      %p145 = scmp.ne.s32.totalorder %s140, %s142
      %p146 = scmp.eq.s32.totalorder %s22, 0
      %p147 = por %p145, %p146
      %p148 = scmp.ne.s32.totalorder %s140, %s142
      %p149 = scmp.eq.s32.totalorder %s27, 1
      %p150 = por %p148, %p149
      %p151 = scmp.ne.s32.totalorder %s142, %s143
      %p152 = scmp.eq.s32.totalorder %s27, 0
      %p153 = por %p151, %p152
      %p154 = scmp.ne.s32.totalorder %s142, %s143
      %p155 = scmp.eq.s32.totalorder %s28, 1
      %p156 = por %p154, %p155
      %p158 = scmp.ne.s32.totalorder %s143, %s157
      %p159 = scmp.eq.s32.totalorder %s28, 0
      %p160 = por %p158, %p159
      %s162 = sadd.s32 %s161, 1
      %p165 = scmp.eq.s32.totalorder %s22, 1
      %p166 = scmp.ne.s32.totalorder %s161, %s163
      %p167 = scmp.eq.s32.totalorder %s22, 0
      %p168 = por %p166, %p167
      %p169 = scmp.ne.s32.totalorder %s161, %s163
      %p170 = scmp.eq.s32.totalorder %s27, 1
      %p171 = por %p169, %p170
      %p172 = scmp.ne.s32.totalorder %s163, %s164
      %p173 = scmp.eq.s32.totalorder %s27, 0
      %p174 = por %p172, %p173
      %p175 = scmp.ne.s32.totalorder %s163, %s164
      %p176 = scmp.eq.s32.totalorder %s28, 1
      %p177 = por %p175, %p176
      %p179 = scmp.ne.s32.totalorder %s164, %s178
      %p180 = scmp.eq.s32.totalorder %s28, 0
      %p181 = por %p179, %p180
      %s183 = sadd.s32 %s182, 1
      %p186 = scmp.eq.s32.totalorder %s22, 1
      %p187 = scmp.ne.s32.totalorder %s182, %s184
      %p188 = scmp.eq.s32.totalorder %s22, 0
      %p189 = por %p187, %p188
      %p190 = scmp.ne.s32.totalorder %s182, %s184
      %p191 = scmp.eq.s32.totalorder %s27, 1
      %p192 = por %p190, %p191
      %p193 = scmp.ne.s32.totalorder %s184, %s185
      %p194 = scmp.eq.s32.totalorder %s27, 0
      %p195 = por %p193, %p194
      %p196 = scmp.ne.s32.totalorder %s184, %s185
      %p197 = scmp.eq.s32.totalorder %s28, 1
      %p198 = por %p196, %p197
      %p200 = scmp.ne.s32.totalorder %s185, %s199
      %p201 = scmp.eq.s32.totalorder %s28, 0
      %p202 = por %p200, %p201
      %s204 = sadd.s32 %s203, 1
      %p207 = scmp.eq.s32.totalorder %s22, 1
      %p208 = scmp.ne.s32.totalorder %s203, %s205
      %p209 = scmp.eq.s32.totalorder %s22, 0
      %p210 = por %p208, %p209
      %p211 = scmp.ne.s32.totalorder %s203, %s205
      %p212 = scmp.eq.s32.totalorder %s27, 1
      %p213 = por %p211, %p212
      %p214 = scmp.ne.s32.totalorder %s205, %s206
      %p215 = scmp.eq.s32.totalorder %s27, 0
      %p216 = por %p214, %p215
      %p217 = scmp.ne.s32.totalorder %s205, %s206
      %p218 = scmp.eq.s32.totalorder %s28, 1
      %p219 = por %p217, %p218
      %p221 = scmp.ne.s32.totalorder %s206, %s220
      %p222 = scmp.eq.s32.totalorder %s28, 0
      %p223 = por %p221, %p222
      %s225 = sadd.s32 %s224, 1
      %p228 = scmp.eq.s32.totalorder %s22, 1
      %p229 = scmp.ne.s32.totalorder %s224, %s226
      %p230 = scmp.eq.s32.totalorder %s22, 0
      %p231 = por %p229, %p230
      %p232 = scmp.ne.s32.totalorder %s224, %s226
      %p233 = scmp.eq.s32.totalorder %s27, 1
      %p234 = por %p232, %p233
      %p235 = scmp.ne.s32.totalorder %s226, %s227
      %p236 = scmp.eq.s32.totalorder %s27, 0
      %p237 = por %p235, %p236
      %p238 = scmp.ne.s32.totalorder %s226, %s227
      %p239 = scmp.eq.s32.totalorder %s28, 1
      %p240 = por %p238, %p239
      %p242 = scmp.ne.s32.totalorder %s227, %s241
      %p243 = scmp.eq.s32.totalorder %s28, 0
      %p244 = por %p242, %p243
      %s246 = sadd.s32 %s245, 1
      %p249 = scmp.eq.s32.totalorder %s22, 1
      %p250 = scmp.ne.s32.totalorder %s245, %s247
      %p251 = scmp.eq.s32.totalorder %s22, 0
      %p252 = por %p250, %p251
      %p253 = scmp.ne.s32.totalorder %s245, %s247
      %p254 = scmp.eq.s32.totalorder %s27, 1
      %p255 = por %p253, %p254
      %p256 = scmp.ne.s32.totalorder %s247, %s248
      %p257 = scmp.eq.s32.totalorder %s27, 0
      %p258 = por %p256, %p257
      %p259 = scmp.ne.s32.totalorder %s247, %s248
      %p260 = scmp.eq.s32.totalorder %s28, 1
      %p261 = por %p259, %p260
      %p263 = scmp.ne.s32.totalorder %s248, %s262
      %p264 = scmp.eq.s32.totalorder %s28, 0
      %p265 = por %p263, %p264
      %s266 = ssub.s32 %s22, %s29
      %p267 = scmp.eq.s32.totalorder %s266, 0
      %s269 = sadd.s32 %s268, 1
      %s270 = scalar_select %p267, %s268, %s269
      %p273 = pneg %p267
      %p274 = scmp.eq.s32.totalorder %s22, 1
      %p275 = por %p273, %p274
      %p276 = scmp.ne.s32.totalorder %s268, %s271
      %p277 = scmp.eq.s32.totalorder %s22, 0
      %p278 = por %p276, %p277
      %p279 = scmp.ne.s32.totalorder %s268, %s271
      %p280 = scmp.eq.s32.totalorder %s27, 1
      %p281 = por %p279, %p280
      %p282 = scmp.ne.s32.totalorder %s271, %s272
      %p283 = scmp.eq.s32.totalorder %s27, 0
      %p284 = por %p282, %p283
      %p285 = scmp.ne.s32.totalorder %s271, %s272
      %p286 = scmp.eq.s32.totalorder %s28, 1
      %p287 = por %p285, %p286
      %p289 = scmp.ne.s32.totalorder %s272, %s288
      %p290 = scmp.eq.s32.totalorder %s28, 0
      %p291 = por %p289, %p290
      %s292 = ssub.s32 %s22, %s29
      %p293 = scmp.eq.s32.totalorder %s292, 0
      %s295 = sadd.s32 %s294, 1
      %s296 = scalar_select %p293, %s294, %s295
      %p299 = pneg %p293
      %p300 = scmp.eq.s32.totalorder %s22, 1
      %p301 = por %p299, %p300
      %p302 = scmp.ne.s32.totalorder %s294, %s297
      %p303 = scmp.eq.s32.totalorder %s22, 0
      %p304 = por %p302, %p303
      %p305 = scmp.ne.s32.totalorder %s294, %s297
      %p306 = scmp.eq.s32.totalorder %s27, 1
      %p307 = por %p305, %p306
      %p308 = scmp.ne.s32.totalorder %s297, %s298
      %p309 = scmp.eq.s32.totalorder %s27, 0
      %p310 = por %p308, %p309
      %p311 = scmp.ne.s32.totalorder %s297, %s298
      %p312 = scmp.eq.s32.totalorder %s28, 1
      %p313 = por %p311, %p312
      %p315 = scmp.ne.s32.totalorder %s298, %s314
      %p316 = scmp.eq.s32.totalorder %s28, 0
      %p317 = por %p315, %p316
      %p318 = scmp.le.s32.totalorder 1, %s22
      %p319 = scmp.lt.s32.totalorder %s22, 3
      %p320 = pnand %p318, %p319
      %p321 = pneg %p320
      // Predicated region
      $region9: #{tpu_custom_call.1} parent=5 // pred_check
        _
      $region10: #{tpu_custom_call.1} parent=5 // pred_check_branch
        %323 = sbr.rel (%p320) target = $region12
      $region11: #{tpu_custom_call.1} parent=5 // pred_region
        %s324 = ssub.s32 %s22, 1
        // Predicated region
        $region13: #{tpu_custom_call.1} parent=11 // pred_check
          %p325 = pneg %p69
        $region14: #{tpu_custom_call.1} parent=11 // pred_check_branch
          %327 = sbr.rel (%p325) target = $region16
        $region15: #{tpu_custom_call.1} parent=11 // pred_region
          %s329 = ssub.s32 6144, 6144
          %330 = vsyncadd [#allocation3], %s329
          %s331 = sshll.u32 [#allocation2], 4
          %s332 = int_to_ptr.vmem [resolvable:$true] %s331
          %337 = dma.hbm_to_vmem [thread:$0]  %s1, 6144, %s332, [#allocation3], 128, 128, 8
        $region16: #{tpu_custom_call.1} parent=11 // pred_fallthru
          _
        // Predicated region
        $region17: #{tpu_custom_call.1} parent=11 // pred_check
          %p338 = pneg %p90
        $region18: #{tpu_custom_call.1} parent=11 // pred_check_branch
          %340 = sbr.rel (%p338) target = $region20
        $region19: #{tpu_custom_call.1} parent=11 // pred_region
          %s342 = ssub.s32 6144, 6144
          %343 = vsyncadd [#allocation5], %s342
          %s344 = sshll.u32 [#allocation4], 4
          %s345 = int_to_ptr.vmem [resolvable:$true] %s344
          %350 = dma.hbm_to_vmem [thread:$0]  %s2, 6144, %s345, [#allocation5], 128, 128, 8
        $region20: #{tpu_custom_call.1} parent=11 // pred_fallthru
          _
        // Predicated region
        $region21: #{tpu_custom_call.1} parent=11 // pred_check
          %p351 = pneg %p111
        $region22: #{tpu_custom_call.1} parent=11 // pred_check_branch
          %353 = sbr.rel (%p351) target = $region24
        $region23: #{tpu_custom_call.1} parent=11 // pred_region
          %s355 = ssub.s32 6144, 6144
          %356 = vsyncadd [#allocation5], %s355
          %s357 = sshll.u32 [#allocation6], 4
          %s358 = int_to_ptr.vmem [resolvable:$true] %s357
          %363 = dma.hbm_to_vmem [thread:$0]  %s3, 6144, %s358, [#allocation5], 128, 128, 8
        $region24: #{tpu_custom_call.1} parent=11 // pred_fallthru
          _
        // Predicated region
        $region25: #{tpu_custom_call.1} parent=11 // pred_check
          %p364 = pneg %p132
        $region26: #{tpu_custom_call.1} parent=11 // pred_check_branch
          %366 = sbr.rel (%p364) target = $region28
        $region27: #{tpu_custom_call.1} parent=11 // pred_region
          %s368 = ssub.s32 2048, 2048
          %369 = vsyncadd [#allocation8], %s368
          %s370 = sshll.u32 [#allocation7], 4
          %s371 = int_to_ptr.vmem [resolvable:$true] %s370
          %376 = dma.hbm_to_vmem [thread:$0]  %s4, 2048, %s371, [#allocation8], 128, 128, 8
        $region28: #{tpu_custom_call.1} parent=11 // pred_fallthru
          _
        // Predicated region
        $region29: #{tpu_custom_call.1} parent=11 // pred_check
          %p377 = pneg %p153
        $region30: #{tpu_custom_call.1} parent=11 // pred_check_branch
          %379 = sbr.rel (%p377) target = $region32
        $region31: #{tpu_custom_call.1} parent=11 // pred_region
          _
        $region32: #{tpu_custom_call.1} parent=11 // pred_fallthru
          _
        // Predicated region
        $region33: #{tpu_custom_call.1} parent=11 // pred_check
          %p380 = pneg %p174
        $region34: #{tpu_custom_call.1} parent=11 // pred_check_branch
          %382 = sbr.rel (%p380) target = $region36
        $region35: #{tpu_custom_call.1} parent=11 // pred_region
          _
        $region36: #{tpu_custom_call.1} parent=11 // pred_fallthru
          _
        // Predicated region
        $region37: #{tpu_custom_call.1} parent=11 // pred_check
          %p383 = pneg %p195
        $region38: #{tpu_custom_call.1} parent=11 // pred_check_branch
          %385 = sbr.rel (%p383) target = $region40
        $region39: #{tpu_custom_call.1} parent=11 // pred_region
          _
        $region40: #{tpu_custom_call.1} parent=11 // pred_fallthru
          _
        // Predicated region
        $region41: #{tpu_custom_call.1} parent=11 // pred_check
          %p386 = pneg %p216
        $region42: #{tpu_custom_call.1} parent=11 // pred_check_branch
          %388 = sbr.rel (%p386) target = $region44
        $region43: #{tpu_custom_call.1} parent=11 // pred_region
          _
        $region44: #{tpu_custom_call.1} parent=11 // pred_fallthru
          _
        // Predicated region
        $region45: #{tpu_custom_call.1} parent=11 // pred_check
          %p389 = pneg %p237
        $region46: #{tpu_custom_call.1} parent=11 // pred_check_branch
          %391 = sbr.rel (%p389) target = $region48
        $region47: #{tpu_custom_call.1} parent=11 // pred_region
          _
        $region48: #{tpu_custom_call.1} parent=11 // pred_fallthru
          _
        // Predicated region
        $region49: #{tpu_custom_call.1} parent=11 // pred_check
          %p392 = pneg %p258
        $region50: #{tpu_custom_call.1} parent=11 // pred_check_branch
          %394 = sbr.rel (%p392) target = $region52
        $region51: #{tpu_custom_call.1} parent=11 // pred_region
          _
        $region52: #{tpu_custom_call.1} parent=11 // pred_fallthru
          _
      $region12: #{tpu_custom_call.1} parent=5 // pred_fallthru
        _
      %p395 = scmp.lt.s32.totalorder %s22, 2
      // Predicated region
      $region53: #{tpu_custom_call.1} parent=5 // pred_check
        %p396 = pneg %p395
      $region54: #{tpu_custom_call.1} parent=5 // pred_check_branch
        %398 = sbr.rel (%p396) target = $region56
      $region55: #{tpu_custom_call.1} parent=5 // pred_region
        // Predicated region
        $region57: #{tpu_custom_call.1} parent=55 // pred_check
          %p399 = pneg %p42
        $region58: #{tpu_custom_call.1} parent=55 // pred_check_branch
          %401 = sbr.rel (%p399) target = $region60
        $region59: #{tpu_custom_call.1} parent=55 // pred_region
          %p402 = scmp.lt.s32.totalorder %s22, 1
          %s403 = scalar_select %p402, %s22, 1
          %s404 = smul.addr %s403, 48
          %s405 = smul.addr %s404, 8
          %s406 = scalar_lea.vmem %s0, %s405
        $region60: #{tpu_custom_call.1} parent=55 // pred_fallthru
          _
      $region56: #{tpu_custom_call.1} parent=5 // pred_fallthru
        _
      %p407 = scmp.le.s32.totalorder 1, %s22
      %p408 = scmp.lt.s32.totalorder %s22, 3
      %p409 = pnand %p407, %p408
      %p410 = pneg %p409
      // Predicated region
      $region61: #{tpu_custom_call.1} parent=5 // pred_check
        _
      $region62: #{tpu_custom_call.1} parent=5 // pred_check_branch
        %412 = sbr.rel (%p409) target = $region64
      $region63: #{tpu_custom_call.1} parent=5 // pred_region
        %s413 = ssub.s32 %s22, 1
        // Predicated region
        $region65: #{tpu_custom_call.1} parent=63 // pred_check
          %p414 = pneg %p69
        $region66: #{tpu_custom_call.1} parent=63 // pred_check_branch
          %416 = sbr.rel (%p414) target = $region68
        $region67: #{tpu_custom_call.1} parent=63 // pred_region
          %417 = dma.done [#allocation3], 6144
        $region68: #{tpu_custom_call.1} parent=63 // pred_fallthru
          _
        // Predicated region
        $region69: #{tpu_custom_call.1} parent=63 // pred_check
          %p418 = pneg %p90
        $region70: #{tpu_custom_call.1} parent=63 // pred_check_branch
          %420 = sbr.rel (%p418) target = $region72
        $region71: #{tpu_custom_call.1} parent=63 // pred_region
          %421 = dma.done [#allocation5], 6144
        $region72: #{tpu_custom_call.1} parent=63 // pred_fallthru
          _
        // Predicated region
        $region73: #{tpu_custom_call.1} parent=63 // pred_check
          %p422 = pneg %p111
        $region74: #{tpu_custom_call.1} parent=63 // pred_check_branch
          %424 = sbr.rel (%p422) target = $region76
        $region75: #{tpu_custom_call.1} parent=63 // pred_region
          %425 = dma.done [#allocation5], 6144
        $region76: #{tpu_custom_call.1} parent=63 // pred_fallthru
          _
        // Predicated region
        $region77: #{tpu_custom_call.1} parent=63 // pred_check
          %p426 = pneg %p132
        $region78: #{tpu_custom_call.1} parent=63 // pred_check_branch
          %428 = sbr.rel (%p426) target = $region80
        $region79: #{tpu_custom_call.1} parent=63 // pred_region
          %429 = dma.done [#allocation8], 2048
        $region80: #{tpu_custom_call.1} parent=63 // pred_fallthru
          _
        %p430 = scmp.lt.s32.totalorder %s27, 1
        %s431 = scalar_select %p430, %s27, 1
        %s432 = smul.addr %s431, 48
        %s433 = smul.addr %s432, 8
        %s434 = scalar_lea.vmem %s0, %s433
        %p435 = pneg %p48
        %p436 = pneg %p45
        %p437 = pneg %p69
        %p438 = pneg %p66
        %p439 = pneg %p90
        %p440 = pneg %p87
        %p441 = pneg %p111
        %p442 = pneg %p108
        %p443 = pneg %p132
        %p444 = pneg %p129
        %p445 = pneg %p153
        %p446 = pneg %p150
        %p447 = pneg %p174
        %p448 = pneg %p171
        %p449 = pneg %p195
        %p450 = pneg %p192
        %p451 = pneg %p216
        %p452 = pneg %p213
        %p453 = pneg %p237
        %p454 = pneg %p234
        %p455 = pneg %p258
        %p456 = pneg %p255
        %p457 = pneg %p284
        %p458 = pneg %p281
        %p459 = scmp.lt.s32.totalorder %s27, 1
        %s460 = scalar_select %p459, %s27, 1
        %s461 = smul.addr %s460, 8
        %s462 = smul.addr %s461, 8
        %s463 = scalar_lea.vmem %s11, %s462
        %p464 = pneg %p310
        %p465 = pneg %p307
        %p466 = scmp.lt.s32.totalorder %s27, 1
        %s467 = scalar_select %p466, %s27, 1
        %s468 = smul.addr %s467, 4
        %s469 = scalar_lea.vmem %s12, %s468
        %p470 = scmp.lt.s32.totalorder %s27, 1
        %s471 = scalar_select %p470, %s27, 1
        %s472 = smul.addr %s471, 48
        %s473 = smul.addr %s472, 8
        %s474 = scalar_lea.vmem %s0, %s473
        %p475 = scmp.lt.s32.totalorder %s27, 1
        %s476 = scalar_select %p475, %s27, 1
        %s477 = smul.addr %s476, 8
        %s478 = smul.addr %s477, 8
        %s479 = scalar_lea.vmem %s11, %s478
        %p480 = scmp.lt.s32.totalorder %s27, 1
        %s481 = scalar_select %p480, %s27, 1
        %s482 = smul.addr %s481, 4
        %s483 = scalar_lea.vmem %s12, %s482
        %v484 = vld [vmem:[%s474] sm:$0xff]
        %v485 = vld [vmem:[%s474 + $0x8] sm:$0xff]
        %v486 = vld [vmem:[%s474 + $0x10] sm:$0xff]
        %v487 = vld [vmem:[%s474 + $0x18] sm:$0xff]
        %v488 = vld [vmem:[%s474 + $0x20] sm:$0xff]
        %v489 = vld [vmem:[%s474 + $0x28] sm:$0xff]
        %v490 = vld [vmem:[%s474 + $0x30] sm:$0xff]
        %v491 = vld [vmem:[%s474 + $0x38] sm:$0xff]
        %v492 = vld [vmem:[%s474 + $0x40] sm:$0xff]
        %v493 = vld [vmem:[%s474 + $0x48] sm:$0xff]
        %v494 = vld [vmem:[%s474 + $0x50] sm:$0xff]
        %v495 = vld [vmem:[%s474 + $0x58] sm:$0xff]
        %v496 = vld [vmem:[%s474 + $0x60] sm:$0xff]
        %v497 = vld [vmem:[%s474 + $0x68] sm:$0xff]
        %v498 = vld [vmem:[%s474 + $0x70] sm:$0xff]
        %v499 = vld [vmem:[%s474 + $0x78] sm:$0xff]
        %v500 = vld [vmem:[%s474 + $0x80] sm:$0xff]
        %v501 = vld [vmem:[%s474 + $0x88] sm:$0xff]
        %v502 = vld [vmem:[%s474 + $0x90] sm:$0xff]
        %v503 = vld [vmem:[%s474 + $0x98] sm:$0xff]
        %v504 = vld [vmem:[%s474 + $0xa0] sm:$0xff]
        %v505 = vld [vmem:[%s474 + $0xa8] sm:$0xff]
        %v506 = vld [vmem:[%s474 + $0xb0] sm:$0xff]
        %v507 = vld [vmem:[%s474 + $0xb8] sm:$0xff]
        %v508 = vld [vmem:[%s474 + $0xc0] sm:$0xff]
        %v509 = vld [vmem:[%s474 + $0xc8] sm:$0xff]
        %v510 = vld [vmem:[%s474 + $0xd0] sm:$0xff]
        %v511 = vld [vmem:[%s474 + $0xd8] sm:$0xff]
        %v512 = vld [vmem:[%s474 + $0xe0] sm:$0xff]
        %v513 = vld [vmem:[%s474 + $0xe8] sm:$0xff]
        %v514 = vld [vmem:[%s474 + $0xf0] sm:$0xff]
        %v515 = vld [vmem:[%s474 + $0xf8] sm:$0xff]
        %v516 = vld [vmem:[%s474 + $0x100] sm:$0xff]
        %v517 = vld [vmem:[%s474 + $0x108] sm:$0xff]
        %v518 = vld [vmem:[%s474 + $0x110] sm:$0xff]
        %v519 = vld [vmem:[%s474 + $0x118] sm:$0xff]
        %v520 = vld [vmem:[%s474 + $0x120] sm:$0xff]
        %v521 = vld [vmem:[%s474 + $0x128] sm:$0xff]
        %v522 = vld [vmem:[%s474 + $0x130] sm:$0xff]
        %v523 = vld [vmem:[%s474 + $0x138] sm:$0xff]
        %v524 = vld [vmem:[%s474 + $0x140] sm:$0xff]
        %v525 = vld [vmem:[%s474 + $0x148] sm:$0xff]
        %v526 = vld [vmem:[%s474 + $0x150] sm:$0xff]
        %v527 = vld [vmem:[%s474 + $0x158] sm:$0xff]
        %v528 = vld [vmem:[%s474 + $0x160] sm:$0xff]
        %v529 = vld [vmem:[%s474 + $0x168] sm:$0xff]
        %v530 = vld [vmem:[%s474 + $0x170] sm:$0xff]
        %v531 = vld [vmem:[%s474 + $0x178] sm:$0xff]
        %v532 = vld [vmem:[%s6] ss:$2 sm:$0x7]
        %vm533 = vcmp.gt.f32.partialorder %v532, 0.5
        %s534 = scalar_lea.vmem %s6, 1
        %v535 = vld [vmem:[%s534] ss:$2 sm:$0x7]
        %vm536 = vcmp.gt.f32.partialorder %v535, 0.5
        %v537 = vld [vmem:[%s5] sm:$0xff]
        %v538 = vld [vmem:[%s5 + $0x8] sm:$0xff]
        %v539 = vld [vmem:[%s5 + $0x10] sm:$0xff]
        %v540 = vld [vmem:[%s5 + $0x18] sm:$0xff]
        %v541 = vld [vmem:[%s5 + $0x20] sm:$0xff]
        %v542 = vld [vmem:[%s5 + $0x28] sm:$0xff]
        %v543 = vld [vmem:[%s5 + $0x30] sm:$0xff]
        %v544 = vld [vmem:[%s5 + $0x38] sm:$0xff]
        %v545 = vld [vmem:[%s5 + $0x40] sm:$0xff]
        %v546 = vld [vmem:[%s5 + $0x48] sm:$0xff]
        %v547 = vld [vmem:[%s5 + $0x50] sm:$0xff]
        %v548 = vld [vmem:[%s5 + $0x58] sm:$0xff]
        %v549 = vld [vmem:[%s5 + $0x60] sm:$0xff]
        %v550 = vld [vmem:[%s5 + $0x68] sm:$0xff]
        %v551 = vld [vmem:[%s5 + $0x70] sm:$0xff]
        %v552 = vld [vmem:[%s5 + $0x78] sm:$0xff]
        %553 = vrot.lane.b32.xlu0 %v484, 1
        %v554 = vpop.permute.xlu0 %553
        %555 = vrot.lane.b32.xlu0 %v487, 1
        %v556 = vpop.permute.xlu0 %555
        %557 = vrot.lane.b32.xlu0 %v490, 1
        %v558 = vpop.permute.xlu0 %557
        %559 = vrot.lane.b32.xlu0 %v493, 1
        %v560 = vpop.permute.xlu0 %559
        %561 = vrot.lane.b32.xlu0 %v496, 1
        %v562 = vpop.permute.xlu0 %561
        %563 = vrot.lane.b32.xlu0 %v499, 1
        %v564 = vpop.permute.xlu0 %563
        %565 = vrot.lane.b32.xlu0 %v502, 1
        %v566 = vpop.permute.xlu0 %565
        %567 = vrot.lane.b32.xlu0 %v505, 1
        %v568 = vpop.permute.xlu0 %567
        %569 = vrot.lane.b32.xlu0 %v508, 1
        %v570 = vpop.permute.xlu0 %569
        %571 = vrot.lane.b32.xlu0 %v511, 1
        %v572 = vpop.permute.xlu0 %571
        %573 = vrot.lane.b32.xlu0 %v514, 1
        %v574 = vpop.permute.xlu0 %573
        %575 = vrot.lane.b32.xlu0 %v517, 1
        %v576 = vpop.permute.xlu0 %575
        %577 = vrot.lane.b32.xlu0 %v520, 1
        %v578 = vpop.permute.xlu0 %577
        %579 = vrot.lane.b32.xlu0 %v523, 1
        %v580 = vpop.permute.xlu0 %579
        %581 = vrot.lane.b32.xlu0 %v526, 1
        %v582 = vpop.permute.xlu0 %581
        %583 = vrot.lane.b32.xlu0 %v529, 1
        %v584 = vpop.permute.xlu0 %583
        %585 = vrot.lane.b32.xlu0 %v485, 1
        %v586 = vpop.permute.xlu0 %585
        %587 = vrot.lane.b32.xlu0 %v488, 1
        %v588 = vpop.permute.xlu0 %587
        %589 = vrot.lane.b32.xlu0 %v491, 1
        %v590 = vpop.permute.xlu0 %589
        %591 = vrot.lane.b32.xlu0 %v494, 1
        %v592 = vpop.permute.xlu0 %591
        %593 = vrot.lane.b32.xlu0 %v497, 1
        %v594 = vpop.permute.xlu0 %593
        %595 = vrot.lane.b32.xlu0 %v500, 1
        %v596 = vpop.permute.xlu0 %595
        %597 = vrot.lane.b32.xlu0 %v503, 1
        %v598 = vpop.permute.xlu0 %597
        %599 = vrot.lane.b32.xlu0 %v506, 1
        %v600 = vpop.permute.xlu0 %599
        %601 = vrot.lane.b32.xlu0 %v509, 1
        %v602 = vpop.permute.xlu0 %601
        %603 = vrot.lane.b32.xlu0 %v512, 1
        %v604 = vpop.permute.xlu0 %603
        %605 = vrot.lane.b32.xlu0 %v515, 1
        %v606 = vpop.permute.xlu0 %605
        %607 = vrot.lane.b32.xlu0 %v518, 1
        %v608 = vpop.permute.xlu0 %607
        %609 = vrot.lane.b32.xlu0 %v521, 1
        %v610 = vpop.permute.xlu0 %609
        %611 = vrot.lane.b32.xlu0 %v524, 1
        %v612 = vpop.permute.xlu0 %611
        %613 = vrot.lane.b32.xlu0 %v527, 1
        %v614 = vpop.permute.xlu0 %613
        %615 = vrot.lane.b32.xlu0 %v530, 1
        %v616 = vpop.permute.xlu0 %615
        %617 = vrot.lane.b32.xlu0 %v486, 1
        %v618 = vpop.permute.xlu0 %617
        %619 = vrot.lane.b32.xlu0 %v489, 1
        %v620 = vpop.permute.xlu0 %619
        %621 = vrot.lane.b32.xlu0 %v492, 1
        %v622 = vpop.permute.xlu0 %621
        %623 = vrot.lane.b32.xlu0 %v495, 1
        %v624 = vpop.permute.xlu0 %623
        %625 = vrot.lane.b32.xlu0 %v498, 1
        %v626 = vpop.permute.xlu0 %625
        %627 = vrot.lane.b32.xlu0 %v501, 1
        %v628 = vpop.permute.xlu0 %627
        %629 = vrot.lane.b32.xlu0 %v504, 1
        %v630 = vpop.permute.xlu0 %629
        %631 = vrot.lane.b32.xlu0 %v507, 1
        %v632 = vpop.permute.xlu0 %631
        %633 = vrot.lane.b32.xlu0 %v510, 1
        %v634 = vpop.permute.xlu0 %633
        %635 = vrot.lane.b32.xlu0 %v513, 1
        %v636 = vpop.permute.xlu0 %635
        %637 = vrot.lane.b32.xlu0 %v516, 1
        %v638 = vpop.permute.xlu0 %637
        %639 = vrot.lane.b32.xlu0 %v519, 1
        %v640 = vpop.permute.xlu0 %639
        %641 = vrot.lane.b32.xlu0 %v522, 1
        %v642 = vpop.permute.xlu0 %641
        %643 = vrot.lane.b32.xlu0 %v525, 1
        %v644 = vpop.permute.xlu0 %643
        %645 = vrot.lane.b32.xlu0 %v528, 1
        %v646 = vpop.permute.xlu0 %645
        %647 = vrot.lane.b32.xlu0 %v531, 1
        %v648 = vpop.permute.xlu0 %647
        %v649 = vlaneseq
        %v650 = vand.u32 %v649, 127
        %vm651 = vcmp.lt.s32.totalorder %v650, 1
        %v652 = vsel %vm651, %v586, %v618
        %v653 = vsel %vm651, %v588, %v620
        %v654 = vsel %vm651, %v590, %v622
        %v655 = vsel %vm651, %v592, %v624
        %v656 = vsel %vm651, %v594, %v626
        %v657 = vsel %vm651, %v596, %v628
        %v658 = vsel %vm651, %v598, %v630
        %v659 = vsel %vm651, %v600, %v632
        %v660 = vsel %vm651, %v602, %v634
        %v661 = vsel %vm651, %v604, %v636
        %v662 = vsel %vm651, %v606, %v638
        %v663 = vsel %vm651, %v608, %v640
        %v664 = vsel %vm651, %v610, %v642
        %v665 = vsel %vm651, %v612, %v644
        %v666 = vsel %vm651, %v614, %v646
        %v667 = vsel %vm651, %v616, %v648
        %v668 = vsel %vm651, %v554, %v586
        %v669 = vsel %vm651, %v556, %v588
        %v670 = vsel %vm651, %v558, %v590
        %v671 = vsel %vm651, %v560, %v592
        %v672 = vsel %vm651, %v562, %v594
        %v673 = vsel %vm651, %v564, %v596
        %v674 = vsel %vm651, %v566, %v598
        %v675 = vsel %vm651, %v568, %v600
        %v676 = vsel %vm651, %v570, %v602
        %v677 = vsel %vm651, %v572, %v604
        %v678 = vsel %vm651, %v574, %v606
        %v679 = vsel %vm651, %v576, %v608
        %v680 = vsel %vm651, %v578, %v610
        %v681 = vsel %vm651, %v580, %v612
        %v682 = vsel %vm651, %v582, %v614
        %v683 = vsel %vm651, %v584, %v616
        %v684 = vsel %vm651, %v618, %v554
        %v685 = vsel %vm651, %v620, %v556
        %v686 = vsel %vm651, %v622, %v558
        %v687 = vsel %vm651, %v624, %v560
        %v688 = vsel %vm651, %v626, %v562
        %v689 = vsel %vm651, %v628, %v564
        %v690 = vsel %vm651, %v630, %v566
        %v691 = vsel %vm651, %v632, %v568
        %v692 = vsel %vm651, %v634, %v570
        %v693 = vsel %vm651, %v636, %v572
        %v694 = vsel %vm651, %v638, %v574
        %v695 = vsel %vm651, %v640, %v576
        %v696 = vsel %vm651, %v642, %v578
        %v697 = vsel %vm651, %v644, %v580
        %v698 = vsel %vm651, %v646, %v582
        %v699 = vsel %vm651, %v648, %v584
        %v700 = vsel %vm533, 1, 0
        %v701 = vlaneseq
        %v702 = vshrl.u32 %v701, 7
        %v703 = vsub.s32 0, %v702
        %v704 = vrot.slane %v700, %v703
        %v705 = vlaneseq
        %v706 = vshrl.u32 %v705, 7
        %v707 = vsub.s32 1, %v706
        %v708 = vrot.slane %v700, %v707
        %v709 = vlaneseq
        %v710 = vshrl.u32 %v709, 7
        %v711 = vsub.s32 2, %v710
        %v712 = vrot.slane %v700, %v711
        %vm713 = vcmp.eq.s32.totalorder %v704, 1
        %vm714 = vcmp.eq.s32.totalorder %v708, 1
        %vm715 = vcmp.eq.s32.totalorder %v712, 1
        %v716 = vsel %vm713, %v684, 0.0
        %v717 = vsel %vm714, %v668, 0.0
        %v718 = vsel %vm715, %v652, 0.0
        %v719 = vsel %vm713, %v685, 0.0
        %v720 = vsel %vm714, %v669, 0.0
        %v721 = vsel %vm715, %v653, 0.0
        %v722 = vsel %vm713, %v686, 0.0
        %v723 = vsel %vm714, %v670, 0.0
        %v724 = vsel %vm715, %v654, 0.0
        %v725 = vsel %vm713, %v687, 0.0
        %v726 = vsel %vm714, %v671, 0.0
        %v727 = vsel %vm715, %v655, 0.0
        %v728 = vsel %vm713, %v688, 0.0
        %v729 = vsel %vm714, %v672, 0.0
        %v730 = vsel %vm715, %v656, 0.0
        %v731 = vsel %vm713, %v689, 0.0
        %v732 = vsel %vm714, %v673, 0.0
        %v733 = vsel %vm715, %v657, 0.0
        %v734 = vsel %vm713, %v690, 0.0
        %v735 = vsel %vm714, %v674, 0.0
        %v736 = vsel %vm715, %v658, 0.0
        %v737 = vsel %vm713, %v691, 0.0
        %v738 = vsel %vm714, %v675, 0.0
        %v739 = vsel %vm715, %v659, 0.0
        %v740 = vsel %vm713, %v692, 0.0
        %v741 = vsel %vm714, %v676, 0.0
        %v742 = vsel %vm715, %v660, 0.0
        %v743 = vsel %vm713, %v693, 0.0
        %v744 = vsel %vm714, %v677, 0.0
        %v745 = vsel %vm715, %v661, 0.0
        %v746 = vsel %vm713, %v694, 0.0
        %v747 = vsel %vm714, %v678, 0.0
        %v748 = vsel %vm715, %v662, 0.0
        %v749 = vsel %vm713, %v695, 0.0
        %v750 = vsel %vm714, %v679, 0.0
        %v751 = vsel %vm715, %v663, 0.0
        %v752 = vsel %vm713, %v696, 0.0
        %v753 = vsel %vm714, %v680, 0.0
        %v754 = vsel %vm715, %v664, 0.0
        %v755 = vsel %vm713, %v697, 0.0
        %v756 = vsel %vm714, %v681, 0.0
        %v757 = vsel %vm715, %v665, 0.0
        %v758 = vsel %vm713, %v698, 0.0
        %v759 = vsel %vm714, %v682, 0.0
        %v760 = vsel %vm715, %v666, 0.0
        %v761 = vsel %vm713, %v699, 0.0
        %v762 = vsel %vm714, %v683, 0.0
        %v763 = vsel %vm715, %v667, 0.0
        %764 = vrot.lane.b32.xlu0 %v484, 127
        %v765 = vpop.permute.xlu0 %764
        %766 = vrot.lane.b32.xlu0 %v487, 127
        %v767 = vpop.permute.xlu0 %766
        %768 = vrot.lane.b32.xlu0 %v490, 127
        %v769 = vpop.permute.xlu0 %768
        %770 = vrot.lane.b32.xlu0 %v493, 127
        %v771 = vpop.permute.xlu0 %770
        %772 = vrot.lane.b32.xlu0 %v496, 127
        %v773 = vpop.permute.xlu0 %772
        %774 = vrot.lane.b32.xlu0 %v499, 127
        %v775 = vpop.permute.xlu0 %774
        %776 = vrot.lane.b32.xlu0 %v502, 127
        %v777 = vpop.permute.xlu0 %776
        %778 = vrot.lane.b32.xlu0 %v505, 127
        %v779 = vpop.permute.xlu0 %778
        %780 = vrot.lane.b32.xlu0 %v508, 127
        %v781 = vpop.permute.xlu0 %780
        %782 = vrot.lane.b32.xlu0 %v511, 127
        %v783 = vpop.permute.xlu0 %782
        %784 = vrot.lane.b32.xlu0 %v514, 127
        %v785 = vpop.permute.xlu0 %784
        %786 = vrot.lane.b32.xlu0 %v517, 127
        %v787 = vpop.permute.xlu0 %786
        %788 = vrot.lane.b32.xlu0 %v520, 127
        %v789 = vpop.permute.xlu0 %788
        %790 = vrot.lane.b32.xlu0 %v523, 127
        %v791 = vpop.permute.xlu0 %790
        %792 = vrot.lane.b32.xlu0 %v526, 127
        %v793 = vpop.permute.xlu0 %792
        %794 = vrot.lane.b32.xlu0 %v529, 127
        %v795 = vpop.permute.xlu0 %794
        %796 = vrot.lane.b32.xlu0 %v485, 127
        %v797 = vpop.permute.xlu0 %796
        %798 = vrot.lane.b32.xlu0 %v488, 127
        %v799 = vpop.permute.xlu0 %798
        %800 = vrot.lane.b32.xlu0 %v491, 127
        %v801 = vpop.permute.xlu0 %800
        %802 = vrot.lane.b32.xlu0 %v494, 127
        %v803 = vpop.permute.xlu0 %802
        %804 = vrot.lane.b32.xlu0 %v497, 127
        %v805 = vpop.permute.xlu0 %804
        %806 = vrot.lane.b32.xlu0 %v500, 127
        %v807 = vpop.permute.xlu0 %806
        %808 = vrot.lane.b32.xlu0 %v503, 127
        %v809 = vpop.permute.xlu0 %808
        %810 = vrot.lane.b32.xlu0 %v506, 127
        %v811 = vpop.permute.xlu0 %810
        %812 = vrot.lane.b32.xlu0 %v509, 127
        %v813 = vpop.permute.xlu0 %812
        %814 = vrot.lane.b32.xlu0 %v512, 127
        %v815 = vpop.permute.xlu0 %814
        %816 = vrot.lane.b32.xlu0 %v515, 127
        %v817 = vpop.permute.xlu0 %816
        %818 = vrot.lane.b32.xlu0 %v518, 127
        %v819 = vpop.permute.xlu0 %818
        %820 = vrot.lane.b32.xlu0 %v521, 127
        %v821 = vpop.permute.xlu0 %820
        %822 = vrot.lane.b32.xlu0 %v524, 127
        %v823 = vpop.permute.xlu0 %822
        %824 = vrot.lane.b32.xlu0 %v527, 127
        %v825 = vpop.permute.xlu0 %824
        %826 = vrot.lane.b32.xlu0 %v530, 127
        %v827 = vpop.permute.xlu0 %826
        %828 = vrot.lane.b32.xlu0 %v486, 127
        %v829 = vpop.permute.xlu0 %828
        %830 = vrot.lane.b32.xlu0 %v489, 127
        %v831 = vpop.permute.xlu0 %830
        %832 = vrot.lane.b32.xlu0 %v492, 127
        %v833 = vpop.permute.xlu0 %832
        %834 = vrot.lane.b32.xlu0 %v495, 127
        %v835 = vpop.permute.xlu0 %834
        %836 = vrot.lane.b32.xlu0 %v498, 127
        %v837 = vpop.permute.xlu0 %836
        %838 = vrot.lane.b32.xlu0 %v501, 127
        %v839 = vpop.permute.xlu0 %838
        %840 = vrot.lane.b32.xlu0 %v504, 127
        %v841 = vpop.permute.xlu0 %840
        %842 = vrot.lane.b32.xlu0 %v507, 127
        %v843 = vpop.permute.xlu0 %842
        %844 = vrot.lane.b32.xlu0 %v510, 127
        %v845 = vpop.permute.xlu0 %844
        %846 = vrot.lane.b32.xlu0 %v513, 127
        %v847 = vpop.permute.xlu0 %846
        %848 = vrot.lane.b32.xlu0 %v516, 127
        %v849 = vpop.permute.xlu0 %848
        %850 = vrot.lane.b32.xlu0 %v519, 127
        %v851 = vpop.permute.xlu0 %850
        %852 = vrot.lane.b32.xlu0 %v522, 127
        %v853 = vpop.permute.xlu0 %852
        %854 = vrot.lane.b32.xlu0 %v525, 127
        %v855 = vpop.permute.xlu0 %854
        %856 = vrot.lane.b32.xlu0 %v528, 127
        %v857 = vpop.permute.xlu0 %856
        %858 = vrot.lane.b32.xlu0 %v531, 127
        %v859 = vpop.permute.xlu0 %858
        %vm860 = vcmp.lt.s32.totalorder %v650, 127
        %v861 = vsel %vm860, %v797, %v829
        %v862 = vsel %vm860, %v799, %v831
        %v863 = vsel %vm860, %v801, %v833
        %v864 = vsel %vm860, %v803, %v835
        %v865 = vsel %vm860, %v805, %v837
        %v866 = vsel %vm860, %v807, %v839
        %v867 = vsel %vm860, %v809, %v841
        %v868 = vsel %vm860, %v811, %v843
        %v869 = vsel %vm860, %v813, %v845
        %v870 = vsel %vm860, %v815, %v847
        %v871 = vsel %vm860, %v817, %v849
        %v872 = vsel %vm860, %v819, %v851
        %v873 = vsel %vm860, %v821, %v853
        %v874 = vsel %vm860, %v823, %v855
        %v875 = vsel %vm860, %v825, %v857
        %v876 = vsel %vm860, %v827, %v859
        %v877 = vsel %vm860, %v765, %v797
        %v878 = vsel %vm860, %v767, %v799
        %v879 = vsel %vm860, %v769, %v801
        %v880 = vsel %vm860, %v771, %v803
        %v881 = vsel %vm860, %v773, %v805
        %v882 = vsel %vm860, %v775, %v807
        %v883 = vsel %vm860, %v777, %v809
        %v884 = vsel %vm860, %v779, %v811
        %v885 = vsel %vm860, %v781, %v813
        %v886 = vsel %vm860, %v783, %v815
        %v887 = vsel %vm860, %v785, %v817
        %v888 = vsel %vm860, %v787, %v819
        %v889 = vsel %vm860, %v789, %v821
        %v890 = vsel %vm860, %v791, %v823
        %v891 = vsel %vm860, %v793, %v825
        %v892 = vsel %vm860, %v795, %v827
        %v893 = vsel %vm860, %v829, %v765
        %v894 = vsel %vm860, %v831, %v767
        %v895 = vsel %vm860, %v833, %v769
        %v896 = vsel %vm860, %v835, %v771
        %v897 = vsel %vm860, %v837, %v773
        %v898 = vsel %vm860, %v839, %v775
        %v899 = vsel %vm860, %v841, %v777
        %v900 = vsel %vm860, %v843, %v779
        %v901 = vsel %vm860, %v845, %v781
        %v902 = vsel %vm860, %v847, %v783
        %v903 = vsel %vm860, %v849, %v785
        %v904 = vsel %vm860, %v851, %v787
        %v905 = vsel %vm860, %v853, %v789
        %v906 = vsel %vm860, %v855, %v791
        %v907 = vsel %vm860, %v857, %v793
        %v908 = vsel %vm860, %v859, %v795
        %v909 = vsel %vm536, 1, 0
        %v910 = vlaneseq
        %v911 = vshrl.u32 %v910, 7
        %v912 = vsub.s32 0, %v911
        %v913 = vrot.slane %v909, %v912
        %v914 = vlaneseq
        %v915 = vshrl.u32 %v914, 7
        %v916 = vsub.s32 1, %v915
        %v917 = vrot.slane %v909, %v916
        %v918 = vlaneseq
        %v919 = vshrl.u32 %v918, 7
        %v920 = vsub.s32 2, %v919
        %v921 = vrot.slane %v909, %v920
        %vm922 = vcmp.eq.s32.totalorder %v913, 1
        %vm923 = vcmp.eq.s32.totalorder %v917, 1
        %vm924 = vcmp.eq.s32.totalorder %v921, 1
        %v925 = vsel %vm922, %v877, 0.0
        %v926 = vsel %vm923, %v861, 0.0
        %v927 = vsel %vm924, %v893, 0.0
        %v928 = vsel %vm922, %v878, 0.0
        %v929 = vsel %vm923, %v862, 0.0
        %v930 = vsel %vm924, %v894, 0.0
        %v931 = vsel %vm922, %v879, 0.0
        %v932 = vsel %vm923, %v863, 0.0
        %v933 = vsel %vm924, %v895, 0.0
        %v934 = vsel %vm922, %v880, 0.0
        %v935 = vsel %vm923, %v864, 0.0
        %v936 = vsel %vm924, %v896, 0.0
        %v937 = vsel %vm922, %v881, 0.0
        %v938 = vsel %vm923, %v865, 0.0
        %v939 = vsel %vm924, %v897, 0.0
        %v940 = vsel %vm922, %v882, 0.0
        %v941 = vsel %vm923, %v866, 0.0
        %v942 = vsel %vm924, %v898, 0.0
        %v943 = vsel %vm922, %v883, 0.0
        %v944 = vsel %vm923, %v867, 0.0
        %v945 = vsel %vm924, %v899, 0.0
        %v946 = vsel %vm922, %v884, 0.0
        %v947 = vsel %vm923, %v868, 0.0
        %v948 = vsel %vm924, %v900, 0.0
        %v949 = vsel %vm922, %v885, 0.0
        %v950 = vsel %vm923, %v869, 0.0
        %v951 = vsel %vm924, %v901, 0.0
        %v952 = vsel %vm922, %v886, 0.0
        %v953 = vsel %vm923, %v870, 0.0
        %v954 = vsel %vm924, %v902, 0.0
        %v955 = vsel %vm922, %v887, 0.0
        %v956 = vsel %vm923, %v871, 0.0
        %v957 = vsel %vm924, %v903, 0.0
        %v958 = vsel %vm922, %v888, 0.0
        %v959 = vsel %vm923, %v872, 0.0
        %v960 = vsel %vm924, %v904, 0.0
        %v961 = vsel %vm922, %v889, 0.0
        %v962 = vsel %vm923, %v873, 0.0
        %v963 = vsel %vm924, %v905, 0.0
        %v964 = vsel %vm922, %v890, 0.0
        %v965 = vsel %vm923, %v874, 0.0
        %v966 = vsel %vm924, %v906, 0.0
        %v967 = vsel %vm922, %v891, 0.0
        %v968 = vsel %vm923, %v875, 0.0
        %v969 = vsel %vm924, %v907, 0.0
        %v970 = vsel %vm922, %v892, 0.0
        %v971 = vsel %vm923, %v876, 0.0
        %v972 = vsel %vm924, %v908, 0.0
        %v973 = vld [vmem:[#allocation2] sm:$0xff]
        %v974 = vld [vmem:[#allocation2 + $0x8] sm:$0xff]
        %v975 = vld [vmem:[#allocation2 + $0x10] sm:$0xff]
        %v976 = vld [vmem:[#allocation2 + $0x18] sm:$0xff]
        %v977 = vld [vmem:[#allocation2 + $0x20] sm:$0xff]
        %v978 = vld [vmem:[#allocation2 + $0x28] sm:$0xff]
        %v979 = vld [vmem:[#allocation2 + $0x30] sm:$0xff]
        %v980 = vld [vmem:[#allocation2 + $0x38] sm:$0xff]
        %v981 = vld [vmem:[#allocation2 + $0x40] sm:$0xff]
        %v982 = vld [vmem:[#allocation2 + $0x48] sm:$0xff]
        %v983 = vld [vmem:[#allocation2 + $0x50] sm:$0xff]
        %v984 = vld [vmem:[#allocation2 + $0x58] sm:$0xff]
        %v985 = vld [vmem:[#allocation2 + $0x60] sm:$0xff]
        %v986 = vld [vmem:[#allocation2 + $0x68] sm:$0xff]
        %v987 = vld [vmem:[#allocation2 + $0x70] sm:$0xff]
        %v988 = vld [vmem:[#allocation2 + $0x78] sm:$0xff]
        %s989 = scalar_lea.vmem [#allocation2], 128
        %v990 = vld [vmem:[%s989] sm:$0xff]
        %v991 = vld [vmem:[%s989 + $0x8] sm:$0xff]
        %v992 = vld [vmem:[%s989 + $0x10] sm:$0xff]
        %v993 = vld [vmem:[%s989 + $0x18] sm:$0xff]
        %v994 = vld [vmem:[%s989 + $0x20] sm:$0xff]
        %v995 = vld [vmem:[%s989 + $0x28] sm:$0xff]
        %v996 = vld [vmem:[%s989 + $0x30] sm:$0xff]
        %v997 = vld [vmem:[%s989 + $0x38] sm:$0xff]
        %v998 = vld [vmem:[%s989 + $0x40] sm:$0xff]
        %v999 = vld [vmem:[%s989 + $0x48] sm:$0xff]
        %v1000 = vld [vmem:[%s989 + $0x50] sm:$0xff]
        %v1001 = vld [vmem:[%s989 + $0x58] sm:$0xff]
        %v1002 = vld [vmem:[%s989 + $0x60] sm:$0xff]
        %v1003 = vld [vmem:[%s989 + $0x68] sm:$0xff]
        %v1004 = vld [vmem:[%s989 + $0x70] sm:$0xff]
        %v1005 = vld [vmem:[%s989 + $0x78] sm:$0xff]
        %1006 = vmatprep.subr.mxu0 %v485
        %1007 = vmatpush1.msra.mxu0 %v484
        %1008 = vmatprep.subr.mxu0 %v488
        %1009 = vmatpush1.msra.mxu0 %v487
        %1010 = vmatprep.subr.mxu0 %v491
        %1011 = vmatpush1.msra.mxu0 %v490
        %1012 = vmatprep.subr.mxu0 %v494
        %1013 = vmatpush1.msra.mxu0 %v493
        %1014 = vmatprep.subr.mxu0 %v497
        %1015 = vmatpush1.msra.mxu0 %v496
        %1016 = vmatprep.subr.mxu0 %v500
        %1017 = vmatpush1.msra.mxu0 %v499
        %1018 = vmatprep.subr.mxu0 %v503
        %1019 = vmatpush1.msra.mxu0 %v502
        %1020 = vmatprep.subr.mxu0 %v506
        %1021 = vmatpush1.msra.mxu0 %v505
        %1022 = vmatprep.subr.mxu0 %v509
        %1023 = vmatpush1.msra.mxu0 %v508
        %1024 = vmatprep.subr.mxu0 %v512
        %1025 = vmatpush1.msra.mxu0 %v511
        %1026 = vmatprep.subr.mxu0 %v515
        %1027 = vmatpush1.msra.mxu0 %v514
        %1028 = vmatprep.subr.mxu0 %v518
        %1029 = vmatpush1.msra.mxu0 %v517
        %1030 = vmatprep.subr.mxu0 %v521
        %1031 = vmatpush1.msra.mxu0 %v520
        %1032 = vmatprep.subr.mxu0 %v524
        %1033 = vmatpush1.msra.mxu0 %v523
        %1034 = vmatprep.subr.mxu0 %v527
        %1035 = vmatpush1.msra.mxu0 %v526
        %1036 = vmatprep.subr.mxu0 %v530
        %1037 = vmatpush1.msra.mxu0 %v529
        %1038 = vmatprep.subr.mxu0 0.0
        %1039 = vmatpush1.msra.mxu0 0.0
        %1040 = vmatprep.subr.mxu0 0.0
        %1041 = vmatpush1.msra.mxu0 0.0
        %1042 = vmatprep.subr.mxu0 0.0
        %1043 = vmatpush1.msra.mxu0 0.0
        %1044 = vmatprep.subr.mxu0 0.0
        %1045 = vmatpush1.msra.mxu0 0.0
        %1046 = vmatprep.subr.mxu0 0.0
        %1047 = vmatpush1.msra.mxu0 0.0
        %1048 = vmatprep.subr.mxu0 0.0
        %1049 = vmatpush1.msra.mxu0 0.0
        %1050 = vmatprep.subr.mxu0 0.0
        %1051 = vmatpush1.msra.mxu0 0.0
        %1052 = vmatprep.subr.mxu0 0.0
        %1053 = vmatpush1.msra.mxu0 0.0
        %1054 = vmatprep.subr.mxu0 0.0
        %1055 = vmatpush1.msra.mxu0 0.0
        %1056 = vmatprep.subr.mxu0 0.0
        %1057 = vmatpush1.msra.mxu0 0.0
        %1058 = vmatprep.subr.mxu0 0.0
        %1059 = vmatpush1.msra.mxu0 0.0
        %1060 = vmatprep.subr.mxu0 0.0
        %1061 = vmatpush1.msra.mxu0 0.0
        %1062 = vmatprep.subr.mxu0 0.0
        %1063 = vmatpush1.msra.mxu0 0.0
        %1064 = vmatprep.subr.mxu0 0.0
        %1065 = vmatpush1.msra.mxu0 0.0
        %1066 = vmatprep.subr.mxu0 0.0
        %1067 = vmatpush1.msra.mxu0 0.0
        %1068 = vmatprep.subr.mxu0 0.0
        %1069 = vmatpush1.msra.mxu0 0.0
        %1070 = vmatprep.mubr.f32.mxu0 0.0
        %1071 = vmatmul.mubr.f32.gmra.mrb[0].mxu0 %v990
        %v1072 = vpop.f32.mrb[0].mxu0
        %v1073 = vadd.f32 0.0, %v1072
        %v1074 = vpop.f32.mrb[0].mxu0
        %v1075 = vadd.f32 0.0, %v1074
        %1076 = vmatprep.mubr.f32.mxu0 0.0
        %1077 = vmatmul.mubr.f32.gmra.mrb[0].mxu0 %v991
        %v1078 = vpop.f32.mrb[0].mxu0
        %v1079 = vadd.f32 0.0, %v1078
        %v1080 = vpop.f32.mrb[0].mxu0
        %v1081 = vadd.f32 0.0, %v1080
        %1082 = vmatprep.mubr.f32.mxu0 0.0
        %1083 = vmatmul.mubr.f32.gmra.mrb[0].mxu0 %v992
        %v1084 = vpop.f32.mrb[0].mxu0
        %v1085 = vadd.f32 0.0, %v1084
        %v1086 = vpop.f32.mrb[0].mxu0
        %v1087 = vadd.f32 0.0, %v1086
        %1088 = vmatprep.mubr.f32.mxu0 0.0
        %1089 = vmatmul.mubr.f32.gmra.mrb[0].mxu0 %v993
        %v1090 = vpop.f32.mrb[0].mxu0
        %v1091 = vadd.f32 0.0, %v1090
        %v1092 = vpop.f32.mrb[0].mxu0
        %v1093 = vadd.f32 0.0, %v1092
        %1094 = vmatprep.mubr.f32.mxu0 0.0
        %1095 = vmatmul.mubr.f32.gmra.mrb[0].mxu0 %v994
        %v1096 = vpop.f32.mrb[0].mxu0
        %v1097 = vadd.f32 0.0, %v1096
        %v1098 = vpop.f32.mrb[0].mxu0
        %v1099 = vadd.f32 0.0, %v1098
        %1100 = vmatprep.mubr.f32.mxu0 0.0
        %1101 = vmatmul.mubr.f32.gmra.mrb[0].mxu0 %v995
        %v1102 = vpop.f32.mrb[0].mxu0
        %v1103 = vadd.f32 0.0, %v1102
        %v1104 = vpop.f32.mrb[0].mxu0
        %v1105 = vadd.f32 0.0, %v1104
        %1106 = vmatprep.mubr.f32.mxu0 0.0
        %1107 = vmatmul.mubr.f32.gmra.mrb[0].mxu0 %v996
        %v1108 = vpop.f32.mrb[0].mxu0
        %v1109 = vadd.f32 0.0, %v1108
        %v1110 = vpop.f32.mrb[0].mxu0
        %v1111 = vadd.f32 0.0, %v1110
        %1112 = vmatprep.mubr.f32.mxu0 0.0
        %1113 = vmatmul.mubr.f32.gmra.mrb[0].mxu0 %v997
        %v1114 = vpop.f32.mrb[0].mxu0
        %v1115 = vadd.f32 0.0, %v1114
        %v1116 = vpop.f32.mrb[0].mxu0
        %v1117 = vadd.f32 0.0, %v1116
        %1118 = vmatprep.mubr.f32.mxu0 0.0
        %1119 = vmatmul.mubr.f32.gmra.mrb[0].mxu0 %v998
        %v1120 = vpop.f32.mrb[0].mxu0
        %v1121 = vadd.f32 0.0, %v1120
        %v1122 = vpop.f32.mrb[0].mxu0
        %v1123 = vadd.f32 0.0, %v1122
        %1124 = vmatprep.mubr.f32.mxu0 0.0
        %1125 = vmatmul.mubr.f32.gmra.mrb[0].mxu0 %v999
        %v1126 = vpop.f32.mrb[0].mxu0
        %v1127 = vadd.f32 0.0, %v1126
        %v1128 = vpop.f32.mrb[0].mxu0
        %v1129 = vadd.f32 0.0, %v1128
        %1130 = vmatprep.mubr.f32.mxu0 0.0
        %1131 = vmatmul.mubr.f32.gmra.mrb[0].mxu0 %v1000
        %v1132 = vpop.f32.mrb[0].mxu0
        %v1133 = vadd.f32 0.0, %v1132
        %v1134 = vpop.f32.mrb[0].mxu0
        %v1135 = vadd.f32 0.0, %v1134
        %1136 = vmatprep.mubr.f32.mxu0 0.0
        %1137 = vmatmul.mubr.f32.gmra.mrb[0].mxu0 %v1001
        %v1138 = vpop.f32.mrb[0].mxu0
        %v1139 = vadd.f32 0.0, %v1138
        %v1140 = vpop.f32.mrb[0].mxu0
        %v1141 = vadd.f32 0.0, %v1140
        %1142 = vmatprep.mubr.f32.mxu0 0.0
        %1143 = vmatmul.mubr.f32.gmra.mrb[0].mxu0 %v1002
        %v1144 = vpop.f32.mrb[0].mxu0
        %v1145 = vadd.f32 0.0, %v1144
        %v1146 = vpop.f32.mrb[0].mxu0
        %v1147 = vadd.f32 0.0, %v1146
        %1148 = vmatprep.mubr.f32.mxu0 0.0
        %1149 = vmatmul.mubr.f32.gmra.mrb[0].mxu0 %v1003
        %v1150 = vpop.f32.mrb[0].mxu0
        %v1151 = vadd.f32 0.0, %v1150
        %v1152 = vpop.f32.mrb[0].mxu0
        %v1153 = vadd.f32 0.0, %v1152
        %1154 = vmatprep.mubr.f32.mxu0 0.0
        %1155 = vmatmul.mubr.f32.gmra.mrb[0].mxu0 %v1004
        %v1156 = vpop.f32.mrb[0].mxu0
        %v1157 = vadd.f32 0.0, %v1156
        %v1158 = vpop.f32.mrb[0].mxu0
        %v1159 = vadd.f32 0.0, %v1158
        %1160 = vmatprep.mubr.f32.mxu0 0.0
        %1161 = vmatmul.mubr.f32.gmra.mrb[0].mxu0 %v1005
        %v1162 = vpop.f32.mrb[0].mxu0
        %v1163 = vadd.f32 0.0, %v1162
        %v1164 = vpop.f32.mrb[0].mxu0
        %v1165 = vadd.f32 0.0, %v1164
        %1166 = vdwg.mxu0
        %1167 = vmatprep.subr.mxu0 0.0
        %1168 = vmatpush1.msra.mxu0 %v486
        %1169 = vmatprep.subr.mxu0 0.0
        %1170 = vmatpush1.msra.mxu0 %v489
        %1171 = vmatprep.subr.mxu0 0.0
        %1172 = vmatpush1.msra.mxu0 %v492
        %1173 = vmatprep.subr.mxu0 0.0
        %1174 = vmatpush1.msra.mxu0 %v495
        %1175 = vmatprep.subr.mxu0 0.0
        %1176 = vmatpush1.msra.mxu0 %v498
        %1177 = vmatprep.subr.mxu0 0.0
        %1178 = vmatpush1.msra.mxu0 %v501
        %1179 = vmatprep.subr.mxu0 0.0
        %1180 = vmatpush1.msra.mxu0 %v504
        %1181 = vmatprep.subr.mxu0 0.0
        %1182 = vmatpush1.msra.mxu0 %v507
        %1183 = vmatprep.subr.mxu0 0.0
        %1184 = vmatpush1.msra.mxu0 %v510
        %1185 = vmatprep.subr.mxu0 0.0
        %1186 = vmatpush1.msra.mxu0 %v513
        %1187 = vmatprep.subr.mxu0 0.0
        %1188 = vmatpush1.msra.mxu0 %v516
        %1189 = vmatprep.subr.mxu0 0.0
        %1190 = vmatpush1.msra.mxu0 %v519
        %1191 = vmatprep.subr.mxu0 0.0
        %1192 = vmatpush1.msra.mxu0 %v522
        %1193 = vmatprep.subr.mxu0 0.0
        %1194 = vmatpush1.msra.mxu0 %v525
        %1195 = vmatprep.subr.mxu0 0.0
        %1196 = vmatpush1.msra.mxu0 %v528
        %1197 = vmatprep.subr.mxu0 0.0
        %1198 = vmatpush1.msra.mxu0 %v531
        %1199 = vmatprep.subr.mxu0 0.0
        %1200 = vmatpush1.msra.mxu0 0.0
        %1201 = vmatprep.subr.mxu0 0.0
        %1202 = vmatpush1.msra.mxu0 0.0
        %1203 = vmatprep.subr.mxu0 0.0
        %1204 = vmatpush1.msra.mxu0 0.0
        %1205 = vmatprep.subr.mxu0 0.0
        %1206 = vmatpush1.msra.mxu0 0.0
        %1207 = vmatprep.subr.mxu0 0.0
        %1208 = vmatpush1.msra.mxu0 0.0
        %1209 = vmatprep.subr.mxu0 0.0
        %1210 = vmatpush1.msra.mxu0 0.0
        %1211 = vmatprep.subr.mxu0 0.0
        %1212 = vmatpush1.msra.mxu0 0.0
        %1213 = vmatprep.subr.mxu0 0.0
        %1214 = vmatpush1.msra.mxu0 0.0
        %1215 = vmatprep.subr.mxu0 0.0
        %1216 = vmatpush1.msra.mxu0 0.0
        %1217 = vmatprep.subr.mxu0 0.0
        %1218 = vmatpush1.msra.mxu0 0.0
        %1219 = vmatprep.subr.mxu0 0.0
        %1220 = vmatpush1.msra.mxu0 0.0
        %1221 = vmatprep.subr.mxu0 0.0
        %1222 = vmatpush1.msra.mxu0 0.0
        %1223 = vmatprep.subr.mxu0 0.0
        %1224 = vmatpush1.msra.mxu0 0.0
        %1225 = vmatprep.subr.mxu0 0.0
        %1226 = vmatpush1.msra.mxu0 0.0
        %1227 = vmatprep.subr.mxu0 0.0
        %1228 = vmatpush1.msra.mxu0 0.0
        %1229 = vmatprep.subr.mxu0 0.0
        %1230 = vmatpush1.msra.mxu0 0.0
        %1231 = vmatprep.mubr.f32.mxu0 0.0
        %1232 = vmatmul.mubr.f32.gmra.mrb[0].mxu0 %v990
        %v1233 = vpop.f32.mrb[0].mxu0
        %v1234 = vadd.f32 0.0, %v1233
        %v1235 = vpop.f32.mrb[0].mxu0
        %1236 = vmatprep.mubr.f32.mxu0 0.0
        %1237 = vmatmul.mubr.f32.gmra.mrb[0].mxu0 %v991
        %v1238 = vpop.f32.mrb[0].mxu0
        %v1239 = vadd.f32 0.0, %v1238
        %v1240 = vpop.f32.mrb[0].mxu0
        %1241 = vmatprep.mubr.f32.mxu0 0.0
        %1242 = vmatmul.mubr.f32.gmra.mrb[0].mxu0 %v992
        %v1243 = vpop.f32.mrb[0].mxu0
        %v1244 = vadd.f32 0.0, %v1243
        %v1245 = vpop.f32.mrb[0].mxu0
        %1246 = vmatprep.mubr.f32.mxu0 0.0
        %1247 = vmatmul.mubr.f32.gmra.mrb[0].mxu0 %v993
        %v1248 = vpop.f32.mrb[0].mxu0
        %v1249 = vadd.f32 0.0, %v1248
        %v1250 = vpop.f32.mrb[0].mxu0
        %1251 = vmatprep.mubr.f32.mxu0 0.0
        %1252 = vmatmul.mubr.f32.gmra.mrb[0].mxu0 %v994
        %v1253 = vpop.f32.mrb[0].mxu0
        %v1254 = vadd.f32 0.0, %v1253
        %v1255 = vpop.f32.mrb[0].mxu0
        %1256 = vmatprep.mubr.f32.mxu0 0.0
        %1257 = vmatmul.mubr.f32.gmra.mrb[0].mxu0 %v995
        %v1258 = vpop.f32.mrb[0].mxu0
        %v1259 = vadd.f32 0.0, %v1258
        %v1260 = vpop.f32.mrb[0].mxu0
        %1261 = vmatprep.mubr.f32.mxu0 0.0
        %1262 = vmatmul.mubr.f32.gmra.mrb[0].mxu0 %v996
        %v1263 = vpop.f32.mrb[0].mxu0
        %v1264 = vadd.f32 0.0, %v1263
        %v1265 = vpop.f32.mrb[0].mxu0
        %1266 = vmatprep.mubr.f32.mxu0 0.0
        %1267 = vmatmul.mubr.f32.gmra.mrb[0].mxu0 %v997
        %v1268 = vpop.f32.mrb[0].mxu0
        %v1269 = vadd.f32 0.0, %v1268
        %v1270 = vpop.f32.mrb[0].mxu0
        %1271 = vmatprep.mubr.f32.mxu0 0.0
        %1272 = vmatmul.mubr.f32.gmra.mrb[0].mxu0 %v998
        %v1273 = vpop.f32.mrb[0].mxu0
        %v1274 = vadd.f32 0.0, %v1273
        %v1275 = vpop.f32.mrb[0].mxu0
        %1276 = vmatprep.mubr.f32.mxu0 0.0
        %1277 = vmatmul.mubr.f32.gmra.mrb[0].mxu0 %v999
        %v1278 = vpop.f32.mrb[0].mxu0
        %v1279 = vadd.f32 0.0, %v1278
        %v1280 = vpop.f32.mrb[0].mxu0
        %1281 = vmatprep.mubr.f32.mxu0 0.0
        %1282 = vmatmul.mubr.f32.gmra.mrb[0].mxu0 %v1000
        %v1283 = vpop.f32.mrb[0].mxu0
        %v1284 = vadd.f32 0.0, %v1283
        %v1285 = vpop.f32.mrb[0].mxu0
        %1286 = vmatprep.mubr.f32.mxu0 0.0
        %1287 = vmatmul.mubr.f32.gmra.mrb[0].mxu0 %v1001
        %v1288 = vpop.f32.mrb[0].mxu0
        %v1289 = vadd.f32 0.0, %v1288
        %v1290 = vpop.f32.mrb[0].mxu0
        %1291 = vmatprep.mubr.f32.mxu0 0.0
        %1292 = vmatmul.mubr.f32.gmra.mrb[0].mxu0 %v1002
        %v1293 = vpop.f32.mrb[0].mxu0
        %v1294 = vadd.f32 0.0, %v1293
        %v1295 = vpop.f32.mrb[0].mxu0
        %1296 = vmatprep.mubr.f32.mxu0 0.0
        %1297 = vmatmul.mubr.f32.gmra.mrb[0].mxu0 %v1003
        %v1298 = vpop.f32.mrb[0].mxu0
        %v1299 = vadd.f32 0.0, %v1298
        %v1300 = vpop.f32.mrb[0].mxu0
        %1301 = vmatprep.mubr.f32.mxu0 0.0
        %1302 = vmatmul.mubr.f32.gmra.mrb[0].mxu0 %v1004
        %v1303 = vpop.f32.mrb[0].mxu0
        %v1304 = vadd.f32 0.0, %v1303
        %v1305 = vpop.f32.mrb[0].mxu0
        %1306 = vmatprep.mubr.f32.mxu0 0.0
        %1307 = vmatmul.mubr.f32.gmra.mrb[0].mxu0 %v1005
        %v1308 = vpop.f32.mrb[0].mxu0
        %v1309 = vadd.f32 0.0, %v1308
        %v1310 = vpop.f32.mrb[0].mxu0
        %1311 = vdwg.mxu0
        %1312 = vmatprep.subr.mxu0 %v717
        %1313 = vmatpush1.msra.mxu0 %v716
        %1314 = vmatprep.subr.mxu0 %v720
        %1315 = vmatpush1.msra.mxu0 %v719
        %1316 = vmatprep.subr.mxu0 %v723
        %1317 = vmatpush1.msra.mxu0 %v722
        %1318 = vmatprep.subr.mxu0 %v726
        %1319 = vmatpush1.msra.mxu0 %v725
        %1320 = vmatprep.subr.mxu0 %v729
        %1321 = vmatpush1.msra.mxu0 %v728
        %1322 = vmatprep.subr.mxu0 %v732
        %1323 = vmatpush1.msra.mxu0 %v731
        %1324 = vmatprep.subr.mxu0 %v735
        %1325 = vmatpush1.msra.mxu0 %v734
        %1326 = vmatprep.subr.mxu0 %v738
        %1327 = vmatpush1.msra.mxu0 %v737
        %1328 = vmatprep.subr.mxu0 %v741
        %1329 = vmatpush1.msra.mxu0 %v740
        %1330 = vmatprep.subr.mxu0 %v744
        %1331 = vmatpush1.msra.mxu0 %v743
        %1332 = vmatprep.subr.mxu0 %v747
        %1333 = vmatpush1.msra.mxu0 %v746
        %1334 = vmatprep.subr.mxu0 %v750
        %1335 = vmatpush1.msra.mxu0 %v749
        %1336 = vmatprep.subr.mxu0 %v753
        %1337 = vmatpush1.msra.mxu0 %v752
        %1338 = vmatprep.subr.mxu0 %v756
        %1339 = vmatpush1.msra.mxu0 %v755
        %1340 = vmatprep.subr.mxu0 %v759
        %1341 = vmatpush1.msra.mxu0 %v758
        %1342 = vmatprep.subr.mxu0 %v762
        %1343 = vmatpush1.msra.mxu0 %v761
        %1344 = vmatprep.subr.mxu0 0.0
        %1345 = vmatpush1.msra.mxu0 0.0
        %1346 = vmatprep.subr.mxu0 0.0
        %1347 = vmatpush1.msra.mxu0 0.0
        %1348 = vmatprep.subr.mxu0 0.0
        %1349 = vmatpush1.msra.mxu0 0.0
        %1350 = vmatprep.subr.mxu0 0.0
        %1351 = vmatpush1.msra.mxu0 0.0
        %1352 = vmatprep.subr.mxu0 0.0
        %1353 = vmatpush1.msra.mxu0 0.0
        %1354 = vmatprep.subr.mxu0 0.0
        %1355 = vmatpush1.msra.mxu0 0.0
        %1356 = vmatprep.subr.mxu0 0.0
        %1357 = vmatpush1.msra.mxu0 0.0
        %1358 = vmatprep.subr.mxu0 0.0
        %1359 = vmatpush1.msra.mxu0 0.0
        %1360 = vmatprep.subr.mxu0 0.0
        %1361 = vmatpush1.msra.mxu0 0.0
        %1362 = vmatprep.subr.mxu0 0.0
        %1363 = vmatpush1.msra.mxu0 0.0
        %1364 = vmatprep.subr.mxu0 0.0
        %1365 = vmatpush1.msra.mxu0 0.0
        %1366 = vmatprep.subr.mxu0 0.0
        %1367 = vmatpush1.msra.mxu0 0.0
        %1368 = vmatprep.subr.mxu0 0.0
        %1369 = vmatpush1.msra.mxu0 0.0
        %1370 = vmatprep.subr.mxu0 0.0
        %1371 = vmatpush1.msra.mxu0 0.0
        %1372 = vmatprep.subr.mxu0 0.0
        %1373 = vmatpush1.msra.mxu0 0.0
        %1374 = vmatprep.subr.mxu0 0.0
        %1375 = vmatpush1.msra.mxu0 0.0
        %1376 = vmatprep.mubr.f32.mxu0 0.0
        %1377 = vmatmul.mubr.f32.gmra.mrb[0].mxu0 %v973
        %v1378 = vpop.f32.mrb[0].mxu0
        %v1379 = vadd.f32 %v1073, %v1378
        %v1380 = vpop.f32.mrb[0].mxu0
        %v1381 = vadd.f32 %v1075, %v1380
        %1382 = vmatprep.mubr.f32.mxu0 0.0
        %1383 = vmatmul.mubr.f32.gmra.mrb[0].mxu0 %v974
        %v1384 = vpop.f32.mrb[0].mxu0
        %v1385 = vadd.f32 %v1079, %v1384
        %v1386 = vpop.f32.mrb[0].mxu0
        %v1387 = vadd.f32 %v1081, %v1386
        %1388 = vmatprep.mubr.f32.mxu0 0.0
        %1389 = vmatmul.mubr.f32.gmra.mrb[0].mxu0 %v975
        %v1390 = vpop.f32.mrb[0].mxu0
        %v1391 = vadd.f32 %v1085, %v1390
        %v1392 = vpop.f32.mrb[0].mxu0
        %v1393 = vadd.f32 %v1087, %v1392
        %1394 = vmatprep.mubr.f32.mxu0 0.0
        %1395 = vmatmul.mubr.f32.gmra.mrb[0].mxu0 %v976
        %v1396 = vpop.f32.mrb[0].mxu0
        %v1397 = vadd.f32 %v1091, %v1396
        %v1398 = vpop.f32.mrb[0].mxu0
        %v1399 = vadd.f32 %v1093, %v1398
        %1400 = vmatprep.mubr.f32.mxu0 0.0
        %1401 = vmatmul.mubr.f32.gmra.mrb[0].mxu0 %v977
        %v1402 = vpop.f32.mrb[0].mxu0
        %v1403 = vadd.f32 %v1097, %v1402
        %v1404 = vpop.f32.mrb[0].mxu0
        %v1405 = vadd.f32 %v1099, %v1404
        %1406 = vmatprep.mubr.f32.mxu0 0.0
        %1407 = vmatmul.mubr.f32.gmra.mrb[0].mxu0 %v978
        %v1408 = vpop.f32.mrb[0].mxu0
        %v1409 = vadd.f32 %v1103, %v1408
        %v1410 = vpop.f32.mrb[0].mxu0
        %v1411 = vadd.f32 %v1105, %v1410
        %1412 = vmatprep.mubr.f32.mxu0 0.0
        %1413 = vmatmul.mubr.f32.gmra.mrb[0].mxu0 %v979
        %v1414 = vpop.f32.mrb[0].mxu0
        %v1415 = vadd.f32 %v1109, %v1414
        %v1416 = vpop.f32.mrb[0].mxu0
        %v1417 = vadd.f32 %v1111, %v1416
        %1418 = vmatprep.mubr.f32.mxu0 0.0
        %1419 = vmatmul.mubr.f32.gmra.mrb[0].mxu0 %v980
        %v1420 = vpop.f32.mrb[0].mxu0
        %v1421 = vadd.f32 %v1115, %v1420
        %v1422 = vpop.f32.mrb[0].mxu0
        %v1423 = vadd.f32 %v1117, %v1422
        %1424 = vmatprep.mubr.f32.mxu0 0.0
        %1425 = vmatmul.mubr.f32.gmra.mrb[0].mxu0 %v981
        %v1426 = vpop.f32.mrb[0].mxu0
        %v1427 = vadd.f32 %v1121, %v1426
        %v1428 = vpop.f32.mrb[0].mxu0
        %v1429 = vadd.f32 %v1123, %v1428
        %1430 = vmatprep.mubr.f32.mxu0 0.0
        %1431 = vmatmul.mubr.f32.gmra.mrb[0].mxu0 %v982
        %v1432 = vpop.f32.mrb[0].mxu0
        %v1433 = vadd.f32 %v1127, %v1432
        %v1434 = vpop.f32.mrb[0].mxu0
        %v1435 = vadd.f32 %v1129, %v1434
        %1436 = vmatprep.mubr.f32.mxu0 0.0
        %1437 = vmatmul.mubr.f32.gmra.mrb[0].mxu0 %v983
        %v1438 = vpop.f32.mrb[0].mxu0
        %v1439 = vadd.f32 %v1133, %v1438
        %v1440 = vpop.f32.mrb[0].mxu0
        %v1441 = vadd.f32 %v1135, %v1440
        %1442 = vmatprep.mubr.f32.mxu0 0.0
        %1443 = vmatmul.mubr.f32.gmra.mrb[0].mxu0 %v984
        %v1444 = vpop.f32.mrb[0].mxu0
        %v1445 = vadd.f32 %v1139, %v1444
        %v1446 = vpop.f32.mrb[0].mxu0
        %v1447 = vadd.f32 %v1141, %v1446
        %1448 = vmatprep.mubr.f32.mxu0 0.0
        %1449 = vmatmul.mubr.f32.gmra.mrb[0].mxu0 %v985
        %v1450 = vpop.f32.mrb[0].mxu0
        %v1451 = vadd.f32 %v1145, %v1450
        %v1452 = vpop.f32.mrb[0].mxu0
        %v1453 = vadd.f32 %v1147, %v1452
        %1454 = vmatprep.mubr.f32.mxu0 0.0
        %1455 = vmatmul.mubr.f32.gmra.mrb[0].mxu0 %v986
        %v1456 = vpop.f32.mrb[0].mxu0
        %v1457 = vadd.f32 %v1151, %v1456
        %v1458 = vpop.f32.mrb[0].mxu0
        %v1459 = vadd.f32 %v1153, %v1458
        %1460 = vmatprep.mubr.f32.mxu0 0.0
        %1461 = vmatmul.mubr.f32.gmra.mrb[0].mxu0 %v987
        %v1462 = vpop.f32.mrb[0].mxu0
        %v1463 = vadd.f32 %v1157, %v1462
        %v1464 = vpop.f32.mrb[0].mxu0
        %v1465 = vadd.f32 %v1159, %v1464
        %1466 = vmatprep.mubr.f32.mxu0 0.0
        %1467 = vmatmul.mubr.f32.gmra.mrb[0].mxu0 %v988
        %v1468 = vpop.f32.mrb[0].mxu0
        %v1469 = vadd.f32 %v1163, %v1468
        %v1470 = vpop.f32.mrb[0].mxu0
        %v1471 = vadd.f32 %v1165, %v1470
        %1472 = vdwg.mxu0
        %1473 = vmatprep.subr.mxu0 0.0
        %1474 = vmatpush1.msra.mxu0 %v718
        %1475 = vmatprep.subr.mxu0 0.0
        %1476 = vmatpush1.msra.mxu0 %v721
        %1477 = vmatprep.subr.mxu0 0.0
        %1478 = vmatpush1.msra.mxu0 %v724
        %1479 = vmatprep.subr.mxu0 0.0
        %1480 = vmatpush1.msra.mxu0 %v727
        %1481 = vmatprep.subr.mxu0 0.0
        %1482 = vmatpush1.msra.mxu0 %v730
        %1483 = vmatprep.subr.mxu0 0.0
        %1484 = vmatpush1.msra.mxu0 %v733
        %1485 = vmatprep.subr.mxu0 0.0
        %1486 = vmatpush1.msra.mxu0 %v736
        %1487 = vmatprep.subr.mxu0 0.0
        %1488 = vmatpush1.msra.mxu0 %v739
        %1489 = vmatprep.subr.mxu0 0.0
        %1490 = vmatpush1.msra.mxu0 %v742
        %1491 = vmatprep.subr.mxu0 0.0
        %1492 = vmatpush1.msra.mxu0 %v745
        %1493 = vmatprep.subr.mxu0 0.0
        %1494 = vmatpush1.msra.mxu0 %v748
        %1495 = vmatprep.subr.mxu0 0.0
        %1496 = vmatpush1.msra.mxu0 %v751
        %1497 = vmatprep.subr.mxu0 0.0
        %1498 = vmatpush1.msra.mxu0 %v754
        %1499 = vmatprep.subr.mxu0 0.0
        %1500 = vmatpush1.msra.mxu0 %v757
        %1501 = vmatprep.subr.mxu0 0.0
        %1502 = vmatpush1.msra.mxu0 %v760
        %1503 = vmatprep.subr.mxu0 0.0
        %1504 = vmatpush1.msra.mxu0 %v763
        %1505 = vmatprep.subr.mxu0 0.0
        %1506 = vmatpush1.msra.mxu0 0.0
        %1507 = vmatprep.subr.mxu0 0.0
        %1508 = vmatpush1.msra.mxu0 0.0
        %1509 = vmatprep.subr.mxu0 0.0
        %1510 = vmatpush1.msra.mxu0 0.0
        %1511 = vmatprep.subr.mxu0 0.0
        %1512 = vmatpush1.msra.mxu0 0.0
        %1513 = vmatprep.subr.mxu0 0.0
        %1514 = vmatpush1.msra.mxu0 0.0
        %1515 = vmatprep.subr.mxu0 0.0
        %1516 = vmatpush1.msra.mxu0 0.0
        %1517 = vmatprep.subr.mxu0 0.0
        %1518 = vmatpush1.msra.mxu0 0.0
        %1519 = vmatprep.subr.mxu0 0.0
        %1520 = vmatpush1.msra.mxu0 0.0
        %1521 = vmatprep.subr.mxu0 0.0
        %1522 = vmatpush1.msra.mxu0 0.0
        %1523 = vmatprep.subr.mxu0 0.0
        %1524 = vmatpush1.msra.mxu0 0.0
        %1525 = vmatprep.subr.mxu0 0.0
        %1526 = vmatpush1.msra.mxu0 0.0
        %1527 = vmatprep.subr.mxu0 0.0
        %1528 = vmatpush1.msra.mxu0 0.0
        %1529 = vmatprep.subr.mxu0 0.0
        %1530 = vmatpush1.msra.mxu0 0.0
        %1531 = vmatprep.subr.mxu0 0.0
        %1532 = vmatpush1.msra.mxu0 0.0
        %1533 = vmatprep.subr.mxu0 0.0
        %1534 = vmatpush1.msra.mxu0 0.0
        %1535 = vmatprep.subr.mxu0 0.0
        %1536 = vmatpush1.msra.mxu0 0.0
        %1537 = vmatprep.mubr.f32.mxu0 0.0
        %1538 = vmatmul.mubr.f32.gmra.mrb[0].mxu0 %v973
        %v1539 = vpop.f32.mrb[0].mxu0
        %v1540 = vadd.f32 %v1234, %v1539
        %v1541 = vpop.f32.mrb[0].mxu0
        %1542 = vmatprep.mubr.f32.mxu0 0.0
        %1543 = vmatmul.mubr.f32.gmra.mrb[0].mxu0 %v974
        %v1544 = vpop.f32.mrb[0].mxu0
        %v1545 = vadd.f32 %v1239, %v1544
        %v1546 = vpop.f32.mrb[0].mxu0
        %1547 = vmatprep.mubr.f32.mxu0 0.0
        %1548 = vmatmul.mubr.f32.gmra.mrb[0].mxu0 %v975
        %v1549 = vpop.f32.mrb[0].mxu0
        %v1550 = vadd.f32 %v1244, %v1549
        %v1551 = vpop.f32.mrb[0].mxu0
        %1552 = vmatprep.mubr.f32.mxu0 0.0
        %1553 = vmatmul.mubr.f32.gmra.mrb[0].mxu0 %v976
        %v1554 = vpop.f32.mrb[0].mxu0
        %v1555 = vadd.f32 %v1249, %v1554
        %v1556 = vpop.f32.mrb[0].mxu0
        %1557 = vmatprep.mubr.f32.mxu0 0.0
        %1558 = vmatmul.mubr.f32.gmra.mrb[0].mxu0 %v977
        %v1559 = vpop.f32.mrb[0].mxu0
        %v1560 = vadd.f32 %v1254, %v1559
        %v1561 = vpop.f32.mrb[0].mxu0
        %1562 = vmatprep.mubr.f32.mxu0 0.0
        %1563 = vmatmul.mubr.f32.gmra.mrb[0].mxu0 %v978
        %v1564 = vpop.f32.mrb[0].mxu0
        %v1565 = vadd.f32 %v1259, %v1564
        %v1566 = vpop.f32.mrb[0].mxu0
        %1567 = vmatprep.mubr.f32.mxu0 0.0
        %1568 = vmatmul.mubr.f32.gmra.mrb[0].mxu0 %v979
        %v1569 = vpop.f32.mrb[0].mxu0
        %v1570 = vadd.f32 %v1264, %v1569
        %v1571 = vpop.f32.mrb[0].mxu0
        %1572 = vmatprep.mubr.f32.mxu0 0.0
        %1573 = vmatmul.mubr.f32.gmra.mrb[0].mxu0 %v980
        %v1574 = vpop.f32.mrb[0].mxu0
        %v1575 = vadd.f32 %v1269, %v1574
        %v1576 = vpop.f32.mrb[0].mxu0
        %1577 = vmatprep.mubr.f32.mxu0 0.0
        %1578 = vmatmul.mubr.f32.gmra.mrb[0].mxu0 %v981
        %v1579 = vpop.f32.mrb[0].mxu0
        %v1580 = vadd.f32 %v1274, %v1579
        %v1581 = vpop.f32.mrb[0].mxu0
        %1582 = vmatprep.mubr.f32.mxu0 0.0
        %1583 = vmatmul.mubr.f32.gmra.mrb[0].mxu0 %v982
        %v1584 = vpop.f32.mrb[0].mxu0
        %v1585 = vadd.f32 %v1279, %v1584
        %v1586 = vpop.f32.mrb[0].mxu0
        %1587 = vmatprep.mubr.f32.mxu0 0.0
        %1588 = vmatmul.mubr.f32.gmra.mrb[0].mxu0 %v983
        %v1589 = vpop.f32.mrb[0].mxu0
        %v1590 = vadd.f32 %v1284, %v1589
        %v1591 = vpop.f32.mrb[0].mxu0
        %1592 = vmatprep.mubr.f32.mxu0 0.0
        %1593 = vmatmul.mubr.f32.gmra.mrb[0].mxu0 %v984
        %v1594 = vpop.f32.mrb[0].mxu0
        %v1595 = vadd.f32 %v1289, %v1594
        %v1596 = vpop.f32.mrb[0].mxu0
        %1597 = vmatprep.mubr.f32.mxu0 0.0
        %1598 = vmatmul.mubr.f32.gmra.mrb[0].mxu0 %v985
        %v1599 = vpop.f32.mrb[0].mxu0
        %v1600 = vadd.f32 %v1294, %v1599
        %v1601 = vpop.f32.mrb[0].mxu0
        %1602 = vmatprep.mubr.f32.mxu0 0.0
        %1603 = vmatmul.mubr.f32.gmra.mrb[0].mxu0 %v986
        %v1604 = vpop.f32.mrb[0].mxu0
        %v1605 = vadd.f32 %v1299, %v1604
        %v1606 = vpop.f32.mrb[0].mxu0
        %1607 = vmatprep.mubr.f32.mxu0 0.0
        %1608 = vmatmul.mubr.f32.gmra.mrb[0].mxu0 %v987
        %v1609 = vpop.f32.mrb[0].mxu0
        %v1610 = vadd.f32 %v1304, %v1609
        %v1611 = vpop.f32.mrb[0].mxu0
        %1612 = vmatprep.mubr.f32.mxu0 0.0
        %1613 = vmatmul.mubr.f32.gmra.mrb[0].mxu0 %v988
        %v1614 = vpop.f32.mrb[0].mxu0
        %v1615 = vadd.f32 %v1309, %v1614
        %v1616 = vpop.f32.mrb[0].mxu0
        %1617 = vdwg.mxu0
        %s1618 = scalar_lea.vmem [#allocation2], 256
        %v1619 = vld [vmem:[%s1618] sm:$0xff]
        %v1620 = vld [vmem:[%s1618 + $0x8] sm:$0xff]
        %v1621 = vld [vmem:[%s1618 + $0x10] sm:$0xff]
        %v1622 = vld [vmem:[%s1618 + $0x18] sm:$0xff]
        %v1623 = vld [vmem:[%s1618 + $0x20] sm:$0xff]
        %v1624 = vld [vmem:[%s1618 + $0x28] sm:$0xff]
        %v1625 = vld [vmem:[%s1618 + $0x30] sm:$0xff]
        %v1626 = vld [vmem:[%s1618 + $0x38] sm:$0xff]
        %v1627 = vld [vmem:[%s1618 + $0x40] sm:$0xff]
        %v1628 = vld [vmem:[%s1618 + $0x48] sm:$0xff]
        %v1629 = vld [vmem:[%s1618 + $0x50] sm:$0xff]
        %v1630 = vld [vmem:[%s1618 + $0x58] sm:$0xff]
        %v1631 = vld [vmem:[%s1618 + $0x60] sm:$0xff]
        %v1632 = vld [vmem:[%s1618 + $0x68] sm:$0xff]
        %v1633 = vld [vmem:[%s1618 + $0x70] sm:$0xff]
        %v1634 = vld [vmem:[%s1618 + $0x78] sm:$0xff]
        %1635 = vmatprep.subr.mxu0 %v926
        %1636 = vmatpush1.msra.mxu0 %v925
        %1637 = vmatprep.subr.mxu0 %v929
        %1638 = vmatpush1.msra.mxu0 %v928
        %1639 = vmatprep.subr.mxu0 %v932
        %1640 = vmatpush1.msra.mxu0 %v931
        %1641 = vmatprep.subr.mxu0 %v935
        %1642 = vmatpush1.msra.mxu0 %v934
        %1643 = vmatprep.subr.mxu0 %v938
        %1644 = vmatpush1.msra.mxu0 %v937
        %1645 = vmatprep.subr.mxu0 %v941
        %1646 = vmatpush1.msra.mxu0 %v940
        %1647 = vmatprep.subr.mxu0 %v944
        %1648 = vmatpush1.msra.mxu0 %v943
        %1649 = vmatprep.subr.mxu0 %v947
        %1650 = vmatpush1.msra.mxu0 %v946
        %1651 = vmatprep.subr.mxu0 %v950
        %1652 = vmatpush1.msra.mxu0 %v949
        %1653 = vmatprep.subr.mxu0 %v953
        %1654 = vmatpush1.msra.mxu0 %v952
        %1655 = vmatprep.subr.mxu0 %v956
        %1656 = vmatpush1.msra.mxu0 %v955
        %1657 = vmatprep.subr.mxu0 %v959
        %1658 = vmatpush1.msra.mxu0 %v958
        %1659 = vmatprep.subr.mxu0 %v962
        %1660 = vmatpush1.msra.mxu0 %v961
        %1661 = vmatprep.subr.mxu0 %v965
        %1662 = vmatpush1.msra.mxu0 %v964
        %1663 = vmatprep.subr.mxu0 %v968
        %1664 = vmatpush1.msra.mxu0 %v967
        %1665 = vmatprep.subr.mxu0 %v971
        %1666 = vmatpush1.msra.mxu0 %v970
        %1667 = vmatprep.subr.mxu0 0.0
        %1668 = vmatpush1.msra.mxu0 0.0
        %1669 = vmatprep.subr.mxu0 0.0
        %1670 = vmatpush1.msra.mxu0 0.0
        %1671 = vmatprep.subr.mxu0 0.0
        %1672 = vmatpush1.msra.mxu0 0.0
        %1673 = vmatprep.subr.mxu0 0.0
        %1674 = vmatpush1.msra.mxu0 0.0
        %1675 = vmatprep.subr.mxu0 0.0
        %1676 = vmatpush1.msra.mxu0 0.0
        %1677 = vmatprep.subr.mxu0 0.0
        %1678 = vmatpush1.msra.mxu0 0.0
        %1679 = vmatprep.subr.mxu0 0.0
        %1680 = vmatpush1.msra.mxu0 0.0
        %1681 = vmatprep.subr.mxu0 0.0
        %1682 = vmatpush1.msra.mxu0 0.0
        %1683 = vmatprep.subr.mxu0 0.0
        %1684 = vmatpush1.msra.mxu0 0.0
        %1685 = vmatprep.subr.mxu0 0.0
        %1686 = vmatpush1.msra.mxu0 0.0
        %1687 = vmatprep.subr.mxu0 0.0
        %1688 = vmatpush1.msra.mxu0 0.0
        %1689 = vmatprep.subr.mxu0 0.0
        %1690 = vmatpush1.msra.mxu0 0.0
        %1691 = vmatprep.subr.mxu0 0.0
        %1692 = vmatpush1.msra.mxu0 0.0
        %1693 = vmatprep.subr.mxu0 0.0
        %1694 = vmatpush1.msra.mxu0 0.0
        %1695 = vmatprep.subr.mxu0 0.0
        %1696 = vmatpush1.msra.mxu0 0.0
        %1697 = vmatprep.subr.mxu0 0.0
        %1698 = vmatpush1.msra.mxu0 0.0
        %1699 = vmatprep.mubr.f32.mxu0 0.0
        %1700 = vmatmul.mubr.f32.gmra.mrb[0].mxu0 %v1619
        %v1701 = vpop.f32.mrb[0].mxu0
        %v1702 = vadd.f32 0.0, %v1701
        %v1703 = vpop.f32.mrb[0].mxu0
        %v1704 = vadd.f32 0.0, %v1703
        %1705 = vmatprep.mubr.f32.mxu0 0.0
        %1706 = vmatmul.mubr.f32.gmra.mrb[0].mxu0 %v1620
        %v1707 = vpop.f32.mrb[0].mxu0
        %v1708 = vadd.f32 0.0, %v1707
        %v1709 = vpop.f32.mrb[0].mxu0
        %v1710 = vadd.f32 0.0, %v1709
        %1711 = vmatprep.mubr.f32.mxu0 0.0
        %1712 = vmatmul.mubr.f32.gmra.mrb[0].mxu0 %v1621
        %v1713 = vpop.f32.mrb[0].mxu0
        %v1714 = vadd.f32 0.0, %v1713
        %v1715 = vpop.f32.mrb[0].mxu0
        %v1716 = vadd.f32 0.0, %v1715
        %1717 = vmatprep.mubr.f32.mxu0 0.0
        %1718 = vmatmul.mubr.f32.gmra.mrb[0].mxu0 %v1622
        %v1719 = vpop.f32.mrb[0].mxu0
        %v1720 = vadd.f32 0.0, %v1719
        %v1721 = vpop.f32.mrb[0].mxu0
        %v1722 = vadd.f32 0.0, %v1721
        %1723 = vmatprep.mubr.f32.mxu0 0.0
        %1724 = vmatmul.mubr.f32.gmra.mrb[0].mxu0 %v1623
        %v1725 = vpop.f32.mrb[0].mxu0
        %v1726 = vadd.f32 0.0, %v1725
        %v1727 = vpop.f32.mrb[0].mxu0
        %v1728 = vadd.f32 0.0, %v1727
        %1729 = vmatprep.mubr.f32.mxu0 0.0
        %1730 = vmatmul.mubr.f32.gmra.mrb[0].mxu0 %v1624
        %v1731 = vpop.f32.mrb[0].mxu0
        %v1732 = vadd.f32 0.0, %v1731
        %v1733 = vpop.f32.mrb[0].mxu0
        %v1734 = vadd.f32 0.0, %v1733
        %1735 = vmatprep.mubr.f32.mxu0 0.0
        %1736 = vmatmul.mubr.f32.gmra.mrb[0].mxu0 %v1625
        %v1737 = vpop.f32.mrb[0].mxu0
        %v1738 = vadd.f32 0.0, %v1737
        %v1739 = vpop.f32.mrb[0].mxu0
        %v1740 = vadd.f32 0.0, %v1739
        %1741 = vmatprep.mubr.f32.mxu0 0.0
        %1742 = vmatmul.mubr.f32.gmra.mrb[0].mxu0 %v1626
        %v1743 = vpop.f32.mrb[0].mxu0
        %v1744 = vadd.f32 0.0, %v1743
        %v1745 = vpop.f32.mrb[0].mxu0
        %v1746 = vadd.f32 0.0, %v1745
        %1747 = vmatprep.mubr.f32.mxu0 0.0
        %1748 = vmatmul.mubr.f32.gmra.mrb[0].mxu0 %v1627
        %v1749 = vpop.f32.mrb[0].mxu0
        %v1750 = vadd.f32 0.0, %v1749
        %v1751 = vpop.f32.mrb[0].mxu0
        %v1752 = vadd.f32 0.0, %v1751
        %1753 = vmatprep.mubr.f32.mxu0 0.0
        %1754 = vmatmul.mubr.f32.gmra.mrb[0].mxu0 %v1628
        %v1755 = vpop.f32.mrb[0].mxu0
        %v1756 = vadd.f32 0.0, %v1755
        %v1757 = vpop.f32.mrb[0].mxu0
        %v1758 = vadd.f32 0.0, %v1757
        %1759 = vmatprep.mubr.f32.mxu0 0.0
        %1760 = vmatmul.mubr.f32.gmra.mrb[0].mxu0 %v1629
        %v1761 = vpop.f32.mrb[0].mxu0
        %v1762 = vadd.f32 0.0, %v1761
        %v1763 = vpop.f32.mrb[0].mxu0
        %v1764 = vadd.f32 0.0, %v1763
        %1765 = vmatprep.mubr.f32.mxu0 0.0
        %1766 = vmatmul.mubr.f32.gmra.mrb[0].mxu0 %v1630
        %v1767 = vpop.f32.mrb[0].mxu0
        %v1768 = vadd.f32 0.0, %v1767
        %v1769 = vpop.f32.mrb[0].mxu0
        %v1770 = vadd.f32 0.0, %v1769
        %1771 = vmatprep.mubr.f32.mxu0 0.0
        %1772 = vmatmul.mubr.f32.gmra.mrb[0].mxu0 %v1631
        %v1773 = vpop.f32.mrb[0].mxu0
        %v1774 = vadd.f32 0.0, %v1773
        %v1775 = vpop.f32.mrb[0].mxu0
        %v1776 = vadd.f32 0.0, %v1775
        %1777 = vmatprep.mubr.f32.mxu0 0.0
        %1778 = vmatmul.mubr.f32.gmra.mrb[0].mxu0 %v1632
        %v1779 = vpop.f32.mrb[0].mxu0
        %v1780 = vadd.f32 0.0, %v1779
        %v1781 = vpop.f32.mrb[0].mxu0
        %v1782 = vadd.f32 0.0, %v1781
        %1783 = vmatprep.mubr.f32.mxu0 0.0
        %1784 = vmatmul.mubr.f32.gmra.mrb[0].mxu0 %v1633
        %v1785 = vpop.f32.mrb[0].mxu0
        %v1786 = vadd.f32 0.0, %v1785
        %v1787 = vpop.f32.mrb[0].mxu0
        %v1788 = vadd.f32 0.0, %v1787
        %1789 = vmatprep.mubr.f32.mxu0 0.0
        %1790 = vmatmul.mubr.f32.gmra.mrb[0].mxu0 %v1634
        %v1791 = vpop.f32.mrb[0].mxu0
        %v1792 = vadd.f32 0.0, %v1791
        %v1793 = vpop.f32.mrb[0].mxu0
        %v1794 = vadd.f32 0.0, %v1793
        %1795 = vdwg.mxu0
        %1796 = vmatprep.subr.mxu0 0.0
        %1797 = vmatpush1.msra.mxu0 %v927
        %1798 = vmatprep.subr.mxu0 0.0
        %1799 = vmatpush1.msra.mxu0 %v930
        %1800 = vmatprep.subr.mxu0 0.0
        %1801 = vmatpush1.msra.mxu0 %v933
        %1802 = vmatprep.subr.mxu0 0.0
        %1803 = vmatpush1.msra.mxu0 %v936
        %1804 = vmatprep.subr.mxu0 0.0
        %1805 = vmatpush1.msra.mxu0 %v939
        %1806 = vmatprep.subr.mxu0 0.0
        %1807 = vmatpush1.msra.mxu0 %v942
        %1808 = vmatprep.subr.mxu0 0.0
        %1809 = vmatpush1.msra.mxu0 %v945
        %1810 = vmatprep.subr.mxu0 0.0
        %1811 = vmatpush1.msra.mxu0 %v948
        %1812 = vmatprep.subr.mxu0 0.0
        %1813 = vmatpush1.msra.mxu0 %v951
        %1814 = vmatprep.subr.mxu0 0.0
        %1815 = vmatpush1.msra.mxu0 %v954
        %1816 = vmatprep.subr.mxu0 0.0
        %1817 = vmatpush1.msra.mxu0 %v957
        %1818 = vmatprep.subr.mxu0 0.0
        %1819 = vmatpush1.msra.mxu0 %v960
        %1820 = vmatprep.subr.mxu0 0.0
        %1821 = vmatpush1.msra.mxu0 %v963
        %1822 = vmatprep.subr.mxu0 0.0
        %1823 = vmatpush1.msra.mxu0 %v966
        %1824 = vmatprep.subr.mxu0 0.0
        %1825 = vmatpush1.msra.mxu0 %v969
        %1826 = vmatprep.subr.mxu0 0.0
        %1827 = vmatpush1.msra.mxu0 %v972
        %1828 = vmatprep.subr.mxu0 0.0
        %1829 = vmatpush1.msra.mxu0 0.0
        %1830 = vmatprep.subr.mxu0 0.0
        %1831 = vmatpush1.msra.mxu0 0.0
        %1832 = vmatprep.subr.mxu0 0.0
        %1833 = vmatpush1.msra.mxu0 0.0
        %1834 = vmatprep.subr.mxu0 0.0
        %1835 = vmatpush1.msra.mxu0 0.0
        %1836 = vmatprep.subr.mxu0 0.0
        %1837 = vmatpush1.msra.mxu0 0.0
        %1838 = vmatprep.subr.mxu0 0.0
        %1839 = vmatpush1.msra.mxu0 0.0
        %1840 = vmatprep.subr.mxu0 0.0
        %1841 = vmatpush1.msra.mxu0 0.0
        %1842 = vmatprep.subr.mxu0 0.0
        %1843 = vmatpush1.msra.mxu0 0.0
        %1844 = vmatprep.subr.mxu0 0.0
        %1845 = vmatpush1.msra.mxu0 0.0
        %1846 = vmatprep.subr.mxu0 0.0
        %1847 = vmatpush1.msra.mxu0 0.0
        %1848 = vmatprep.subr.mxu0 0.0
        %1849 = vmatpush1.msra.mxu0 0.0
        %1850 = vmatprep.subr.mxu0 0.0
        %1851 = vmatpush1.msra.mxu0 0.0
        %1852 = vmatprep.subr.mxu0 0.0
        %1853 = vmatpush1.msra.mxu0 0.0
        %1854 = vmatprep.subr.mxu0 0.0
        %1855 = vmatpush1.msra.mxu0 0.0
        %1856 = vmatprep.subr.mxu0 0.0
        %1857 = vmatpush1.msra.mxu0 0.0
        %1858 = vmatprep.subr.mxu0 0.0
        %1859 = vmatpush1.msra.mxu0 0.0
        %1860 = vmatprep.mubr.f32.mxu0 0.0
        %1861 = vmatmul.mubr.f32.gmra.mrb[0].mxu0 %v1619
        %v1862 = vpop.f32.mrb[0].mxu0
        %v1863 = vadd.f32 0.0, %v1862
        %v1864 = vpop.f32.mrb[0].mxu0
        %1865 = vmatprep.mubr.f32.mxu0 0.0
        %1866 = vmatmul.mubr.f32.gmra.mrb[0].mxu0 %v1620
        %v1867 = vpop.f32.mrb[0].mxu0
        %v1868 = vadd.f32 0.0, %v1867
        %v1869 = vpop.f32.mrb[0].mxu0
        %1870 = vmatprep.mubr.f32.mxu0 0.0
        %1871 = vmatmul.mubr.f32.gmra.mrb[0].mxu0 %v1621
        %v1872 = vpop.f32.mrb[0].mxu0
        %v1873 = vadd.f32 0.0, %v1872
        %v1874 = vpop.f32.mrb[0].mxu0
        %1875 = vmatprep.mubr.f32.mxu0 0.0
        %1876 = vmatmul.mubr.f32.gmra.mrb[0].mxu0 %v1622
        %v1877 = vpop.f32.mrb[0].mxu0
        %v1878 = vadd.f32 0.0, %v1877
        %v1879 = vpop.f32.mrb[0].mxu0
        %1880 = vmatprep.mubr.f32.mxu0 0.0
        %1881 = vmatmul.mubr.f32.gmra.mrb[0].mxu0 %v1623
        %v1882 = vpop.f32.mrb[0].mxu0
        %v1883 = vadd.f32 0.0, %v1882
        %v1884 = vpop.f32.mrb[0].mxu0
        %1885 = vmatprep.mubr.f32.mxu0 0.0
        %1886 = vmatmul.mubr.f32.gmra.mrb[0].mxu0 %v1624
        %v1887 = vpop.f32.mrb[0].mxu0
        %v1888 = vadd.f32 0.0, %v1887
        %v1889 = vpop.f32.mrb[0].mxu0
        %1890 = vmatprep.mubr.f32.mxu0 0.0
        %1891 = vmatmul.mubr.f32.gmra.mrb[0].mxu0 %v1625
        %v1892 = vpop.f32.mrb[0].mxu0
        %v1893 = vadd.f32 0.0, %v1892
        %v1894 = vpop.f32.mrb[0].mxu0
        %1895 = vmatprep.mubr.f32.mxu0 0.0
        %1896 = vmatmul.mubr.f32.gmra.mrb[0].mxu0 %v1626
        %v1897 = vpop.f32.mrb[0].mxu0
        %v1898 = vadd.f32 0.0, %v1897
        %v1899 = vpop.f32.mrb[0].mxu0
        %1900 = vmatprep.mubr.f32.mxu0 0.0
        %1901 = vmatmul.mubr.f32.gmra.mrb[0].mxu0 %v1627
        %v1902 = vpop.f32.mrb[0].mxu0
        %v1903 = vadd.f32 0.0, %v1902
        %v1904 = vpop.f32.mrb[0].mxu0
        %1905 = vmatprep.mubr.f32.mxu0 0.0
        %1906 = vmatmul.mubr.f32.gmra.mrb[0].mxu0 %v1628
        %v1907 = vpop.f32.mrb[0].mxu0
        %v1908 = vadd.f32 0.0, %v1907
        %v1909 = vpop.f32.mrb[0].mxu0
        %1910 = vmatprep.mubr.f32.mxu0 0.0
        %1911 = vmatmul.mubr.f32.gmra.mrb[0].mxu0 %v1629
        %v1912 = vpop.f32.mrb[0].mxu0
        %v1913 = vadd.f32 0.0, %v1912
        %v1914 = vpop.f32.mrb[0].mxu0
        %1915 = vmatprep.mubr.f32.mxu0 0.0
        %1916 = vmatmul.mubr.f32.gmra.mrb[0].mxu0 %v1630
        %v1917 = vpop.f32.mrb[0].mxu0
        %v1918 = vadd.f32 0.0, %v1917
        %v1919 = vpop.f32.mrb[0].mxu0
        %1920 = vmatprep.mubr.f32.mxu0 0.0
        %1921 = vmatmul.mubr.f32.gmra.mrb[0].mxu0 %v1631
        %v1922 = vpop.f32.mrb[0].mxu0
        %v1923 = vadd.f32 0.0, %v1922
        %v1924 = vpop.f32.mrb[0].mxu0
        %1925 = vmatprep.mubr.f32.mxu0 0.0
        %1926 = vmatmul.mubr.f32.gmra.mrb[0].mxu0 %v1632
        %v1927 = vpop.f32.mrb[0].mxu0
        %v1928 = vadd.f32 0.0, %v1927
        %v1929 = vpop.f32.mrb[0].mxu0
        %1930 = vmatprep.mubr.f32.mxu0 0.0
        %1931 = vmatmul.mubr.f32.gmra.mrb[0].mxu0 %v1633
        %v1932 = vpop.f32.mrb[0].mxu0
        %v1933 = vadd.f32 0.0, %v1932
        %v1934 = vpop.f32.mrb[0].mxu0
        %1935 = vmatprep.mubr.f32.mxu0 0.0
        %1936 = vmatmul.mubr.f32.gmra.mrb[0].mxu0 %v1634
        %v1937 = vpop.f32.mrb[0].mxu0
        %v1938 = vadd.f32 0.0, %v1937
        %v1939 = vpop.f32.mrb[0].mxu0
        %1940 = vdwg.mxu0
        %v1941 = vadd.f32 %v1379, %v1702
        %v1942 = vadd.f32 %v1381, %v1704
        %v1943 = vadd.f32 %v1540, %v1863
        %v1944 = vadd.f32 %v1385, %v1708
        %v1945 = vadd.f32 %v1387, %v1710
        %v1946 = vadd.f32 %v1545, %v1868
        %v1947 = vadd.f32 %v1391, %v1714
        %v1948 = vadd.f32 %v1393, %v1716
        %v1949 = vadd.f32 %v1550, %v1873
        %v1950 = vadd.f32 %v1397, %v1720
        %v1951 = vadd.f32 %v1399, %v1722
        %v1952 = vadd.f32 %v1555, %v1878
        %v1953 = vadd.f32 %v1403, %v1726
        %v1954 = vadd.f32 %v1405, %v1728
        %v1955 = vadd.f32 %v1560, %v1883
        %v1956 = vadd.f32 %v1409, %v1732
        %v1957 = vadd.f32 %v1411, %v1734
        %v1958 = vadd.f32 %v1565, %v1888
        %v1959 = vadd.f32 %v1415, %v1738
        %v1960 = vadd.f32 %v1417, %v1740
        %v1961 = vadd.f32 %v1570, %v1893
        %v1962 = vadd.f32 %v1421, %v1744
        %v1963 = vadd.f32 %v1423, %v1746
        %v1964 = vadd.f32 %v1575, %v1898
        %v1965 = vadd.f32 %v1427, %v1750
        %v1966 = vadd.f32 %v1429, %v1752
        %v1967 = vadd.f32 %v1580, %v1903
        %v1968 = vadd.f32 %v1433, %v1756
        %v1969 = vadd.f32 %v1435, %v1758
        %v1970 = vadd.f32 %v1585, %v1908
        %v1971 = vadd.f32 %v1439, %v1762
        %v1972 = vadd.f32 %v1441, %v1764
        %v1973 = vadd.f32 %v1590, %v1913
        %v1974 = vadd.f32 %v1445, %v1768
        %v1975 = vadd.f32 %v1447, %v1770
        %v1976 = vadd.f32 %v1595, %v1918
        %v1977 = vadd.f32 %v1451, %v1774
        %v1978 = vadd.f32 %v1453, %v1776
        %v1979 = vadd.f32 %v1600, %v1923
        %v1980 = vadd.f32 %v1457, %v1780
        %v1981 = vadd.f32 %v1459, %v1782
        %v1982 = vadd.f32 %v1605, %v1928
        %v1983 = vadd.f32 %v1463, %v1786
        %v1984 = vadd.f32 %v1465, %v1788
        %v1985 = vadd.f32 %v1610, %v1933
        %v1986 = vadd.f32 %v1469, %v1792
        %v1987 = vadd.f32 %v1471, %v1794
        %v1988 = vadd.f32 %v1615, %v1938
        %1990 = vset.pattern.permute.xlu0 0
        %1991 = vperm.xlu0 %1990, %v537
        %v1992 = vpop.permute.xlu0 %1991
        %1995 = vset.pattern.permute.xlu0 0
        %1996 = vperm.xlu0 %1995, %v538
        %v1997 = vpop.permute.xlu0 %1996
        %2000 = vset.pattern.permute.xlu0 0
        %2001 = vperm.xlu0 %2000, %v539
        %v2002 = vpop.permute.xlu0 %2001
        %2005 = vset.pattern.permute.xlu0 0
        %2006 = vperm.xlu0 %2005, %v540
        %v2007 = vpop.permute.xlu0 %2006
        %2010 = vset.pattern.permute.xlu0 0
        %2011 = vperm.xlu0 %2010, %v541
        %v2012 = vpop.permute.xlu0 %2011
        %2015 = vset.pattern.permute.xlu0 0
        %2016 = vperm.xlu0 %2015, %v542
        %v2017 = vpop.permute.xlu0 %2016
        %2020 = vset.pattern.permute.xlu0 0
        %2021 = vperm.xlu0 %2020, %v543
        %v2022 = vpop.permute.xlu0 %2021
        %2025 = vset.pattern.permute.xlu0 0
        %2026 = vperm.xlu0 %2025, %v544
        %v2027 = vpop.permute.xlu0 %2026
        %2030 = vset.pattern.permute.xlu0 0
        %2031 = vperm.xlu0 %2030, %v545
        %v2032 = vpop.permute.xlu0 %2031
        %2035 = vset.pattern.permute.xlu0 0
        %2036 = vperm.xlu0 %2035, %v546
        %v2037 = vpop.permute.xlu0 %2036
        %2040 = vset.pattern.permute.xlu0 0
        %2041 = vperm.xlu0 %2040, %v547
        %v2042 = vpop.permute.xlu0 %2041
        %2045 = vset.pattern.permute.xlu0 0
        %2046 = vperm.xlu0 %2045, %v548
        %v2047 = vpop.permute.xlu0 %2046
        %2050 = vset.pattern.permute.xlu0 0
        %2051 = vperm.xlu0 %2050, %v549
        %v2052 = vpop.permute.xlu0 %2051
        %2055 = vset.pattern.permute.xlu0 0
        %2056 = vperm.xlu0 %2055, %v550
        %v2057 = vpop.permute.xlu0 %2056
        %2060 = vset.pattern.permute.xlu0 0
        %2061 = vperm.xlu0 %2060, %v551
        %v2062 = vpop.permute.xlu0 %2061
        %2065 = vset.pattern.permute.xlu0 0
        %2066 = vperm.xlu0 %2065, %v552
        %v2067 = vpop.permute.xlu0 %2066
        %v2069 = vadd.f32 %v1941, %v1992
        %v2070 = vadd.f32 %v1942, %v1992
        %v2071 = vadd.f32 %v1943, %v1992
        %v2072 = vadd.f32 %v1944, %v1997
        %v2073 = vadd.f32 %v1945, %v1997
        %v2074 = vadd.f32 %v1946, %v1997
        %v2075 = vadd.f32 %v1947, %v2002
        %v2076 = vadd.f32 %v1948, %v2002
        %v2077 = vadd.f32 %v1949, %v2002
        %v2078 = vadd.f32 %v1950, %v2007
        %v2079 = vadd.f32 %v1951, %v2007
        %v2080 = vadd.f32 %v1952, %v2007
        %v2081 = vadd.f32 %v1953, %v2012
        %v2082 = vadd.f32 %v1954, %v2012
        %v2083 = vadd.f32 %v1955, %v2012
        %v2084 = vadd.f32 %v1956, %v2017
        %v2085 = vadd.f32 %v1957, %v2017
        %v2086 = vadd.f32 %v1958, %v2017
        %v2087 = vadd.f32 %v1959, %v2022
        %v2088 = vadd.f32 %v1960, %v2022
        %v2089 = vadd.f32 %v1961, %v2022
        %v2090 = vadd.f32 %v1962, %v2027
        %v2091 = vadd.f32 %v1963, %v2027
        %v2092 = vadd.f32 %v1964, %v2027
        %v2093 = vadd.f32 %v1965, %v2032
        %v2094 = vadd.f32 %v1966, %v2032
        %v2095 = vadd.f32 %v1967, %v2032
        %v2096 = vadd.f32 %v1968, %v2037
        %v2097 = vadd.f32 %v1969, %v2037
        %v2098 = vadd.f32 %v1970, %v2037
        %v2099 = vadd.f32 %v1971, %v2042
        %v2100 = vadd.f32 %v1972, %v2042
        %v2101 = vadd.f32 %v1973, %v2042
        %v2102 = vadd.f32 %v1974, %v2047
        %v2103 = vadd.f32 %v1975, %v2047
        %v2104 = vadd.f32 %v1976, %v2047
        %v2105 = vadd.f32 %v1977, %v2052
        %v2106 = vadd.f32 %v1978, %v2052
        %v2107 = vadd.f32 %v1979, %v2052
        %v2108 = vadd.f32 %v1980, %v2057
        %v2109 = vadd.f32 %v1981, %v2057
        %v2110 = vadd.f32 %v1982, %v2057
        %v2111 = vadd.f32 %v1983, %v2062
        %v2112 = vadd.f32 %v1984, %v2062
        %v2113 = vadd.f32 %v1985, %v2062
        %v2114 = vadd.f32 %v1986, %v2067
        %v2115 = vadd.f32 %v1987, %v2067
        %v2116 = vadd.f32 %v1988, %v2067
        %v2117 = vmul.f32 %v2069, 0.5
        %v2118 = vmul.f32 %v2070, 0.5
        %v2119 = vmul.f32 %v2071, 0.5
        %v2120 = vmul.f32 %v2072, 0.5
        %v2121 = vmul.f32 %v2073, 0.5
        %v2122 = vmul.f32 %v2074, 0.5
        %v2123 = vmul.f32 %v2075, 0.5
        %v2124 = vmul.f32 %v2076, 0.5
        %v2125 = vmul.f32 %v2077, 0.5
        %v2126 = vmul.f32 %v2078, 0.5
        %v2127 = vmul.f32 %v2079, 0.5
        %v2128 = vmul.f32 %v2080, 0.5
        %v2129 = vmul.f32 %v2081, 0.5
        %v2130 = vmul.f32 %v2082, 0.5
        %v2131 = vmul.f32 %v2083, 0.5
        %v2132 = vmul.f32 %v2084, 0.5
        %v2133 = vmul.f32 %v2085, 0.5
        %v2134 = vmul.f32 %v2086, 0.5
        %v2135 = vmul.f32 %v2087, 0.5
        %v2136 = vmul.f32 %v2088, 0.5
        %v2137 = vmul.f32 %v2089, 0.5
        %v2138 = vmul.f32 %v2090, 0.5
        %v2139 = vmul.f32 %v2091, 0.5
        %v2140 = vmul.f32 %v2092, 0.5
        %v2141 = vmul.f32 %v2093, 0.5
        %v2142 = vmul.f32 %v2094, 0.5
        %v2143 = vmul.f32 %v2095, 0.5
        %v2144 = vmul.f32 %v2096, 0.5
        %v2145 = vmul.f32 %v2097, 0.5
        %v2146 = vmul.f32 %v2098, 0.5
        %v2147 = vmul.f32 %v2099, 0.5
        %v2148 = vmul.f32 %v2100, 0.5
        %v2149 = vmul.f32 %v2101, 0.5
        %v2150 = vmul.f32 %v2102, 0.5
        %v2151 = vmul.f32 %v2103, 0.5
        %v2152 = vmul.f32 %v2104, 0.5
        %v2153 = vmul.f32 %v2105, 0.5
        %v2154 = vmul.f32 %v2106, 0.5
        %v2155 = vmul.f32 %v2107, 0.5
        %v2156 = vmul.f32 %v2108, 0.5
        %v2157 = vmul.f32 %v2109, 0.5
        %v2158 = vmul.f32 %v2110, 0.5
        %v2159 = vmul.f32 %v2111, 0.5
        %v2160 = vmul.f32 %v2112, 0.5
        %v2161 = vmul.f32 %v2113, 0.5
        %v2162 = vmul.f32 %v2114, 0.5
        %v2163 = vmul.f32 %v2115, 0.5
        %v2164 = vmul.f32 %v2116, 0.5
        %v2165 = vmul.f32 %v2069, 0.70710677
        %v2166 = vmul.f32 %v2070, 0.70710677
        %v2167 = vmul.f32 %v2071, 0.70710677
        %v2168 = vmul.f32 %v2072, 0.70710677
        %v2169 = vmul.f32 %v2073, 0.70710677
        %v2170 = vmul.f32 %v2074, 0.70710677
        %v2171 = vmul.f32 %v2075, 0.70710677
        %v2172 = vmul.f32 %v2076, 0.70710677
        %v2173 = vmul.f32 %v2077, 0.70710677
        %v2174 = vmul.f32 %v2078, 0.70710677
        %v2175 = vmul.f32 %v2079, 0.70710677
        %v2176 = vmul.f32 %v2080, 0.70710677
        %v2177 = vmul.f32 %v2081, 0.70710677
        %v2178 = vmul.f32 %v2082, 0.70710677
        %v2179 = vmul.f32 %v2083, 0.70710677
        %v2180 = vmul.f32 %v2084, 0.70710677
        %v2181 = vmul.f32 %v2085, 0.70710677
        %v2182 = vmul.f32 %v2086, 0.70710677
        %v2183 = vmul.f32 %v2087, 0.70710677
        %v2184 = vmul.f32 %v2088, 0.70710677
        %v2185 = vmul.f32 %v2089, 0.70710677
        %v2186 = vmul.f32 %v2090, 0.70710677
        %v2187 = vmul.f32 %v2091, 0.70710677
        %v2188 = vmul.f32 %v2092, 0.70710677
        %v2189 = vmul.f32 %v2093, 0.70710677
        %v2190 = vmul.f32 %v2094, 0.70710677
        %v2191 = vmul.f32 %v2095, 0.70710677
        %v2192 = vmul.f32 %v2096, 0.70710677
        %v2193 = vmul.f32 %v2097, 0.70710677
        %v2194 = vmul.f32 %v2098, 0.70710677
        %v2195 = vmul.f32 %v2099, 0.70710677
        %v2196 = vmul.f32 %v2100, 0.70710677
        %v2197 = vmul.f32 %v2101, 0.70710677
        %v2198 = vmul.f32 %v2102, 0.70710677
        %v2199 = vmul.f32 %v2103, 0.70710677
        %v2200 = vmul.f32 %v2104, 0.70710677
        %v2201 = vmul.f32 %v2105, 0.70710677
        %v2202 = vmul.f32 %v2106, 0.70710677
        %v2203 = vmul.f32 %v2107, 0.70710677
        %v2204 = vmul.f32 %v2108, 0.70710677
        %v2205 = vmul.f32 %v2109, 0.70710677
        %v2206 = vmul.f32 %v2110, 0.70710677
        %v2207 = vmul.f32 %v2111, 0.70710677
        %v2208 = vmul.f32 %v2112, 0.70710677
        %v2209 = vmul.f32 %v2113, 0.70710677
        %v2210 = vmul.f32 %v2114, 0.70710677
        %v2211 = vmul.f32 %v2115, 0.70710677
        %v2212 = vmul.f32 %v2116, 0.70710677
        %vm2213 = vcmp.ge.f32.partialorder %v2165, 0.0
        %vm2214 = vcmp.ge.f32.partialorder %v2166, 0.0
        %vm2215 = vcmp.ge.f32.partialorder %v2167, 0.0
        %vm2216 = vcmp.ge.f32.partialorder %v2168, 0.0
        %vm2217 = vcmp.ge.f32.partialorder %v2169, 0.0
        %vm2218 = vcmp.ge.f32.partialorder %v2170, 0.0
        %vm2219 = vcmp.ge.f32.partialorder %v2171, 0.0
        %vm2220 = vcmp.ge.f32.partialorder %v2172, 0.0
        %vm2221 = vcmp.ge.f32.partialorder %v2173, 0.0
        %vm2222 = vcmp.ge.f32.partialorder %v2174, 0.0
        %vm2223 = vcmp.ge.f32.partialorder %v2175, 0.0
        %vm2224 = vcmp.ge.f32.partialorder %v2176, 0.0
        %vm2225 = vcmp.ge.f32.partialorder %v2177, 0.0
        %vm2226 = vcmp.ge.f32.partialorder %v2178, 0.0
        %vm2227 = vcmp.ge.f32.partialorder %v2179, 0.0
        %vm2228 = vcmp.ge.f32.partialorder %v2180, 0.0
        %vm2229 = vcmp.ge.f32.partialorder %v2181, 0.0
        %vm2230 = vcmp.ge.f32.partialorder %v2182, 0.0
        %vm2231 = vcmp.ge.f32.partialorder %v2183, 0.0
        %vm2232 = vcmp.ge.f32.partialorder %v2184, 0.0
        %vm2233 = vcmp.ge.f32.partialorder %v2185, 0.0
        %vm2234 = vcmp.ge.f32.partialorder %v2186, 0.0
        %vm2235 = vcmp.ge.f32.partialorder %v2187, 0.0
        %vm2236 = vcmp.ge.f32.partialorder %v2188, 0.0
        %vm2237 = vcmp.ge.f32.partialorder %v2189, 0.0
        %vm2238 = vcmp.ge.f32.partialorder %v2190, 0.0
        %vm2239 = vcmp.ge.f32.partialorder %v2191, 0.0
        %vm2240 = vcmp.ge.f32.partialorder %v2192, 0.0
        %vm2241 = vcmp.ge.f32.partialorder %v2193, 0.0
        %vm2242 = vcmp.ge.f32.partialorder %v2194, 0.0
        %vm2243 = vcmp.ge.f32.partialorder %v2195, 0.0
        %vm2244 = vcmp.ge.f32.partialorder %v2196, 0.0
        %vm2245 = vcmp.ge.f32.partialorder %v2197, 0.0
        %vm2246 = vcmp.ge.f32.partialorder %v2198, 0.0
        %vm2247 = vcmp.ge.f32.partialorder %v2199, 0.0
        %vm2248 = vcmp.ge.f32.partialorder %v2200, 0.0
        %vm2249 = vcmp.ge.f32.partialorder %v2201, 0.0
        %vm2250 = vcmp.ge.f32.partialorder %v2202, 0.0
        %vm2251 = vcmp.ge.f32.partialorder %v2203, 0.0
        %vm2252 = vcmp.ge.f32.partialorder %v2204, 0.0
        %vm2253 = vcmp.ge.f32.partialorder %v2205, 0.0
        %vm2254 = vcmp.ge.f32.partialorder %v2206, 0.0
        %vm2255 = vcmp.ge.f32.partialorder %v2207, 0.0
        %vm2256 = vcmp.ge.f32.partialorder %v2208, 0.0
        %vm2257 = vcmp.ge.f32.partialorder %v2209, 0.0
        %vm2258 = vcmp.ge.f32.partialorder %v2210, 0.0
        %vm2259 = vcmp.ge.f32.partialorder %v2211, 0.0
        %vm2260 = vcmp.ge.f32.partialorder %v2212, 0.0
        %v2261 = vsel %vm2213, 1.0, -1.0
        %v2262 = vsel %vm2214, 1.0, -1.0
        %v2263 = vsel %vm2215, 1.0, -1.0
        %v2264 = vsel %vm2216, 1.0, -1.0
        %v2265 = vsel %vm2217, 1.0, -1.0
        %v2266 = vsel %vm2218, 1.0, -1.0
        %v2267 = vsel %vm2219, 1.0, -1.0
        %v2268 = vsel %vm2220, 1.0, -1.0
        %v2269 = vsel %vm2221, 1.0, -1.0
        %v2270 = vsel %vm2222, 1.0, -1.0
        %v2271 = vsel %vm2223, 1.0, -1.0
        %v2272 = vsel %vm2224, 1.0, -1.0
        %v2273 = vsel %vm2225, 1.0, -1.0
        %v2274 = vsel %vm2226, 1.0, -1.0
        %v2275 = vsel %vm2227, 1.0, -1.0
        %v2276 = vsel %vm2228, 1.0, -1.0
        %v2277 = vsel %vm2229, 1.0, -1.0
        %v2278 = vsel %vm2230, 1.0, -1.0
        %v2279 = vsel %vm2231, 1.0, -1.0
        %v2280 = vsel %vm2232, 1.0, -1.0
        %v2281 = vsel %vm2233, 1.0, -1.0
        %v2282 = vsel %vm2234, 1.0, -1.0
        %v2283 = vsel %vm2235, 1.0, -1.0
        %v2284 = vsel %vm2236, 1.0, -1.0
        %v2285 = vsel %vm2237, 1.0, -1.0
        %v2286 = vsel %vm2238, 1.0, -1.0
        %v2287 = vsel %vm2239, 1.0, -1.0
        %v2288 = vsel %vm2240, 1.0, -1.0
        %v2289 = vsel %vm2241, 1.0, -1.0
        %v2290 = vsel %vm2242, 1.0, -1.0
        %v2291 = vsel %vm2243, 1.0, -1.0
        %v2292 = vsel %vm2244, 1.0, -1.0
        %v2293 = vsel %vm2245, 1.0, -1.0
        %v2294 = vsel %vm2246, 1.0, -1.0
        %v2295 = vsel %vm2247, 1.0, -1.0
        %v2296 = vsel %vm2248, 1.0, -1.0
        %v2297 = vsel %vm2249, 1.0, -1.0
        %v2298 = vsel %vm2250, 1.0, -1.0
        %v2299 = vsel %vm2251, 1.0, -1.0
        %v2300 = vsel %vm2252, 1.0, -1.0
        %v2301 = vsel %vm2253, 1.0, -1.0
        %v2302 = vsel %vm2254, 1.0, -1.0
        %v2303 = vsel %vm2255, 1.0, -1.0
        %v2304 = vsel %vm2256, 1.0, -1.0
        %v2305 = vsel %vm2257, 1.0, -1.0
        %v2306 = vsel %vm2258, 1.0, -1.0
        %v2307 = vsel %vm2259, 1.0, -1.0
        %v2308 = vsel %vm2260, 1.0, -1.0
        %v2309 = vand.u32 2147483647, %v2165
        %v2310 = vand.u32 2147483647, %v2166
        %v2311 = vand.u32 2147483647, %v2167
        %v2312 = vand.u32 2147483647, %v2168
        %v2313 = vand.u32 2147483647, %v2169
        %v2314 = vand.u32 2147483647, %v2170
        %v2315 = vand.u32 2147483647, %v2171
        %v2316 = vand.u32 2147483647, %v2172
        %v2317 = vand.u32 2147483647, %v2173
        %v2318 = vand.u32 2147483647, %v2174
        %v2319 = vand.u32 2147483647, %v2175
        %v2320 = vand.u32 2147483647, %v2176
        %v2321 = vand.u32 2147483647, %v2177
        %v2322 = vand.u32 2147483647, %v2178
        %v2323 = vand.u32 2147483647, %v2179
        %v2324 = vand.u32 2147483647, %v2180
        %v2325 = vand.u32 2147483647, %v2181
        %v2326 = vand.u32 2147483647, %v2182
        %v2327 = vand.u32 2147483647, %v2183
        %v2328 = vand.u32 2147483647, %v2184
        %v2329 = vand.u32 2147483647, %v2185
        %v2330 = vand.u32 2147483647, %v2186
        %v2331 = vand.u32 2147483647, %v2187
        %v2332 = vand.u32 2147483647, %v2188
        %v2333 = vand.u32 2147483647, %v2189
        %v2334 = vand.u32 2147483647, %v2190
        %v2335 = vand.u32 2147483647, %v2191
        %v2336 = vand.u32 2147483647, %v2192
        %v2337 = vand.u32 2147483647, %v2193
        %v2338 = vand.u32 2147483647, %v2194
        %v2339 = vand.u32 2147483647, %v2195
        %v2340 = vand.u32 2147483647, %v2196
        %v2341 = vand.u32 2147483647, %v2197
        %v2342 = vand.u32 2147483647, %v2198
        %v2343 = vand.u32 2147483647, %v2199
        %v2344 = vand.u32 2147483647, %v2200
        %v2345 = vand.u32 2147483647, %v2201
        %v2346 = vand.u32 2147483647, %v2202
        %v2347 = vand.u32 2147483647, %v2203
        %v2348 = vand.u32 2147483647, %v2204
        %v2349 = vand.u32 2147483647, %v2205
        %v2350 = vand.u32 2147483647, %v2206
        %v2351 = vand.u32 2147483647, %v2207
        %v2352 = vand.u32 2147483647, %v2208
        %v2353 = vand.u32 2147483647, %v2209
        %v2354 = vand.u32 2147483647, %v2210
        %v2355 = vand.u32 2147483647, %v2211
        %v2356 = vand.u32 2147483647, %v2212
        %v2357 = vmul.f32 %v2309, 0.3275911
        %v2358 = vmul.f32 %v2310, 0.3275911
        %v2359 = vmul.f32 %v2311, 0.3275911
        %v2360 = vmul.f32 %v2312, 0.3275911
        %v2361 = vmul.f32 %v2313, 0.3275911
        %v2362 = vmul.f32 %v2314, 0.3275911
        %v2363 = vmul.f32 %v2315, 0.3275911
        %v2364 = vmul.f32 %v2316, 0.3275911
        %v2365 = vmul.f32 %v2317, 0.3275911
        %v2366 = vmul.f32 %v2318, 0.3275911
        %v2367 = vmul.f32 %v2319, 0.3275911
        %v2368 = vmul.f32 %v2320, 0.3275911
        %v2369 = vmul.f32 %v2321, 0.3275911
        %v2370 = vmul.f32 %v2322, 0.3275911
        %v2371 = vmul.f32 %v2323, 0.3275911
        %v2372 = vmul.f32 %v2324, 0.3275911
        %v2373 = vmul.f32 %v2325, 0.3275911
        %v2374 = vmul.f32 %v2326, 0.3275911
        %v2375 = vmul.f32 %v2327, 0.3275911
        %v2376 = vmul.f32 %v2328, 0.3275911
        %v2377 = vmul.f32 %v2329, 0.3275911
        %v2378 = vmul.f32 %v2330, 0.3275911
        %v2379 = vmul.f32 %v2331, 0.3275911
        %v2380 = vmul.f32 %v2332, 0.3275911
        %v2381 = vmul.f32 %v2333, 0.3275911
        %v2382 = vmul.f32 %v2334, 0.3275911
        %v2383 = vmul.f32 %v2335, 0.3275911
        %v2384 = vmul.f32 %v2336, 0.3275911
        %v2385 = vmul.f32 %v2337, 0.3275911
        %v2386 = vmul.f32 %v2338, 0.3275911
        %v2387 = vmul.f32 %v2339, 0.3275911
        %v2388 = vmul.f32 %v2340, 0.3275911
        %v2389 = vmul.f32 %v2341, 0.3275911
        %v2390 = vmul.f32 %v2342, 0.3275911
        %v2391 = vmul.f32 %v2343, 0.3275911
        %v2392 = vmul.f32 %v2344, 0.3275911
        %v2393 = vmul.f32 %v2345, 0.3275911
        %v2394 = vmul.f32 %v2346, 0.3275911
        %v2395 = vmul.f32 %v2347, 0.3275911
        %v2396 = vmul.f32 %v2348, 0.3275911
        %v2397 = vmul.f32 %v2349, 0.3275911
        %v2398 = vmul.f32 %v2350, 0.3275911
        %v2399 = vmul.f32 %v2351, 0.3275911
        %v2400 = vmul.f32 %v2352, 0.3275911
        %v2401 = vmul.f32 %v2353, 0.3275911
        %v2402 = vmul.f32 %v2354, 0.3275911
        %v2403 = vmul.f32 %v2355, 0.3275911
        %v2404 = vmul.f32 %v2356, 0.3275911
        %v2405 = vadd.f32 %v2357, 1.0
        %v2406 = vadd.f32 %v2358, 1.0
        %v2407 = vadd.f32 %v2359, 1.0
        %v2408 = vadd.f32 %v2360, 1.0
        %v2409 = vadd.f32 %v2361, 1.0
        %v2410 = vadd.f32 %v2362, 1.0
        %v2411 = vadd.f32 %v2363, 1.0
        %v2412 = vadd.f32 %v2364, 1.0
        %v2413 = vadd.f32 %v2365, 1.0
        %v2414 = vadd.f32 %v2366, 1.0
        %v2415 = vadd.f32 %v2367, 1.0
        %v2416 = vadd.f32 %v2368, 1.0
        %v2417 = vadd.f32 %v2369, 1.0
        %v2418 = vadd.f32 %v2370, 1.0
        %v2419 = vadd.f32 %v2371, 1.0
        %v2420 = vadd.f32 %v2372, 1.0
        %v2421 = vadd.f32 %v2373, 1.0
        %v2422 = vadd.f32 %v2374, 1.0
        %v2423 = vadd.f32 %v2375, 1.0
        %v2424 = vadd.f32 %v2376, 1.0
        %v2425 = vadd.f32 %v2377, 1.0
        %v2426 = vadd.f32 %v2378, 1.0
        %v2427 = vadd.f32 %v2379, 1.0
        %v2428 = vadd.f32 %v2380, 1.0
        %v2429 = vadd.f32 %v2381, 1.0
        %v2430 = vadd.f32 %v2382, 1.0
        %v2431 = vadd.f32 %v2383, 1.0
        %v2432 = vadd.f32 %v2384, 1.0
        %v2433 = vadd.f32 %v2385, 1.0
        %v2434 = vadd.f32 %v2386, 1.0
        %v2435 = vadd.f32 %v2387, 1.0
        %v2436 = vadd.f32 %v2388, 1.0
        %v2437 = vadd.f32 %v2389, 1.0
        %v2438 = vadd.f32 %v2390, 1.0
        %v2439 = vadd.f32 %v2391, 1.0
        %v2440 = vadd.f32 %v2392, 1.0
        %v2441 = vadd.f32 %v2393, 1.0
        %v2442 = vadd.f32 %v2394, 1.0
        %v2443 = vadd.f32 %v2395, 1.0
        %v2444 = vadd.f32 %v2396, 1.0
        %v2445 = vadd.f32 %v2397, 1.0
        %v2446 = vadd.f32 %v2398, 1.0
        %v2447 = vadd.f32 %v2399, 1.0
        %v2448 = vadd.f32 %v2400, 1.0
        %v2449 = vadd.f32 %v2401, 1.0
        %v2450 = vadd.f32 %v2402, 1.0
        %v2451 = vadd.f32 %v2403, 1.0
        %v2452 = vadd.f32 %v2404, 1.0
        %v2453 = vrcp.pop %v2405
        %v2454 = vmul.f32 1.0, %v2453
        %v2455 = vrcp.pop %v2406
        %v2456 = vmul.f32 1.0, %v2455
        %v2457 = vrcp.pop %v2407
        %v2458 = vmul.f32 1.0, %v2457
        %v2459 = vrcp.pop %v2408
        %v2460 = vmul.f32 1.0, %v2459
        %v2461 = vrcp.pop %v2409
        %v2462 = vmul.f32 1.0, %v2461
        %v2463 = vrcp.pop %v2410
        %v2464 = vmul.f32 1.0, %v2463
        %v2465 = vrcp.pop %v2411
        %v2466 = vmul.f32 1.0, %v2465
        %v2467 = vrcp.pop %v2412
        %v2468 = vmul.f32 1.0, %v2467
        %v2469 = vrcp.pop %v2413
        %v2470 = vmul.f32 1.0, %v2469
        %v2471 = vrcp.pop %v2414
        %v2472 = vmul.f32 1.0, %v2471
        %v2473 = vrcp.pop %v2415
        %v2474 = vmul.f32 1.0, %v2473
        %v2475 = vrcp.pop %v2416
        %v2476 = vmul.f32 1.0, %v2475
        %v2477 = vrcp.pop %v2417
        %v2478 = vmul.f32 1.0, %v2477
        %v2479 = vrcp.pop %v2418
        %v2480 = vmul.f32 1.0, %v2479
        %v2481 = vrcp.pop %v2419
        %v2482 = vmul.f32 1.0, %v2481
        %v2483 = vrcp.pop %v2420
        %v2484 = vmul.f32 1.0, %v2483
        %v2485 = vrcp.pop %v2421
        %v2486 = vmul.f32 1.0, %v2485
        %v2487 = vrcp.pop %v2422
        %v2488 = vmul.f32 1.0, %v2487
        %v2489 = vrcp.pop %v2423
        %v2490 = vmul.f32 1.0, %v2489
        %v2491 = vrcp.pop %v2424
        %v2492 = vmul.f32 1.0, %v2491
        %v2493 = vrcp.pop %v2425
        %v2494 = vmul.f32 1.0, %v2493
        %v2495 = vrcp.pop %v2426
        %v2496 = vmul.f32 1.0, %v2495
        %v2497 = vrcp.pop %v2427
        %v2498 = vmul.f32 1.0, %v2497
        %v2499 = vrcp.pop %v2428
        %v2500 = vmul.f32 1.0, %v2499
        %v2501 = vrcp.pop %v2429
        %v2502 = vmul.f32 1.0, %v2501
        %v2503 = vrcp.pop %v2430
        %v2504 = vmul.f32 1.0, %v2503
        %v2505 = vrcp.pop %v2431
        %v2506 = vmul.f32 1.0, %v2505
        %v2507 = vrcp.pop %v2432
        %v2508 = vmul.f32 1.0, %v2507
        %v2509 = vrcp.pop %v2433
        %v2510 = vmul.f32 1.0, %v2509
        %v2511 = vrcp.pop %v2434
        %v2512 = vmul.f32 1.0, %v2511
        %v2513 = vrcp.pop %v2435
        %v2514 = vmul.f32 1.0, %v2513
        %v2515 = vrcp.pop %v2436
        %v2516 = vmul.f32 1.0, %v2515
        %v2517 = vrcp.pop %v2437
        %v2518 = vmul.f32 1.0, %v2517
        %v2519 = vrcp.pop %v2438
        %v2520 = vmul.f32 1.0, %v2519
        %v2521 = vrcp.pop %v2439
        %v2522 = vmul.f32 1.0, %v2521
        %v2523 = vrcp.pop %v2440
        %v2524 = vmul.f32 1.0, %v2523
        %v2525 = vrcp.pop %v2441
        %v2526 = vmul.f32 1.0, %v2525
        %v2527 = vrcp.pop %v2442
        %v2528 = vmul.f32 1.0, %v2527
        %v2529 = vrcp.pop %v2443
        %v2530 = vmul.f32 1.0, %v2529
        %v2531 = vrcp.pop %v2444
        %v2532 = vmul.f32 1.0, %v2531
        %v2533 = vrcp.pop %v2445
        %v2534 = vmul.f32 1.0, %v2533
        %v2535 = vrcp.pop %v2446
        %v2536 = vmul.f32 1.0, %v2535
        %v2537 = vrcp.pop %v2447
        %v2538 = vmul.f32 1.0, %v2537
        %v2539 = vrcp.pop %v2448
        %v2540 = vmul.f32 1.0, %v2539
        %v2541 = vrcp.pop %v2449
        %v2542 = vmul.f32 1.0, %v2541
        %v2543 = vrcp.pop %v2450
        %v2544 = vmul.f32 1.0, %v2543
        %v2545 = vrcp.pop %v2451
        %v2546 = vmul.f32 1.0, %v2545
        %v2547 = vrcp.pop %v2452
        %v2548 = vmul.f32 1.0, %v2547
        %v2549 = vmul.f32 %v2454, 1.0614054
        %v2550 = vmul.f32 %v2456, 1.0614054
        %v2551 = vmul.f32 %v2458, 1.0614054
        %v2552 = vmul.f32 %v2460, 1.0614054
        %v2553 = vmul.f32 %v2462, 1.0614054
        %v2554 = vmul.f32 %v2464, 1.0614054
        %v2555 = vmul.f32 %v2466, 1.0614054
        %v2556 = vmul.f32 %v2468, 1.0614054
        %v2557 = vmul.f32 %v2470, 1.0614054
        %v2558 = vmul.f32 %v2472, 1.0614054
        %v2559 = vmul.f32 %v2474, 1.0614054
        %v2560 = vmul.f32 %v2476, 1.0614054
        %v2561 = vmul.f32 %v2478, 1.0614054
        %v2562 = vmul.f32 %v2480, 1.0614054
        %v2563 = vmul.f32 %v2482, 1.0614054
        %v2564 = vmul.f32 %v2484, 1.0614054
        %v2565 = vmul.f32 %v2486, 1.0614054
        %v2566 = vmul.f32 %v2488, 1.0614054
        %v2567 = vmul.f32 %v2490, 1.0614054
        %v2568 = vmul.f32 %v2492, 1.0614054
        %v2569 = vmul.f32 %v2494, 1.0614054
        %v2570 = vmul.f32 %v2496, 1.0614054
        %v2571 = vmul.f32 %v2498, 1.0614054
        %v2572 = vmul.f32 %v2500, 1.0614054
        %v2573 = vmul.f32 %v2502, 1.0614054
        %v2574 = vmul.f32 %v2504, 1.0614054
        %v2575 = vmul.f32 %v2506, 1.0614054
        %v2576 = vmul.f32 %v2508, 1.0614054
        %v2577 = vmul.f32 %v2510, 1.0614054
        %v2578 = vmul.f32 %v2512, 1.0614054
        %v2579 = vmul.f32 %v2514, 1.0614054
        %v2580 = vmul.f32 %v2516, 1.0614054
        %v2581 = vmul.f32 %v2518, 1.0614054
        %v2582 = vmul.f32 %v2520, 1.0614054
        %v2583 = vmul.f32 %v2522, 1.0614054
        %v2584 = vmul.f32 %v2524, 1.0614054
        %v2585 = vmul.f32 %v2526, 1.0614054
        %v2586 = vmul.f32 %v2528, 1.0614054
        %v2587 = vmul.f32 %v2530, 1.0614054
        %v2588 = vmul.f32 %v2532, 1.0614054
        %v2589 = vmul.f32 %v2534, 1.0614054
        %v2590 = vmul.f32 %v2536, 1.0614054
        %v2591 = vmul.f32 %v2538, 1.0614054
        %v2592 = vmul.f32 %v2540, 1.0614054
        %v2593 = vmul.f32 %v2542, 1.0614054
        %v2594 = vmul.f32 %v2544, 1.0614054
        %v2595 = vmul.f32 %v2546, 1.0614054
        %v2596 = vmul.f32 %v2548, 1.0614054
        %v2597 = vsub.f32 %v2549, 1.4531521
        %v2598 = vsub.f32 %v2550, 1.4531521
        %v2599 = vsub.f32 %v2551, 1.4531521
        %v2600 = vsub.f32 %v2552, 1.4531521
        %v2601 = vsub.f32 %v2553, 1.4531521
        %v2602 = vsub.f32 %v2554, 1.4531521
        %v2603 = vsub.f32 %v2555, 1.4531521
        %v2604 = vsub.f32 %v2556, 1.4531521
        %v2605 = vsub.f32 %v2557, 1.4531521
        %v2606 = vsub.f32 %v2558, 1.4531521
        %v2607 = vsub.f32 %v2559, 1.4531521
        %v2608 = vsub.f32 %v2560, 1.4531521
        %v2609 = vsub.f32 %v2561, 1.4531521
        %v2610 = vsub.f32 %v2562, 1.4531521
        %v2611 = vsub.f32 %v2563, 1.4531521
        %v2612 = vsub.f32 %v2564, 1.4531521
        %v2613 = vsub.f32 %v2565, 1.4531521
        %v2614 = vsub.f32 %v2566, 1.4531521
        %v2615 = vsub.f32 %v2567, 1.4531521
        %v2616 = vsub.f32 %v2568, 1.4531521
        %v2617 = vsub.f32 %v2569, 1.4531521
        %v2618 = vsub.f32 %v2570, 1.4531521
        %v2619 = vsub.f32 %v2571, 1.4531521
        %v2620 = vsub.f32 %v2572, 1.4531521
        %v2621 = vsub.f32 %v2573, 1.4531521
        %v2622 = vsub.f32 %v2574, 1.4531521
        %v2623 = vsub.f32 %v2575, 1.4531521
        %v2624 = vsub.f32 %v2576, 1.4531521
        %v2625 = vsub.f32 %v2577, 1.4531521
        %v2626 = vsub.f32 %v2578, 1.4531521
        %v2627 = vsub.f32 %v2579, 1.4531521
        %v2628 = vsub.f32 %v2580, 1.4531521
        %v2629 = vsub.f32 %v2581, 1.4531521
        %v2630 = vsub.f32 %v2582, 1.4531521
        %v2631 = vsub.f32 %v2583, 1.4531521
        %v2632 = vsub.f32 %v2584, 1.4531521
        %v2633 = vsub.f32 %v2585, 1.4531521
        %v2634 = vsub.f32 %v2586, 1.4531521
        %v2635 = vsub.f32 %v2587, 1.4531521
        %v2636 = vsub.f32 %v2588, 1.4531521
        %v2637 = vsub.f32 %v2589, 1.4531521
        %v2638 = vsub.f32 %v2590, 1.4531521
        %v2639 = vsub.f32 %v2591, 1.4531521
        %v2640 = vsub.f32 %v2592, 1.4531521
        %v2641 = vsub.f32 %v2593, 1.4531521
        %v2642 = vsub.f32 %v2594, 1.4531521
        %v2643 = vsub.f32 %v2595, 1.4531521
        %v2644 = vsub.f32 %v2596, 1.4531521
        %v2645 = vmul.f32 %v2597, %v2454
        %v2646 = vmul.f32 %v2598, %v2456
        %v2647 = vmul.f32 %v2599, %v2458
        %v2648 = vmul.f32 %v2600, %v2460
        %v2649 = vmul.f32 %v2601, %v2462
        %v2650 = vmul.f32 %v2602, %v2464
        %v2651 = vmul.f32 %v2603, %v2466
        %v2652 = vmul.f32 %v2604, %v2468
        %v2653 = vmul.f32 %v2605, %v2470
        %v2654 = vmul.f32 %v2606, %v2472
        %v2655 = vmul.f32 %v2607, %v2474
        %v2656 = vmul.f32 %v2608, %v2476
        %v2657 = vmul.f32 %v2609, %v2478
        %v2658 = vmul.f32 %v2610, %v2480
        %v2659 = vmul.f32 %v2611, %v2482
        %v2660 = vmul.f32 %v2612, %v2484
        %v2661 = vmul.f32 %v2613, %v2486
        %v2662 = vmul.f32 %v2614, %v2488
        %v2663 = vmul.f32 %v2615, %v2490
        %v2664 = vmul.f32 %v2616, %v2492
        %v2665 = vmul.f32 %v2617, %v2494
        %v2666 = vmul.f32 %v2618, %v2496
        %v2667 = vmul.f32 %v2619, %v2498
        %v2668 = vmul.f32 %v2620, %v2500
        %v2669 = vmul.f32 %v2621, %v2502
        %v2670 = vmul.f32 %v2622, %v2504
        %v2671 = vmul.f32 %v2623, %v2506
        %v2672 = vmul.f32 %v2624, %v2508
        %v2673 = vmul.f32 %v2625, %v2510
        %v2674 = vmul.f32 %v2626, %v2512
        %v2675 = vmul.f32 %v2627, %v2514
        %v2676 = vmul.f32 %v2628, %v2516
        %v2677 = vmul.f32 %v2629, %v2518
        %v2678 = vmul.f32 %v2630, %v2520
        %v2679 = vmul.f32 %v2631, %v2522
        %v2680 = vmul.f32 %v2632, %v2524
        %v2681 = vmul.f32 %v2633, %v2526
        %v2682 = vmul.f32 %v2634, %v2528
        %v2683 = vmul.f32 %v2635, %v2530
        %v2684 = vmul.f32 %v2636, %v2532
        %v2685 = vmul.f32 %v2637, %v2534
        %v2686 = vmul.f32 %v2638, %v2536
        %v2687 = vmul.f32 %v2639, %v2538
        %v2688 = vmul.f32 %v2640, %v2540
        %v2689 = vmul.f32 %v2641, %v2542
        %v2690 = vmul.f32 %v2642, %v2544
        %v2691 = vmul.f32 %v2643, %v2546
        %v2692 = vmul.f32 %v2644, %v2548
        %v2693 = vadd.f32 %v2645, 1.4214138
        %v2694 = vadd.f32 %v2646, 1.4214138
        %v2695 = vadd.f32 %v2647, 1.4214138
        %v2696 = vadd.f32 %v2648, 1.4214138
        %v2697 = vadd.f32 %v2649, 1.4214138
        %v2698 = vadd.f32 %v2650, 1.4214138
        %v2699 = vadd.f32 %v2651, 1.4214138
        %v2700 = vadd.f32 %v2652, 1.4214138
        %v2701 = vadd.f32 %v2653, 1.4214138
        %v2702 = vadd.f32 %v2654, 1.4214138
        %v2703 = vadd.f32 %v2655, 1.4214138
        %v2704 = vadd.f32 %v2656, 1.4214138
        %v2705 = vadd.f32 %v2657, 1.4214138
        %v2706 = vadd.f32 %v2658, 1.4214138
        %v2707 = vadd.f32 %v2659, 1.4214138
        %v2708 = vadd.f32 %v2660, 1.4214138
        %v2709 = vadd.f32 %v2661, 1.4214138
        %v2710 = vadd.f32 %v2662, 1.4214138
        %v2711 = vadd.f32 %v2663, 1.4214138
        %v2712 = vadd.f32 %v2664, 1.4214138
        %v2713 = vadd.f32 %v2665, 1.4214138
        %v2714 = vadd.f32 %v2666, 1.4214138
        %v2715 = vadd.f32 %v2667, 1.4214138
        %v2716 = vadd.f32 %v2668, 1.4214138
        %v2717 = vadd.f32 %v2669, 1.4214138
        %v2718 = vadd.f32 %v2670, 1.4214138
        %v2719 = vadd.f32 %v2671, 1.4214138
        %v2720 = vadd.f32 %v2672, 1.4214138
        %v2721 = vadd.f32 %v2673, 1.4214138
        %v2722 = vadd.f32 %v2674, 1.4214138
        %v2723 = vadd.f32 %v2675, 1.4214138
        %v2724 = vadd.f32 %v2676, 1.4214138
        %v2725 = vadd.f32 %v2677, 1.4214138
        %v2726 = vadd.f32 %v2678, 1.4214138
        %v2727 = vadd.f32 %v2679, 1.4214138
        %v2728 = vadd.f32 %v2680, 1.4214138
        %v2729 = vadd.f32 %v2681, 1.4214138
        %v2730 = vadd.f32 %v2682, 1.4214138
        %v2731 = vadd.f32 %v2683, 1.4214138
        %v2732 = vadd.f32 %v2684, 1.4214138
        %v2733 = vadd.f32 %v2685, 1.4214138
        %v2734 = vadd.f32 %v2686, 1.4214138
        %v2735 = vadd.f32 %v2687, 1.4214138
        %v2736 = vadd.f32 %v2688, 1.4214138
        %v2737 = vadd.f32 %v2689, 1.4214138
        %v2738 = vadd.f32 %v2690, 1.4214138
        %v2739 = vadd.f32 %v2691, 1.4214138
        %v2740 = vadd.f32 %v2692, 1.4214138
        %v2741 = vmul.f32 %v2693, %v2454
        %v2742 = vmul.f32 %v2694, %v2456
        %v2743 = vmul.f32 %v2695, %v2458
        %v2744 = vmul.f32 %v2696, %v2460
        %v2745 = vmul.f32 %v2697, %v2462
        %v2746 = vmul.f32 %v2698, %v2464
        %v2747 = vmul.f32 %v2699, %v2466
        %v2748 = vmul.f32 %v2700, %v2468
        %v2749 = vmul.f32 %v2701, %v2470
        %v2750 = vmul.f32 %v2702, %v2472
        %v2751 = vmul.f32 %v2703, %v2474
        %v2752 = vmul.f32 %v2704, %v2476
        %v2753 = vmul.f32 %v2705, %v2478
        %v2754 = vmul.f32 %v2706, %v2480
        %v2755 = vmul.f32 %v2707, %v2482
        %v2756 = vmul.f32 %v2708, %v2484
        %v2757 = vmul.f32 %v2709, %v2486
        %v2758 = vmul.f32 %v2710, %v2488
        %v2759 = vmul.f32 %v2711, %v2490
        %v2760 = vmul.f32 %v2712, %v2492
        %v2761 = vmul.f32 %v2713, %v2494
        %v2762 = vmul.f32 %v2714, %v2496
        %v2763 = vmul.f32 %v2715, %v2498
        %v2764 = vmul.f32 %v2716, %v2500
        %v2765 = vmul.f32 %v2717, %v2502
        %v2766 = vmul.f32 %v2718, %v2504
        %v2767 = vmul.f32 %v2719, %v2506
        %v2768 = vmul.f32 %v2720, %v2508
        %v2769 = vmul.f32 %v2721, %v2510
        %v2770 = vmul.f32 %v2722, %v2512
        %v2771 = vmul.f32 %v2723, %v2514
        %v2772 = vmul.f32 %v2724, %v2516
        %v2773 = vmul.f32 %v2725, %v2518
        %v2774 = vmul.f32 %v2726, %v2520
        %v2775 = vmul.f32 %v2727, %v2522
        %v2776 = vmul.f32 %v2728, %v2524
        %v2777 = vmul.f32 %v2729, %v2526
        %v2778 = vmul.f32 %v2730, %v2528
        %v2779 = vmul.f32 %v2731, %v2530
        %v2780 = vmul.f32 %v2732, %v2532
        %v2781 = vmul.f32 %v2733, %v2534
        %v2782 = vmul.f32 %v2734, %v2536
        %v2783 = vmul.f32 %v2735, %v2538
        %v2784 = vmul.f32 %v2736, %v2540
        %v2785 = vmul.f32 %v2737, %v2542
        %v2786 = vmul.f32 %v2738, %v2544
        %v2787 = vmul.f32 %v2739, %v2546
        %v2788 = vmul.f32 %v2740, %v2548
        %v2789 = vsub.f32 %v2741, 0.28449672
        %v2790 = vsub.f32 %v2742, 0.28449672
        %v2791 = vsub.f32 %v2743, 0.28449672
        %v2792 = vsub.f32 %v2744, 0.28449672
        %v2793 = vsub.f32 %v2745, 0.28449672
        %v2794 = vsub.f32 %v2746, 0.28449672
        %v2795 = vsub.f32 %v2747, 0.28449672
        %v2796 = vsub.f32 %v2748, 0.28449672
        %v2797 = vsub.f32 %v2749, 0.28449672
        %v2798 = vsub.f32 %v2750, 0.28449672
        %v2799 = vsub.f32 %v2751, 0.28449672
        %v2800 = vsub.f32 %v2752, 0.28449672
        %v2801 = vsub.f32 %v2753, 0.28449672
        %v2802 = vsub.f32 %v2754, 0.28449672
        %v2803 = vsub.f32 %v2755, 0.28449672
        %v2804 = vsub.f32 %v2756, 0.28449672
        %v2805 = vsub.f32 %v2757, 0.28449672
        %v2806 = vsub.f32 %v2758, 0.28449672
        %v2807 = vsub.f32 %v2759, 0.28449672
        %v2808 = vsub.f32 %v2760, 0.28449672
        %v2809 = vsub.f32 %v2761, 0.28449672
        %v2810 = vsub.f32 %v2762, 0.28449672
        %v2811 = vsub.f32 %v2763, 0.28449672
        %v2812 = vsub.f32 %v2764, 0.28449672
        %v2813 = vsub.f32 %v2765, 0.28449672
        %v2814 = vsub.f32 %v2766, 0.28449672
        %v2815 = vsub.f32 %v2767, 0.28449672
        %v2816 = vsub.f32 %v2768, 0.28449672
        %v2817 = vsub.f32 %v2769, 0.28449672
        %v2818 = vsub.f32 %v2770, 0.28449672
        %v2819 = vsub.f32 %v2771, 0.28449672
        %v2820 = vsub.f32 %v2772, 0.28449672
        %v2821 = vsub.f32 %v2773, 0.28449672
        %v2822 = vsub.f32 %v2774, 0.28449672
        %v2823 = vsub.f32 %v2775, 0.28449672
        %v2824 = vsub.f32 %v2776, 0.28449672
        %v2825 = vsub.f32 %v2777, 0.28449672
        %v2826 = vsub.f32 %v2778, 0.28449672
        %v2827 = vsub.f32 %v2779, 0.28449672
        %v2828 = vsub.f32 %v2780, 0.28449672
        %v2829 = vsub.f32 %v2781, 0.28449672
        %v2830 = vsub.f32 %v2782, 0.28449672
        %v2831 = vsub.f32 %v2783, 0.28449672
        %v2832 = vsub.f32 %v2784, 0.28449672
        %v2833 = vsub.f32 %v2785, 0.28449672
        %v2834 = vsub.f32 %v2786, 0.28449672
        %v2835 = vsub.f32 %v2787, 0.28449672
        %v2836 = vsub.f32 %v2788, 0.28449672
        %v2837 = vmul.f32 %v2789, %v2454
        %v2838 = vmul.f32 %v2790, %v2456
        %v2839 = vmul.f32 %v2791, %v2458
        %v2840 = vmul.f32 %v2792, %v2460
        %v2841 = vmul.f32 %v2793, %v2462
        %v2842 = vmul.f32 %v2794, %v2464
        %v2843 = vmul.f32 %v2795, %v2466
        %v2844 = vmul.f32 %v2796, %v2468
        %v2845 = vmul.f32 %v2797, %v2470
        %v2846 = vmul.f32 %v2798, %v2472
        %v2847 = vmul.f32 %v2799, %v2474
        %v2848 = vmul.f32 %v2800, %v2476
        %v2849 = vmul.f32 %v2801, %v2478
        %v2850 = vmul.f32 %v2802, %v2480
        %v2851 = vmul.f32 %v2803, %v2482
        %v2852 = vmul.f32 %v2804, %v2484
        %v2853 = vmul.f32 %v2805, %v2486
        %v2854 = vmul.f32 %v2806, %v2488
        %v2855 = vmul.f32 %v2807, %v2490
        %v2856 = vmul.f32 %v2808, %v2492
        %v2857 = vmul.f32 %v2809, %v2494
        %v2858 = vmul.f32 %v2810, %v2496
        %v2859 = vmul.f32 %v2811, %v2498
        %v2860 = vmul.f32 %v2812, %v2500
        %v2861 = vmul.f32 %v2813, %v2502
        %v2862 = vmul.f32 %v2814, %v2504
        %v2863 = vmul.f32 %v2815, %v2506
        %v2864 = vmul.f32 %v2816, %v2508
        %v2865 = vmul.f32 %v2817, %v2510
        %v2866 = vmul.f32 %v2818, %v2512
        %v2867 = vmul.f32 %v2819, %v2514
        %v2868 = vmul.f32 %v2820, %v2516
        %v2869 = vmul.f32 %v2821, %v2518
        %v2870 = vmul.f32 %v2822, %v2520
        %v2871 = vmul.f32 %v2823, %v2522
        %v2872 = vmul.f32 %v2824, %v2524
        %v2873 = vmul.f32 %v2825, %v2526
        %v2874 = vmul.f32 %v2826, %v2528
        %v2875 = vmul.f32 %v2827, %v2530
        %v2876 = vmul.f32 %v2828, %v2532
        %v2877 = vmul.f32 %v2829, %v2534
        %v2878 = vmul.f32 %v2830, %v2536
        %v2879 = vmul.f32 %v2831, %v2538
        %v2880 = vmul.f32 %v2832, %v2540
        %v2881 = vmul.f32 %v2833, %v2542
        %v2882 = vmul.f32 %v2834, %v2544
        %v2883 = vmul.f32 %v2835, %v2546
        %v2884 = vmul.f32 %v2836, %v2548
        %v2885 = vadd.f32 %v2837, 0.2548296
        %v2886 = vadd.f32 %v2838, 0.2548296
        %v2887 = vadd.f32 %v2839, 0.2548296
        %v2888 = vadd.f32 %v2840, 0.2548296
        %v2889 = vadd.f32 %v2841, 0.2548296
        %v2890 = vadd.f32 %v2842, 0.2548296
        %v2891 = vadd.f32 %v2843, 0.2548296
        %v2892 = vadd.f32 %v2844, 0.2548296
        %v2893 = vadd.f32 %v2845, 0.2548296
        %v2894 = vadd.f32 %v2846, 0.2548296
        %v2895 = vadd.f32 %v2847, 0.2548296
        %v2896 = vadd.f32 %v2848, 0.2548296
        %v2897 = vadd.f32 %v2849, 0.2548296
        %v2898 = vadd.f32 %v2850, 0.2548296
        %v2899 = vadd.f32 %v2851, 0.2548296
        %v2900 = vadd.f32 %v2852, 0.2548296
        %v2901 = vadd.f32 %v2853, 0.2548296
        %v2902 = vadd.f32 %v2854, 0.2548296
        %v2903 = vadd.f32 %v2855, 0.2548296
        %v2904 = vadd.f32 %v2856, 0.2548296
        %v2905 = vadd.f32 %v2857, 0.2548296
        %v2906 = vadd.f32 %v2858, 0.2548296
        %v2907 = vadd.f32 %v2859, 0.2548296
        %v2908 = vadd.f32 %v2860, 0.2548296
        %v2909 = vadd.f32 %v2861, 0.2548296
        %v2910 = vadd.f32 %v2862, 0.2548296
        %v2911 = vadd.f32 %v2863, 0.2548296
        %v2912 = vadd.f32 %v2864, 0.2548296
        %v2913 = vadd.f32 %v2865, 0.2548296
        %v2914 = vadd.f32 %v2866, 0.2548296
        %v2915 = vadd.f32 %v2867, 0.2548296
        %v2916 = vadd.f32 %v2868, 0.2548296
        %v2917 = vadd.f32 %v2869, 0.2548296
        %v2918 = vadd.f32 %v2870, 0.2548296
        %v2919 = vadd.f32 %v2871, 0.2548296
        %v2920 = vadd.f32 %v2872, 0.2548296
        %v2921 = vadd.f32 %v2873, 0.2548296
        %v2922 = vadd.f32 %v2874, 0.2548296
        %v2923 = vadd.f32 %v2875, 0.2548296
        %v2924 = vadd.f32 %v2876, 0.2548296
        %v2925 = vadd.f32 %v2877, 0.2548296
        %v2926 = vadd.f32 %v2878, 0.2548296
        %v2927 = vadd.f32 %v2879, 0.2548296
        %v2928 = vadd.f32 %v2880, 0.2548296
        %v2929 = vadd.f32 %v2881, 0.2548296
        %v2930 = vadd.f32 %v2882, 0.2548296
        %v2931 = vadd.f32 %v2883, 0.2548296
        %v2932 = vadd.f32 %v2884, 0.2548296
        %v2933 = vmul.f32 %v2885, %v2454
        %v2934 = vmul.f32 %v2886, %v2456
        %v2935 = vmul.f32 %v2887, %v2458
        %v2936 = vmul.f32 %v2888, %v2460
        %v2937 = vmul.f32 %v2889, %v2462
        %v2938 = vmul.f32 %v2890, %v2464
        %v2939 = vmul.f32 %v2891, %v2466
        %v2940 = vmul.f32 %v2892, %v2468
        %v2941 = vmul.f32 %v2893, %v2470
        %v2942 = vmul.f32 %v2894, %v2472
        %v2943 = vmul.f32 %v2895, %v2474
        %v2944 = vmul.f32 %v2896, %v2476
        %v2945 = vmul.f32 %v2897, %v2478
        %v2946 = vmul.f32 %v2898, %v2480
        %v2947 = vmul.f32 %v2899, %v2482
        %v2948 = vmul.f32 %v2900, %v2484
        %v2949 = vmul.f32 %v2901, %v2486
        %v2950 = vmul.f32 %v2902, %v2488
        %v2951 = vmul.f32 %v2903, %v2490
        %v2952 = vmul.f32 %v2904, %v2492
        %v2953 = vmul.f32 %v2905, %v2494
        %v2954 = vmul.f32 %v2906, %v2496
        %v2955 = vmul.f32 %v2907, %v2498
        %v2956 = vmul.f32 %v2908, %v2500
        %v2957 = vmul.f32 %v2909, %v2502
        %v2958 = vmul.f32 %v2910, %v2504
        %v2959 = vmul.f32 %v2911, %v2506
        %v2960 = vmul.f32 %v2912, %v2508
        %v2961 = vmul.f32 %v2913, %v2510
        %v2962 = vmul.f32 %v2914, %v2512
        %v2963 = vmul.f32 %v2915, %v2514
        %v2964 = vmul.f32 %v2916, %v2516
        %v2965 = vmul.f32 %v2917, %v2518
        %v2966 = vmul.f32 %v2918, %v2520
        %v2967 = vmul.f32 %v2919, %v2522
        %v2968 = vmul.f32 %v2920, %v2524
        %v2969 = vmul.f32 %v2921, %v2526
        %v2970 = vmul.f32 %v2922, %v2528
        %v2971 = vmul.f32 %v2923, %v2530
        %v2972 = vmul.f32 %v2924, %v2532
        %v2973 = vmul.f32 %v2925, %v2534
        %v2974 = vmul.f32 %v2926, %v2536
        %v2975 = vmul.f32 %v2927, %v2538
        %v2976 = vmul.f32 %v2928, %v2540
        %v2977 = vmul.f32 %v2929, %v2542
        %v2978 = vmul.f32 %v2930, %v2544
        %v2979 = vmul.f32 %v2931, %v2546
        %v2980 = vmul.f32 %v2932, %v2548
        %v2981 = vsub.f32 0.0, %v2309
        %v2982 = vsub.f32 0.0, %v2310
        %v2983 = vsub.f32 0.0, %v2311
        %v2984 = vsub.f32 0.0, %v2312
        %v2985 = vsub.f32 0.0, %v2313
        %v2986 = vsub.f32 0.0, %v2314
        %v2987 = vsub.f32 0.0, %v2315
        %v2988 = vsub.f32 0.0, %v2316
        %v2989 = vsub.f32 0.0, %v2317
        %v2990 = vsub.f32 0.0, %v2318
        %v2991 = vsub.f32 0.0, %v2319
        %v2992 = vsub.f32 0.0, %v2320
        %v2993 = vsub.f32 0.0, %v2321
        %v2994 = vsub.f32 0.0, %v2322
        %v2995 = vsub.f32 0.0, %v2323
        %v2996 = vsub.f32 0.0, %v2324
        %v2997 = vsub.f32 0.0, %v2325
        %v2998 = vsub.f32 0.0, %v2326
        %v2999 = vsub.f32 0.0, %v2327
        %v3000 = vsub.f32 0.0, %v2328
        %v3001 = vsub.f32 0.0, %v2329
        %v3002 = vsub.f32 0.0, %v2330
        %v3003 = vsub.f32 0.0, %v2331
        %v3004 = vsub.f32 0.0, %v2332
        %v3005 = vsub.f32 0.0, %v2333
        %v3006 = vsub.f32 0.0, %v2334
        %v3007 = vsub.f32 0.0, %v2335
        %v3008 = vsub.f32 0.0, %v2336
        %v3009 = vsub.f32 0.0, %v2337
        %v3010 = vsub.f32 0.0, %v2338
        %v3011 = vsub.f32 0.0, %v2339
        %v3012 = vsub.f32 0.0, %v2340
        %v3013 = vsub.f32 0.0, %v2341
        %v3014 = vsub.f32 0.0, %v2342
        %v3015 = vsub.f32 0.0, %v2343
        %v3016 = vsub.f32 0.0, %v2344
        %v3017 = vsub.f32 0.0, %v2345
        %v3018 = vsub.f32 0.0, %v2346
        %v3019 = vsub.f32 0.0, %v2347
        %v3020 = vsub.f32 0.0, %v2348
        %v3021 = vsub.f32 0.0, %v2349
        %v3022 = vsub.f32 0.0, %v2350
        %v3023 = vsub.f32 0.0, %v2351
        %v3024 = vsub.f32 0.0, %v2352
        %v3025 = vsub.f32 0.0, %v2353
        %v3026 = vsub.f32 0.0, %v2354
        %v3027 = vsub.f32 0.0, %v2355
        %v3028 = vsub.f32 0.0, %v2356
        %v3029 = vmul.f32 %v2981, %v2309
        %v3030 = vmul.f32 %v2982, %v2310
        %v3031 = vmul.f32 %v2983, %v2311
        %v3032 = vmul.f32 %v2984, %v2312
        %v3033 = vmul.f32 %v2985, %v2313
        %v3034 = vmul.f32 %v2986, %v2314
        %v3035 = vmul.f32 %v2987, %v2315
        %v3036 = vmul.f32 %v2988, %v2316
        %v3037 = vmul.f32 %v2989, %v2317
        %v3038 = vmul.f32 %v2990, %v2318
        %v3039 = vmul.f32 %v2991, %v2319
        %v3040 = vmul.f32 %v2992, %v2320
        %v3041 = vmul.f32 %v2993, %v2321
        %v3042 = vmul.f32 %v2994, %v2322
        %v3043 = vmul.f32 %v2995, %v2323
        %v3044 = vmul.f32 %v2996, %v2324
        %v3045 = vmul.f32 %v2997, %v2325
        %v3046 = vmul.f32 %v2998, %v2326
        %v3047 = vmul.f32 %v2999, %v2327
        %v3048 = vmul.f32 %v3000, %v2328
        %v3049 = vmul.f32 %v3001, %v2329
        %v3050 = vmul.f32 %v3002, %v2330
        %v3051 = vmul.f32 %v3003, %v2331
        %v3052 = vmul.f32 %v3004, %v2332
        %v3053 = vmul.f32 %v3005, %v2333
        %v3054 = vmul.f32 %v3006, %v2334
        %v3055 = vmul.f32 %v3007, %v2335
        %v3056 = vmul.f32 %v3008, %v2336
        %v3057 = vmul.f32 %v3009, %v2337
        %v3058 = vmul.f32 %v3010, %v2338
        %v3059 = vmul.f32 %v3011, %v2339
        %v3060 = vmul.f32 %v3012, %v2340
        %v3061 = vmul.f32 %v3013, %v2341
        %v3062 = vmul.f32 %v3014, %v2342
        %v3063 = vmul.f32 %v3015, %v2343
        %v3064 = vmul.f32 %v3016, %v2344
        %v3065 = vmul.f32 %v3017, %v2345
        %v3066 = vmul.f32 %v3018, %v2346
        %v3067 = vmul.f32 %v3019, %v2347
        %v3068 = vmul.f32 %v3020, %v2348
        %v3069 = vmul.f32 %v3021, %v2349
        %v3070 = vmul.f32 %v3022, %v2350
        %v3071 = vmul.f32 %v3023, %v2351
        %v3072 = vmul.f32 %v3024, %v2352
        %v3073 = vmul.f32 %v3025, %v2353
        %v3074 = vmul.f32 %v3026, %v2354
        %v3075 = vmul.f32 %v3027, %v2355
        %v3076 = vmul.f32 %v3028, %v2356
        %v3077 = vmul.f32 %v3029, 1.442695
        %v3078 = vpow.pop %v3077
        %v3079 = vmul.f32 %v3030, 1.442695
        %v3080 = vpow.pop %v3079
        %v3081 = vmul.f32 %v3031, 1.442695
        %v3082 = vpow.pop %v3081
        %v3083 = vmul.f32 %v3032, 1.442695
        %v3084 = vpow.pop %v3083
        %v3085 = vmul.f32 %v3033, 1.442695
        %v3086 = vpow.pop %v3085
        %v3087 = vmul.f32 %v3034, 1.442695
        %v3088 = vpow.pop %v3087
        %v3089 = vmul.f32 %v3035, 1.442695
        %v3090 = vpow.pop %v3089
        %v3091 = vmul.f32 %v3036, 1.442695
        %v3092 = vpow.pop %v3091
        %v3093 = vmul.f32 %v3037, 1.442695
        %v3094 = vpow.pop %v3093
        %v3095 = vmul.f32 %v3038, 1.442695
        %v3096 = vpow.pop %v3095
        %v3097 = vmul.f32 %v3039, 1.442695
        %v3098 = vpow.pop %v3097
        %v3099 = vmul.f32 %v3040, 1.442695
        %v3100 = vpow.pop %v3099
        %v3101 = vmul.f32 %v3041, 1.442695
        %v3102 = vpow.pop %v3101
        %v3103 = vmul.f32 %v3042, 1.442695
        %v3104 = vpow.pop %v3103
        %v3105 = vmul.f32 %v3043, 1.442695
        %v3106 = vpow.pop %v3105
        %v3107 = vmul.f32 %v3044, 1.442695
        %v3108 = vpow.pop %v3107
        %v3109 = vmul.f32 %v3045, 1.442695
        %v3110 = vpow.pop %v3109
        %v3111 = vmul.f32 %v3046, 1.442695
        %v3112 = vpow.pop %v3111
        %v3113 = vmul.f32 %v3047, 1.442695
        %v3114 = vpow.pop %v3113
        %v3115 = vmul.f32 %v3048, 1.442695
        %v3116 = vpow.pop %v3115
        %v3117 = vmul.f32 %v3049, 1.442695
        %v3118 = vpow.pop %v3117
        %v3119 = vmul.f32 %v3050, 1.442695
        %v3120 = vpow.pop %v3119
        %v3121 = vmul.f32 %v3051, 1.442695
        %v3122 = vpow.pop %v3121
        %v3123 = vmul.f32 %v3052, 1.442695
        %v3124 = vpow.pop %v3123
        %v3125 = vmul.f32 %v3053, 1.442695
        %v3126 = vpow.pop %v3125
        %v3127 = vmul.f32 %v3054, 1.442695
        %v3128 = vpow.pop %v3127
        %v3129 = vmul.f32 %v3055, 1.442695
        %v3130 = vpow.pop %v3129
        %v3131 = vmul.f32 %v3056, 1.442695
        %v3132 = vpow.pop %v3131
        %v3133 = vmul.f32 %v3057, 1.442695
        %v3134 = vpow.pop %v3133
        %v3135 = vmul.f32 %v3058, 1.442695
        %v3136 = vpow.pop %v3135
        %v3137 = vmul.f32 %v3059, 1.442695
        %v3138 = vpow.pop %v3137
        %v3139 = vmul.f32 %v3060, 1.442695
        %v3140 = vpow.pop %v3139
        %v3141 = vmul.f32 %v3061, 1.442695
        %v3142 = vpow.pop %v3141
        %v3143 = vmul.f32 %v3062, 1.442695
        %v3144 = vpow.pop %v3143
        %v3145 = vmul.f32 %v3063, 1.442695
        %v3146 = vpow.pop %v3145
        %v3147 = vmul.f32 %v3064, 1.442695
        %v3148 = vpow.pop %v3147
        %v3149 = vmul.f32 %v3065, 1.442695
        %v3150 = vpow.pop %v3149
        %v3151 = vmul.f32 %v3066, 1.442695
        %v3152 = vpow.pop %v3151
        %v3153 = vmul.f32 %v3067, 1.442695
        %v3154 = vpow.pop %v3153
        %v3155 = vmul.f32 %v3068, 1.442695
        %v3156 = vpow.pop %v3155
        %v3157 = vmul.f32 %v3069, 1.442695
        %v3158 = vpow.pop %v3157
        %v3159 = vmul.f32 %v3070, 1.442695
        %v3160 = vpow.pop %v3159
        %v3161 = vmul.f32 %v3071, 1.442695
        %v3162 = vpow.pop %v3161
        %v3163 = vmul.f32 %v3072, 1.442695
        %v3164 = vpow.pop %v3163
        %v3165 = vmul.f32 %v3073, 1.442695
        %v3166 = vpow.pop %v3165
        %v3167 = vmul.f32 %v3074, 1.442695
        %v3168 = vpow.pop %v3167
        %v3169 = vmul.f32 %v3075, 1.442695
        %v3170 = vpow.pop %v3169
        %v3171 = vmul.f32 %v3076, 1.442695
        %v3172 = vpow.pop %v3171
        %v3173 = vmul.f32 %v2933, %v3078
        %v3174 = vmul.f32 %v2934, %v3080
        %v3175 = vmul.f32 %v2935, %v3082
        %v3176 = vmul.f32 %v2936, %v3084
        %v3177 = vmul.f32 %v2937, %v3086
        %v3178 = vmul.f32 %v2938, %v3088
        %v3179 = vmul.f32 %v2939, %v3090
        %v3180 = vmul.f32 %v2940, %v3092
        %v3181 = vmul.f32 %v2941, %v3094
        %v3182 = vmul.f32 %v2942, %v3096
        %v3183 = vmul.f32 %v2943, %v3098
        %v3184 = vmul.f32 %v2944, %v3100
        %v3185 = vmul.f32 %v2945, %v3102
        %v3186 = vmul.f32 %v2946, %v3104
        %v3187 = vmul.f32 %v2947, %v3106
        %v3188 = vmul.f32 %v2948, %v3108
        %v3189 = vmul.f32 %v2949, %v3110
        %v3190 = vmul.f32 %v2950, %v3112
        %v3191 = vmul.f32 %v2951, %v3114
        %v3192 = vmul.f32 %v2952, %v3116
        %v3193 = vmul.f32 %v2953, %v3118
        %v3194 = vmul.f32 %v2954, %v3120
        %v3195 = vmul.f32 %v2955, %v3122
        %v3196 = vmul.f32 %v2956, %v3124
        %v3197 = vmul.f32 %v2957, %v3126
        %v3198 = vmul.f32 %v2958, %v3128
        %v3199 = vmul.f32 %v2959, %v3130
        %v3200 = vmul.f32 %v2960, %v3132
        %v3201 = vmul.f32 %v2961, %v3134
        %v3202 = vmul.f32 %v2962, %v3136
        %v3203 = vmul.f32 %v2963, %v3138
        %v3204 = vmul.f32 %v2964, %v3140
        %v3205 = vmul.f32 %v2965, %v3142
        %v3206 = vmul.f32 %v2966, %v3144
        %v3207 = vmul.f32 %v2967, %v3146
        %v3208 = vmul.f32 %v2968, %v3148
        %v3209 = vmul.f32 %v2969, %v3150
        %v3210 = vmul.f32 %v2970, %v3152
        %v3211 = vmul.f32 %v2971, %v3154
        %v3212 = vmul.f32 %v2972, %v3156
        %v3213 = vmul.f32 %v2973, %v3158
        %v3214 = vmul.f32 %v2974, %v3160
        %v3215 = vmul.f32 %v2975, %v3162
        %v3216 = vmul.f32 %v2976, %v3164
        %v3217 = vmul.f32 %v2977, %v3166
        %v3218 = vmul.f32 %v2978, %v3168
        %v3219 = vmul.f32 %v2979, %v3170
        %v3220 = vmul.f32 %v2980, %v3172
        %v3221 = vsub.f32 1.0, %v3173
        %v3222 = vsub.f32 1.0, %v3174
        %v3223 = vsub.f32 1.0, %v3175
        %v3224 = vsub.f32 1.0, %v3176
        %v3225 = vsub.f32 1.0, %v3177
        %v3226 = vsub.f32 1.0, %v3178
        %v3227 = vsub.f32 1.0, %v3179
        %v3228 = vsub.f32 1.0, %v3180
        %v3229 = vsub.f32 1.0, %v3181
        %v3230 = vsub.f32 1.0, %v3182
        %v3231 = vsub.f32 1.0, %v3183
        %v3232 = vsub.f32 1.0, %v3184
        %v3233 = vsub.f32 1.0, %v3185
        %v3234 = vsub.f32 1.0, %v3186
        %v3235 = vsub.f32 1.0, %v3187
        %v3236 = vsub.f32 1.0, %v3188
        %v3237 = vsub.f32 1.0, %v3189
        %v3238 = vsub.f32 1.0, %v3190
        %v3239 = vsub.f32 1.0, %v3191
        %v3240 = vsub.f32 1.0, %v3192
        %v3241 = vsub.f32 1.0, %v3193
        %v3242 = vsub.f32 1.0, %v3194
        %v3243 = vsub.f32 1.0, %v3195
        %v3244 = vsub.f32 1.0, %v3196
        %v3245 = vsub.f32 1.0, %v3197
        %v3246 = vsub.f32 1.0, %v3198
        %v3247 = vsub.f32 1.0, %v3199
        %v3248 = vsub.f32 1.0, %v3200
        %v3249 = vsub.f32 1.0, %v3201
        %v3250 = vsub.f32 1.0, %v3202
        %v3251 = vsub.f32 1.0, %v3203
        %v3252 = vsub.f32 1.0, %v3204
        %v3253 = vsub.f32 1.0, %v3205
        %v3254 = vsub.f32 1.0, %v3206
        %v3255 = vsub.f32 1.0, %v3207
        %v3256 = vsub.f32 1.0, %v3208
        %v3257 = vsub.f32 1.0, %v3209
        %v3258 = vsub.f32 1.0, %v3210
        %v3259 = vsub.f32 1.0, %v3211
        %v3260 = vsub.f32 1.0, %v3212
        %v3261 = vsub.f32 1.0, %v3213
        %v3262 = vsub.f32 1.0, %v3214
        %v3263 = vsub.f32 1.0, %v3215
        %v3264 = vsub.f32 1.0, %v3216
        %v3265 = vsub.f32 1.0, %v3217
        %v3266 = vsub.f32 1.0, %v3218
        %v3267 = vsub.f32 1.0, %v3219
        %v3268 = vsub.f32 1.0, %v3220
        %v3269 = vmul.f32 %v2261, %v3221
        %v3270 = vmul.f32 %v2262, %v3222
        %v3271 = vmul.f32 %v2263, %v3223
        %v3272 = vmul.f32 %v2264, %v3224
        %v3273 = vmul.f32 %v2265, %v3225
        %v3274 = vmul.f32 %v2266, %v3226
        %v3275 = vmul.f32 %v2267, %v3227
        %v3276 = vmul.f32 %v2268, %v3228
        %v3277 = vmul.f32 %v2269, %v3229
        %v3278 = vmul.f32 %v2270, %v3230
        %v3279 = vmul.f32 %v2271, %v3231
        %v3280 = vmul.f32 %v2272, %v3232
        %v3281 = vmul.f32 %v2273, %v3233
        %v3282 = vmul.f32 %v2274, %v3234
        %v3283 = vmul.f32 %v2275, %v3235
        %v3284 = vmul.f32 %v2276, %v3236
        %v3285 = vmul.f32 %v2277, %v3237
        %v3286 = vmul.f32 %v2278, %v3238
        %v3287 = vmul.f32 %v2279, %v3239
        %v3288 = vmul.f32 %v2280, %v3240
        %v3289 = vmul.f32 %v2281, %v3241
        %v3290 = vmul.f32 %v2282, %v3242
        %v3291 = vmul.f32 %v2283, %v3243
        %v3292 = vmul.f32 %v2284, %v3244
        %v3293 = vmul.f32 %v2285, %v3245
        %v3294 = vmul.f32 %v2286, %v3246
        %v3295 = vmul.f32 %v2287, %v3247
        %v3296 = vmul.f32 %v2288, %v3248
        %v3297 = vmul.f32 %v2289, %v3249
        %v3298 = vmul.f32 %v2290, %v3250
        %v3299 = vmul.f32 %v2291, %v3251
        %v3300 = vmul.f32 %v2292, %v3252
        %v3301 = vmul.f32 %v2293, %v3253
        %v3302 = vmul.f32 %v2294, %v3254
        %v3303 = vmul.f32 %v2295, %v3255
        %v3304 = vmul.f32 %v2296, %v3256
        %v3305 = vmul.f32 %v2297, %v3257
        %v3306 = vmul.f32 %v2298, %v3258
        %v3307 = vmul.f32 %v2299, %v3259
        %v3308 = vmul.f32 %v2300, %v3260
        %v3309 = vmul.f32 %v2301, %v3261
        %v3310 = vmul.f32 %v2302, %v3262
        %v3311 = vmul.f32 %v2303, %v3263
        %v3312 = vmul.f32 %v2304, %v3264
        %v3313 = vmul.f32 %v2305, %v3265
        %v3314 = vmul.f32 %v2306, %v3266
        %v3315 = vmul.f32 %v2307, %v3267
        %v3316 = vmul.f32 %v2308, %v3268
        %v3317 = vadd.f32 %v3269, 1.0
        %v3318 = vadd.f32 %v3270, 1.0
        %v3319 = vadd.f32 %v3271, 1.0
        %v3320 = vadd.f32 %v3272, 1.0
        %v3321 = vadd.f32 %v3273, 1.0
        %v3322 = vadd.f32 %v3274, 1.0
        %v3323 = vadd.f32 %v3275, 1.0
        %v3324 = vadd.f32 %v3276, 1.0
        %v3325 = vadd.f32 %v3277, 1.0
        %v3326 = vadd.f32 %v3278, 1.0
        %v3327 = vadd.f32 %v3279, 1.0
        %v3328 = vadd.f32 %v3280, 1.0
        %v3329 = vadd.f32 %v3281, 1.0
        %v3330 = vadd.f32 %v3282, 1.0
        %v3331 = vadd.f32 %v3283, 1.0
        %v3332 = vadd.f32 %v3284, 1.0
        %v3333 = vadd.f32 %v3285, 1.0
        %v3334 = vadd.f32 %v3286, 1.0
        %v3335 = vadd.f32 %v3287, 1.0
        %v3336 = vadd.f32 %v3288, 1.0
        %v3337 = vadd.f32 %v3289, 1.0
        %v3338 = vadd.f32 %v3290, 1.0
        %v3339 = vadd.f32 %v3291, 1.0
        %v3340 = vadd.f32 %v3292, 1.0
        %v3341 = vadd.f32 %v3293, 1.0
        %v3342 = vadd.f32 %v3294, 1.0
        %v3343 = vadd.f32 %v3295, 1.0
        %v3344 = vadd.f32 %v3296, 1.0
        %v3345 = vadd.f32 %v3297, 1.0
        %v3346 = vadd.f32 %v3298, 1.0
        %v3347 = vadd.f32 %v3299, 1.0
        %v3348 = vadd.f32 %v3300, 1.0
        %v3349 = vadd.f32 %v3301, 1.0
        %v3350 = vadd.f32 %v3302, 1.0
        %v3351 = vadd.f32 %v3303, 1.0
        %v3352 = vadd.f32 %v3304, 1.0
        %v3353 = vadd.f32 %v3305, 1.0
        %v3354 = vadd.f32 %v3306, 1.0
        %v3355 = vadd.f32 %v3307, 1.0
        %v3356 = vadd.f32 %v3308, 1.0
        %v3357 = vadd.f32 %v3309, 1.0
        %v3358 = vadd.f32 %v3310, 1.0
        %v3359 = vadd.f32 %v3311, 1.0
        %v3360 = vadd.f32 %v3312, 1.0
        %v3361 = vadd.f32 %v3313, 1.0
        %v3362 = vadd.f32 %v3314, 1.0
        %v3363 = vadd.f32 %v3315, 1.0
        %v3364 = vadd.f32 %v3316, 1.0
        %v3365 = vmul.f32 %v2117, %v3317
        %v3366 = vmul.f32 %v2118, %v3318
        %v3367 = vmul.f32 %v2119, %v3319
        %v3368 = vmul.f32 %v2120, %v3320
        %v3369 = vmul.f32 %v2121, %v3321
        %v3370 = vmul.f32 %v2122, %v3322
        %v3371 = vmul.f32 %v2123, %v3323
        %v3372 = vmul.f32 %v2124, %v3324
        %v3373 = vmul.f32 %v2125, %v3325
        %v3374 = vmul.f32 %v2126, %v3326
        %v3375 = vmul.f32 %v2127, %v3327
        %v3376 = vmul.f32 %v2128, %v3328
        %v3377 = vmul.f32 %v2129, %v3329
        %v3378 = vmul.f32 %v2130, %v3330
        %v3379 = vmul.f32 %v2131, %v3331
        %v3380 = vmul.f32 %v2132, %v3332
        %v3381 = vmul.f32 %v2133, %v3333
        %v3382 = vmul.f32 %v2134, %v3334
        %v3383 = vmul.f32 %v2135, %v3335
        %v3384 = vmul.f32 %v2136, %v3336
        %v3385 = vmul.f32 %v2137, %v3337
        %v3386 = vmul.f32 %v2138, %v3338
        %v3387 = vmul.f32 %v2139, %v3339
        %v3388 = vmul.f32 %v2140, %v3340
        %v3389 = vmul.f32 %v2141, %v3341
        %v3390 = vmul.f32 %v2142, %v3342
        %v3391 = vmul.f32 %v2143, %v3343
        %v3392 = vmul.f32 %v2144, %v3344
        %v3393 = vmul.f32 %v2145, %v3345
        %v3394 = vmul.f32 %v2146, %v3346
        %v3395 = vmul.f32 %v2147, %v3347
        %v3396 = vmul.f32 %v2148, %v3348
        %v3397 = vmul.f32 %v2149, %v3349
        %v3398 = vmul.f32 %v2150, %v3350
        %v3399 = vmul.f32 %v2151, %v3351
        %v3400 = vmul.f32 %v2152, %v3352
        %v3401 = vmul.f32 %v2153, %v3353
        %v3402 = vmul.f32 %v2154, %v3354
        %v3403 = vmul.f32 %v2155, %v3355
        %v3404 = vmul.f32 %v2156, %v3356
        %v3405 = vmul.f32 %v2157, %v3357
        %v3406 = vmul.f32 %v2158, %v3358
        %v3407 = vmul.f32 %v2159, %v3359
        %v3408 = vmul.f32 %v2160, %v3360
        %v3409 = vmul.f32 %v2161, %v3361
        %v3410 = vmul.f32 %v2162, %v3362
        %v3411 = vmul.f32 %v2163, %v3363
        %v3412 = vmul.f32 %v2164, %v3364
        %3413 = vrot.lane.b32.xlu0 %v3365, 1
        %v3414 = vpop.permute.xlu0 %3413
        %3415 = vrot.lane.b32.xlu0 %v3368, 1
        %v3416 = vpop.permute.xlu0 %3415
        %3417 = vrot.lane.b32.xlu0 %v3371, 1
        %v3418 = vpop.permute.xlu0 %3417
        %3419 = vrot.lane.b32.xlu0 %v3374, 1
        %v3420 = vpop.permute.xlu0 %3419
        %3421 = vrot.lane.b32.xlu0 %v3377, 1
        %v3422 = vpop.permute.xlu0 %3421
        %3423 = vrot.lane.b32.xlu0 %v3380, 1
        %v3424 = vpop.permute.xlu0 %3423
        %3425 = vrot.lane.b32.xlu0 %v3383, 1
        %v3426 = vpop.permute.xlu0 %3425
        %3427 = vrot.lane.b32.xlu0 %v3386, 1
        %v3428 = vpop.permute.xlu0 %3427
        %3429 = vrot.lane.b32.xlu0 %v3389, 1
        %v3430 = vpop.permute.xlu0 %3429
        %3431 = vrot.lane.b32.xlu0 %v3392, 1
        %v3432 = vpop.permute.xlu0 %3431
        %3433 = vrot.lane.b32.xlu0 %v3395, 1
        %v3434 = vpop.permute.xlu0 %3433
        %3435 = vrot.lane.b32.xlu0 %v3398, 1
        %v3436 = vpop.permute.xlu0 %3435
        %3437 = vrot.lane.b32.xlu0 %v3401, 1
        %v3438 = vpop.permute.xlu0 %3437
        %3439 = vrot.lane.b32.xlu0 %v3404, 1
        %v3440 = vpop.permute.xlu0 %3439
        %3441 = vrot.lane.b32.xlu0 %v3407, 1
        %v3442 = vpop.permute.xlu0 %3441
        %3443 = vrot.lane.b32.xlu0 %v3410, 1
        %v3444 = vpop.permute.xlu0 %3443
        %3445 = vrot.lane.b32.xlu0 %v3366, 1
        %v3446 = vpop.permute.xlu0 %3445
        %3447 = vrot.lane.b32.xlu0 %v3369, 1
        %v3448 = vpop.permute.xlu0 %3447
        %3449 = vrot.lane.b32.xlu0 %v3372, 1
        %v3450 = vpop.permute.xlu0 %3449
        %3451 = vrot.lane.b32.xlu0 %v3375, 1
        %v3452 = vpop.permute.xlu0 %3451
        %3453 = vrot.lane.b32.xlu0 %v3378, 1
        %v3454 = vpop.permute.xlu0 %3453
        %3455 = vrot.lane.b32.xlu0 %v3381, 1
        %v3456 = vpop.permute.xlu0 %3455
        %3457 = vrot.lane.b32.xlu0 %v3384, 1
        %v3458 = vpop.permute.xlu0 %3457
        %3459 = vrot.lane.b32.xlu0 %v3387, 1
        %v3460 = vpop.permute.xlu0 %3459
        %3461 = vrot.lane.b32.xlu0 %v3390, 1
        %v3462 = vpop.permute.xlu0 %3461
        %3463 = vrot.lane.b32.xlu0 %v3393, 1
        %v3464 = vpop.permute.xlu0 %3463
        %3465 = vrot.lane.b32.xlu0 %v3396, 1
        %v3466 = vpop.permute.xlu0 %3465
        %3467 = vrot.lane.b32.xlu0 %v3399, 1
        %v3468 = vpop.permute.xlu0 %3467
        %3469 = vrot.lane.b32.xlu0 %v3402, 1
        %v3470 = vpop.permute.xlu0 %3469
        %3471 = vrot.lane.b32.xlu0 %v3405, 1
        %v3472 = vpop.permute.xlu0 %3471
        %3473 = vrot.lane.b32.xlu0 %v3408, 1
        %v3474 = vpop.permute.xlu0 %3473
        %3475 = vrot.lane.b32.xlu0 %v3411, 1
        %v3476 = vpop.permute.xlu0 %3475
        %3477 = vrot.lane.b32.xlu0 %v3367, 1
        %v3478 = vpop.permute.xlu0 %3477
        %3479 = vrot.lane.b32.xlu0 %v3370, 1
        %v3480 = vpop.permute.xlu0 %3479
        %3481 = vrot.lane.b32.xlu0 %v3373, 1
        %v3482 = vpop.permute.xlu0 %3481
        %3483 = vrot.lane.b32.xlu0 %v3376, 1
        %v3484 = vpop.permute.xlu0 %3483
        %3485 = vrot.lane.b32.xlu0 %v3379, 1
        %v3486 = vpop.permute.xlu0 %3485
        %3487 = vrot.lane.b32.xlu0 %v3382, 1
        %v3488 = vpop.permute.xlu0 %3487
        %3489 = vrot.lane.b32.xlu0 %v3385, 1
        %v3490 = vpop.permute.xlu0 %3489
        %3491 = vrot.lane.b32.xlu0 %v3388, 1
        %v3492 = vpop.permute.xlu0 %3491
        %3493 = vrot.lane.b32.xlu0 %v3391, 1
        %v3494 = vpop.permute.xlu0 %3493
        %3495 = vrot.lane.b32.xlu0 %v3394, 1
        %v3496 = vpop.permute.xlu0 %3495
        %3497 = vrot.lane.b32.xlu0 %v3397, 1
        %v3498 = vpop.permute.xlu0 %3497
        %3499 = vrot.lane.b32.xlu0 %v3400, 1
        %v3500 = vpop.permute.xlu0 %3499
        %3501 = vrot.lane.b32.xlu0 %v3403, 1
        %v3502 = vpop.permute.xlu0 %3501
        %3503 = vrot.lane.b32.xlu0 %v3406, 1
        %v3504 = vpop.permute.xlu0 %3503
        %3505 = vrot.lane.b32.xlu0 %v3409, 1
        %v3506 = vpop.permute.xlu0 %3505
        %3507 = vrot.lane.b32.xlu0 %v3412, 1
        %v3508 = vpop.permute.xlu0 %3507
        %v3509 = vsel %vm651, %v3446, %v3478
        %v3510 = vsel %vm651, %v3448, %v3480
        %v3511 = vsel %vm651, %v3450, %v3482
        %v3512 = vsel %vm651, %v3452, %v3484
        %v3513 = vsel %vm651, %v3454, %v3486
        %v3514 = vsel %vm651, %v3456, %v3488
        %v3515 = vsel %vm651, %v3458, %v3490
        %v3516 = vsel %vm651, %v3460, %v3492
        %v3517 = vsel %vm651, %v3462, %v3494
        %v3518 = vsel %vm651, %v3464, %v3496
        %v3519 = vsel %vm651, %v3466, %v3498
        %v3520 = vsel %vm651, %v3468, %v3500
        %v3521 = vsel %vm651, %v3470, %v3502
        %v3522 = vsel %vm651, %v3472, %v3504
        %v3523 = vsel %vm651, %v3474, %v3506
        %v3524 = vsel %vm651, %v3476, %v3508
        %v3525 = vsel %vm651, %v3414, %v3446
        %v3526 = vsel %vm651, %v3416, %v3448
        %v3527 = vsel %vm651, %v3418, %v3450
        %v3528 = vsel %vm651, %v3420, %v3452
        %v3529 = vsel %vm651, %v3422, %v3454
        %v3530 = vsel %vm651, %v3424, %v3456
        %v3531 = vsel %vm651, %v3426, %v3458
        %v3532 = vsel %vm651, %v3428, %v3460
        %v3533 = vsel %vm651, %v3430, %v3462
        %v3534 = vsel %vm651, %v3432, %v3464
        %v3535 = vsel %vm651, %v3434, %v3466
        %v3536 = vsel %vm651, %v3436, %v3468
        %v3537 = vsel %vm651, %v3438, %v3470
        %v3538 = vsel %vm651, %v3440, %v3472
        %v3539 = vsel %vm651, %v3442, %v3474
        %v3540 = vsel %vm651, %v3444, %v3476
        %v3541 = vsel %vm651, %v3478, %v3414
        %v3542 = vsel %vm651, %v3480, %v3416
        %v3543 = vsel %vm651, %v3482, %v3418
        %v3544 = vsel %vm651, %v3484, %v3420
        %v3545 = vsel %vm651, %v3486, %v3422
        %v3546 = vsel %vm651, %v3488, %v3424
        %v3547 = vsel %vm651, %v3490, %v3426
        %v3548 = vsel %vm651, %v3492, %v3428
        %v3549 = vsel %vm651, %v3494, %v3430
        %v3550 = vsel %vm651, %v3496, %v3432
        %v3551 = vsel %vm651, %v3498, %v3434
        %v3552 = vsel %vm651, %v3500, %v3436
        %v3553 = vsel %vm651, %v3502, %v3438
        %v3554 = vsel %vm651, %v3504, %v3440
        %v3555 = vsel %vm651, %v3506, %v3442
        %v3556 = vsel %vm651, %v3508, %v3444
        %v3557 = vsel %vm713, %v3541, 0.0
        %v3558 = vsel %vm714, %v3525, 0.0
        %v3559 = vsel %vm715, %v3509, 0.0
        %v3560 = vsel %vm713, %v3542, 0.0
        %v3561 = vsel %vm714, %v3526, 0.0
        %v3562 = vsel %vm715, %v3510, 0.0
        %v3563 = vsel %vm713, %v3543, 0.0
        %v3564 = vsel %vm714, %v3527, 0.0
        %v3565 = vsel %vm715, %v3511, 0.0
        %v3566 = vsel %vm713, %v3544, 0.0
        %v3567 = vsel %vm714, %v3528, 0.0
        %v3568 = vsel %vm715, %v3512, 0.0
        %v3569 = vsel %vm713, %v3545, 0.0
        %v3570 = vsel %vm714, %v3529, 0.0
        %v3571 = vsel %vm715, %v3513, 0.0
        %v3572 = vsel %vm713, %v3546, 0.0
        %v3573 = vsel %vm714, %v3530, 0.0
        %v3574 = vsel %vm715, %v3514, 0.0
        %v3575 = vsel %vm713, %v3547, 0.0
        %v3576 = vsel %vm714, %v3531, 0.0
        %v3577 = vsel %vm715, %v3515, 0.0
        %v3578 = vsel %vm713, %v3548, 0.0
        %v3579 = vsel %vm714, %v3532, 0.0
        %v3580 = vsel %vm715, %v3516, 0.0
        %v3581 = vsel %vm713, %v3549, 0.0
        %v3582 = vsel %vm714, %v3533, 0.0
        %v3583 = vsel %vm715, %v3517, 0.0
        %v3584 = vsel %vm713, %v3550, 0.0
        %v3585 = vsel %vm714, %v3534, 0.0
        %v3586 = vsel %vm715, %v3518, 0.0
        %v3587 = vsel %vm713, %v3551, 0.0
        %v3588 = vsel %vm714, %v3535, 0.0
        %v3589 = vsel %vm715, %v3519, 0.0
        %v3590 = vsel %vm713, %v3552, 0.0
        %v3591 = vsel %vm714, %v3536, 0.0
        %v3592 = vsel %vm715, %v3520, 0.0
        %v3593 = vsel %vm713, %v3553, 0.0
        %v3594 = vsel %vm714, %v3537, 0.0
        %v3595 = vsel %vm715, %v3521, 0.0
        %v3596 = vsel %vm713, %v3554, 0.0
        %v3597 = vsel %vm714, %v3538, 0.0
        %v3598 = vsel %vm715, %v3522, 0.0
        %v3599 = vsel %vm713, %v3555, 0.0
        %v3600 = vsel %vm714, %v3539, 0.0
        %v3601 = vsel %vm715, %v3523, 0.0
        %v3602 = vsel %vm713, %v3556, 0.0
        %v3603 = vsel %vm714, %v3540, 0.0
        %v3604 = vsel %vm715, %v3524, 0.0
        %3605 = vrot.lane.b32.xlu0 %v3365, 127
        %v3606 = vpop.permute.xlu0 %3605
        %3607 = vrot.lane.b32.xlu0 %v3368, 127
        %v3608 = vpop.permute.xlu0 %3607
        %3609 = vrot.lane.b32.xlu0 %v3371, 127
        %v3610 = vpop.permute.xlu0 %3609
        %3611 = vrot.lane.b32.xlu0 %v3374, 127
        %v3612 = vpop.permute.xlu0 %3611
        %3613 = vrot.lane.b32.xlu0 %v3377, 127
        %v3614 = vpop.permute.xlu0 %3613
        %3615 = vrot.lane.b32.xlu0 %v3380, 127
        %v3616 = vpop.permute.xlu0 %3615
        %3617 = vrot.lane.b32.xlu0 %v3383, 127
        %v3618 = vpop.permute.xlu0 %3617
        %3619 = vrot.lane.b32.xlu0 %v3386, 127
        %v3620 = vpop.permute.xlu0 %3619
        %3621 = vrot.lane.b32.xlu0 %v3389, 127
        %v3622 = vpop.permute.xlu0 %3621
        %3623 = vrot.lane.b32.xlu0 %v3392, 127
        %v3624 = vpop.permute.xlu0 %3623
        %3625 = vrot.lane.b32.xlu0 %v3395, 127
        %v3626 = vpop.permute.xlu0 %3625
        %3627 = vrot.lane.b32.xlu0 %v3398, 127
        %v3628 = vpop.permute.xlu0 %3627
        %3629 = vrot.lane.b32.xlu0 %v3401, 127
        %v3630 = vpop.permute.xlu0 %3629
        %3631 = vrot.lane.b32.xlu0 %v3404, 127
        %v3632 = vpop.permute.xlu0 %3631
        %3633 = vrot.lane.b32.xlu0 %v3407, 127
        %v3634 = vpop.permute.xlu0 %3633
        %3635 = vrot.lane.b32.xlu0 %v3410, 127
        %v3636 = vpop.permute.xlu0 %3635
        %3637 = vrot.lane.b32.xlu0 %v3366, 127
        %v3638 = vpop.permute.xlu0 %3637
        %3639 = vrot.lane.b32.xlu0 %v3369, 127
        %v3640 = vpop.permute.xlu0 %3639
        %3641 = vrot.lane.b32.xlu0 %v3372, 127
        %v3642 = vpop.permute.xlu0 %3641
        %3643 = vrot.lane.b32.xlu0 %v3375, 127
        %v3644 = vpop.permute.xlu0 %3643
        %3645 = vrot.lane.b32.xlu0 %v3378, 127
        %v3646 = vpop.permute.xlu0 %3645
        %3647 = vrot.lane.b32.xlu0 %v3381, 127
        %v3648 = vpop.permute.xlu0 %3647
        %3649 = vrot.lane.b32.xlu0 %v3384, 127
        %v3650 = vpop.permute.xlu0 %3649
        %3651 = vrot.lane.b32.xlu0 %v3387, 127
        %v3652 = vpop.permute.xlu0 %3651
        %3653 = vrot.lane.b32.xlu0 %v3390, 127
        %v3654 = vpop.permute.xlu0 %3653
        %3655 = vrot.lane.b32.xlu0 %v3393, 127
        %v3656 = vpop.permute.xlu0 %3655
        %3657 = vrot.lane.b32.xlu0 %v3396, 127
        %v3658 = vpop.permute.xlu0 %3657
        %3659 = vrot.lane.b32.xlu0 %v3399, 127
        %v3660 = vpop.permute.xlu0 %3659
        %3661 = vrot.lane.b32.xlu0 %v3402, 127
        %v3662 = vpop.permute.xlu0 %3661
        %3663 = vrot.lane.b32.xlu0 %v3405, 127
        %v3664 = vpop.permute.xlu0 %3663
        %3665 = vrot.lane.b32.xlu0 %v3408, 127
        %v3666 = vpop.permute.xlu0 %3665
        %3667 = vrot.lane.b32.xlu0 %v3411, 127
        %v3668 = vpop.permute.xlu0 %3667
        %3669 = vrot.lane.b32.xlu0 %v3367, 127
        %v3670 = vpop.permute.xlu0 %3669
        %3671 = vrot.lane.b32.xlu0 %v3370, 127
        %v3672 = vpop.permute.xlu0 %3671
        %3673 = vrot.lane.b32.xlu0 %v3373, 127
        %v3674 = vpop.permute.xlu0 %3673
        %3675 = vrot.lane.b32.xlu0 %v3376, 127
        %v3676 = vpop.permute.xlu0 %3675
        %3677 = vrot.lane.b32.xlu0 %v3379, 127
        %v3678 = vpop.permute.xlu0 %3677
        %3679 = vrot.lane.b32.xlu0 %v3382, 127
        %v3680 = vpop.permute.xlu0 %3679
        %3681 = vrot.lane.b32.xlu0 %v3385, 127
        %v3682 = vpop.permute.xlu0 %3681
        %3683 = vrot.lane.b32.xlu0 %v3388, 127
        %v3684 = vpop.permute.xlu0 %3683
        %3685 = vrot.lane.b32.xlu0 %v3391, 127
        %v3686 = vpop.permute.xlu0 %3685
        %3687 = vrot.lane.b32.xlu0 %v3394, 127
        %v3688 = vpop.permute.xlu0 %3687
        %3689 = vrot.lane.b32.xlu0 %v3397, 127
        %v3690 = vpop.permute.xlu0 %3689
        %3691 = vrot.lane.b32.xlu0 %v3400, 127
        %v3692 = vpop.permute.xlu0 %3691
        %3693 = vrot.lane.b32.xlu0 %v3403, 127
        %v3694 = vpop.permute.xlu0 %3693
        %3695 = vrot.lane.b32.xlu0 %v3406, 127
        %v3696 = vpop.permute.xlu0 %3695
        %3697 = vrot.lane.b32.xlu0 %v3409, 127
        %v3698 = vpop.permute.xlu0 %3697
        %3699 = vrot.lane.b32.xlu0 %v3412, 127
        %v3700 = vpop.permute.xlu0 %3699
        %v3701 = vsel %vm860, %v3638, %v3670
        %v3702 = vsel %vm860, %v3640, %v3672
        %v3703 = vsel %vm860, %v3642, %v3674
        %v3704 = vsel %vm860, %v3644, %v3676
        %v3705 = vsel %vm860, %v3646, %v3678
        %v3706 = vsel %vm860, %v3648, %v3680
        %v3707 = vsel %vm860, %v3650, %v3682
        %v3708 = vsel %vm860, %v3652, %v3684
        %v3709 = vsel %vm860, %v3654, %v3686
        %v3710 = vsel %vm860, %v3656, %v3688
        %v3711 = vsel %vm860, %v3658, %v3690
        %v3712 = vsel %vm860, %v3660, %v3692
        %v3713 = vsel %vm860, %v3662, %v3694
        %v3714 = vsel %vm860, %v3664, %v3696
        %v3715 = vsel %vm860, %v3666, %v3698
        %v3716 = vsel %vm860, %v3668, %v3700
        %v3717 = vsel %vm860, %v3606, %v3638
        %v3718 = vsel %vm860, %v3608, %v3640
        %v3719 = vsel %vm860, %v3610, %v3642
        %v3720 = vsel %vm860, %v3612, %v3644
        %v3721 = vsel %vm860, %v3614, %v3646
        %v3722 = vsel %vm860, %v3616, %v3648
        %v3723 = vsel %vm860, %v3618, %v3650
        %v3724 = vsel %vm860, %v3620, %v3652
        %v3725 = vsel %vm860, %v3622, %v3654
        %v3726 = vsel %vm860, %v3624, %v3656
        %v3727 = vsel %vm860, %v3626, %v3658
        %v3728 = vsel %vm860, %v3628, %v3660
        %v3729 = vsel %vm860, %v3630, %v3662
        %v3730 = vsel %vm860, %v3632, %v3664
        %v3731 = vsel %vm860, %v3634, %v3666
        %v3732 = vsel %vm860, %v3636, %v3668
        %v3733 = vsel %vm860, %v3670, %v3606
        %v3734 = vsel %vm860, %v3672, %v3608
        %v3735 = vsel %vm860, %v3674, %v3610
        %v3736 = vsel %vm860, %v3676, %v3612
        %v3737 = vsel %vm860, %v3678, %v3614
        %v3738 = vsel %vm860, %v3680, %v3616
        %v3739 = vsel %vm860, %v3682, %v3618
        %v3740 = vsel %vm860, %v3684, %v3620
        %v3741 = vsel %vm860, %v3686, %v3622
        %v3742 = vsel %vm860, %v3688, %v3624
        %v3743 = vsel %vm860, %v3690, %v3626
        %v3744 = vsel %vm860, %v3692, %v3628
        %v3745 = vsel %vm860, %v3694, %v3630
        %v3746 = vsel %vm860, %v3696, %v3632
        %v3747 = vsel %vm860, %v3698, %v3634
        %v3748 = vsel %vm860, %v3700, %v3636
        %v3749 = vsel %vm922, %v3717, 0.0
        %v3750 = vsel %vm923, %v3701, 0.0
        %v3751 = vsel %vm924, %v3733, 0.0
        %v3752 = vsel %vm922, %v3718, 0.0
        %v3753 = vsel %vm923, %v3702, 0.0
        %v3754 = vsel %vm924, %v3734, 0.0
        %v3755 = vsel %vm922, %v3719, 0.0
        %v3756 = vsel %vm923, %v3703, 0.0
        %v3757 = vsel %vm924, %v3735, 0.0
        %v3758 = vsel %vm922, %v3720, 0.0
        %v3759 = vsel %vm923, %v3704, 0.0
        %v3760 = vsel %vm924, %v3736, 0.0
        %v3761 = vsel %vm922, %v3721, 0.0
        %v3762 = vsel %vm923, %v3705, 0.0
        %v3763 = vsel %vm924, %v3737, 0.0
        %v3764 = vsel %vm922, %v3722, 0.0
        %v3765 = vsel %vm923, %v3706, 0.0
        %v3766 = vsel %vm924, %v3738, 0.0
        %v3767 = vsel %vm922, %v3723, 0.0
        %v3768 = vsel %vm923, %v3707, 0.0
        %v3769 = vsel %vm924, %v3739, 0.0
        %v3770 = vsel %vm922, %v3724, 0.0
        %v3771 = vsel %vm923, %v3708, 0.0
        %v3772 = vsel %vm924, %v3740, 0.0
        %v3773 = vsel %vm922, %v3725, 0.0
        %v3774 = vsel %vm923, %v3709, 0.0
        %v3775 = vsel %vm924, %v3741, 0.0
        %v3776 = vsel %vm922, %v3726, 0.0
        %v3777 = vsel %vm923, %v3710, 0.0
        %v3778 = vsel %vm924, %v3742, 0.0
        %v3779 = vsel %vm922, %v3727, 0.0
        %v3780 = vsel %vm923, %v3711, 0.0
        %v3781 = vsel %vm924, %v3743, 0.0
        %v3782 = vsel %vm922, %v3728, 0.0
        %v3783 = vsel %vm923, %v3712, 0.0
        %v3784 = vsel %vm924, %v3744, 0.0
        %v3785 = vsel %vm922, %v3729, 0.0
        %v3786 = vsel %vm923, %v3713, 0.0
        %v3787 = vsel %vm924, %v3745, 0.0
        %v3788 = vsel %vm922, %v3730, 0.0
        %v3789 = vsel %vm923, %v3714, 0.0
        %v3790 = vsel %vm924, %v3746, 0.0
        %v3791 = vsel %vm922, %v3731, 0.0
        %v3792 = vsel %vm923, %v3715, 0.0
        %v3793 = vsel %vm924, %v3747, 0.0
        %v3794 = vsel %vm922, %v3732, 0.0
        %v3795 = vsel %vm923, %v3716, 0.0
        %v3796 = vsel %vm924, %v3748, 0.0
        %v3797 = vld [vmem:[#allocation4] sm:$0xff]
        %v3798 = vld [vmem:[#allocation4 + $0x8] sm:$0xff]
        %v3799 = vld [vmem:[#allocation4 + $0x10] sm:$0xff]
        %v3800 = vld [vmem:[#allocation4 + $0x18] sm:$0xff]
        %v3801 = vld [vmem:[#allocation4 + $0x20] sm:$0xff]
        %v3802 = vld [vmem:[#allocation4 + $0x28] sm:$0xff]
        %v3803 = vld [vmem:[#allocation4 + $0x30] sm:$0xff]
        %v3804 = vld [vmem:[#allocation4 + $0x38] sm:$0xff]
        %v3805 = vld [vmem:[#allocation4 + $0x40] sm:$0xff]
        %v3806 = vld [vmem:[#allocation4 + $0x48] sm:$0xff]
        %v3807 = vld [vmem:[#allocation4 + $0x50] sm:$0xff]
        %v3808 = vld [vmem:[#allocation4 + $0x58] sm:$0xff]
        %v3809 = vld [vmem:[#allocation4 + $0x60] sm:$0xff]
        %v3810 = vld [vmem:[#allocation4 + $0x68] sm:$0xff]
        %v3811 = vld [vmem:[#allocation4 + $0x70] sm:$0xff]
        %v3812 = vld [vmem:[#allocation4 + $0x78] sm:$0xff]
        %s3813 = scalar_lea.vmem [#allocation4], 128
        %v3814 = vld [vmem:[%s3813] sm:$0xff]
        %v3815 = vld [vmem:[%s3813 + $0x8] sm:$0xff]
        %v3816 = vld [vmem:[%s3813 + $0x10] sm:$0xff]
        %v3817 = vld [vmem:[%s3813 + $0x18] sm:$0xff]
        %v3818 = vld [vmem:[%s3813 + $0x20] sm:$0xff]
        %v3819 = vld [vmem:[%s3813 + $0x28] sm:$0xff]
        %v3820 = vld [vmem:[%s3813 + $0x30] sm:$0xff]
        %v3821 = vld [vmem:[%s3813 + $0x38] sm:$0xff]
        %v3822 = vld [vmem:[%s3813 + $0x40] sm:$0xff]
        %v3823 = vld [vmem:[%s3813 + $0x48] sm:$0xff]
        %v3824 = vld [vmem:[%s3813 + $0x50] sm:$0xff]
        %v3825 = vld [vmem:[%s3813 + $0x58] sm:$0xff]
        %v3826 = vld [vmem:[%s3813 + $0x60] sm:$0xff]
        %v3827 = vld [vmem:[%s3813 + $0x68] sm:$0xff]
        %v3828 = vld [vmem:[%s3813 + $0x70] sm:$0xff]
        %v3829 = vld [vmem:[%s3813 + $0x78] sm:$0xff]
        %3830 = vmatprep.subr.mxu0 %v3366
        %3831 = vmatpush1.msra.mxu0 %v3365
        %3832 = vmatprep.subr.mxu0 %v3369
        %3833 = vmatpush1.msra.mxu0 %v3368
        %3834 = vmatprep.subr.mxu0 %v3372
        %3835 = vmatpush1.msra.mxu0 %v3371
        %3836 = vmatprep.subr.mxu0 %v3375
        %3837 = vmatpush1.msra.mxu0 %v3374
        %3838 = vmatprep.subr.mxu0 %v3378
        %3839 = vmatpush1.msra.mxu0 %v3377
        %3840 = vmatprep.subr.mxu0 %v3381
        %3841 = vmatpush1.msra.mxu0 %v3380
        %3842 = vmatprep.subr.mxu0 %v3384
        %3843 = vmatpush1.msra.mxu0 %v3383
        %3844 = vmatprep.subr.mxu0 %v3387
        %3845 = vmatpush1.msra.mxu0 %v3386
        %3846 = vmatprep.subr.mxu0 %v3390
        %3847 = vmatpush1.msra.mxu0 %v3389
        %3848 = vmatprep.subr.mxu0 %v3393
        %3849 = vmatpush1.msra.mxu0 %v3392
        %3850 = vmatprep.subr.mxu0 %v3396
        %3851 = vmatpush1.msra.mxu0 %v3395
        %3852 = vmatprep.subr.mxu0 %v3399
        %3853 = vmatpush1.msra.mxu0 %v3398
        %3854 = vmatprep.subr.mxu0 %v3402
        %3855 = vmatpush1.msra.mxu0 %v3401
        %3856 = vmatprep.subr.mxu0 %v3405
        %3857 = vmatpush1.msra.mxu0 %v3404
        %3858 = vmatprep.subr.mxu0 %v3408
        %3859 = vmatpush1.msra.mxu0 %v3407
        %3860 = vmatprep.subr.mxu0 %v3411
        %3861 = vmatpush1.msra.mxu0 %v3410
        %3862 = vmatprep.subr.mxu0 0.0
        %3863 = vmatpush1.msra.mxu0 0.0
        %3864 = vmatprep.subr.mxu0 0.0
        %3865 = vmatpush1.msra.mxu0 0.0
        %3866 = vmatprep.subr.mxu0 0.0
        %3867 = vmatpush1.msra.mxu0 0.0
        %3868 = vmatprep.subr.mxu0 0.0
        %3869 = vmatpush1.msra.mxu0 0.0
        %3870 = vmatprep.subr.mxu0 0.0
        %3871 = vmatpush1.msra.mxu0 0.0
        %3872 = vmatprep.subr.mxu0 0.0
        %3873 = vmatpush1.msra.mxu0 0.0
        %3874 = vmatprep.subr.mxu0 0.0
        %3875 = vmatpush1.msra.mxu0 0.0
        %3876 = vmatprep.subr.mxu0 0.0
        %3877 = vmatpush1.msra.mxu0 0.0
        %3878 = vmatprep.subr.mxu0 0.0
        %3879 = vmatpush1.msra.mxu0 0.0
        %3880 = vmatprep.subr.mxu0 0.0
        %3881 = vmatpush1.msra.mxu0 0.0
        %3882 = vmatprep.subr.mxu0 0.0
        %3883 = vmatpush1.msra.mxu0 0.0
        %3884 = vmatprep.subr.mxu0 0.0
        %3885 = vmatpush1.msra.mxu0 0.0
        %3886 = vmatprep.subr.mxu0 0.0
        %3887 = vmatpush1.msra.mxu0 0.0
        %3888 = vmatprep.subr.mxu0 0.0
        %3889 = vmatpush1.msra.mxu0 0.0
        %3890 = vmatprep.subr.mxu0 0.0
        %3891 = vmatpush1.msra.mxu0 0.0
        %3892 = vmatprep.subr.mxu0 0.0
        %3893 = vmatpush1.msra.mxu0 0.0
        %3894 = vmatprep.mubr.f32.mxu0 0.0
        %3895 = vmatmul.mubr.f32.gmra.mrb[0].mxu0 %v3814
        %v3896 = vpop.f32.mrb[0].mxu0
        %v3897 = vadd.f32 0.0, %v3896
        %v3898 = vpop.f32.mrb[0].mxu0
        %v3899 = vadd.f32 0.0, %v3898
        %3900 = vmatprep.mubr.f32.mxu0 0.0
        %3901 = vmatmul.mubr.f32.gmra.mrb[0].mxu0 %v3815
        %v3902 = vpop.f32.mrb[0].mxu0
        %v3903 = vadd.f32 0.0, %v3902
        %v3904 = vpop.f32.mrb[0].mxu0
        %v3905 = vadd.f32 0.0, %v3904
        %3906 = vmatprep.mubr.f32.mxu0 0.0
        %3907 = vmatmul.mubr.f32.gmra.mrb[0].mxu0 %v3816
        %v3908 = vpop.f32.mrb[0].mxu0
        %v3909 = vadd.f32 0.0, %v3908
        %v3910 = vpop.f32.mrb[0].mxu0
        %v3911 = vadd.f32 0.0, %v3910
        %3912 = vmatprep.mubr.f32.mxu0 0.0
        %3913 = vmatmul.mubr.f32.gmra.mrb[0].mxu0 %v3817
        %v3914 = vpop.f32.mrb[0].mxu0
        %v3915 = vadd.f32 0.0, %v3914
        %v3916 = vpop.f32.mrb[0].mxu0
        %v3917 = vadd.f32 0.0, %v3916
        %3918 = vmatprep.mubr.f32.mxu0 0.0
        %3919 = vmatmul.mubr.f32.gmra.mrb[0].mxu0 %v3818
        %v3920 = vpop.f32.mrb[0].mxu0
        %v3921 = vadd.f32 0.0, %v3920
        %v3922 = vpop.f32.mrb[0].mxu0
        %v3923 = vadd.f32 0.0, %v3922
        %3924 = vmatprep.mubr.f32.mxu0 0.0
        %3925 = vmatmul.mubr.f32.gmra.mrb[0].mxu0 %v3819
        %v3926 = vpop.f32.mrb[0].mxu0
        %v3927 = vadd.f32 0.0, %v3926
        %v3928 = vpop.f32.mrb[0].mxu0
        %v3929 = vadd.f32 0.0, %v3928
        %3930 = vmatprep.mubr.f32.mxu0 0.0
        %3931 = vmatmul.mubr.f32.gmra.mrb[0].mxu0 %v3820
        %v3932 = vpop.f32.mrb[0].mxu0
        %v3933 = vadd.f32 0.0, %v3932
        %v3934 = vpop.f32.mrb[0].mxu0
        %v3935 = vadd.f32 0.0, %v3934
        %3936 = vmatprep.mubr.f32.mxu0 0.0
        %3937 = vmatmul.mubr.f32.gmra.mrb[0].mxu0 %v3821
        %v3938 = vpop.f32.mrb[0].mxu0
        %v3939 = vadd.f32 0.0, %v3938
        %v3940 = vpop.f32.mrb[0].mxu0
        %v3941 = vadd.f32 0.0, %v3940
        %3942 = vmatprep.mubr.f32.mxu0 0.0
        %3943 = vmatmul.mubr.f32.gmra.mrb[0].mxu0 %v3822
        %v3944 = vpop.f32.mrb[0].mxu0
        %v3945 = vadd.f32 0.0, %v3944
        %v3946 = vpop.f32.mrb[0].mxu0
        %v3947 = vadd.f32 0.0, %v3946
        %3948 = vmatprep.mubr.f32.mxu0 0.0
        %3949 = vmatmul.mubr.f32.gmra.mrb[0].mxu0 %v3823
        %v3950 = vpop.f32.mrb[0].mxu0
        %v3951 = vadd.f32 0.0, %v3950
        %v3952 = vpop.f32.mrb[0].mxu0
        %v3953 = vadd.f32 0.0, %v3952
        %3954 = vmatprep.mubr.f32.mxu0 0.0
        %3955 = vmatmul.mubr.f32.gmra.mrb[0].mxu0 %v3824
        %v3956 = vpop.f32.mrb[0].mxu0
        %v3957 = vadd.f32 0.0, %v3956
        %v3958 = vpop.f32.mrb[0].mxu0
        %v3959 = vadd.f32 0.0, %v3958
        %3960 = vmatprep.mubr.f32.mxu0 0.0
        %3961 = vmatmul.mubr.f32.gmra.mrb[0].mxu0 %v3825
        %v3962 = vpop.f32.mrb[0].mxu0
        %v3963 = vadd.f32 0.0, %v3962
        %v3964 = vpop.f32.mrb[0].mxu0
        %v3965 = vadd.f32 0.0, %v3964
        %3966 = vmatprep.mubr.f32.mxu0 0.0
        %3967 = vmatmul.mubr.f32.gmra.mrb[0].mxu0 %v3826
        %v3968 = vpop.f32.mrb[0].mxu0
        %v3969 = vadd.f32 0.0, %v3968
        %v3970 = vpop.f32.mrb[0].mxu0
        %v3971 = vadd.f32 0.0, %v3970
        %3972 = vmatprep.mubr.f32.mxu0 0.0
        %3973 = vmatmul.mubr.f32.gmra.mrb[0].mxu0 %v3827
        %v3974 = vpop.f32.mrb[0].mxu0
        %v3975 = vadd.f32 0.0, %v3974
        %v3976 = vpop.f32.mrb[0].mxu0
        %v3977 = vadd.f32 0.0, %v3976
        %3978 = vmatprep.mubr.f32.mxu0 0.0
        %3979 = vmatmul.mubr.f32.gmra.mrb[0].mxu0 %v3828
        %v3980 = vpop.f32.mrb[0].mxu0
        %v3981 = vadd.f32 0.0, %v3980
        %v3982 = vpop.f32.mrb[0].mxu0
        %v3983 = vadd.f32 0.0, %v3982
        %3984 = vmatprep.mubr.f32.mxu0 0.0
        %3985 = vmatmul.mubr.f32.gmra.mrb[0].mxu0 %v3829
        %v3986 = vpop.f32.mrb[0].mxu0
        %v3987 = vadd.f32 0.0, %v3986
        %v3988 = vpop.f32.mrb[0].mxu0
        %v3989 = vadd.f32 0.0, %v3988
        %3990 = vdwg.mxu0
        %3991 = vmatprep.subr.mxu0 0.0
        %3992 = vmatpush1.msra.mxu0 %v3367
        %3993 = vmatprep.subr.mxu0 0.0
        %3994 = vmatpush1.msra.mxu0 %v3370
        %3995 = vmatprep.subr.mxu0 0.0
        %3996 = vmatpush1.msra.mxu0 %v3373
        %3997 = vmatprep.subr.mxu0 0.0
        %3998 = vmatpush1.msra.mxu0 %v3376
        %3999 = vmatprep.subr.mxu0 0.0
        %4000 = vmatpush1.msra.mxu0 %v3379
        %4001 = vmatprep.subr.mxu0 0.0
        %4002 = vmatpush1.msra.mxu0 %v3382
        %4003 = vmatprep.subr.mxu0 0.0
        %4004 = vmatpush1.msra.mxu0 %v3385
        %4005 = vmatprep.subr.mxu0 0.0
        %4006 = vmatpush1.msra.mxu0 %v3388
        %4007 = vmatprep.subr.mxu0 0.0
        %4008 = vmatpush1.msra.mxu0 %v3391
        %4009 = vmatprep.subr.mxu0 0.0
        %4010 = vmatpush1.msra.mxu0 %v3394
        %4011 = vmatprep.subr.mxu0 0.0
        %4012 = vmatpush1.msra.mxu0 %v3397
        %4013 = vmatprep.subr.mxu0 0.0
        %4014 = vmatpush1.msra.mxu0 %v3400
        %4015 = vmatprep.subr.mxu0 0.0
        %4016 = vmatpush1.msra.mxu0 %v3403
        %4017 = vmatprep.subr.mxu0 0.0
        %4018 = vmatpush1.msra.mxu0 %v3406
        %4019 = vmatprep.subr.mxu0 0.0
        %4020 = vmatpush1.msra.mxu0 %v3409
        %4021 = vmatprep.subr.mxu0 0.0
        %4022 = vmatpush1.msra.mxu0 %v3412
        %4023 = vmatprep.subr.mxu0 0.0
        %4024 = vmatpush1.msra.mxu0 0.0
        %4025 = vmatprep.subr.mxu0 0.0
        %4026 = vmatpush1.msra.mxu0 0.0
        %4027 = vmatprep.subr.mxu0 0.0
        %4028 = vmatpush1.msra.mxu0 0.0
        %4029 = vmatprep.subr.mxu0 0.0
        %4030 = vmatpush1.msra.mxu0 0.0
        %4031 = vmatprep.subr.mxu0 0.0
        %4032 = vmatpush1.msra.mxu0 0.0
        %4033 = vmatprep.subr.mxu0 0.0
        %4034 = vmatpush1.msra.mxu0 0.0
        %4035 = vmatprep.subr.mxu0 0.0
        %4036 = vmatpush1.msra.mxu0 0.0
        %4037 = vmatprep.subr.mxu0 0.0
        %4038 = vmatpush1.msra.mxu0 0.0
        %4039 = vmatprep.subr.mxu0 0.0
        %4040 = vmatpush1.msra.mxu0 0.0
        %4041 = vmatprep.subr.mxu0 0.0
        %4042 = vmatpush1.msra.mxu0 0.0
        %4043 = vmatprep.subr.mxu0 0.0
        %4044 = vmatpush1.msra.mxu0 0.0
        %4045 = vmatprep.subr.mxu0 0.0
        %4046 = vmatpush1.msra.mxu0 0.0
        %4047 = vmatprep.subr.mxu0 0.0
        %4048 = vmatpush1.msra.mxu0 0.0
        %4049 = vmatprep.subr.mxu0 0.0
        %4050 = vmatpush1.msra.mxu0 0.0
        %4051 = vmatprep.subr.mxu0 0.0
        %4052 = vmatpush1.msra.mxu0 0.0
        %4053 = vmatprep.subr.mxu0 0.0
        %4054 = vmatpush1.msra.mxu0 0.0
        %4055 = vmatprep.mubr.f32.mxu0 0.0
        %4056 = vmatmul.mubr.f32.gmra.mrb[0].mxu0 %v3814
        %v4057 = vpop.f32.mrb[0].mxu0
        %v4058 = vadd.f32 0.0, %v4057
        %v4059 = vpop.f32.mrb[0].mxu0
        %4060 = vmatprep.mubr.f32.mxu0 0.0
        %4061 = vmatmul.mubr.f32.gmra.mrb[0].mxu0 %v3815
        %v4062 = vpop.f32.mrb[0].mxu0
        %v4063 = vadd.f32 0.0, %v4062
        %v4064 = vpop.f32.mrb[0].mxu0
        %4065 = vmatprep.mubr.f32.mxu0 0.0
        %4066 = vmatmul.mubr.f32.gmra.mrb[0].mxu0 %v3816
        %v4067 = vpop.f32.mrb[0].mxu0
        %v4068 = vadd.f32 0.0, %v4067
        %v4069 = vpop.f32.mrb[0].mxu0
        %4070 = vmatprep.mubr.f32.mxu0 0.0
        %4071 = vmatmul.mubr.f32.gmra.mrb[0].mxu0 %v3817
        %v4072 = vpop.f32.mrb[0].mxu0
        %v4073 = vadd.f32 0.0, %v4072
        %v4074 = vpop.f32.mrb[0].mxu0
        %4075 = vmatprep.mubr.f32.mxu0 0.0
        %4076 = vmatmul.mubr.f32.gmra.mrb[0].mxu0 %v3818
        %v4077 = vpop.f32.mrb[0].mxu0
        %v4078 = vadd.f32 0.0, %v4077
        %v4079 = vpop.f32.mrb[0].mxu0
        %4080 = vmatprep.mubr.f32.mxu0 0.0
        %4081 = vmatmul.mubr.f32.gmra.mrb[0].mxu0 %v3819
        %v4082 = vpop.f32.mrb[0].mxu0
        %v4083 = vadd.f32 0.0, %v4082
        %v4084 = vpop.f32.mrb[0].mxu0
        %4085 = vmatprep.mubr.f32.mxu0 0.0
        %4086 = vmatmul.mubr.f32.gmra.mrb[0].mxu0 %v3820
        %v4087 = vpop.f32.mrb[0].mxu0
        %v4088 = vadd.f32 0.0, %v4087
        %v4089 = vpop.f32.mrb[0].mxu0
        %4090 = vmatprep.mubr.f32.mxu0 0.0
        %4091 = vmatmul.mubr.f32.gmra.mrb[0].mxu0 %v3821
        %v4092 = vpop.f32.mrb[0].mxu0
        %v4093 = vadd.f32 0.0, %v4092
        %v4094 = vpop.f32.mrb[0].mxu0
        %4095 = vmatprep.mubr.f32.mxu0 0.0
        %4096 = vmatmul.mubr.f32.gmra.mrb[0].mxu0 %v3822
        %v4097 = vpop.f32.mrb[0].mxu0
        %v4098 = vadd.f32 0.0, %v4097
        %v4099 = vpop.f32.mrb[0].mxu0
        %4100 = vmatprep.mubr.f32.mxu0 0.0
        %4101 = vmatmul.mubr.f32.gmra.mrb[0].mxu0 %v3823
        %v4102 = vpop.f32.mrb[0].mxu0
        %v4103 = vadd.f32 0.0, %v4102
        %v4104 = vpop.f32.mrb[0].mxu0
        %4105 = vmatprep.mubr.f32.mxu0 0.0
        %4106 = vmatmul.mubr.f32.gmra.mrb[0].mxu0 %v3824
        %v4107 = vpop.f32.mrb[0].mxu0
        %v4108 = vadd.f32 0.0, %v4107
        %v4109 = vpop.f32.mrb[0].mxu0
        %4110 = vmatprep.mubr.f32.mxu0 0.0
        %4111 = vmatmul.mubr.f32.gmra.mrb[0].mxu0 %v3825
        %v4112 = vpop.f32.mrb[0].mxu0
        %v4113 = vadd.f32 0.0, %v4112
        %v4114 = vpop.f32.mrb[0].mxu0
        %4115 = vmatprep.mubr.f32.mxu0 0.0
        %4116 = vmatmul.mubr.f32.gmra.mrb[0].mxu0 %v3826
        %v4117 = vpop.f32.mrb[0].mxu0
        %v4118 = vadd.f32 0.0, %v4117
        %v4119 = vpop.f32.mrb[0].mxu0
        %4120 = vmatprep.mubr.f32.mxu0 0.0
        %4121 = vmatmul.mubr.f32.gmra.mrb[0].mxu0 %v3827
        %v4122 = vpop.f32.mrb[0].mxu0
        %v4123 = vadd.f32 0.0, %v4122
        %v4124 = vpop.f32.mrb[0].mxu0
        %4125 = vmatprep.mubr.f32.mxu0 0.0
        %4126 = vmatmul.mubr.f32.gmra.mrb[0].mxu0 %v3828
        %v4127 = vpop.f32.mrb[0].mxu0
        %v4128 = vadd.f32 0.0, %v4127
        %v4129 = vpop.f32.mrb[0].mxu0
        %4130 = vmatprep.mubr.f32.mxu0 0.0
        %4131 = vmatmul.mubr.f32.gmra.mrb[0].mxu0 %v3829
        %v4132 = vpop.f32.mrb[0].mxu0
        %v4133 = vadd.f32 0.0, %v4132
        %v4134 = vpop.f32.mrb[0].mxu0
        %4135 = vdwg.mxu0
        %4136 = vmatprep.subr.mxu0 %v3558
        %4137 = vmatpush1.msra.mxu0 %v3557
        %4138 = vmatprep.subr.mxu0 %v3561
        %4139 = vmatpush1.msra.mxu0 %v3560
        %4140 = vmatprep.subr.mxu0 %v3564
        %4141 = vmatpush1.msra.mxu0 %v3563
        %4142 = vmatprep.subr.mxu0 %v3567
        %4143 = vmatpush1.msra.mxu0 %v3566
        %4144 = vmatprep.subr.mxu0 %v3570
        %4145 = vmatpush1.msra.mxu0 %v3569
        %4146 = vmatprep.subr.mxu0 %v3573
        %4147 = vmatpush1.msra.mxu0 %v3572
        %4148 = vmatprep.subr.mxu0 %v3576
        %4149 = vmatpush1.msra.mxu0 %v3575
        %4150 = vmatprep.subr.mxu0 %v3579
        %4151 = vmatpush1.msra.mxu0 %v3578
        %4152 = vmatprep.subr.mxu0 %v3582
        %4153 = vmatpush1.msra.mxu0 %v3581
        %4154 = vmatprep.subr.mxu0 %v3585
        %4155 = vmatpush1.msra.mxu0 %v3584
        %4156 = vmatprep.subr.mxu0 %v3588
        %4157 = vmatpush1.msra.mxu0 %v3587
        %4158 = vmatprep.subr.mxu0 %v3591
        %4159 = vmatpush1.msra.mxu0 %v3590
        %4160 = vmatprep.subr.mxu0 %v3594
        %4161 = vmatpush1.msra.mxu0 %v3593
        %4162 = vmatprep.subr.mxu0 %v3597
        %4163 = vmatpush1.msra.mxu0 %v3596
        %4164 = vmatprep.subr.mxu0 %v3600
        %4165 = vmatpush1.msra.mxu0 %v3599
        %4166 = vmatprep.subr.mxu0 %v3603
        %4167 = vmatpush1.msra.mxu0 %v3602
        %4168 = vmatprep.subr.mxu0 0.0
        %4169 = vmatpush1.msra.mxu0 0.0
        %4170 = vmatprep.subr.mxu0 0.0
        %4171 = vmatpush1.msra.mxu0 0.0
        %4172 = vmatprep.subr.mxu0 0.0
        %4173 = vmatpush1.msra.mxu0 0.0
        %4174 = vmatprep.subr.mxu0 0.0
        %4175 = vmatpush1.msra.mxu0 0.0
        %4176 = vmatprep.subr.mxu0 0.0
        %4177 = vmatpush1.msra.mxu0 0.0
        %4178 = vmatprep.subr.mxu0 0.0
        %4179 = vmatpush1.msra.mxu0 0.0
        %4180 = vmatprep.subr.mxu0 0.0
        %4181 = vmatpush1.msra.mxu0 0.0
        %4182 = vmatprep.subr.mxu0 0.0
        %4183 = vmatpush1.msra.mxu0 0.0
        %4184 = vmatprep.subr.mxu0 0.0
        %4185 = vmatpush1.msra.mxu0 0.0
        %4186 = vmatprep.subr.mxu0 0.0
        %4187 = vmatpush1.msra.mxu0 0.0
        %4188 = vmatprep.subr.mxu0 0.0
        %4189 = vmatpush1.msra.mxu0 0.0
        %4190 = vmatprep.subr.mxu0 0.0
        %4191 = vmatpush1.msra.mxu0 0.0
        %4192 = vmatprep.subr.mxu0 0.0
        %4193 = vmatpush1.msra.mxu0 0.0
        %4194 = vmatprep.subr.mxu0 0.0
        %4195 = vmatpush1.msra.mxu0 0.0
        %4196 = vmatprep.subr.mxu0 0.0
        %4197 = vmatpush1.msra.mxu0 0.0
        %4198 = vmatprep.subr.mxu0 0.0
        %4199 = vmatpush1.msra.mxu0 0.0
        %4200 = vmatprep.mubr.f32.mxu0 0.0
        %4201 = vmatmul.mubr.f32.gmra.mrb[0].mxu0 %v3797
        %v4202 = vpop.f32.mrb[0].mxu0
        %v4203 = vadd.f32 %v3897, %v4202
        %v4204 = vpop.f32.mrb[0].mxu0
        %v4205 = vadd.f32 %v3899, %v4204
        %4206 = vmatprep.mubr.f32.mxu0 0.0
        %4207 = vmatmul.mubr.f32.gmra.mrb[0].mxu0 %v3798
        %v4208 = vpop.f32.mrb[0].mxu0
        %v4209 = vadd.f32 %v3903, %v4208
        %v4210 = vpop.f32.mrb[0].mxu0
        %v4211 = vadd.f32 %v3905, %v4210
        %4212 = vmatprep.mubr.f32.mxu0 0.0
        %4213 = vmatmul.mubr.f32.gmra.mrb[0].mxu0 %v3799
        %v4214 = vpop.f32.mrb[0].mxu0
        %v4215 = vadd.f32 %v3909, %v4214
        %v4216 = vpop.f32.mrb[0].mxu0
        %v4217 = vadd.f32 %v3911, %v4216
        %4218 = vmatprep.mubr.f32.mxu0 0.0
        %4219 = vmatmul.mubr.f32.gmra.mrb[0].mxu0 %v3800
        %v4220 = vpop.f32.mrb[0].mxu0
        %v4221 = vadd.f32 %v3915, %v4220
        %v4222 = vpop.f32.mrb[0].mxu0
        %v4223 = vadd.f32 %v3917, %v4222
        %4224 = vmatprep.mubr.f32.mxu0 0.0
        %4225 = vmatmul.mubr.f32.gmra.mrb[0].mxu0 %v3801
        %v4226 = vpop.f32.mrb[0].mxu0
        %v4227 = vadd.f32 %v3921, %v4226
        %v4228 = vpop.f32.mrb[0].mxu0
        %v4229 = vadd.f32 %v3923, %v4228
        %4230 = vmatprep.mubr.f32.mxu0 0.0
        %4231 = vmatmul.mubr.f32.gmra.mrb[0].mxu0 %v3802
        %v4232 = vpop.f32.mrb[0].mxu0
        %v4233 = vadd.f32 %v3927, %v4232
        %v4234 = vpop.f32.mrb[0].mxu0
        %v4235 = vadd.f32 %v3929, %v4234
        %4236 = vmatprep.mubr.f32.mxu0 0.0
        %4237 = vmatmul.mubr.f32.gmra.mrb[0].mxu0 %v3803
        %v4238 = vpop.f32.mrb[0].mxu0
        %v4239 = vadd.f32 %v3933, %v4238
        %v4240 = vpop.f32.mrb[0].mxu0
        %v4241 = vadd.f32 %v3935, %v4240
        %4242 = vmatprep.mubr.f32.mxu0 0.0
        %4243 = vmatmul.mubr.f32.gmra.mrb[0].mxu0 %v3804
        %v4244 = vpop.f32.mrb[0].mxu0
        %v4245 = vadd.f32 %v3939, %v4244
        %v4246 = vpop.f32.mrb[0].mxu0
        %v4247 = vadd.f32 %v3941, %v4246
        %4248 = vmatprep.mubr.f32.mxu0 0.0
        %4249 = vmatmul.mubr.f32.gmra.mrb[0].mxu0 %v3805
        %v4250 = vpop.f32.mrb[0].mxu0
        %v4251 = vadd.f32 %v3945, %v4250
        %v4252 = vpop.f32.mrb[0].mxu0
        %v4253 = vadd.f32 %v3947, %v4252
        %4254 = vmatprep.mubr.f32.mxu0 0.0
        %4255 = vmatmul.mubr.f32.gmra.mrb[0].mxu0 %v3806
        %v4256 = vpop.f32.mrb[0].mxu0
        %v4257 = vadd.f32 %v3951, %v4256
        %v4258 = vpop.f32.mrb[0].mxu0
        %v4259 = vadd.f32 %v3953, %v4258
        %4260 = vmatprep.mubr.f32.mxu0 0.0
        %4261 = vmatmul.mubr.f32.gmra.mrb[0].mxu0 %v3807
        %v4262 = vpop.f32.mrb[0].mxu0
        %v4263 = vadd.f32 %v3957, %v4262
        %v4264 = vpop.f32.mrb[0].mxu0
        %v4265 = vadd.f32 %v3959, %v4264
        %4266 = vmatprep.mubr.f32.mxu0 0.0
        %4267 = vmatmul.mubr.f32.gmra.mrb[0].mxu0 %v3808
        %v4268 = vpop.f32.mrb[0].mxu0
        %v4269 = vadd.f32 %v3963, %v4268
        %v4270 = vpop.f32.mrb[0].mxu0
        %v4271 = vadd.f32 %v3965, %v4270
        %4272 = vmatprep.mubr.f32.mxu0 0.0
        %4273 = vmatmul.mubr.f32.gmra.mrb[0].mxu0 %v3809
        %v4274 = vpop.f32.mrb[0].mxu0
        %v4275 = vadd.f32 %v3969, %v4274
        %v4276 = vpop.f32.mrb[0].mxu0
        %v4277 = vadd.f32 %v3971, %v4276
        %4278 = vmatprep.mubr.f32.mxu0 0.0
        %4279 = vmatmul.mubr.f32.gmra.mrb[0].mxu0 %v3810
        %v4280 = vpop.f32.mrb[0].mxu0
        %v4281 = vadd.f32 %v3975, %v4280
        %v4282 = vpop.f32.mrb[0].mxu0
        %v4283 = vadd.f32 %v3977, %v4282
        %4284 = vmatprep.mubr.f32.mxu0 0.0
        %4285 = vmatmul.mubr.f32.gmra.mrb[0].mxu0 %v3811
        %v4286 = vpop.f32.mrb[0].mxu0
        %v4287 = vadd.f32 %v3981, %v4286
        %v4288 = vpop.f32.mrb[0].mxu0
        %v4289 = vadd.f32 %v3983, %v4288
        %4290 = vmatprep.mubr.f32.mxu0 0.0
        %4291 = vmatmul.mubr.f32.gmra.mrb[0].mxu0 %v3812
        %v4292 = vpop.f32.mrb[0].mxu0
        %v4293 = vadd.f32 %v3987, %v4292
        %v4294 = vpop.f32.mrb[0].mxu0
        %v4295 = vadd.f32 %v3989, %v4294
        %4296 = vdwg.mxu0
        %4297 = vmatprep.subr.mxu0 0.0
        %4298 = vmatpush1.msra.mxu0 %v3559
        %4299 = vmatprep.subr.mxu0 0.0
        %4300 = vmatpush1.msra.mxu0 %v3562
        %4301 = vmatprep.subr.mxu0 0.0
        %4302 = vmatpush1.msra.mxu0 %v3565
        %4303 = vmatprep.subr.mxu0 0.0
        %4304 = vmatpush1.msra.mxu0 %v3568
        %4305 = vmatprep.subr.mxu0 0.0
        %4306 = vmatpush1.msra.mxu0 %v3571
        %4307 = vmatprep.subr.mxu0 0.0
        %4308 = vmatpush1.msra.mxu0 %v3574
        %4309 = vmatprep.subr.mxu0 0.0
        %4310 = vmatpush1.msra.mxu0 %v3577
        %4311 = vmatprep.subr.mxu0 0.0
        %4312 = vmatpush1.msra.mxu0 %v3580
        %4313 = vmatprep.subr.mxu0 0.0
        %4314 = vmatpush1.msra.mxu0 %v3583
        %4315 = vmatprep.subr.mxu0 0.0
        %4316 = vmatpush1.msra.mxu0 %v3586
        %4317 = vmatprep.subr.mxu0 0.0
        %4318 = vmatpush1.msra.mxu0 %v3589
        %4319 = vmatprep.subr.mxu0 0.0
        %4320 = vmatpush1.msra.mxu0 %v3592
        %4321 = vmatprep.subr.mxu0 0.0
        %4322 = vmatpush1.msra.mxu0 %v3595
        %4323 = vmatprep.subr.mxu0 0.0
        %4324 = vmatpush1.msra.mxu0 %v3598
        %4325 = vmatprep.subr.mxu0 0.0
        %4326 = vmatpush1.msra.mxu0 %v3601
        %4327 = vmatprep.subr.mxu0 0.0
        %4328 = vmatpush1.msra.mxu0 %v3604
        %4329 = vmatprep.subr.mxu0 0.0
        %4330 = vmatpush1.msra.mxu0 0.0
        %4331 = vmatprep.subr.mxu0 0.0
        %4332 = vmatpush1.msra.mxu0 0.0
        %4333 = vmatprep.subr.mxu0 0.0
        %4334 = vmatpush1.msra.mxu0 0.0
        %4335 = vmatprep.subr.mxu0 0.0
        %4336 = vmatpush1.msra.mxu0 0.0
        %4337 = vmatprep.subr.mxu0 0.0
        %4338 = vmatpush1.msra.mxu0 0.0
        %4339 = vmatprep.subr.mxu0 0.0
        %4340 = vmatpush1.msra.mxu0 0.0
        %4341 = vmatprep.subr.mxu0 0.0
        %4342 = vmatpush1.msra.mxu0 0.0
        %4343 = vmatprep.subr.mxu0 0.0
        %4344 = vmatpush1.msra.mxu0 0.0
        %4345 = vmatprep.subr.mxu0 0.0
        %4346 = vmatpush1.msra.mxu0 0.0
        %4347 = vmatprep.subr.mxu0 0.0
        %4348 = vmatpush1.msra.mxu0 0.0
        %4349 = vmatprep.subr.mxu0 0.0
        %4350 = vmatpush1.msra.mxu0 0.0
        %4351 = vmatprep.subr.mxu0 0.0
        %4352 = vmatpush1.msra.mxu0 0.0
        %4353 = vmatprep.subr.mxu0 0.0
        %4354 = vmatpush1.msra.mxu0 0.0
        %4355 = vmatprep.subr.mxu0 0.0
        %4356 = vmatpush1.msra.mxu0 0.0
        %4357 = vmatprep.subr.mxu0 0.0
        %4358 = vmatpush1.msra.mxu0 0.0
        %4359 = vmatprep.subr.mxu0 0.0
        %4360 = vmatpush1.msra.mxu0 0.0
        %4361 = vmatprep.mubr.f32.mxu0 0.0
        %4362 = vmatmul.mubr.f32.gmra.mrb[0].mxu0 %v3797
        %v4363 = vpop.f32.mrb[0].mxu0
        %v4364 = vadd.f32 %v4058, %v4363
        %v4365 = vpop.f32.mrb[0].mxu0
        %4366 = vmatprep.mubr.f32.mxu0 0.0
        %4367 = vmatmul.mubr.f32.gmra.mrb[0].mxu0 %v3798
        %v4368 = vpop.f32.mrb[0].mxu0
        %v4369 = vadd.f32 %v4063, %v4368
        %v4370 = vpop.f32.mrb[0].mxu0
        %4371 = vmatprep.mubr.f32.mxu0 0.0
        %4372 = vmatmul.mubr.f32.gmra.mrb[0].mxu0 %v3799
        %v4373 = vpop.f32.mrb[0].mxu0
        %v4374 = vadd.f32 %v4068, %v4373
        %v4375 = vpop.f32.mrb[0].mxu0
        %4376 = vmatprep.mubr.f32.mxu0 0.0
        %4377 = vmatmul.mubr.f32.gmra.mrb[0].mxu0 %v3800
        %v4378 = vpop.f32.mrb[0].mxu0
        %v4379 = vadd.f32 %v4073, %v4378
        %v4380 = vpop.f32.mrb[0].mxu0
        %4381 = vmatprep.mubr.f32.mxu0 0.0
        %4382 = vmatmul.mubr.f32.gmra.mrb[0].mxu0 %v3801
        %v4383 = vpop.f32.mrb[0].mxu0
        %v4384 = vadd.f32 %v4078, %v4383
        %v4385 = vpop.f32.mrb[0].mxu0
        %4386 = vmatprep.mubr.f32.mxu0 0.0
        %4387 = vmatmul.mubr.f32.gmra.mrb[0].mxu0 %v3802
        %v4388 = vpop.f32.mrb[0].mxu0
        %v4389 = vadd.f32 %v4083, %v4388
        %v4390 = vpop.f32.mrb[0].mxu0
        %4391 = vmatprep.mubr.f32.mxu0 0.0
        %4392 = vmatmul.mubr.f32.gmra.mrb[0].mxu0 %v3803
        %v4393 = vpop.f32.mrb[0].mxu0
        %v4394 = vadd.f32 %v4088, %v4393
        %v4395 = vpop.f32.mrb[0].mxu0
        %4396 = vmatprep.mubr.f32.mxu0 0.0
        %4397 = vmatmul.mubr.f32.gmra.mrb[0].mxu0 %v3804
        %v4398 = vpop.f32.mrb[0].mxu0
        %v4399 = vadd.f32 %v4093, %v4398
        %v4400 = vpop.f32.mrb[0].mxu0
        %4401 = vmatprep.mubr.f32.mxu0 0.0
        %4402 = vmatmul.mubr.f32.gmra.mrb[0].mxu0 %v3805
        %v4403 = vpop.f32.mrb[0].mxu0
        %v4404 = vadd.f32 %v4098, %v4403
        %v4405 = vpop.f32.mrb[0].mxu0
        %4406 = vmatprep.mubr.f32.mxu0 0.0
        %4407 = vmatmul.mubr.f32.gmra.mrb[0].mxu0 %v3806
        %v4408 = vpop.f32.mrb[0].mxu0
        %v4409 = vadd.f32 %v4103, %v4408
        %v4410 = vpop.f32.mrb[0].mxu0
        %4411 = vmatprep.mubr.f32.mxu0 0.0
        %4412 = vmatmul.mubr.f32.gmra.mrb[0].mxu0 %v3807
        %v4413 = vpop.f32.mrb[0].mxu0
        %v4414 = vadd.f32 %v4108, %v4413
        %v4415 = vpop.f32.mrb[0].mxu0
        %4416 = vmatprep.mubr.f32.mxu0 0.0
        %4417 = vmatmul.mubr.f32.gmra.mrb[0].mxu0 %v3808
        %v4418 = vpop.f32.mrb[0].mxu0
        %v4419 = vadd.f32 %v4113, %v4418
        %v4420 = vpop.f32.mrb[0].mxu0
        %4421 = vmatprep.mubr.f32.mxu0 0.0
        %4422 = vmatmul.mubr.f32.gmra.mrb[0].mxu0 %v3809
        %v4423 = vpop.f32.mrb[0].mxu0
        %v4424 = vadd.f32 %v4118, %v4423
        %v4425 = vpop.f32.mrb[0].mxu0
        %4426 = vmatprep.mubr.f32.mxu0 0.0
        %4427 = vmatmul.mubr.f32.gmra.mrb[0].mxu0 %v3810
        %v4428 = vpop.f32.mrb[0].mxu0
        %v4429 = vadd.f32 %v4123, %v4428
        %v4430 = vpop.f32.mrb[0].mxu0
        %4431 = vmatprep.mubr.f32.mxu0 0.0
        %4432 = vmatmul.mubr.f32.gmra.mrb[0].mxu0 %v3811
        %v4433 = vpop.f32.mrb[0].mxu0
        %v4434 = vadd.f32 %v4128, %v4433
        %v4435 = vpop.f32.mrb[0].mxu0
        %4436 = vmatprep.mubr.f32.mxu0 0.0
        %4437 = vmatmul.mubr.f32.gmra.mrb[0].mxu0 %v3812
        %v4438 = vpop.f32.mrb[0].mxu0
        %v4439 = vadd.f32 %v4133, %v4438
        %v4440 = vpop.f32.mrb[0].mxu0
        %4441 = vdwg.mxu0
        %s4442 = scalar_lea.vmem [#allocation4], 256
        %v4443 = vld [vmem:[%s4442] sm:$0xff]
        %v4444 = vld [vmem:[%s4442 + $0x8] sm:$0xff]
        %v4445 = vld [vmem:[%s4442 + $0x10] sm:$0xff]
        %v4446 = vld [vmem:[%s4442 + $0x18] sm:$0xff]
        %v4447 = vld [vmem:[%s4442 + $0x20] sm:$0xff]
        %v4448 = vld [vmem:[%s4442 + $0x28] sm:$0xff]
        %v4449 = vld [vmem:[%s4442 + $0x30] sm:$0xff]
        %v4450 = vld [vmem:[%s4442 + $0x38] sm:$0xff]
        %v4451 = vld [vmem:[%s4442 + $0x40] sm:$0xff]
        %v4452 = vld [vmem:[%s4442 + $0x48] sm:$0xff]
        %v4453 = vld [vmem:[%s4442 + $0x50] sm:$0xff]
        %v4454 = vld [vmem:[%s4442 + $0x58] sm:$0xff]
        %v4455 = vld [vmem:[%s4442 + $0x60] sm:$0xff]
        %v4456 = vld [vmem:[%s4442 + $0x68] sm:$0xff]
        %v4457 = vld [vmem:[%s4442 + $0x70] sm:$0xff]
        %v4458 = vld [vmem:[%s4442 + $0x78] sm:$0xff]
        %4459 = vmatprep.subr.mxu0 %v3750
        %4460 = vmatpush1.msra.mxu0 %v3749
        %4461 = vmatprep.subr.mxu0 %v3753
        %4462 = vmatpush1.msra.mxu0 %v3752
        %4463 = vmatprep.subr.mxu0 %v3756
        %4464 = vmatpush1.msra.mxu0 %v3755
        %4465 = vmatprep.subr.mxu0 %v3759
        %4466 = vmatpush1.msra.mxu0 %v3758
        %4467 = vmatprep.subr.mxu0 %v3762
        %4468 = vmatpush1.msra.mxu0 %v3761
        %4469 = vmatprep.subr.mxu0 %v3765
        %4470 = vmatpush1.msra.mxu0 %v3764
        %4471 = vmatprep.subr.mxu0 %v3768
        %4472 = vmatpush1.msra.mxu0 %v3767
        %4473 = vmatprep.subr.mxu0 %v3771
        %4474 = vmatpush1.msra.mxu0 %v3770
        %4475 = vmatprep.subr.mxu0 %v3774
        %4476 = vmatpush1.msra.mxu0 %v3773
        %4477 = vmatprep.subr.mxu0 %v3777
        %4478 = vmatpush1.msra.mxu0 %v3776
        %4479 = vmatprep.subr.mxu0 %v3780
        %4480 = vmatpush1.msra.mxu0 %v3779
        %4481 = vmatprep.subr.mxu0 %v3783
        %4482 = vmatpush1.msra.mxu0 %v3782
        %4483 = vmatprep.subr.mxu0 %v3786
        %4484 = vmatpush1.msra.mxu0 %v3785
        %4485 = vmatprep.subr.mxu0 %v3789
        %4486 = vmatpush1.msra.mxu0 %v3788
        %4487 = vmatprep.subr.mxu0 %v3792
        %4488 = vmatpush1.msra.mxu0 %v3791
        %4489 = vmatprep.subr.mxu0 %v3795
        %4490 = vmatpush1.msra.mxu0 %v3794
        %4491 = vmatprep.subr.mxu0 0.0
        %4492 = vmatpush1.msra.mxu0 0.0
        %4493 = vmatprep.subr.mxu0 0.0
        %4494 = vmatpush1.msra.mxu0 0.0
        %4495 = vmatprep.subr.mxu0 0.0
        %4496 = vmatpush1.msra.mxu0 0.0
        %4497 = vmatprep.subr.mxu0 0.0
        %4498 = vmatpush1.msra.mxu0 0.0
        %4499 = vmatprep.subr.mxu0 0.0
        %4500 = vmatpush1.msra.mxu0 0.0
        %4501 = vmatprep.subr.mxu0 0.0
        %4502 = vmatpush1.msra.mxu0 0.0
        %4503 = vmatprep.subr.mxu0 0.0
        %4504 = vmatpush1.msra.mxu0 0.0
        %4505 = vmatprep.subr.mxu0 0.0
        %4506 = vmatpush1.msra.mxu0 0.0
        %4507 = vmatprep.subr.mxu0 0.0
        %4508 = vmatpush1.msra.mxu0 0.0
        %4509 = vmatprep.subr.mxu0 0.0
        %4510 = vmatpush1.msra.mxu0 0.0
        %4511 = vmatprep.subr.mxu0 0.0
        %4512 = vmatpush1.msra.mxu0 0.0
        %4513 = vmatprep.subr.mxu0 0.0
        %4514 = vmatpush1.msra.mxu0 0.0
        %4515 = vmatprep.subr.mxu0 0.0
        %4516 = vmatpush1.msra.mxu0 0.0
        %4517 = vmatprep.subr.mxu0 0.0
        %4518 = vmatpush1.msra.mxu0 0.0
        %4519 = vmatprep.subr.mxu0 0.0
        %4520 = vmatpush1.msra.mxu0 0.0
        %4521 = vmatprep.subr.mxu0 0.0
        %4522 = vmatpush1.msra.mxu0 0.0
        %4523 = vmatprep.mubr.f32.mxu0 0.0
        %4524 = vmatmul.mubr.f32.gmra.mrb[0].mxu0 %v4443
        %v4525 = vpop.f32.mrb[0].mxu0
        %v4526 = vadd.f32 0.0, %v4525
        %v4527 = vpop.f32.mrb[0].mxu0
        %v4528 = vadd.f32 0.0, %v4527
        %4529 = vmatprep.mubr.f32.mxu0 0.0
        %4530 = vmatmul.mubr.f32.gmra.mrb[0].mxu0 %v4444
        %v4531 = vpop.f32.mrb[0].mxu0
        %v4532 = vadd.f32 0.0, %v4531
        %v4533 = vpop.f32.mrb[0].mxu0
        %v4534 = vadd.f32 0.0, %v4533
        %4535 = vmatprep.mubr.f32.mxu0 0.0
        %4536 = vmatmul.mubr.f32.gmra.mrb[0].mxu0 %v4445
        %v4537 = vpop.f32.mrb[0].mxu0
        %v4538 = vadd.f32 0.0, %v4537
        %v4539 = vpop.f32.mrb[0].mxu0
        %v4540 = vadd.f32 0.0, %v4539
        %4541 = vmatprep.mubr.f32.mxu0 0.0
        %4542 = vmatmul.mubr.f32.gmra.mrb[0].mxu0 %v4446
        %v4543 = vpop.f32.mrb[0].mxu0
        %v4544 = vadd.f32 0.0, %v4543
        %v4545 = vpop.f32.mrb[0].mxu0
        %v4546 = vadd.f32 0.0, %v4545
        %4547 = vmatprep.mubr.f32.mxu0 0.0
        %4548 = vmatmul.mubr.f32.gmra.mrb[0].mxu0 %v4447
        %v4549 = vpop.f32.mrb[0].mxu0
        %v4550 = vadd.f32 0.0, %v4549
        %v4551 = vpop.f32.mrb[0].mxu0
        %v4552 = vadd.f32 0.0, %v4551
        %4553 = vmatprep.mubr.f32.mxu0 0.0
        %4554 = vmatmul.mubr.f32.gmra.mrb[0].mxu0 %v4448
        %v4555 = vpop.f32.mrb[0].mxu0
        %v4556 = vadd.f32 0.0, %v4555
        %v4557 = vpop.f32.mrb[0].mxu0
        %v4558 = vadd.f32 0.0, %v4557
        %4559 = vmatprep.mubr.f32.mxu0 0.0
        %4560 = vmatmul.mubr.f32.gmra.mrb[0].mxu0 %v4449
        %v4561 = vpop.f32.mrb[0].mxu0
        %v4562 = vadd.f32 0.0, %v4561
        %v4563 = vpop.f32.mrb[0].mxu0
        %v4564 = vadd.f32 0.0, %v4563
        %4565 = vmatprep.mubr.f32.mxu0 0.0
        %4566 = vmatmul.mubr.f32.gmra.mrb[0].mxu0 %v4450
        %v4567 = vpop.f32.mrb[0].mxu0
        %v4568 = vadd.f32 0.0, %v4567
        %v4569 = vpop.f32.mrb[0].mxu0
        %v4570 = vadd.f32 0.0, %v4569
        %4571 = vmatprep.mubr.f32.mxu0 0.0
        %4572 = vmatmul.mubr.f32.gmra.mrb[0].mxu0 %v4451
        %v4573 = vpop.f32.mrb[0].mxu0
        %v4574 = vadd.f32 0.0, %v4573
        %v4575 = vpop.f32.mrb[0].mxu0
        %v4576 = vadd.f32 0.0, %v4575
        %4577 = vmatprep.mubr.f32.mxu0 0.0
        %4578 = vmatmul.mubr.f32.gmra.mrb[0].mxu0 %v4452
        %v4579 = vpop.f32.mrb[0].mxu0
        %v4580 = vadd.f32 0.0, %v4579
        %v4581 = vpop.f32.mrb[0].mxu0
        %v4582 = vadd.f32 0.0, %v4581
        %4583 = vmatprep.mubr.f32.mxu0 0.0
        %4584 = vmatmul.mubr.f32.gmra.mrb[0].mxu0 %v4453
        %v4585 = vpop.f32.mrb[0].mxu0
        %v4586 = vadd.f32 0.0, %v4585
        %v4587 = vpop.f32.mrb[0].mxu0
        %v4588 = vadd.f32 0.0, %v4587
        %4589 = vmatprep.mubr.f32.mxu0 0.0
        %4590 = vmatmul.mubr.f32.gmra.mrb[0].mxu0 %v4454
        %v4591 = vpop.f32.mrb[0].mxu0
        %v4592 = vadd.f32 0.0, %v4591
        %v4593 = vpop.f32.mrb[0].mxu0
        %v4594 = vadd.f32 0.0, %v4593
        %4595 = vmatprep.mubr.f32.mxu0 0.0
        %4596 = vmatmul.mubr.f32.gmra.mrb[0].mxu0 %v4455
        %v4597 = vpop.f32.mrb[0].mxu0
        %v4598 = vadd.f32 0.0, %v4597
        %v4599 = vpop.f32.mrb[0].mxu0
        %v4600 = vadd.f32 0.0, %v4599
        %4601 = vmatprep.mubr.f32.mxu0 0.0
        %4602 = vmatmul.mubr.f32.gmra.mrb[0].mxu0 %v4456
        %v4603 = vpop.f32.mrb[0].mxu0
        %v4604 = vadd.f32 0.0, %v4603
        %v4605 = vpop.f32.mrb[0].mxu0
        %v4606 = vadd.f32 0.0, %v4605
        %4607 = vmatprep.mubr.f32.mxu0 0.0
        %4608 = vmatmul.mubr.f32.gmra.mrb[0].mxu0 %v4457
        %v4609 = vpop.f32.mrb[0].mxu0
        %v4610 = vadd.f32 0.0, %v4609
        %v4611 = vpop.f32.mrb[0].mxu0
        %v4612 = vadd.f32 0.0, %v4611
        %4613 = vmatprep.mubr.f32.mxu0 0.0
        %4614 = vmatmul.mubr.f32.gmra.mrb[0].mxu0 %v4458
        %v4615 = vpop.f32.mrb[0].mxu0
        %v4616 = vadd.f32 0.0, %v4615
        %v4617 = vpop.f32.mrb[0].mxu0
        %v4618 = vadd.f32 0.0, %v4617
        %4619 = vdwg.mxu0
        %4620 = vmatprep.subr.mxu0 0.0
        %4621 = vmatpush1.msra.mxu0 %v3751
        %4622 = vmatprep.subr.mxu0 0.0
        %4623 = vmatpush1.msra.mxu0 %v3754
        %4624 = vmatprep.subr.mxu0 0.0
        %4625 = vmatpush1.msra.mxu0 %v3757
        %4626 = vmatprep.subr.mxu0 0.0
        %4627 = vmatpush1.msra.mxu0 %v3760
        %4628 = vmatprep.subr.mxu0 0.0
        %4629 = vmatpush1.msra.mxu0 %v3763
        %4630 = vmatprep.subr.mxu0 0.0
        %4631 = vmatpush1.msra.mxu0 %v3766
        %4632 = vmatprep.subr.mxu0 0.0
        %4633 = vmatpush1.msra.mxu0 %v3769
        %4634 = vmatprep.subr.mxu0 0.0
        %4635 = vmatpush1.msra.mxu0 %v3772
        %4636 = vmatprep.subr.mxu0 0.0
        %4637 = vmatpush1.msra.mxu0 %v3775
        %4638 = vmatprep.subr.mxu0 0.0
        %4639 = vmatpush1.msra.mxu0 %v3778
        %4640 = vmatprep.subr.mxu0 0.0
        %4641 = vmatpush1.msra.mxu0 %v3781
        %4642 = vmatprep.subr.mxu0 0.0
        %4643 = vmatpush1.msra.mxu0 %v3784
        %4644 = vmatprep.subr.mxu0 0.0
        %4645 = vmatpush1.msra.mxu0 %v3787
        %4646 = vmatprep.subr.mxu0 0.0
        %4647 = vmatpush1.msra.mxu0 %v3790
        %4648 = vmatprep.subr.mxu0 0.0
        %4649 = vmatpush1.msra.mxu0 %v3793
        %4650 = vmatprep.subr.mxu0 0.0
        %4651 = vmatpush1.msra.mxu0 %v3796
        %4652 = vmatprep.subr.mxu0 0.0
        %4653 = vmatpush1.msra.mxu0 0.0
        %4654 = vmatprep.subr.mxu0 0.0
        %4655 = vmatpush1.msra.mxu0 0.0
        %4656 = vmatprep.subr.mxu0 0.0
        %4657 = vmatpush1.msra.mxu0 0.0
        %4658 = vmatprep.subr.mxu0 0.0
        %4659 = vmatpush1.msra.mxu0 0.0
        %4660 = vmatprep.subr.mxu0 0.0
        %4661 = vmatpush1.msra.mxu0 0.0
        %4662 = vmatprep.subr.mxu0 0.0
        %4663 = vmatpush1.msra.mxu0 0.0
        %4664 = vmatprep.subr.mxu0 0.0
        %4665 = vmatpush1.msra.mxu0 0.0
        %4666 = vmatprep.subr.mxu0 0.0
        %4667 = vmatpush1.msra.mxu0 0.0
        %4668 = vmatprep.subr.mxu0 0.0
        %4669 = vmatpush1.msra.mxu0 0.0
        %4670 = vmatprep.subr.mxu0 0.0
        %4671 = vmatpush1.msra.mxu0 0.0
        %4672 = vmatprep.subr.mxu0 0.0
        %4673 = vmatpush1.msra.mxu0 0.0
        %4674 = vmatprep.subr.mxu0 0.0
        %4675 = vmatpush1.msra.mxu0 0.0
        %4676 = vmatprep.subr.mxu0 0.0
        %4677 = vmatpush1.msra.mxu0 0.0
        %4678 = vmatprep.subr.mxu0 0.0
        %4679 = vmatpush1.msra.mxu0 0.0
        %4680 = vmatprep.subr.mxu0 0.0
        %4681 = vmatpush1.msra.mxu0 0.0
        %4682 = vmatprep.subr.mxu0 0.0
        %4683 = vmatpush1.msra.mxu0 0.0
        %4684 = vmatprep.mubr.f32.mxu0 0.0
        %4685 = vmatmul.mubr.f32.gmra.mrb[0].mxu0 %v4443
        %v4686 = vpop.f32.mrb[0].mxu0
        %v4687 = vadd.f32 0.0, %v4686
        %v4688 = vpop.f32.mrb[0].mxu0
        %4689 = vmatprep.mubr.f32.mxu0 0.0
        %4690 = vmatmul.mubr.f32.gmra.mrb[0].mxu0 %v4444
        %v4691 = vpop.f32.mrb[0].mxu0
        %v4692 = vadd.f32 0.0, %v4691
        %v4693 = vpop.f32.mrb[0].mxu0
        %4694 = vmatprep.mubr.f32.mxu0 0.0
        %4695 = vmatmul.mubr.f32.gmra.mrb[0].mxu0 %v4445
        %v4696 = vpop.f32.mrb[0].mxu0
        %v4697 = vadd.f32 0.0, %v4696
        %v4698 = vpop.f32.mrb[0].mxu0
        %4699 = vmatprep.mubr.f32.mxu0 0.0
        %4700 = vmatmul.mubr.f32.gmra.mrb[0].mxu0 %v4446
        %v4701 = vpop.f32.mrb[0].mxu0
        %v4702 = vadd.f32 0.0, %v4701
        %v4703 = vpop.f32.mrb[0].mxu0
        %4704 = vmatprep.mubr.f32.mxu0 0.0
        %4705 = vmatmul.mubr.f32.gmra.mrb[0].mxu0 %v4447
        %v4706 = vpop.f32.mrb[0].mxu0
        %v4707 = vadd.f32 0.0, %v4706
        %v4708 = vpop.f32.mrb[0].mxu0
        %4709 = vmatprep.mubr.f32.mxu0 0.0
        %4710 = vmatmul.mubr.f32.gmra.mrb[0].mxu0 %v4448
        %v4711 = vpop.f32.mrb[0].mxu0
        %v4712 = vadd.f32 0.0, %v4711
        %v4713 = vpop.f32.mrb[0].mxu0
        %4714 = vmatprep.mubr.f32.mxu0 0.0
        %4715 = vmatmul.mubr.f32.gmra.mrb[0].mxu0 %v4449
        %v4716 = vpop.f32.mrb[0].mxu0
        %v4717 = vadd.f32 0.0, %v4716
        %v4718 = vpop.f32.mrb[0].mxu0
        %4719 = vmatprep.mubr.f32.mxu0 0.0
        %4720 = vmatmul.mubr.f32.gmra.mrb[0].mxu0 %v4450
        %v4721 = vpop.f32.mrb[0].mxu0
        %v4722 = vadd.f32 0.0, %v4721
        %v4723 = vpop.f32.mrb[0].mxu0
        %4724 = vmatprep.mubr.f32.mxu0 0.0
        %4725 = vmatmul.mubr.f32.gmra.mrb[0].mxu0 %v4451
        %v4726 = vpop.f32.mrb[0].mxu0
        %v4727 = vadd.f32 0.0, %v4726
        %v4728 = vpop.f32.mrb[0].mxu0
        %4729 = vmatprep.mubr.f32.mxu0 0.0
        %4730 = vmatmul.mubr.f32.gmra.mrb[0].mxu0 %v4452
        %v4731 = vpop.f32.mrb[0].mxu0
        %v4732 = vadd.f32 0.0, %v4731
        %v4733 = vpop.f32.mrb[0].mxu0
        %4734 = vmatprep.mubr.f32.mxu0 0.0
        %4735 = vmatmul.mubr.f32.gmra.mrb[0].mxu0 %v4453
        %v4736 = vpop.f32.mrb[0].mxu0
        %v4737 = vadd.f32 0.0, %v4736
        %v4738 = vpop.f32.mrb[0].mxu0
        %4739 = vmatprep.mubr.f32.mxu0 0.0
        %4740 = vmatmul.mubr.f32.gmra.mrb[0].mxu0 %v4454
        %v4741 = vpop.f32.mrb[0].mxu0
        %v4742 = vadd.f32 0.0, %v4741
        %v4743 = vpop.f32.mrb[0].mxu0
        %4744 = vmatprep.mubr.f32.mxu0 0.0
        %4745 = vmatmul.mubr.f32.gmra.mrb[0].mxu0 %v4455
        %v4746 = vpop.f32.mrb[0].mxu0
        %v4747 = vadd.f32 0.0, %v4746
        %v4748 = vpop.f32.mrb[0].mxu0
        %4749 = vmatprep.mubr.f32.mxu0 0.0
        %4750 = vmatmul.mubr.f32.gmra.mrb[0].mxu0 %v4456
        %v4751 = vpop.f32.mrb[0].mxu0
        %v4752 = vadd.f32 0.0, %v4751
        %v4753 = vpop.f32.mrb[0].mxu0
        %4754 = vmatprep.mubr.f32.mxu0 0.0
        %4755 = vmatmul.mubr.f32.gmra.mrb[0].mxu0 %v4457
        %v4756 = vpop.f32.mrb[0].mxu0
        %v4757 = vadd.f32 0.0, %v4756
        %v4758 = vpop.f32.mrb[0].mxu0
        %4759 = vmatprep.mubr.f32.mxu0 0.0
        %4760 = vmatmul.mubr.f32.gmra.mrb[0].mxu0 %v4458
        %v4761 = vpop.f32.mrb[0].mxu0
        %v4762 = vadd.f32 0.0, %v4761
        %v4763 = vpop.f32.mrb[0].mxu0
        %4764 = vdwg.mxu0
        %v4765 = vadd.f32 %v4203, %v4526
        %v4766 = vadd.f32 %v4205, %v4528
        %v4767 = vadd.f32 %v4364, %v4687
        %v4768 = vadd.f32 %v4209, %v4532
        %v4769 = vadd.f32 %v4211, %v4534
        %v4770 = vadd.f32 %v4369, %v4692
        %v4771 = vadd.f32 %v4215, %v4538
        %v4772 = vadd.f32 %v4217, %v4540
        %v4773 = vadd.f32 %v4374, %v4697
        %v4774 = vadd.f32 %v4221, %v4544
        %v4775 = vadd.f32 %v4223, %v4546
        %v4776 = vadd.f32 %v4379, %v4702
        %v4777 = vadd.f32 %v4227, %v4550
        %v4778 = vadd.f32 %v4229, %v4552
        %v4779 = vadd.f32 %v4384, %v4707
        %v4780 = vadd.f32 %v4233, %v4556
        %v4781 = vadd.f32 %v4235, %v4558
        %v4782 = vadd.f32 %v4389, %v4712
        %v4783 = vadd.f32 %v4239, %v4562
        %v4784 = vadd.f32 %v4241, %v4564
        %v4785 = vadd.f32 %v4394, %v4717
        %v4786 = vadd.f32 %v4245, %v4568
        %v4787 = vadd.f32 %v4247, %v4570
        %v4788 = vadd.f32 %v4399, %v4722
        %v4789 = vadd.f32 %v4251, %v4574
        %v4790 = vadd.f32 %v4253, %v4576
        %v4791 = vadd.f32 %v4404, %v4727
        %v4792 = vadd.f32 %v4257, %v4580
        %v4793 = vadd.f32 %v4259, %v4582
        %v4794 = vadd.f32 %v4409, %v4732
        %v4795 = vadd.f32 %v4263, %v4586
        %v4796 = vadd.f32 %v4265, %v4588
        %v4797 = vadd.f32 %v4414, %v4737
        %v4798 = vadd.f32 %v4269, %v4592
        %v4799 = vadd.f32 %v4271, %v4594
        %v4800 = vadd.f32 %v4419, %v4742
        %v4801 = vadd.f32 %v4275, %v4598
        %v4802 = vadd.f32 %v4277, %v4600
        %v4803 = vadd.f32 %v4424, %v4747
        %v4804 = vadd.f32 %v4281, %v4604
        %v4805 = vadd.f32 %v4283, %v4606
        %v4806 = vadd.f32 %v4429, %v4752
        %v4807 = vadd.f32 %v4287, %v4610
        %v4808 = vadd.f32 %v4289, %v4612
        %v4809 = vadd.f32 %v4434, %v4757
        %v4810 = vadd.f32 %v4293, %v4616
        %v4811 = vadd.f32 %v4295, %v4618
        %v4812 = vadd.f32 %v4439, %v4762
        %4813 = vset.pattern.permute.xlu0 1
        %4814 = vperm.xlu0 %4813, %v537
        %v4815 = vpop.permute.xlu0 %4814
        %4817 = vset.pattern.permute.xlu0 1
        %4818 = vperm.xlu0 %4817, %v538
        %v4819 = vpop.permute.xlu0 %4818
        %4821 = vset.pattern.permute.xlu0 1
        %4822 = vperm.xlu0 %4821, %v539
        %v4823 = vpop.permute.xlu0 %4822
        %4825 = vset.pattern.permute.xlu0 1
        %4826 = vperm.xlu0 %4825, %v540
        %v4827 = vpop.permute.xlu0 %4826
        %4829 = vset.pattern.permute.xlu0 1
        %4830 = vperm.xlu0 %4829, %v541
        %v4831 = vpop.permute.xlu0 %4830
        %4833 = vset.pattern.permute.xlu0 1
        %4834 = vperm.xlu0 %4833, %v542
        %v4835 = vpop.permute.xlu0 %4834
        %4837 = vset.pattern.permute.xlu0 1
        %4838 = vperm.xlu0 %4837, %v543
        %v4839 = vpop.permute.xlu0 %4838
        %4841 = vset.pattern.permute.xlu0 1
        %4842 = vperm.xlu0 %4841, %v544
        %v4843 = vpop.permute.xlu0 %4842
        %4845 = vset.pattern.permute.xlu0 1
        %4846 = vperm.xlu0 %4845, %v545
        %v4847 = vpop.permute.xlu0 %4846
        %4849 = vset.pattern.permute.xlu0 1
        %4850 = vperm.xlu0 %4849, %v546
        %v4851 = vpop.permute.xlu0 %4850
        %4853 = vset.pattern.permute.xlu0 1
        %4854 = vperm.xlu0 %4853, %v547
        %v4855 = vpop.permute.xlu0 %4854
        %4857 = vset.pattern.permute.xlu0 1
        %4858 = vperm.xlu0 %4857, %v548
        %v4859 = vpop.permute.xlu0 %4858
        %4861 = vset.pattern.permute.xlu0 1
        %4862 = vperm.xlu0 %4861, %v549
        %v4863 = vpop.permute.xlu0 %4862
        %4865 = vset.pattern.permute.xlu0 1
        %4866 = vperm.xlu0 %4865, %v550
        %v4867 = vpop.permute.xlu0 %4866
        %4869 = vset.pattern.permute.xlu0 1
        %4870 = vperm.xlu0 %4869, %v551
        %v4871 = vpop.permute.xlu0 %4870
        %4873 = vset.pattern.permute.xlu0 1
        %4874 = vperm.xlu0 %4873, %v552
        %v4875 = vpop.permute.xlu0 %4874
        %v4877 = vadd.f32 %v4765, %v4815
        %v4878 = vadd.f32 %v4766, %v4815
        %v4879 = vadd.f32 %v4767, %v4815
        %v4880 = vadd.f32 %v4768, %v4819
        %v4881 = vadd.f32 %v4769, %v4819
        %v4882 = vadd.f32 %v4770, %v4819
        %v4883 = vadd.f32 %v4771, %v4823
        %v4884 = vadd.f32 %v4772, %v4823
        %v4885 = vadd.f32 %v4773, %v4823
        %v4886 = vadd.f32 %v4774, %v4827
        %v4887 = vadd.f32 %v4775, %v4827
        %v4888 = vadd.f32 %v4776, %v4827
        %v4889 = vadd.f32 %v4777, %v4831
        %v4890 = vadd.f32 %v4778, %v4831
        %v4891 = vadd.f32 %v4779, %v4831
        %v4892 = vadd.f32 %v4780, %v4835
        %v4893 = vadd.f32 %v4781, %v4835
        %v4894 = vadd.f32 %v4782, %v4835
        %v4895 = vadd.f32 %v4783, %v4839
        %v4896 = vadd.f32 %v4784, %v4839
        %v4897 = vadd.f32 %v4785, %v4839
        %v4898 = vadd.f32 %v4786, %v4843
        %v4899 = vadd.f32 %v4787, %v4843
        %v4900 = vadd.f32 %v4788, %v4843
        %v4901 = vadd.f32 %v4789, %v4847
        %v4902 = vadd.f32 %v4790, %v4847
        %v4903 = vadd.f32 %v4791, %v4847
        %v4904 = vadd.f32 %v4792, %v4851
        %v4905 = vadd.f32 %v4793, %v4851
        %v4906 = vadd.f32 %v4794, %v4851
        %v4907 = vadd.f32 %v4795, %v4855
        %v4908 = vadd.f32 %v4796, %v4855
        %v4909 = vadd.f32 %v4797, %v4855
        %v4910 = vadd.f32 %v4798, %v4859
        %v4911 = vadd.f32 %v4799, %v4859
        %v4912 = vadd.f32 %v4800, %v4859
        %v4913 = vadd.f32 %v4801, %v4863
        %v4914 = vadd.f32 %v4802, %v4863
        %v4915 = vadd.f32 %v4803, %v4863
        %v4916 = vadd.f32 %v4804, %v4867
        %v4917 = vadd.f32 %v4805, %v4867
        %v4918 = vadd.f32 %v4806, %v4867
        %v4919 = vadd.f32 %v4807, %v4871
        %v4920 = vadd.f32 %v4808, %v4871
        %v4921 = vadd.f32 %v4809, %v4871
        %v4922 = vadd.f32 %v4810, %v4875
        %v4923 = vadd.f32 %v4811, %v4875
        %v4924 = vadd.f32 %v4812, %v4875
        %v4925 = vmul.f32 %v4877, 0.5
        %v4926 = vmul.f32 %v4878, 0.5
        %v4927 = vmul.f32 %v4879, 0.5
        %v4928 = vmul.f32 %v4880, 0.5
        %v4929 = vmul.f32 %v4881, 0.5
        %v4930 = vmul.f32 %v4882, 0.5
        %v4931 = vmul.f32 %v4883, 0.5
        %v4932 = vmul.f32 %v4884, 0.5
        %v4933 = vmul.f32 %v4885, 0.5
        %v4934 = vmul.f32 %v4886, 0.5
        %v4935 = vmul.f32 %v4887, 0.5
        %v4936 = vmul.f32 %v4888, 0.5
        %v4937 = vmul.f32 %v4889, 0.5
        %v4938 = vmul.f32 %v4890, 0.5
        %v4939 = vmul.f32 %v4891, 0.5
        %v4940 = vmul.f32 %v4892, 0.5
        %v4941 = vmul.f32 %v4893, 0.5
        %v4942 = vmul.f32 %v4894, 0.5
        %v4943 = vmul.f32 %v4895, 0.5
        %v4944 = vmul.f32 %v4896, 0.5
        %v4945 = vmul.f32 %v4897, 0.5
        %v4946 = vmul.f32 %v4898, 0.5
        %v4947 = vmul.f32 %v4899, 0.5
        %v4948 = vmul.f32 %v4900, 0.5
        %v4949 = vmul.f32 %v4901, 0.5
        %v4950 = vmul.f32 %v4902, 0.5
        %v4951 = vmul.f32 %v4903, 0.5
        %v4952 = vmul.f32 %v4904, 0.5
        %v4953 = vmul.f32 %v4905, 0.5
        %v4954 = vmul.f32 %v4906, 0.5
        %v4955 = vmul.f32 %v4907, 0.5
        %v4956 = vmul.f32 %v4908, 0.5
        %v4957 = vmul.f32 %v4909, 0.5
        %v4958 = vmul.f32 %v4910, 0.5
        %v4959 = vmul.f32 %v4911, 0.5
        %v4960 = vmul.f32 %v4912, 0.5
        %v4961 = vmul.f32 %v4913, 0.5
        %v4962 = vmul.f32 %v4914, 0.5
        %v4963 = vmul.f32 %v4915, 0.5
        %v4964 = vmul.f32 %v4916, 0.5
        %v4965 = vmul.f32 %v4917, 0.5
        %v4966 = vmul.f32 %v4918, 0.5
        %v4967 = vmul.f32 %v4919, 0.5
        %v4968 = vmul.f32 %v4920, 0.5
        %v4969 = vmul.f32 %v4921, 0.5
        %v4970 = vmul.f32 %v4922, 0.5
        %v4971 = vmul.f32 %v4923, 0.5
        %v4972 = vmul.f32 %v4924, 0.5
        %v4973 = vmul.f32 %v4877, 0.70710677
        %v4974 = vmul.f32 %v4878, 0.70710677
        %v4975 = vmul.f32 %v4879, 0.70710677
        %v4976 = vmul.f32 %v4880, 0.70710677
        %v4977 = vmul.f32 %v4881, 0.70710677
        %v4978 = vmul.f32 %v4882, 0.70710677
        %v4979 = vmul.f32 %v4883, 0.70710677
        %v4980 = vmul.f32 %v4884, 0.70710677
        %v4981 = vmul.f32 %v4885, 0.70710677
        %v4982 = vmul.f32 %v4886, 0.70710677
        %v4983 = vmul.f32 %v4887, 0.70710677
        %v4984 = vmul.f32 %v4888, 0.70710677
        %v4985 = vmul.f32 %v4889, 0.70710677
        %v4986 = vmul.f32 %v4890, 0.70710677
        %v4987 = vmul.f32 %v4891, 0.70710677
        %v4988 = vmul.f32 %v4892, 0.70710677
        %v4989 = vmul.f32 %v4893, 0.70710677
        %v4990 = vmul.f32 %v4894, 0.70710677
        %v4991 = vmul.f32 %v4895, 0.70710677
        %v4992 = vmul.f32 %v4896, 0.70710677
        %v4993 = vmul.f32 %v4897, 0.70710677
        %v4994 = vmul.f32 %v4898, 0.70710677
        %v4995 = vmul.f32 %v4899, 0.70710677
        %v4996 = vmul.f32 %v4900, 0.70710677
        %v4997 = vmul.f32 %v4901, 0.70710677
        %v4998 = vmul.f32 %v4902, 0.70710677
        %v4999 = vmul.f32 %v4903, 0.70710677
        %v5000 = vmul.f32 %v4904, 0.70710677
        %v5001 = vmul.f32 %v4905, 0.70710677
        %v5002 = vmul.f32 %v4906, 0.70710677
        %v5003 = vmul.f32 %v4907, 0.70710677
        %v5004 = vmul.f32 %v4908, 0.70710677
        %v5005 = vmul.f32 %v4909, 0.70710677
        %v5006 = vmul.f32 %v4910, 0.70710677
        %v5007 = vmul.f32 %v4911, 0.70710677
        %v5008 = vmul.f32 %v4912, 0.70710677
        %v5009 = vmul.f32 %v4913, 0.70710677
        %v5010 = vmul.f32 %v4914, 0.70710677
        %v5011 = vmul.f32 %v4915, 0.70710677
        %v5012 = vmul.f32 %v4916, 0.70710677
        %v5013 = vmul.f32 %v4917, 0.70710677
        %v5014 = vmul.f32 %v4918, 0.70710677
        %v5015 = vmul.f32 %v4919, 0.70710677
        %v5016 = vmul.f32 %v4920, 0.70710677
        %v5017 = vmul.f32 %v4921, 0.70710677
        %v5018 = vmul.f32 %v4922, 0.70710677
        %v5019 = vmul.f32 %v4923, 0.70710677
        %v5020 = vmul.f32 %v4924, 0.70710677
        %vm5021 = vcmp.ge.f32.partialorder %v4973, 0.0
        %vm5022 = vcmp.ge.f32.partialorder %v4974, 0.0
        %vm5023 = vcmp.ge.f32.partialorder %v4975, 0.0
        %vm5024 = vcmp.ge.f32.partialorder %v4976, 0.0
        %vm5025 = vcmp.ge.f32.partialorder %v4977, 0.0
        %vm5026 = vcmp.ge.f32.partialorder %v4978, 0.0
        %vm5027 = vcmp.ge.f32.partialorder %v4979, 0.0
        %vm5028 = vcmp.ge.f32.partialorder %v4980, 0.0
        %vm5029 = vcmp.ge.f32.partialorder %v4981, 0.0
        %vm5030 = vcmp.ge.f32.partialorder %v4982, 0.0
        %vm5031 = vcmp.ge.f32.partialorder %v4983, 0.0
        %vm5032 = vcmp.ge.f32.partialorder %v4984, 0.0
        %vm5033 = vcmp.ge.f32.partialorder %v4985, 0.0
        %vm5034 = vcmp.ge.f32.partialorder %v4986, 0.0
        %vm5035 = vcmp.ge.f32.partialorder %v4987, 0.0
        %vm5036 = vcmp.ge.f32.partialorder %v4988, 0.0
        %vm5037 = vcmp.ge.f32.partialorder %v4989, 0.0
        %vm5038 = vcmp.ge.f32.partialorder %v4990, 0.0
        %vm5039 = vcmp.ge.f32.partialorder %v4991, 0.0
        %vm5040 = vcmp.ge.f32.partialorder %v4992, 0.0
        %vm5041 = vcmp.ge.f32.partialorder %v4993, 0.0
        %vm5042 = vcmp.ge.f32.partialorder %v4994, 0.0
        %vm5043 = vcmp.ge.f32.partialorder %v4995, 0.0
        %vm5044 = vcmp.ge.f32.partialorder %v4996, 0.0
        %vm5045 = vcmp.ge.f32.partialorder %v4997, 0.0
        %vm5046 = vcmp.ge.f32.partialorder %v4998, 0.0
        %vm5047 = vcmp.ge.f32.partialorder %v4999, 0.0
        %vm5048 = vcmp.ge.f32.partialorder %v5000, 0.0
        %vm5049 = vcmp.ge.f32.partialorder %v5001, 0.0
        %vm5050 = vcmp.ge.f32.partialorder %v5002, 0.0
        %vm5051 = vcmp.ge.f32.partialorder %v5003, 0.0
        %vm5052 = vcmp.ge.f32.partialorder %v5004, 0.0
        %vm5053 = vcmp.ge.f32.partialorder %v5005, 0.0
        %vm5054 = vcmp.ge.f32.partialorder %v5006, 0.0
        %vm5055 = vcmp.ge.f32.partialorder %v5007, 0.0
        %vm5056 = vcmp.ge.f32.partialorder %v5008, 0.0
        %vm5057 = vcmp.ge.f32.partialorder %v5009, 0.0
        %vm5058 = vcmp.ge.f32.partialorder %v5010, 0.0
        %vm5059 = vcmp.ge.f32.partialorder %v5011, 0.0
        %vm5060 = vcmp.ge.f32.partialorder %v5012, 0.0
        %vm5061 = vcmp.ge.f32.partialorder %v5013, 0.0
        %vm5062 = vcmp.ge.f32.partialorder %v5014, 0.0
        %vm5063 = vcmp.ge.f32.partialorder %v5015, 0.0
        %vm5064 = vcmp.ge.f32.partialorder %v5016, 0.0
        %vm5065 = vcmp.ge.f32.partialorder %v5017, 0.0
        %vm5066 = vcmp.ge.f32.partialorder %v5018, 0.0
        %vm5067 = vcmp.ge.f32.partialorder %v5019, 0.0
        %vm5068 = vcmp.ge.f32.partialorder %v5020, 0.0
        %v5069 = vsel %vm5021, 1.0, -1.0
        %v5070 = vsel %vm5022, 1.0, -1.0
        %v5071 = vsel %vm5023, 1.0, -1.0
        %v5072 = vsel %vm5024, 1.0, -1.0
        %v5073 = vsel %vm5025, 1.0, -1.0
        %v5074 = vsel %vm5026, 1.0, -1.0
        %v5075 = vsel %vm5027, 1.0, -1.0
        %v5076 = vsel %vm5028, 1.0, -1.0
        %v5077 = vsel %vm5029, 1.0, -1.0
        %v5078 = vsel %vm5030, 1.0, -1.0
        %v5079 = vsel %vm5031, 1.0, -1.0
        %v5080 = vsel %vm5032, 1.0, -1.0
        %v5081 = vsel %vm5033, 1.0, -1.0
        %v5082 = vsel %vm5034, 1.0, -1.0
        %v5083 = vsel %vm5035, 1.0, -1.0
        %v5084 = vsel %vm5036, 1.0, -1.0
        %v5085 = vsel %vm5037, 1.0, -1.0
        %v5086 = vsel %vm5038, 1.0, -1.0
        %v5087 = vsel %vm5039, 1.0, -1.0
        %v5088 = vsel %vm5040, 1.0, -1.0
        %v5089 = vsel %vm5041, 1.0, -1.0
        %v5090 = vsel %vm5042, 1.0, -1.0
        %v5091 = vsel %vm5043, 1.0, -1.0
        %v5092 = vsel %vm5044, 1.0, -1.0
        %v5093 = vsel %vm5045, 1.0, -1.0
        %v5094 = vsel %vm5046, 1.0, -1.0
        %v5095 = vsel %vm5047, 1.0, -1.0
        %v5096 = vsel %vm5048, 1.0, -1.0
        %v5097 = vsel %vm5049, 1.0, -1.0
        %v5098 = vsel %vm5050, 1.0, -1.0
        %v5099 = vsel %vm5051, 1.0, -1.0
        %v5100 = vsel %vm5052, 1.0, -1.0
        %v5101 = vsel %vm5053, 1.0, -1.0
        %v5102 = vsel %vm5054, 1.0, -1.0
        %v5103 = vsel %vm5055, 1.0, -1.0
        %v5104 = vsel %vm5056, 1.0, -1.0
        %v5105 = vsel %vm5057, 1.0, -1.0
        %v5106 = vsel %vm5058, 1.0, -1.0
        %v5107 = vsel %vm5059, 1.0, -1.0
        %v5108 = vsel %vm5060, 1.0, -1.0
        %v5109 = vsel %vm5061, 1.0, -1.0
        %v5110 = vsel %vm5062, 1.0, -1.0
        %v5111 = vsel %vm5063, 1.0, -1.0
        %v5112 = vsel %vm5064, 1.0, -1.0
        %v5113 = vsel %vm5065, 1.0, -1.0
        %v5114 = vsel %vm5066, 1.0, -1.0
        %v5115 = vsel %vm5067, 1.0, -1.0
        %v5116 = vsel %vm5068, 1.0, -1.0
        %v5117 = vand.u32 2147483647, %v4973
        %v5118 = vand.u32 2147483647, %v4974
        %v5119 = vand.u32 2147483647, %v4975
        %v5120 = vand.u32 2147483647, %v4976
        %v5121 = vand.u32 2147483647, %v4977
        %v5122 = vand.u32 2147483647, %v4978
        %v5123 = vand.u32 2147483647, %v4979
        %v5124 = vand.u32 2147483647, %v4980
        %v5125 = vand.u32 2147483647, %v4981
        %v5126 = vand.u32 2147483647, %v4982
        %v5127 = vand.u32 2147483647, %v4983
        %v5128 = vand.u32 2147483647, %v4984
        %v5129 = vand.u32 2147483647, %v4985
        %v5130 = vand.u32 2147483647, %v4986
        %v5131 = vand.u32 2147483647, %v4987
        %v5132 = vand.u32 2147483647, %v4988
        %v5133 = vand.u32 2147483647, %v4989
        %v5134 = vand.u32 2147483647, %v4990
        %v5135 = vand.u32 2147483647, %v4991
        %v5136 = vand.u32 2147483647, %v4992
        %v5137 = vand.u32 2147483647, %v4993
        %v5138 = vand.u32 2147483647, %v4994
        %v5139 = vand.u32 2147483647, %v4995
        %v5140 = vand.u32 2147483647, %v4996
        %v5141 = vand.u32 2147483647, %v4997
        %v5142 = vand.u32 2147483647, %v4998
        %v5143 = vand.u32 2147483647, %v4999
        %v5144 = vand.u32 2147483647, %v5000
        %v5145 = vand.u32 2147483647, %v5001
        %v5146 = vand.u32 2147483647, %v5002
        %v5147 = vand.u32 2147483647, %v5003
        %v5148 = vand.u32 2147483647, %v5004
        %v5149 = vand.u32 2147483647, %v5005
        %v5150 = vand.u32 2147483647, %v5006
        %v5151 = vand.u32 2147483647, %v5007
        %v5152 = vand.u32 2147483647, %v5008
        %v5153 = vand.u32 2147483647, %v5009
        %v5154 = vand.u32 2147483647, %v5010
        %v5155 = vand.u32 2147483647, %v5011
        %v5156 = vand.u32 2147483647, %v5012
        %v5157 = vand.u32 2147483647, %v5013
        %v5158 = vand.u32 2147483647, %v5014
        %v5159 = vand.u32 2147483647, %v5015
        %v5160 = vand.u32 2147483647, %v5016
        %v5161 = vand.u32 2147483647, %v5017
        %v5162 = vand.u32 2147483647, %v5018
        %v5163 = vand.u32 2147483647, %v5019
        %v5164 = vand.u32 2147483647, %v5020
        %v5165 = vmul.f32 %v5117, 0.3275911
        %v5166 = vmul.f32 %v5118, 0.3275911
        %v5167 = vmul.f32 %v5119, 0.3275911
        %v5168 = vmul.f32 %v5120, 0.3275911
        %v5169 = vmul.f32 %v5121, 0.3275911
        %v5170 = vmul.f32 %v5122, 0.3275911
        %v5171 = vmul.f32 %v5123, 0.3275911
        %v5172 = vmul.f32 %v5124, 0.3275911
        %v5173 = vmul.f32 %v5125, 0.3275911
        %v5174 = vmul.f32 %v5126, 0.3275911
        %v5175 = vmul.f32 %v5127, 0.3275911
        %v5176 = vmul.f32 %v5128, 0.3275911
        %v5177 = vmul.f32 %v5129, 0.3275911
        %v5178 = vmul.f32 %v5130, 0.3275911
        %v5179 = vmul.f32 %v5131, 0.3275911
        %v5180 = vmul.f32 %v5132, 0.3275911
        %v5181 = vmul.f32 %v5133, 0.3275911
        %v5182 = vmul.f32 %v5134, 0.3275911
        %v5183 = vmul.f32 %v5135, 0.3275911
        %v5184 = vmul.f32 %v5136, 0.3275911
        %v5185 = vmul.f32 %v5137, 0.3275911
        %v5186 = vmul.f32 %v5138, 0.3275911
        %v5187 = vmul.f32 %v5139, 0.3275911
        %v5188 = vmul.f32 %v5140, 0.3275911
        %v5189 = vmul.f32 %v5141, 0.3275911
        %v5190 = vmul.f32 %v5142, 0.3275911
        %v5191 = vmul.f32 %v5143, 0.3275911
        %v5192 = vmul.f32 %v5144, 0.3275911
        %v5193 = vmul.f32 %v5145, 0.3275911
        %v5194 = vmul.f32 %v5146, 0.3275911
        %v5195 = vmul.f32 %v5147, 0.3275911
        %v5196 = vmul.f32 %v5148, 0.3275911
        %v5197 = vmul.f32 %v5149, 0.3275911
        %v5198 = vmul.f32 %v5150, 0.3275911
        %v5199 = vmul.f32 %v5151, 0.3275911
        %v5200 = vmul.f32 %v5152, 0.3275911
        %v5201 = vmul.f32 %v5153, 0.3275911
        %v5202 = vmul.f32 %v5154, 0.3275911
        %v5203 = vmul.f32 %v5155, 0.3275911
        %v5204 = vmul.f32 %v5156, 0.3275911
        %v5205 = vmul.f32 %v5157, 0.3275911
        %v5206 = vmul.f32 %v5158, 0.3275911
        %v5207 = vmul.f32 %v5159, 0.3275911
        %v5208 = vmul.f32 %v5160, 0.3275911
        %v5209 = vmul.f32 %v5161, 0.3275911
        %v5210 = vmul.f32 %v5162, 0.3275911
        %v5211 = vmul.f32 %v5163, 0.3275911
        %v5212 = vmul.f32 %v5164, 0.3275911
        %v5213 = vadd.f32 %v5165, 1.0
        %v5214 = vadd.f32 %v5166, 1.0
        %v5215 = vadd.f32 %v5167, 1.0
        %v5216 = vadd.f32 %v5168, 1.0
        %v5217 = vadd.f32 %v5169, 1.0
        %v5218 = vadd.f32 %v5170, 1.0
        %v5219 = vadd.f32 %v5171, 1.0
        %v5220 = vadd.f32 %v5172, 1.0
        %v5221 = vadd.f32 %v5173, 1.0
        %v5222 = vadd.f32 %v5174, 1.0
        %v5223 = vadd.f32 %v5175, 1.0
        %v5224 = vadd.f32 %v5176, 1.0
        %v5225 = vadd.f32 %v5177, 1.0
        %v5226 = vadd.f32 %v5178, 1.0
        %v5227 = vadd.f32 %v5179, 1.0
        %v5228 = vadd.f32 %v5180, 1.0
        %v5229 = vadd.f32 %v5181, 1.0
        %v5230 = vadd.f32 %v5182, 1.0
        %v5231 = vadd.f32 %v5183, 1.0
        %v5232 = vadd.f32 %v5184, 1.0
        %v5233 = vadd.f32 %v5185, 1.0
        %v5234 = vadd.f32 %v5186, 1.0
        %v5235 = vadd.f32 %v5187, 1.0
        %v5236 = vadd.f32 %v5188, 1.0
        %v5237 = vadd.f32 %v5189, 1.0
        %v5238 = vadd.f32 %v5190, 1.0
        %v5239 = vadd.f32 %v5191, 1.0
        %v5240 = vadd.f32 %v5192, 1.0
        %v5241 = vadd.f32 %v5193, 1.0
        %v5242 = vadd.f32 %v5194, 1.0
        %v5243 = vadd.f32 %v5195, 1.0
        %v5244 = vadd.f32 %v5196, 1.0
        %v5245 = vadd.f32 %v5197, 1.0
        %v5246 = vadd.f32 %v5198, 1.0
        %v5247 = vadd.f32 %v5199, 1.0
        %v5248 = vadd.f32 %v5200, 1.0
        %v5249 = vadd.f32 %v5201, 1.0
        %v5250 = vadd.f32 %v5202, 1.0
        %v5251 = vadd.f32 %v5203, 1.0
        %v5252 = vadd.f32 %v5204, 1.0
        %v5253 = vadd.f32 %v5205, 1.0
        %v5254 = vadd.f32 %v5206, 1.0
        %v5255 = vadd.f32 %v5207, 1.0
        %v5256 = vadd.f32 %v5208, 1.0
        %v5257 = vadd.f32 %v5209, 1.0
        %v5258 = vadd.f32 %v5210, 1.0
        %v5259 = vadd.f32 %v5211, 1.0
        %v5260 = vadd.f32 %v5212, 1.0
        %v5261 = vrcp.pop %v5213
        %v5262 = vmul.f32 1.0, %v5261
        %v5263 = vrcp.pop %v5214
        %v5264 = vmul.f32 1.0, %v5263
        %v5265 = vrcp.pop %v5215
        %v5266 = vmul.f32 1.0, %v5265
        %v5267 = vrcp.pop %v5216
        %v5268 = vmul.f32 1.0, %v5267
        %v5269 = vrcp.pop %v5217
        %v5270 = vmul.f32 1.0, %v5269
        %v5271 = vrcp.pop %v5218
        %v5272 = vmul.f32 1.0, %v5271
        %v5273 = vrcp.pop %v5219
        %v5274 = vmul.f32 1.0, %v5273
        %v5275 = vrcp.pop %v5220
        %v5276 = vmul.f32 1.0, %v5275
        %v5277 = vrcp.pop %v5221
        %v5278 = vmul.f32 1.0, %v5277
        %v5279 = vrcp.pop %v5222
        %v5280 = vmul.f32 1.0, %v5279
        %v5281 = vrcp.pop %v5223
        %v5282 = vmul.f32 1.0, %v5281
        %v5283 = vrcp.pop %v5224
        %v5284 = vmul.f32 1.0, %v5283
        %v5285 = vrcp.pop %v5225
        %v5286 = vmul.f32 1.0, %v5285
        %v5287 = vrcp.pop %v5226
        %v5288 = vmul.f32 1.0, %v5287
        %v5289 = vrcp.pop %v5227
        %v5290 = vmul.f32 1.0, %v5289
        %v5291 = vrcp.pop %v5228
        %v5292 = vmul.f32 1.0, %v5291
        %v5293 = vrcp.pop %v5229
        %v5294 = vmul.f32 1.0, %v5293
        %v5295 = vrcp.pop %v5230
        %v5296 = vmul.f32 1.0, %v5295
        %v5297 = vrcp.pop %v5231
        %v5298 = vmul.f32 1.0, %v5297
        %v5299 = vrcp.pop %v5232
        %v5300 = vmul.f32 1.0, %v5299
        %v5301 = vrcp.pop %v5233
        %v5302 = vmul.f32 1.0, %v5301
        %v5303 = vrcp.pop %v5234
        %v5304 = vmul.f32 1.0, %v5303
        %v5305 = vrcp.pop %v5235
        %v5306 = vmul.f32 1.0, %v5305
        %v5307 = vrcp.pop %v5236
        %v5308 = vmul.f32 1.0, %v5307
        %v5309 = vrcp.pop %v5237
        %v5310 = vmul.f32 1.0, %v5309
        %v5311 = vrcp.pop %v5238
        %v5312 = vmul.f32 1.0, %v5311
        %v5313 = vrcp.pop %v5239
        %v5314 = vmul.f32 1.0, %v5313
        %v5315 = vrcp.pop %v5240
        %v5316 = vmul.f32 1.0, %v5315
        %v5317 = vrcp.pop %v5241
        %v5318 = vmul.f32 1.0, %v5317
        %v5319 = vrcp.pop %v5242
        %v5320 = vmul.f32 1.0, %v5319
        %v5321 = vrcp.pop %v5243
        %v5322 = vmul.f32 1.0, %v5321
        %v5323 = vrcp.pop %v5244
        %v5324 = vmul.f32 1.0, %v5323
        %v5325 = vrcp.pop %v5245
        %v5326 = vmul.f32 1.0, %v5325
        %v5327 = vrcp.pop %v5246
        %v5328 = vmul.f32 1.0, %v5327
        %v5329 = vrcp.pop %v5247
        %v5330 = vmul.f32 1.0, %v5329
        %v5331 = vrcp.pop %v5248
        %v5332 = vmul.f32 1.0, %v5331
        %v5333 = vrcp.pop %v5249
        %v5334 = vmul.f32 1.0, %v5333
        %v5335 = vrcp.pop %v5250
        %v5336 = vmul.f32 1.0, %v5335
        %v5337 = vrcp.pop %v5251
        %v5338 = vmul.f32 1.0, %v5337
        %v5339 = vrcp.pop %v5252
        %v5340 = vmul.f32 1.0, %v5339
        %v5341 = vrcp.pop %v5253
        %v5342 = vmul.f32 1.0, %v5341
        %v5343 = vrcp.pop %v5254
        %v5344 = vmul.f32 1.0, %v5343
        %v5345 = vrcp.pop %v5255
        %v5346 = vmul.f32 1.0, %v5345
        %v5347 = vrcp.pop %v5256
        %v5348 = vmul.f32 1.0, %v5347
        %v5349 = vrcp.pop %v5257
        %v5350 = vmul.f32 1.0, %v5349
        %v5351 = vrcp.pop %v5258
        %v5352 = vmul.f32 1.0, %v5351
        %v5353 = vrcp.pop %v5259
        %v5354 = vmul.f32 1.0, %v5353
        %v5355 = vrcp.pop %v5260
        %v5356 = vmul.f32 1.0, %v5355
        %v5357 = vmul.f32 %v5262, 1.0614054
        %v5358 = vmul.f32 %v5264, 1.0614054
        %v5359 = vmul.f32 %v5266, 1.0614054
        %v5360 = vmul.f32 %v5268, 1.0614054
        %v5361 = vmul.f32 %v5270, 1.0614054
        %v5362 = vmul.f32 %v5272, 1.0614054
        %v5363 = vmul.f32 %v5274, 1.0614054
        %v5364 = vmul.f32 %v5276, 1.0614054
        %v5365 = vmul.f32 %v5278, 1.0614054
        %v5366 = vmul.f32 %v5280, 1.0614054
        %v5367 = vmul.f32 %v5282, 1.0614054
        %v5368 = vmul.f32 %v5284, 1.0614054
        %v5369 = vmul.f32 %v5286, 1.0614054
        %v5370 = vmul.f32 %v5288, 1.0614054
        %v5371 = vmul.f32 %v5290, 1.0614054
        %v5372 = vmul.f32 %v5292, 1.0614054
        %v5373 = vmul.f32 %v5294, 1.0614054
        %v5374 = vmul.f32 %v5296, 1.0614054
        %v5375 = vmul.f32 %v5298, 1.0614054
        %v5376 = vmul.f32 %v5300, 1.0614054
        %v5377 = vmul.f32 %v5302, 1.0614054
        %v5378 = vmul.f32 %v5304, 1.0614054
        %v5379 = vmul.f32 %v5306, 1.0614054
        %v5380 = vmul.f32 %v5308, 1.0614054
        %v5381 = vmul.f32 %v5310, 1.0614054
        %v5382 = vmul.f32 %v5312, 1.0614054
        %v5383 = vmul.f32 %v5314, 1.0614054
        %v5384 = vmul.f32 %v5316, 1.0614054
        %v5385 = vmul.f32 %v5318, 1.0614054
        %v5386 = vmul.f32 %v5320, 1.0614054
        %v5387 = vmul.f32 %v5322, 1.0614054
        %v5388 = vmul.f32 %v5324, 1.0614054
        %v5389 = vmul.f32 %v5326, 1.0614054
        %v5390 = vmul.f32 %v5328, 1.0614054
        %v5391 = vmul.f32 %v5330, 1.0614054
        %v5392 = vmul.f32 %v5332, 1.0614054
        %v5393 = vmul.f32 %v5334, 1.0614054
        %v5394 = vmul.f32 %v5336, 1.0614054
        %v5395 = vmul.f32 %v5338, 1.0614054
        %v5396 = vmul.f32 %v5340, 1.0614054
        %v5397 = vmul.f32 %v5342, 1.0614054
        %v5398 = vmul.f32 %v5344, 1.0614054
        %v5399 = vmul.f32 %v5346, 1.0614054
        %v5400 = vmul.f32 %v5348, 1.0614054
        %v5401 = vmul.f32 %v5350, 1.0614054
        %v5402 = vmul.f32 %v5352, 1.0614054
        %v5403 = vmul.f32 %v5354, 1.0614054
        %v5404 = vmul.f32 %v5356, 1.0614054
        %v5405 = vsub.f32 %v5357, 1.4531521
        %v5406 = vsub.f32 %v5358, 1.4531521
        %v5407 = vsub.f32 %v5359, 1.4531521
        %v5408 = vsub.f32 %v5360, 1.4531521
        %v5409 = vsub.f32 %v5361, 1.4531521
        %v5410 = vsub.f32 %v5362, 1.4531521
        %v5411 = vsub.f32 %v5363, 1.4531521
        %v5412 = vsub.f32 %v5364, 1.4531521
        %v5413 = vsub.f32 %v5365, 1.4531521
        %v5414 = vsub.f32 %v5366, 1.4531521
        %v5415 = vsub.f32 %v5367, 1.4531521
        %v5416 = vsub.f32 %v5368, 1.4531521
        %v5417 = vsub.f32 %v5369, 1.4531521
        %v5418 = vsub.f32 %v5370, 1.4531521
        %v5419 = vsub.f32 %v5371, 1.4531521
        %v5420 = vsub.f32 %v5372, 1.4531521
        %v5421 = vsub.f32 %v5373, 1.4531521
        %v5422 = vsub.f32 %v5374, 1.4531521
        %v5423 = vsub.f32 %v5375, 1.4531521
        %v5424 = vsub.f32 %v5376, 1.4531521
        %v5425 = vsub.f32 %v5377, 1.4531521
        %v5426 = vsub.f32 %v5378, 1.4531521
        %v5427 = vsub.f32 %v5379, 1.4531521
        %v5428 = vsub.f32 %v5380, 1.4531521
        %v5429 = vsub.f32 %v5381, 1.4531521
        %v5430 = vsub.f32 %v5382, 1.4531521
        %v5431 = vsub.f32 %v5383, 1.4531521
        %v5432 = vsub.f32 %v5384, 1.4531521
        %v5433 = vsub.f32 %v5385, 1.4531521
        %v5434 = vsub.f32 %v5386, 1.4531521
        %v5435 = vsub.f32 %v5387, 1.4531521
        %v5436 = vsub.f32 %v5388, 1.4531521
        %v5437 = vsub.f32 %v5389, 1.4531521
        %v5438 = vsub.f32 %v5390, 1.4531521
        %v5439 = vsub.f32 %v5391, 1.4531521
        %v5440 = vsub.f32 %v5392, 1.4531521
        %v5441 = vsub.f32 %v5393, 1.4531521
        %v5442 = vsub.f32 %v5394, 1.4531521
        %v5443 = vsub.f32 %v5395, 1.4531521
        %v5444 = vsub.f32 %v5396, 1.4531521
        %v5445 = vsub.f32 %v5397, 1.4531521
        %v5446 = vsub.f32 %v5398, 1.4531521
        %v5447 = vsub.f32 %v5399, 1.4531521
        %v5448 = vsub.f32 %v5400, 1.4531521
        %v5449 = vsub.f32 %v5401, 1.4531521
        %v5450 = vsub.f32 %v5402, 1.4531521
        %v5451 = vsub.f32 %v5403, 1.4531521
        %v5452 = vsub.f32 %v5404, 1.4531521
        %v5453 = vmul.f32 %v5405, %v5262
        %v5454 = vmul.f32 %v5406, %v5264
        %v5455 = vmul.f32 %v5407, %v5266
        %v5456 = vmul.f32 %v5408, %v5268
        %v5457 = vmul.f32 %v5409, %v5270
        %v5458 = vmul.f32 %v5410, %v5272
        %v5459 = vmul.f32 %v5411, %v5274
        %v5460 = vmul.f32 %v5412, %v5276
        %v5461 = vmul.f32 %v5413, %v5278
        %v5462 = vmul.f32 %v5414, %v5280
        %v5463 = vmul.f32 %v5415, %v5282
        %v5464 = vmul.f32 %v5416, %v5284
        %v5465 = vmul.f32 %v5417, %v5286
        %v5466 = vmul.f32 %v5418, %v5288
        %v5467 = vmul.f32 %v5419, %v5290
        %v5468 = vmul.f32 %v5420, %v5292
        %v5469 = vmul.f32 %v5421, %v5294
        %v5470 = vmul.f32 %v5422, %v5296
        %v5471 = vmul.f32 %v5423, %v5298
        %v5472 = vmul.f32 %v5424, %v5300
        %v5473 = vmul.f32 %v5425, %v5302
        %v5474 = vmul.f32 %v5426, %v5304
        %v5475 = vmul.f32 %v5427, %v5306
        %v5476 = vmul.f32 %v5428, %v5308
        %v5477 = vmul.f32 %v5429, %v5310
        %v5478 = vmul.f32 %v5430, %v5312
        %v5479 = vmul.f32 %v5431, %v5314
        %v5480 = vmul.f32 %v5432, %v5316
        %v5481 = vmul.f32 %v5433, %v5318
        %v5482 = vmul.f32 %v5434, %v5320
        %v5483 = vmul.f32 %v5435, %v5322
        %v5484 = vmul.f32 %v5436, %v5324
        %v5485 = vmul.f32 %v5437, %v5326
        %v5486 = vmul.f32 %v5438, %v5328
        %v5487 = vmul.f32 %v5439, %v5330
        %v5488 = vmul.f32 %v5440, %v5332
        %v5489 = vmul.f32 %v5441, %v5334
        %v5490 = vmul.f32 %v5442, %v5336
        %v5491 = vmul.f32 %v5443, %v5338
        %v5492 = vmul.f32 %v5444, %v5340
        %v5493 = vmul.f32 %v5445, %v5342
        %v5494 = vmul.f32 %v5446, %v5344
        %v5495 = vmul.f32 %v5447, %v5346
        %v5496 = vmul.f32 %v5448, %v5348
        %v5497 = vmul.f32 %v5449, %v5350
        %v5498 = vmul.f32 %v5450, %v5352
        %v5499 = vmul.f32 %v5451, %v5354
        %v5500 = vmul.f32 %v5452, %v5356
        %v5501 = vadd.f32 %v5453, 1.4214138
        %v5502 = vadd.f32 %v5454, 1.4214138
        %v5503 = vadd.f32 %v5455, 1.4214138
        %v5504 = vadd.f32 %v5456, 1.4214138
        %v5505 = vadd.f32 %v5457, 1.4214138
        %v5506 = vadd.f32 %v5458, 1.4214138
        %v5507 = vadd.f32 %v5459, 1.4214138
        %v5508 = vadd.f32 %v5460, 1.4214138
        %v5509 = vadd.f32 %v5461, 1.4214138
        %v5510 = vadd.f32 %v5462, 1.4214138
        %v5511 = vadd.f32 %v5463, 1.4214138
        %v5512 = vadd.f32 %v5464, 1.4214138
        %v5513 = vadd.f32 %v5465, 1.4214138
        %v5514 = vadd.f32 %v5466, 1.4214138
        %v5515 = vadd.f32 %v5467, 1.4214138
        %v5516 = vadd.f32 %v5468, 1.4214138
        %v5517 = vadd.f32 %v5469, 1.4214138
        %v5518 = vadd.f32 %v5470, 1.4214138
        %v5519 = vadd.f32 %v5471, 1.4214138
        %v5520 = vadd.f32 %v5472, 1.4214138
        %v5521 = vadd.f32 %v5473, 1.4214138
        %v5522 = vadd.f32 %v5474, 1.4214138
        %v5523 = vadd.f32 %v5475, 1.4214138
        %v5524 = vadd.f32 %v5476, 1.4214138
        %v5525 = vadd.f32 %v5477, 1.4214138
        %v5526 = vadd.f32 %v5478, 1.4214138
        %v5527 = vadd.f32 %v5479, 1.4214138
        %v5528 = vadd.f32 %v5480, 1.4214138
        %v5529 = vadd.f32 %v5481, 1.4214138
        %v5530 = vadd.f32 %v5482, 1.4214138
        %v5531 = vadd.f32 %v5483, 1.4214138
        %v5532 = vadd.f32 %v5484, 1.4214138
        %v5533 = vadd.f32 %v5485, 1.4214138
        %v5534 = vadd.f32 %v5486, 1.4214138
        %v5535 = vadd.f32 %v5487, 1.4214138
        %v5536 = vadd.f32 %v5488, 1.4214138
        %v5537 = vadd.f32 %v5489, 1.4214138
        %v5538 = vadd.f32 %v5490, 1.4214138
        %v5539 = vadd.f32 %v5491, 1.4214138
        %v5540 = vadd.f32 %v5492, 1.4214138
        %v5541 = vadd.f32 %v5493, 1.4214138
        %v5542 = vadd.f32 %v5494, 1.4214138
        %v5543 = vadd.f32 %v5495, 1.4214138
        %v5544 = vadd.f32 %v5496, 1.4214138
        %v5545 = vadd.f32 %v5497, 1.4214138
        %v5546 = vadd.f32 %v5498, 1.4214138
        %v5547 = vadd.f32 %v5499, 1.4214138
        %v5548 = vadd.f32 %v5500, 1.4214138
        %v5549 = vmul.f32 %v5501, %v5262
        %v5550 = vmul.f32 %v5502, %v5264
        %v5551 = vmul.f32 %v5503, %v5266
        %v5552 = vmul.f32 %v5504, %v5268
        %v5553 = vmul.f32 %v5505, %v5270
        %v5554 = vmul.f32 %v5506, %v5272
        %v5555 = vmul.f32 %v5507, %v5274
        %v5556 = vmul.f32 %v5508, %v5276
        %v5557 = vmul.f32 %v5509, %v5278
        %v5558 = vmul.f32 %v5510, %v5280
        %v5559 = vmul.f32 %v5511, %v5282
        %v5560 = vmul.f32 %v5512, %v5284
        %v5561 = vmul.f32 %v5513, %v5286
        %v5562 = vmul.f32 %v5514, %v5288
        %v5563 = vmul.f32 %v5515, %v5290
        %v5564 = vmul.f32 %v5516, %v5292
        %v5565 = vmul.f32 %v5517, %v5294
        %v5566 = vmul.f32 %v5518, %v5296
        %v5567 = vmul.f32 %v5519, %v5298
        %v5568 = vmul.f32 %v5520, %v5300
        %v5569 = vmul.f32 %v5521, %v5302
        %v5570 = vmul.f32 %v5522, %v5304
        %v5571 = vmul.f32 %v5523, %v5306
        %v5572 = vmul.f32 %v5524, %v5308
        %v5573 = vmul.f32 %v5525, %v5310
        %v5574 = vmul.f32 %v5526, %v5312
        %v5575 = vmul.f32 %v5527, %v5314
        %v5576 = vmul.f32 %v5528, %v5316
        %v5577 = vmul.f32 %v5529, %v5318
        %v5578 = vmul.f32 %v5530, %v5320
        %v5579 = vmul.f32 %v5531, %v5322
        %v5580 = vmul.f32 %v5532, %v5324
        %v5581 = vmul.f32 %v5533, %v5326
        %v5582 = vmul.f32 %v5534, %v5328
        %v5583 = vmul.f32 %v5535, %v5330
        %v5584 = vmul.f32 %v5536, %v5332
        %v5585 = vmul.f32 %v5537, %v5334
        %v5586 = vmul.f32 %v5538, %v5336
        %v5587 = vmul.f32 %v5539, %v5338
        %v5588 = vmul.f32 %v5540, %v5340
        %v5589 = vmul.f32 %v5541, %v5342
        %v5590 = vmul.f32 %v5542, %v5344
        %v5591 = vmul.f32 %v5543, %v5346
        %v5592 = vmul.f32 %v5544, %v5348
        %v5593 = vmul.f32 %v5545, %v5350
        %v5594 = vmul.f32 %v5546, %v5352
        %v5595 = vmul.f32 %v5547, %v5354
        %v5596 = vmul.f32 %v5548, %v5356
        %v5597 = vsub.f32 %v5549, 0.28449672
        %v5598 = vsub.f32 %v5550, 0.28449672
        %v5599 = vsub.f32 %v5551, 0.28449672
        %v5600 = vsub.f32 %v5552, 0.28449672
        %v5601 = vsub.f32 %v5553, 0.28449672
        %v5602 = vsub.f32 %v5554, 0.28449672
        %v5603 = vsub.f32 %v5555, 0.28449672
        %v5604 = vsub.f32 %v5556, 0.28449672
        %v5605 = vsub.f32 %v5557, 0.28449672
        %v5606 = vsub.f32 %v5558, 0.28449672
        %v5607 = vsub.f32 %v5559, 0.28449672
        %v5608 = vsub.f32 %v5560, 0.28449672
        %v5609 = vsub.f32 %v5561, 0.28449672
        %v5610 = vsub.f32 %v5562, 0.28449672
        %v5611 = vsub.f32 %v5563, 0.28449672
        %v5612 = vsub.f32 %v5564, 0.28449672
        %v5613 = vsub.f32 %v5565, 0.28449672
        %v5614 = vsub.f32 %v5566, 0.28449672
        %v5615 = vsub.f32 %v5567, 0.28449672
        %v5616 = vsub.f32 %v5568, 0.28449672
        %v5617 = vsub.f32 %v5569, 0.28449672
        %v5618 = vsub.f32 %v5570, 0.28449672
        %v5619 = vsub.f32 %v5571, 0.28449672
        %v5620 = vsub.f32 %v5572, 0.28449672
        %v5621 = vsub.f32 %v5573, 0.28449672
        %v5622 = vsub.f32 %v5574, 0.28449672
        %v5623 = vsub.f32 %v5575, 0.28449672
        %v5624 = vsub.f32 %v5576, 0.28449672
        %v5625 = vsub.f32 %v5577, 0.28449672
        %v5626 = vsub.f32 %v5578, 0.28449672
        %v5627 = vsub.f32 %v5579, 0.28449672
        %v5628 = vsub.f32 %v5580, 0.28449672
        %v5629 = vsub.f32 %v5581, 0.28449672
        %v5630 = vsub.f32 %v5582, 0.28449672
        %v5631 = vsub.f32 %v5583, 0.28449672
        %v5632 = vsub.f32 %v5584, 0.28449672
        %v5633 = vsub.f32 %v5585, 0.28449672
        %v5634 = vsub.f32 %v5586, 0.28449672
        %v5635 = vsub.f32 %v5587, 0.28449672
        %v5636 = vsub.f32 %v5588, 0.28449672
        %v5637 = vsub.f32 %v5589, 0.28449672
        %v5638 = vsub.f32 %v5590, 0.28449672
        %v5639 = vsub.f32 %v5591, 0.28449672
        %v5640 = vsub.f32 %v5592, 0.28449672
        %v5641 = vsub.f32 %v5593, 0.28449672
        %v5642 = vsub.f32 %v5594, 0.28449672
        %v5643 = vsub.f32 %v5595, 0.28449672
        %v5644 = vsub.f32 %v5596, 0.28449672
        %v5645 = vmul.f32 %v5597, %v5262
        %v5646 = vmul.f32 %v5598, %v5264
        %v5647 = vmul.f32 %v5599, %v5266
        %v5648 = vmul.f32 %v5600, %v5268
        %v5649 = vmul.f32 %v5601, %v5270
        %v5650 = vmul.f32 %v5602, %v5272
        %v5651 = vmul.f32 %v5603, %v5274
        %v5652 = vmul.f32 %v5604, %v5276
        %v5653 = vmul.f32 %v5605, %v5278
        %v5654 = vmul.f32 %v5606, %v5280
        %v5655 = vmul.f32 %v5607, %v5282
        %v5656 = vmul.f32 %v5608, %v5284
        %v5657 = vmul.f32 %v5609, %v5286
        %v5658 = vmul.f32 %v5610, %v5288
        %v5659 = vmul.f32 %v5611, %v5290
        %v5660 = vmul.f32 %v5612, %v5292
        %v5661 = vmul.f32 %v5613, %v5294
        %v5662 = vmul.f32 %v5614, %v5296
        %v5663 = vmul.f32 %v5615, %v5298
        %v5664 = vmul.f32 %v5616, %v5300
        %v5665 = vmul.f32 %v5617, %v5302
        %v5666 = vmul.f32 %v5618, %v5304
        %v5667 = vmul.f32 %v5619, %v5306
        %v5668 = vmul.f32 %v5620, %v5308
        %v5669 = vmul.f32 %v5621, %v5310
        %v5670 = vmul.f32 %v5622, %v5312
        %v5671 = vmul.f32 %v5623, %v5314
        %v5672 = vmul.f32 %v5624, %v5316
        %v5673 = vmul.f32 %v5625, %v5318
        %v5674 = vmul.f32 %v5626, %v5320
        %v5675 = vmul.f32 %v5627, %v5322
        %v5676 = vmul.f32 %v5628, %v5324
        %v5677 = vmul.f32 %v5629, %v5326
        %v5678 = vmul.f32 %v5630, %v5328
        %v5679 = vmul.f32 %v5631, %v5330
        %v5680 = vmul.f32 %v5632, %v5332
        %v5681 = vmul.f32 %v5633, %v5334
        %v5682 = vmul.f32 %v5634, %v5336
        %v5683 = vmul.f32 %v5635, %v5338
        %v5684 = vmul.f32 %v5636, %v5340
        %v5685 = vmul.f32 %v5637, %v5342
        %v5686 = vmul.f32 %v5638, %v5344
        %v5687 = vmul.f32 %v5639, %v5346
        %v5688 = vmul.f32 %v5640, %v5348
        %v5689 = vmul.f32 %v5641, %v5350
        %v5690 = vmul.f32 %v5642, %v5352
        %v5691 = vmul.f32 %v5643, %v5354
        %v5692 = vmul.f32 %v5644, %v5356
        %v5693 = vadd.f32 %v5645, 0.2548296
        %v5694 = vadd.f32 %v5646, 0.2548296
        %v5695 = vadd.f32 %v5647, 0.2548296
        %v5696 = vadd.f32 %v5648, 0.2548296
        %v5697 = vadd.f32 %v5649, 0.2548296
        %v5698 = vadd.f32 %v5650, 0.2548296
        %v5699 = vadd.f32 %v5651, 0.2548296
        %v5700 = vadd.f32 %v5652, 0.2548296
        %v5701 = vadd.f32 %v5653, 0.2548296
        %v5702 = vadd.f32 %v5654, 0.2548296
        %v5703 = vadd.f32 %v5655, 0.2548296
        %v5704 = vadd.f32 %v5656, 0.2548296
        %v5705 = vadd.f32 %v5657, 0.2548296
        %v5706 = vadd.f32 %v5658, 0.2548296
        %v5707 = vadd.f32 %v5659, 0.2548296
        %v5708 = vadd.f32 %v5660, 0.2548296
        %v5709 = vadd.f32 %v5661, 0.2548296
        %v5710 = vadd.f32 %v5662, 0.2548296
        %v5711 = vadd.f32 %v5663, 0.2548296
        %v5712 = vadd.f32 %v5664, 0.2548296
        %v5713 = vadd.f32 %v5665, 0.2548296
        %v5714 = vadd.f32 %v5666, 0.2548296
        %v5715 = vadd.f32 %v5667, 0.2548296
        %v5716 = vadd.f32 %v5668, 0.2548296
        %v5717 = vadd.f32 %v5669, 0.2548296
        %v5718 = vadd.f32 %v5670, 0.2548296
        %v5719 = vadd.f32 %v5671, 0.2548296
        %v5720 = vadd.f32 %v5672, 0.2548296
        %v5721 = vadd.f32 %v5673, 0.2548296
        %v5722 = vadd.f32 %v5674, 0.2548296
        %v5723 = vadd.f32 %v5675, 0.2548296
        %v5724 = vadd.f32 %v5676, 0.2548296
        %v5725 = vadd.f32 %v5677, 0.2548296
        %v5726 = vadd.f32 %v5678, 0.2548296
        %v5727 = vadd.f32 %v5679, 0.2548296
        %v5728 = vadd.f32 %v5680, 0.2548296
        %v5729 = vadd.f32 %v5681, 0.2548296
        %v5730 = vadd.f32 %v5682, 0.2548296
        %v5731 = vadd.f32 %v5683, 0.2548296
        %v5732 = vadd.f32 %v5684, 0.2548296
        %v5733 = vadd.f32 %v5685, 0.2548296
        %v5734 = vadd.f32 %v5686, 0.2548296
        %v5735 = vadd.f32 %v5687, 0.2548296
        %v5736 = vadd.f32 %v5688, 0.2548296
        %v5737 = vadd.f32 %v5689, 0.2548296
        %v5738 = vadd.f32 %v5690, 0.2548296
        %v5739 = vadd.f32 %v5691, 0.2548296
        %v5740 = vadd.f32 %v5692, 0.2548296
        %v5741 = vmul.f32 %v5693, %v5262
        %v5742 = vmul.f32 %v5694, %v5264
        %v5743 = vmul.f32 %v5695, %v5266
        %v5744 = vmul.f32 %v5696, %v5268
        %v5745 = vmul.f32 %v5697, %v5270
        %v5746 = vmul.f32 %v5698, %v5272
        %v5747 = vmul.f32 %v5699, %v5274
        %v5748 = vmul.f32 %v5700, %v5276
        %v5749 = vmul.f32 %v5701, %v5278
        %v5750 = vmul.f32 %v5702, %v5280
        %v5751 = vmul.f32 %v5703, %v5282
        %v5752 = vmul.f32 %v5704, %v5284
        %v5753 = vmul.f32 %v5705, %v5286
        %v5754 = vmul.f32 %v5706, %v5288
        %v5755 = vmul.f32 %v5707, %v5290
        %v5756 = vmul.f32 %v5708, %v5292
        %v5757 = vmul.f32 %v5709, %v5294
        %v5758 = vmul.f32 %v5710, %v5296
        %v5759 = vmul.f32 %v5711, %v5298
        %v5760 = vmul.f32 %v5712, %v5300
        %v5761 = vmul.f32 %v5713, %v5302
        %v5762 = vmul.f32 %v5714, %v5304
        %v5763 = vmul.f32 %v5715, %v5306
        %v5764 = vmul.f32 %v5716, %v5308
        %v5765 = vmul.f32 %v5717, %v5310
        %v5766 = vmul.f32 %v5718, %v5312
        %v5767 = vmul.f32 %v5719, %v5314
        %v5768 = vmul.f32 %v5720, %v5316
        %v5769 = vmul.f32 %v5721, %v5318
        %v5770 = vmul.f32 %v5722, %v5320
        %v5771 = vmul.f32 %v5723, %v5322
        %v5772 = vmul.f32 %v5724, %v5324
        %v5773 = vmul.f32 %v5725, %v5326
        %v5774 = vmul.f32 %v5726, %v5328
        %v5775 = vmul.f32 %v5727, %v5330
        %v5776 = vmul.f32 %v5728, %v5332
        %v5777 = vmul.f32 %v5729, %v5334
        %v5778 = vmul.f32 %v5730, %v5336
        %v5779 = vmul.f32 %v5731, %v5338
        %v5780 = vmul.f32 %v5732, %v5340
        %v5781 = vmul.f32 %v5733, %v5342
        %v5782 = vmul.f32 %v5734, %v5344
        %v5783 = vmul.f32 %v5735, %v5346
        %v5784 = vmul.f32 %v5736, %v5348
        %v5785 = vmul.f32 %v5737, %v5350
        %v5786 = vmul.f32 %v5738, %v5352
        %v5787 = vmul.f32 %v5739, %v5354
        %v5788 = vmul.f32 %v5740, %v5356
        %v5789 = vsub.f32 0.0, %v5117
        %v5790 = vsub.f32 0.0, %v5118
        %v5791 = vsub.f32 0.0, %v5119
        %v5792 = vsub.f32 0.0, %v5120
        %v5793 = vsub.f32 0.0, %v5121
        %v5794 = vsub.f32 0.0, %v5122
        %v5795 = vsub.f32 0.0, %v5123
        %v5796 = vsub.f32 0.0, %v5124
        %v5797 = vsub.f32 0.0, %v5125
        %v5798 = vsub.f32 0.0, %v5126
        %v5799 = vsub.f32 0.0, %v5127
        %v5800 = vsub.f32 0.0, %v5128
        %v5801 = vsub.f32 0.0, %v5129
        %v5802 = vsub.f32 0.0, %v5130
        %v5803 = vsub.f32 0.0, %v5131
        %v5804 = vsub.f32 0.0, %v5132
        %v5805 = vsub.f32 0.0, %v5133
        %v5806 = vsub.f32 0.0, %v5134
        %v5807 = vsub.f32 0.0, %v5135
        %v5808 = vsub.f32 0.0, %v5136
        %v5809 = vsub.f32 0.0, %v5137
        %v5810 = vsub.f32 0.0, %v5138
        %v5811 = vsub.f32 0.0, %v5139
        %v5812 = vsub.f32 0.0, %v5140
        %v5813 = vsub.f32 0.0, %v5141
        %v5814 = vsub.f32 0.0, %v5142
        %v5815 = vsub.f32 0.0, %v5143
        %v5816 = vsub.f32 0.0, %v5144
        %v5817 = vsub.f32 0.0, %v5145
        %v5818 = vsub.f32 0.0, %v5146
        %v5819 = vsub.f32 0.0, %v5147
        %v5820 = vsub.f32 0.0, %v5148
        %v5821 = vsub.f32 0.0, %v5149
        %v5822 = vsub.f32 0.0, %v5150
        %v5823 = vsub.f32 0.0, %v5151
        %v5824 = vsub.f32 0.0, %v5152
        %v5825 = vsub.f32 0.0, %v5153
        %v5826 = vsub.f32 0.0, %v5154
        %v5827 = vsub.f32 0.0, %v5155
        %v5828 = vsub.f32 0.0, %v5156
        %v5829 = vsub.f32 0.0, %v5157
        %v5830 = vsub.f32 0.0, %v5158
        %v5831 = vsub.f32 0.0, %v5159
        %v5832 = vsub.f32 0.0, %v5160
        %v5833 = vsub.f32 0.0, %v5161
        %v5834 = vsub.f32 0.0, %v5162
        %v5835 = vsub.f32 0.0, %v5163
        %v5836 = vsub.f32 0.0, %v5164
        %v5837 = vmul.f32 %v5789, %v5117
        %v5838 = vmul.f32 %v5790, %v5118
        %v5839 = vmul.f32 %v5791, %v5119
        %v5840 = vmul.f32 %v5792, %v5120
        %v5841 = vmul.f32 %v5793, %v5121
        %v5842 = vmul.f32 %v5794, %v5122
        %v5843 = vmul.f32 %v5795, %v5123
        %v5844 = vmul.f32 %v5796, %v5124
        %v5845 = vmul.f32 %v5797, %v5125
        %v5846 = vmul.f32 %v5798, %v5126
        %v5847 = vmul.f32 %v5799, %v5127
        %v5848 = vmul.f32 %v5800, %v5128
        %v5849 = vmul.f32 %v5801, %v5129
        %v5850 = vmul.f32 %v5802, %v5130
        %v5851 = vmul.f32 %v5803, %v5131
        %v5852 = vmul.f32 %v5804, %v5132
        %v5853 = vmul.f32 %v5805, %v5133
        %v5854 = vmul.f32 %v5806, %v5134
        %v5855 = vmul.f32 %v5807, %v5135
        %v5856 = vmul.f32 %v5808, %v5136
        %v5857 = vmul.f32 %v5809, %v5137
        %v5858 = vmul.f32 %v5810, %v5138
        %v5859 = vmul.f32 %v5811, %v5139
        %v5860 = vmul.f32 %v5812, %v5140
        %v5861 = vmul.f32 %v5813, %v5141
        %v5862 = vmul.f32 %v5814, %v5142
        %v5863 = vmul.f32 %v5815, %v5143
        %v5864 = vmul.f32 %v5816, %v5144
        %v5865 = vmul.f32 %v5817, %v5145
        %v5866 = vmul.f32 %v5818, %v5146
        %v5867 = vmul.f32 %v5819, %v5147
        %v5868 = vmul.f32 %v5820, %v5148
        %v5869 = vmul.f32 %v5821, %v5149
        %v5870 = vmul.f32 %v5822, %v5150
        %v5871 = vmul.f32 %v5823, %v5151
        %v5872 = vmul.f32 %v5824, %v5152
        %v5873 = vmul.f32 %v5825, %v5153
        %v5874 = vmul.f32 %v5826, %v5154
        %v5875 = vmul.f32 %v5827, %v5155
        %v5876 = vmul.f32 %v5828, %v5156
        %v5877 = vmul.f32 %v5829, %v5157
        %v5878 = vmul.f32 %v5830, %v5158
        %v5879 = vmul.f32 %v5831, %v5159
        %v5880 = vmul.f32 %v5832, %v5160
        %v5881 = vmul.f32 %v5833, %v5161
        %v5882 = vmul.f32 %v5834, %v5162
        %v5883 = vmul.f32 %v5835, %v5163
        %v5884 = vmul.f32 %v5836, %v5164
        %v5885 = vmul.f32 %v5837, 1.442695
        %v5886 = vpow.pop %v5885
        %v5887 = vmul.f32 %v5838, 1.442695
        %v5888 = vpow.pop %v5887
        %v5889 = vmul.f32 %v5839, 1.442695
        %v5890 = vpow.pop %v5889
        %v5891 = vmul.f32 %v5840, 1.442695
        %v5892 = vpow.pop %v5891
        %v5893 = vmul.f32 %v5841, 1.442695
        %v5894 = vpow.pop %v5893
        %v5895 = vmul.f32 %v5842, 1.442695
        %v5896 = vpow.pop %v5895
        %v5897 = vmul.f32 %v5843, 1.442695
        %v5898 = vpow.pop %v5897
        %v5899 = vmul.f32 %v5844, 1.442695
        %v5900 = vpow.pop %v5899
        %v5901 = vmul.f32 %v5845, 1.442695
        %v5902 = vpow.pop %v5901
        %v5903 = vmul.f32 %v5846, 1.442695
        %v5904 = vpow.pop %v5903
        %v5905 = vmul.f32 %v5847, 1.442695
        %v5906 = vpow.pop %v5905
        %v5907 = vmul.f32 %v5848, 1.442695
        %v5908 = vpow.pop %v5907
        %v5909 = vmul.f32 %v5849, 1.442695
        %v5910 = vpow.pop %v5909
        %v5911 = vmul.f32 %v5850, 1.442695
        %v5912 = vpow.pop %v5911
        %v5913 = vmul.f32 %v5851, 1.442695
        %v5914 = vpow.pop %v5913
        %v5915 = vmul.f32 %v5852, 1.442695
        %v5916 = vpow.pop %v5915
        %v5917 = vmul.f32 %v5853, 1.442695
        %v5918 = vpow.pop %v5917
        %v5919 = vmul.f32 %v5854, 1.442695
        %v5920 = vpow.pop %v5919
        %v5921 = vmul.f32 %v5855, 1.442695
        %v5922 = vpow.pop %v5921
        %v5923 = vmul.f32 %v5856, 1.442695
        %v5924 = vpow.pop %v5923
        %v5925 = vmul.f32 %v5857, 1.442695
        %v5926 = vpow.pop %v5925
        %v5927 = vmul.f32 %v5858, 1.442695
        %v5928 = vpow.pop %v5927
        %v5929 = vmul.f32 %v5859, 1.442695
        %v5930 = vpow.pop %v5929
        %v5931 = vmul.f32 %v5860, 1.442695
        %v5932 = vpow.pop %v5931
        %v5933 = vmul.f32 %v5861, 1.442695
        %v5934 = vpow.pop %v5933
        %v5935 = vmul.f32 %v5862, 1.442695
        %v5936 = vpow.pop %v5935
        %v5937 = vmul.f32 %v5863, 1.442695
        %v5938 = vpow.pop %v5937
        %v5939 = vmul.f32 %v5864, 1.442695
        %v5940 = vpow.pop %v5939
        %v5941 = vmul.f32 %v5865, 1.442695
        %v5942 = vpow.pop %v5941
        %v5943 = vmul.f32 %v5866, 1.442695
        %v5944 = vpow.pop %v5943
        %v5945 = vmul.f32 %v5867, 1.442695
        %v5946 = vpow.pop %v5945
        %v5947 = vmul.f32 %v5868, 1.442695
        %v5948 = vpow.pop %v5947
        %v5949 = vmul.f32 %v5869, 1.442695
        %v5950 = vpow.pop %v5949
        %v5951 = vmul.f32 %v5870, 1.442695
        %v5952 = vpow.pop %v5951
        %v5953 = vmul.f32 %v5871, 1.442695
        %v5954 = vpow.pop %v5953
        %v5955 = vmul.f32 %v5872, 1.442695
        %v5956 = vpow.pop %v5955
        %v5957 = vmul.f32 %v5873, 1.442695
        %v5958 = vpow.pop %v5957
        %v5959 = vmul.f32 %v5874, 1.442695
        %v5960 = vpow.pop %v5959
        %v5961 = vmul.f32 %v5875, 1.442695
        %v5962 = vpow.pop %v5961
        %v5963 = vmul.f32 %v5876, 1.442695
        %v5964 = vpow.pop %v5963
        %v5965 = vmul.f32 %v5877, 1.442695
        %v5966 = vpow.pop %v5965
        %v5967 = vmul.f32 %v5878, 1.442695
        %v5968 = vpow.pop %v5967
        %v5969 = vmul.f32 %v5879, 1.442695
        %v5970 = vpow.pop %v5969
        %v5971 = vmul.f32 %v5880, 1.442695
        %v5972 = vpow.pop %v5971
        %v5973 = vmul.f32 %v5881, 1.442695
        %v5974 = vpow.pop %v5973
        %v5975 = vmul.f32 %v5882, 1.442695
        %v5976 = vpow.pop %v5975
        %v5977 = vmul.f32 %v5883, 1.442695
        %v5978 = vpow.pop %v5977
        %v5979 = vmul.f32 %v5884, 1.442695
        %v5980 = vpow.pop %v5979
        %v5981 = vmul.f32 %v5741, %v5886
        %v5982 = vmul.f32 %v5742, %v5888
        %v5983 = vmul.f32 %v5743, %v5890
        %v5984 = vmul.f32 %v5744, %v5892
        %v5985 = vmul.f32 %v5745, %v5894
        %v5986 = vmul.f32 %v5746, %v5896
        %v5987 = vmul.f32 %v5747, %v5898
        %v5988 = vmul.f32 %v5748, %v5900
        %v5989 = vmul.f32 %v5749, %v5902
        %v5990 = vmul.f32 %v5750, %v5904
        %v5991 = vmul.f32 %v5751, %v5906
        %v5992 = vmul.f32 %v5752, %v5908
        %v5993 = vmul.f32 %v5753, %v5910
        %v5994 = vmul.f32 %v5754, %v5912
        %v5995 = vmul.f32 %v5755, %v5914
        %v5996 = vmul.f32 %v5756, %v5916
        %v5997 = vmul.f32 %v5757, %v5918
        %v5998 = vmul.f32 %v5758, %v5920
        %v5999 = vmul.f32 %v5759, %v5922
        %v6000 = vmul.f32 %v5760, %v5924
        %v6001 = vmul.f32 %v5761, %v5926
        %v6002 = vmul.f32 %v5762, %v5928
        %v6003 = vmul.f32 %v5763, %v5930
        %v6004 = vmul.f32 %v5764, %v5932
        %v6005 = vmul.f32 %v5765, %v5934
        %v6006 = vmul.f32 %v5766, %v5936
        %v6007 = vmul.f32 %v5767, %v5938
        %v6008 = vmul.f32 %v5768, %v5940
        %v6009 = vmul.f32 %v5769, %v5942
        %v6010 = vmul.f32 %v5770, %v5944
        %v6011 = vmul.f32 %v5771, %v5946
        %v6012 = vmul.f32 %v5772, %v5948
        %v6013 = vmul.f32 %v5773, %v5950
        %v6014 = vmul.f32 %v5774, %v5952
        %v6015 = vmul.f32 %v5775, %v5954
        %v6016 = vmul.f32 %v5776, %v5956
        %v6017 = vmul.f32 %v5777, %v5958
        %v6018 = vmul.f32 %v5778, %v5960
        %v6019 = vmul.f32 %v5779, %v5962
        %v6020 = vmul.f32 %v5780, %v5964
        %v6021 = vmul.f32 %v5781, %v5966
        %v6022 = vmul.f32 %v5782, %v5968
        %v6023 = vmul.f32 %v5783, %v5970
        %v6024 = vmul.f32 %v5784, %v5972
        %v6025 = vmul.f32 %v5785, %v5974
        %v6026 = vmul.f32 %v5786, %v5976
        %v6027 = vmul.f32 %v5787, %v5978
        %v6028 = vmul.f32 %v5788, %v5980
        %v6029 = vsub.f32 1.0, %v5981
        %v6030 = vsub.f32 1.0, %v5982
        %v6031 = vsub.f32 1.0, %v5983
        %v6032 = vsub.f32 1.0, %v5984
        %v6033 = vsub.f32 1.0, %v5985
        %v6034 = vsub.f32 1.0, %v5986
        %v6035 = vsub.f32 1.0, %v5987
        %v6036 = vsub.f32 1.0, %v5988
        %v6037 = vsub.f32 1.0, %v5989
        %v6038 = vsub.f32 1.0, %v5990
        %v6039 = vsub.f32 1.0, %v5991
        %v6040 = vsub.f32 1.0, %v5992
        %v6041 = vsub.f32 1.0, %v5993
        %v6042 = vsub.f32 1.0, %v5994
        %v6043 = vsub.f32 1.0, %v5995
        %v6044 = vsub.f32 1.0, %v5996
        %v6045 = vsub.f32 1.0, %v5997
        %v6046 = vsub.f32 1.0, %v5998
        %v6047 = vsub.f32 1.0, %v5999
        %v6048 = vsub.f32 1.0, %v6000
        %v6049 = vsub.f32 1.0, %v6001
        %v6050 = vsub.f32 1.0, %v6002
        %v6051 = vsub.f32 1.0, %v6003
        %v6052 = vsub.f32 1.0, %v6004
        %v6053 = vsub.f32 1.0, %v6005
        %v6054 = vsub.f32 1.0, %v6006
        %v6055 = vsub.f32 1.0, %v6007
        %v6056 = vsub.f32 1.0, %v6008
        %v6057 = vsub.f32 1.0, %v6009
        %v6058 = vsub.f32 1.0, %v6010
        %v6059 = vsub.f32 1.0, %v6011
        %v6060 = vsub.f32 1.0, %v6012
        %v6061 = vsub.f32 1.0, %v6013
        %v6062 = vsub.f32 1.0, %v6014
        %v6063 = vsub.f32 1.0, %v6015
        %v6064 = vsub.f32 1.0, %v6016
        %v6065 = vsub.f32 1.0, %v6017
        %v6066 = vsub.f32 1.0, %v6018
        %v6067 = vsub.f32 1.0, %v6019
        %v6068 = vsub.f32 1.0, %v6020
        %v6069 = vsub.f32 1.0, %v6021
        %v6070 = vsub.f32 1.0, %v6022
        %v6071 = vsub.f32 1.0, %v6023
        %v6072 = vsub.f32 1.0, %v6024
        %v6073 = vsub.f32 1.0, %v6025
        %v6074 = vsub.f32 1.0, %v6026
        %v6075 = vsub.f32 1.0, %v6027
        %v6076 = vsub.f32 1.0, %v6028
        %v6077 = vmul.f32 %v5069, %v6029
        %v6078 = vmul.f32 %v5070, %v6030
        %v6079 = vmul.f32 %v5071, %v6031
        %v6080 = vmul.f32 %v5072, %v6032
        %v6081 = vmul.f32 %v5073, %v6033
        %v6082 = vmul.f32 %v5074, %v6034
        %v6083 = vmul.f32 %v5075, %v6035
        %v6084 = vmul.f32 %v5076, %v6036
        %v6085 = vmul.f32 %v5077, %v6037
        %v6086 = vmul.f32 %v5078, %v6038
        %v6087 = vmul.f32 %v5079, %v6039
        %v6088 = vmul.f32 %v5080, %v6040
        %v6089 = vmul.f32 %v5081, %v6041
        %v6090 = vmul.f32 %v5082, %v6042
        %v6091 = vmul.f32 %v5083, %v6043
        %v6092 = vmul.f32 %v5084, %v6044
        %v6093 = vmul.f32 %v5085, %v6045
        %v6094 = vmul.f32 %v5086, %v6046
        %v6095 = vmul.f32 %v5087, %v6047
        %v6096 = vmul.f32 %v5088, %v6048
        %v6097 = vmul.f32 %v5089, %v6049
        %v6098 = vmul.f32 %v5090, %v6050
        %v6099 = vmul.f32 %v5091, %v6051
        %v6100 = vmul.f32 %v5092, %v6052
        %v6101 = vmul.f32 %v5093, %v6053
        %v6102 = vmul.f32 %v5094, %v6054
        %v6103 = vmul.f32 %v5095, %v6055
        %v6104 = vmul.f32 %v5096, %v6056
        %v6105 = vmul.f32 %v5097, %v6057
        %v6106 = vmul.f32 %v5098, %v6058
        %v6107 = vmul.f32 %v5099, %v6059
        %v6108 = vmul.f32 %v5100, %v6060
        %v6109 = vmul.f32 %v5101, %v6061
        %v6110 = vmul.f32 %v5102, %v6062
        %v6111 = vmul.f32 %v5103, %v6063
        %v6112 = vmul.f32 %v5104, %v6064
        %v6113 = vmul.f32 %v5105, %v6065
        %v6114 = vmul.f32 %v5106, %v6066
        %v6115 = vmul.f32 %v5107, %v6067
        %v6116 = vmul.f32 %v5108, %v6068
        %v6117 = vmul.f32 %v5109, %v6069
        %v6118 = vmul.f32 %v5110, %v6070
        %v6119 = vmul.f32 %v5111, %v6071
        %v6120 = vmul.f32 %v5112, %v6072
        %v6121 = vmul.f32 %v5113, %v6073
        %v6122 = vmul.f32 %v5114, %v6074
        %v6123 = vmul.f32 %v5115, %v6075
        %v6124 = vmul.f32 %v5116, %v6076
        %v6125 = vadd.f32 %v6077, 1.0
        %v6126 = vadd.f32 %v6078, 1.0
        %v6127 = vadd.f32 %v6079, 1.0
        %v6128 = vadd.f32 %v6080, 1.0
        %v6129 = vadd.f32 %v6081, 1.0
        %v6130 = vadd.f32 %v6082, 1.0
        %v6131 = vadd.f32 %v6083, 1.0
        %v6132 = vadd.f32 %v6084, 1.0
        %v6133 = vadd.f32 %v6085, 1.0
        %v6134 = vadd.f32 %v6086, 1.0
        %v6135 = vadd.f32 %v6087, 1.0
        %v6136 = vadd.f32 %v6088, 1.0
        %v6137 = vadd.f32 %v6089, 1.0
        %v6138 = vadd.f32 %v6090, 1.0
        %v6139 = vadd.f32 %v6091, 1.0
        %v6140 = vadd.f32 %v6092, 1.0
        %v6141 = vadd.f32 %v6093, 1.0
        %v6142 = vadd.f32 %v6094, 1.0
        %v6143 = vadd.f32 %v6095, 1.0
        %v6144 = vadd.f32 %v6096, 1.0
        %v6145 = vadd.f32 %v6097, 1.0
        %v6146 = vadd.f32 %v6098, 1.0
        %v6147 = vadd.f32 %v6099, 1.0
        %v6148 = vadd.f32 %v6100, 1.0
        %v6149 = vadd.f32 %v6101, 1.0
        %v6150 = vadd.f32 %v6102, 1.0
        %v6151 = vadd.f32 %v6103, 1.0
        %v6152 = vadd.f32 %v6104, 1.0
        %v6153 = vadd.f32 %v6105, 1.0
        %v6154 = vadd.f32 %v6106, 1.0
        %v6155 = vadd.f32 %v6107, 1.0
        %v6156 = vadd.f32 %v6108, 1.0
        %v6157 = vadd.f32 %v6109, 1.0
        %v6158 = vadd.f32 %v6110, 1.0
        %v6159 = vadd.f32 %v6111, 1.0
        %v6160 = vadd.f32 %v6112, 1.0
        %v6161 = vadd.f32 %v6113, 1.0
        %v6162 = vadd.f32 %v6114, 1.0
        %v6163 = vadd.f32 %v6115, 1.0
        %v6164 = vadd.f32 %v6116, 1.0
        %v6165 = vadd.f32 %v6117, 1.0
        %v6166 = vadd.f32 %v6118, 1.0
        %v6167 = vadd.f32 %v6119, 1.0
        %v6168 = vadd.f32 %v6120, 1.0
        %v6169 = vadd.f32 %v6121, 1.0
        %v6170 = vadd.f32 %v6122, 1.0
        %v6171 = vadd.f32 %v6123, 1.0
        %v6172 = vadd.f32 %v6124, 1.0
        %v6173 = vmul.f32 %v4925, %v6125
        %v6174 = vmul.f32 %v4926, %v6126
        %v6175 = vmul.f32 %v4927, %v6127
        %v6176 = vmul.f32 %v4928, %v6128
        %v6177 = vmul.f32 %v4929, %v6129
        %v6178 = vmul.f32 %v4930, %v6130
        %v6179 = vmul.f32 %v4931, %v6131
        %v6180 = vmul.f32 %v4932, %v6132
        %v6181 = vmul.f32 %v4933, %v6133
        %v6182 = vmul.f32 %v4934, %v6134
        %v6183 = vmul.f32 %v4935, %v6135
        %v6184 = vmul.f32 %v4936, %v6136
        %v6185 = vmul.f32 %v4937, %v6137
        %v6186 = vmul.f32 %v4938, %v6138
        %v6187 = vmul.f32 %v4939, %v6139
        %v6188 = vmul.f32 %v4940, %v6140
        %v6189 = vmul.f32 %v4941, %v6141
        %v6190 = vmul.f32 %v4942, %v6142
        %v6191 = vmul.f32 %v4943, %v6143
        %v6192 = vmul.f32 %v4944, %v6144
        %v6193 = vmul.f32 %v4945, %v6145
        %v6194 = vmul.f32 %v4946, %v6146
        %v6195 = vmul.f32 %v4947, %v6147
        %v6196 = vmul.f32 %v4948, %v6148
        %v6197 = vmul.f32 %v4949, %v6149
        %v6198 = vmul.f32 %v4950, %v6150
        %v6199 = vmul.f32 %v4951, %v6151
        %v6200 = vmul.f32 %v4952, %v6152
        %v6201 = vmul.f32 %v4953, %v6153
        %v6202 = vmul.f32 %v4954, %v6154
        %v6203 = vmul.f32 %v4955, %v6155
        %v6204 = vmul.f32 %v4956, %v6156
        %v6205 = vmul.f32 %v4957, %v6157
        %v6206 = vmul.f32 %v4958, %v6158
        %v6207 = vmul.f32 %v4959, %v6159
        %v6208 = vmul.f32 %v4960, %v6160
        %v6209 = vmul.f32 %v4961, %v6161
        %v6210 = vmul.f32 %v4962, %v6162
        %v6211 = vmul.f32 %v4963, %v6163
        %v6212 = vmul.f32 %v4964, %v6164
        %v6213 = vmul.f32 %v4965, %v6165
        %v6214 = vmul.f32 %v4966, %v6166
        %v6215 = vmul.f32 %v4967, %v6167
        %v6216 = vmul.f32 %v4968, %v6168
        %v6217 = vmul.f32 %v4969, %v6169
        %v6218 = vmul.f32 %v4970, %v6170
        %v6219 = vmul.f32 %v4971, %v6171
        %v6220 = vmul.f32 %v4972, %v6172
        %v6221 = vadd.f32 %v484, %v6173
        %v6222 = vadd.f32 %v485, %v6174
        %v6223 = vadd.f32 %v486, %v6175
        %v6224 = vadd.f32 %v487, %v6176
        %v6225 = vadd.f32 %v488, %v6177
        %v6226 = vadd.f32 %v489, %v6178
        %v6227 = vadd.f32 %v490, %v6179
        %v6228 = vadd.f32 %v491, %v6180
        %v6229 = vadd.f32 %v492, %v6181
        %v6230 = vadd.f32 %v493, %v6182
        %v6231 = vadd.f32 %v494, %v6183
        %v6232 = vadd.f32 %v495, %v6184
        %v6233 = vadd.f32 %v496, %v6185
        %v6234 = vadd.f32 %v497, %v6186
        %v6235 = vadd.f32 %v498, %v6187
        %v6236 = vadd.f32 %v499, %v6188
        %v6237 = vadd.f32 %v500, %v6189
        %v6238 = vadd.f32 %v501, %v6190
        %v6239 = vadd.f32 %v502, %v6191
        %v6240 = vadd.f32 %v503, %v6192
        %v6241 = vadd.f32 %v504, %v6193
        %v6242 = vadd.f32 %v505, %v6194
        %v6243 = vadd.f32 %v506, %v6195
        %v6244 = vadd.f32 %v507, %v6196
        %v6245 = vadd.f32 %v508, %v6197
        %v6246 = vadd.f32 %v509, %v6198
        %v6247 = vadd.f32 %v510, %v6199
        %v6248 = vadd.f32 %v511, %v6200
        %v6249 = vadd.f32 %v512, %v6201
        %v6250 = vadd.f32 %v513, %v6202
        %v6251 = vadd.f32 %v514, %v6203
        %v6252 = vadd.f32 %v515, %v6204
        %v6253 = vadd.f32 %v516, %v6205
        %v6254 = vadd.f32 %v517, %v6206
        %v6255 = vadd.f32 %v518, %v6207
        %v6256 = vadd.f32 %v519, %v6208
        %v6257 = vadd.f32 %v520, %v6209
        %v6258 = vadd.f32 %v521, %v6210
        %v6259 = vadd.f32 %v522, %v6211
        %v6260 = vadd.f32 %v523, %v6212
        %v6261 = vadd.f32 %v524, %v6213
        %v6262 = vadd.f32 %v525, %v6214
        %v6263 = vadd.f32 %v526, %v6215
        %v6264 = vadd.f32 %v527, %v6216
        %v6265 = vadd.f32 %v528, %v6217
        %v6266 = vadd.f32 %v529, %v6218
        %v6267 = vadd.f32 %v530, %v6219
        %v6268 = vadd.f32 %v531, %v6220
        %6269 = vrot.lane.b32.xlu0 %v6221, 1
        %v6270 = vpop.permute.xlu0 %6269
        %6271 = vrot.lane.b32.xlu0 %v6224, 1
        %v6272 = vpop.permute.xlu0 %6271
        %6273 = vrot.lane.b32.xlu0 %v6227, 1
        %v6274 = vpop.permute.xlu0 %6273
        %6275 = vrot.lane.b32.xlu0 %v6230, 1
        %v6276 = vpop.permute.xlu0 %6275
        %6277 = vrot.lane.b32.xlu0 %v6233, 1
        %v6278 = vpop.permute.xlu0 %6277
        %6279 = vrot.lane.b32.xlu0 %v6236, 1
        %v6280 = vpop.permute.xlu0 %6279
        %6281 = vrot.lane.b32.xlu0 %v6239, 1
        %v6282 = vpop.permute.xlu0 %6281
        %6283 = vrot.lane.b32.xlu0 %v6242, 1
        %v6284 = vpop.permute.xlu0 %6283
        %6285 = vrot.lane.b32.xlu0 %v6245, 1
        %v6286 = vpop.permute.xlu0 %6285
        %6287 = vrot.lane.b32.xlu0 %v6248, 1
        %v6288 = vpop.permute.xlu0 %6287
        %6289 = vrot.lane.b32.xlu0 %v6251, 1
        %v6290 = vpop.permute.xlu0 %6289
        %6291 = vrot.lane.b32.xlu0 %v6254, 1
        %v6292 = vpop.permute.xlu0 %6291
        %6293 = vrot.lane.b32.xlu0 %v6257, 1
        %v6294 = vpop.permute.xlu0 %6293
        %6295 = vrot.lane.b32.xlu0 %v6260, 1
        %v6296 = vpop.permute.xlu0 %6295
        %6297 = vrot.lane.b32.xlu0 %v6263, 1
        %v6298 = vpop.permute.xlu0 %6297
        %6299 = vrot.lane.b32.xlu0 %v6266, 1
        %v6300 = vpop.permute.xlu0 %6299
        %6301 = vrot.lane.b32.xlu0 %v6222, 1
        %v6302 = vpop.permute.xlu0 %6301
        %6303 = vrot.lane.b32.xlu0 %v6225, 1
        %v6304 = vpop.permute.xlu0 %6303
        %6305 = vrot.lane.b32.xlu0 %v6228, 1
        %v6306 = vpop.permute.xlu0 %6305
        %6307 = vrot.lane.b32.xlu0 %v6231, 1
        %v6308 = vpop.permute.xlu0 %6307
        %6309 = vrot.lane.b32.xlu0 %v6234, 1
        %v6310 = vpop.permute.xlu0 %6309
        %6311 = vrot.lane.b32.xlu0 %v6237, 1
        %v6312 = vpop.permute.xlu0 %6311
        %6313 = vrot.lane.b32.xlu0 %v6240, 1
        %v6314 = vpop.permute.xlu0 %6313
        %6315 = vrot.lane.b32.xlu0 %v6243, 1
        %v6316 = vpop.permute.xlu0 %6315
        %6317 = vrot.lane.b32.xlu0 %v6246, 1
        %v6318 = vpop.permute.xlu0 %6317
        %6319 = vrot.lane.b32.xlu0 %v6249, 1
        %v6320 = vpop.permute.xlu0 %6319
        %6321 = vrot.lane.b32.xlu0 %v6252, 1
        %v6322 = vpop.permute.xlu0 %6321
        %6323 = vrot.lane.b32.xlu0 %v6255, 1
        %v6324 = vpop.permute.xlu0 %6323
        %6325 = vrot.lane.b32.xlu0 %v6258, 1
        %v6326 = vpop.permute.xlu0 %6325
        %6327 = vrot.lane.b32.xlu0 %v6261, 1
        %v6328 = vpop.permute.xlu0 %6327
        %6329 = vrot.lane.b32.xlu0 %v6264, 1
        %v6330 = vpop.permute.xlu0 %6329
        %6331 = vrot.lane.b32.xlu0 %v6267, 1
        %v6332 = vpop.permute.xlu0 %6331
        %6333 = vrot.lane.b32.xlu0 %v6223, 1
        %v6334 = vpop.permute.xlu0 %6333
        %6335 = vrot.lane.b32.xlu0 %v6226, 1
        %v6336 = vpop.permute.xlu0 %6335
        %6337 = vrot.lane.b32.xlu0 %v6229, 1
        %v6338 = vpop.permute.xlu0 %6337
        %6339 = vrot.lane.b32.xlu0 %v6232, 1
        %v6340 = vpop.permute.xlu0 %6339
        %6341 = vrot.lane.b32.xlu0 %v6235, 1
        %v6342 = vpop.permute.xlu0 %6341
        %6343 = vrot.lane.b32.xlu0 %v6238, 1
        %v6344 = vpop.permute.xlu0 %6343
        %6345 = vrot.lane.b32.xlu0 %v6241, 1
        %v6346 = vpop.permute.xlu0 %6345
        %6347 = vrot.lane.b32.xlu0 %v6244, 1
        %v6348 = vpop.permute.xlu0 %6347
        %6349 = vrot.lane.b32.xlu0 %v6247, 1
        %v6350 = vpop.permute.xlu0 %6349
        %6351 = vrot.lane.b32.xlu0 %v6250, 1
        %v6352 = vpop.permute.xlu0 %6351
        %6353 = vrot.lane.b32.xlu0 %v6253, 1
        %v6354 = vpop.permute.xlu0 %6353
        %6355 = vrot.lane.b32.xlu0 %v6256, 1
        %v6356 = vpop.permute.xlu0 %6355
        %6357 = vrot.lane.b32.xlu0 %v6259, 1
        %v6358 = vpop.permute.xlu0 %6357
        %6359 = vrot.lane.b32.xlu0 %v6262, 1
        %v6360 = vpop.permute.xlu0 %6359
        %6361 = vrot.lane.b32.xlu0 %v6265, 1
        %v6362 = vpop.permute.xlu0 %6361
        %6363 = vrot.lane.b32.xlu0 %v6268, 1
        %v6364 = vpop.permute.xlu0 %6363
        %v6365 = vsel %vm651, %v6302, %v6334
        %v6366 = vsel %vm651, %v6304, %v6336
        %v6367 = vsel %vm651, %v6306, %v6338
        %v6368 = vsel %vm651, %v6308, %v6340
        %v6369 = vsel %vm651, %v6310, %v6342
        %v6370 = vsel %vm651, %v6312, %v6344
        %v6371 = vsel %vm651, %v6314, %v6346
        %v6372 = vsel %vm651, %v6316, %v6348
        %v6373 = vsel %vm651, %v6318, %v6350
        %v6374 = vsel %vm651, %v6320, %v6352
        %v6375 = vsel %vm651, %v6322, %v6354
        %v6376 = vsel %vm651, %v6324, %v6356
        %v6377 = vsel %vm651, %v6326, %v6358
        %v6378 = vsel %vm651, %v6328, %v6360
        %v6379 = vsel %vm651, %v6330, %v6362
        %v6380 = vsel %vm651, %v6332, %v6364
        %v6381 = vsel %vm651, %v6270, %v6302
        %v6382 = vsel %vm651, %v6272, %v6304
        %v6383 = vsel %vm651, %v6274, %v6306
        %v6384 = vsel %vm651, %v6276, %v6308
        %v6385 = vsel %vm651, %v6278, %v6310
        %v6386 = vsel %vm651, %v6280, %v6312
        %v6387 = vsel %vm651, %v6282, %v6314
        %v6388 = vsel %vm651, %v6284, %v6316
        %v6389 = vsel %vm651, %v6286, %v6318
        %v6390 = vsel %vm651, %v6288, %v6320
        %v6391 = vsel %vm651, %v6290, %v6322
        %v6392 = vsel %vm651, %v6292, %v6324
        %v6393 = vsel %vm651, %v6294, %v6326
        %v6394 = vsel %vm651, %v6296, %v6328
        %v6395 = vsel %vm651, %v6298, %v6330
        %v6396 = vsel %vm651, %v6300, %v6332
        %v6397 = vsel %vm651, %v6334, %v6270
        %v6398 = vsel %vm651, %v6336, %v6272
        %v6399 = vsel %vm651, %v6338, %v6274
        %v6400 = vsel %vm651, %v6340, %v6276
        %v6401 = vsel %vm651, %v6342, %v6278
        %v6402 = vsel %vm651, %v6344, %v6280
        %v6403 = vsel %vm651, %v6346, %v6282
        %v6404 = vsel %vm651, %v6348, %v6284
        %v6405 = vsel %vm651, %v6350, %v6286
        %v6406 = vsel %vm651, %v6352, %v6288
        %v6407 = vsel %vm651, %v6354, %v6290
        %v6408 = vsel %vm651, %v6356, %v6292
        %v6409 = vsel %vm651, %v6358, %v6294
        %v6410 = vsel %vm651, %v6360, %v6296
        %v6411 = vsel %vm651, %v6362, %v6298
        %v6412 = vsel %vm651, %v6364, %v6300
        %v6413 = vsel %vm713, %v6397, 0.0
        %v6414 = vsel %vm714, %v6381, 0.0
        %v6415 = vsel %vm715, %v6365, 0.0
        %v6416 = vsel %vm713, %v6398, 0.0
        %v6417 = vsel %vm714, %v6382, 0.0
        %v6418 = vsel %vm715, %v6366, 0.0
        %v6419 = vsel %vm713, %v6399, 0.0
        %v6420 = vsel %vm714, %v6383, 0.0
        %v6421 = vsel %vm715, %v6367, 0.0
        %v6422 = vsel %vm713, %v6400, 0.0
        %v6423 = vsel %vm714, %v6384, 0.0
        %v6424 = vsel %vm715, %v6368, 0.0
        %v6425 = vsel %vm713, %v6401, 0.0
        %v6426 = vsel %vm714, %v6385, 0.0
        %v6427 = vsel %vm715, %v6369, 0.0
        %v6428 = vsel %vm713, %v6402, 0.0
        %v6429 = vsel %vm714, %v6386, 0.0
        %v6430 = vsel %vm715, %v6370, 0.0
        %v6431 = vsel %vm713, %v6403, 0.0
        %v6432 = vsel %vm714, %v6387, 0.0
        %v6433 = vsel %vm715, %v6371, 0.0
        %v6434 = vsel %vm713, %v6404, 0.0
        %v6435 = vsel %vm714, %v6388, 0.0
        %v6436 = vsel %vm715, %v6372, 0.0
        %v6437 = vsel %vm713, %v6405, 0.0
        %v6438 = vsel %vm714, %v6389, 0.0
        %v6439 = vsel %vm715, %v6373, 0.0
        %v6440 = vsel %vm713, %v6406, 0.0
        %v6441 = vsel %vm714, %v6390, 0.0
        %v6442 = vsel %vm715, %v6374, 0.0
        %v6443 = vsel %vm713, %v6407, 0.0
        %v6444 = vsel %vm714, %v6391, 0.0
        %v6445 = vsel %vm715, %v6375, 0.0
        %v6446 = vsel %vm713, %v6408, 0.0
        %v6447 = vsel %vm714, %v6392, 0.0
        %v6448 = vsel %vm715, %v6376, 0.0
        %v6449 = vsel %vm713, %v6409, 0.0
        %v6450 = vsel %vm714, %v6393, 0.0
        %v6451 = vsel %vm715, %v6377, 0.0
        %v6452 = vsel %vm713, %v6410, 0.0
        %v6453 = vsel %vm714, %v6394, 0.0
        %v6454 = vsel %vm715, %v6378, 0.0
        %v6455 = vsel %vm713, %v6411, 0.0
        %v6456 = vsel %vm714, %v6395, 0.0
        %v6457 = vsel %vm715, %v6379, 0.0
        %v6458 = vsel %vm713, %v6412, 0.0
        %v6459 = vsel %vm714, %v6396, 0.0
        %v6460 = vsel %vm715, %v6380, 0.0
        %6461 = vrot.lane.b32.xlu0 %v6221, 127
        %v6462 = vpop.permute.xlu0 %6461
        %6463 = vrot.lane.b32.xlu0 %v6224, 127
        %v6464 = vpop.permute.xlu0 %6463
        %6465 = vrot.lane.b32.xlu0 %v6227, 127
        %v6466 = vpop.permute.xlu0 %6465
        %6467 = vrot.lane.b32.xlu0 %v6230, 127
        %v6468 = vpop.permute.xlu0 %6467
        %6469 = vrot.lane.b32.xlu0 %v6233, 127
        %v6470 = vpop.permute.xlu0 %6469
        %6471 = vrot.lane.b32.xlu0 %v6236, 127
        %v6472 = vpop.permute.xlu0 %6471
        %6473 = vrot.lane.b32.xlu0 %v6239, 127
        %v6474 = vpop.permute.xlu0 %6473
        %6475 = vrot.lane.b32.xlu0 %v6242, 127
        %v6476 = vpop.permute.xlu0 %6475
        %6477 = vrot.lane.b32.xlu0 %v6245, 127
        %v6478 = vpop.permute.xlu0 %6477
        %6479 = vrot.lane.b32.xlu0 %v6248, 127
        %v6480 = vpop.permute.xlu0 %6479
        %6481 = vrot.lane.b32.xlu0 %v6251, 127
        %v6482 = vpop.permute.xlu0 %6481
        %6483 = vrot.lane.b32.xlu0 %v6254, 127
        %v6484 = vpop.permute.xlu0 %6483
        %6485 = vrot.lane.b32.xlu0 %v6257, 127
        %v6486 = vpop.permute.xlu0 %6485
        %6487 = vrot.lane.b32.xlu0 %v6260, 127
        %v6488 = vpop.permute.xlu0 %6487
        %6489 = vrot.lane.b32.xlu0 %v6263, 127
        %v6490 = vpop.permute.xlu0 %6489
        %6491 = vrot.lane.b32.xlu0 %v6266, 127
        %v6492 = vpop.permute.xlu0 %6491
        %6493 = vrot.lane.b32.xlu0 %v6222, 127
        %v6494 = vpop.permute.xlu0 %6493
        %6495 = vrot.lane.b32.xlu0 %v6225, 127
        %v6496 = vpop.permute.xlu0 %6495
        %6497 = vrot.lane.b32.xlu0 %v6228, 127
        %v6498 = vpop.permute.xlu0 %6497
        %6499 = vrot.lane.b32.xlu0 %v6231, 127
        %v6500 = vpop.permute.xlu0 %6499
        %6501 = vrot.lane.b32.xlu0 %v6234, 127
        %v6502 = vpop.permute.xlu0 %6501
        %6503 = vrot.lane.b32.xlu0 %v6237, 127
        %v6504 = vpop.permute.xlu0 %6503
        %6505 = vrot.lane.b32.xlu0 %v6240, 127
        %v6506 = vpop.permute.xlu0 %6505
        %6507 = vrot.lane.b32.xlu0 %v6243, 127
        %v6508 = vpop.permute.xlu0 %6507
        %6509 = vrot.lane.b32.xlu0 %v6246, 127
        %v6510 = vpop.permute.xlu0 %6509
        %6511 = vrot.lane.b32.xlu0 %v6249, 127
        %v6512 = vpop.permute.xlu0 %6511
        %6513 = vrot.lane.b32.xlu0 %v6252, 127
        %v6514 = vpop.permute.xlu0 %6513
        %6515 = vrot.lane.b32.xlu0 %v6255, 127
        %v6516 = vpop.permute.xlu0 %6515
        %6517 = vrot.lane.b32.xlu0 %v6258, 127
        %v6518 = vpop.permute.xlu0 %6517
        %6519 = vrot.lane.b32.xlu0 %v6261, 127
        %v6520 = vpop.permute.xlu0 %6519
        %6521 = vrot.lane.b32.xlu0 %v6264, 127
        %v6522 = vpop.permute.xlu0 %6521
        %6523 = vrot.lane.b32.xlu0 %v6267, 127
        %v6524 = vpop.permute.xlu0 %6523
        %6525 = vrot.lane.b32.xlu0 %v6223, 127
        %v6526 = vpop.permute.xlu0 %6525
        %6527 = vrot.lane.b32.xlu0 %v6226, 127
        %v6528 = vpop.permute.xlu0 %6527
        %6529 = vrot.lane.b32.xlu0 %v6229, 127
        %v6530 = vpop.permute.xlu0 %6529
        %6531 = vrot.lane.b32.xlu0 %v6232, 127
        %v6532 = vpop.permute.xlu0 %6531
        %6533 = vrot.lane.b32.xlu0 %v6235, 127
        %v6534 = vpop.permute.xlu0 %6533
        %6535 = vrot.lane.b32.xlu0 %v6238, 127
        %v6536 = vpop.permute.xlu0 %6535
        %6537 = vrot.lane.b32.xlu0 %v6241, 127
        %v6538 = vpop.permute.xlu0 %6537
        %6539 = vrot.lane.b32.xlu0 %v6244, 127
        %v6540 = vpop.permute.xlu0 %6539
        %6541 = vrot.lane.b32.xlu0 %v6247, 127
        %v6542 = vpop.permute.xlu0 %6541
        %6543 = vrot.lane.b32.xlu0 %v6250, 127
        %v6544 = vpop.permute.xlu0 %6543
        %6545 = vrot.lane.b32.xlu0 %v6253, 127
        %v6546 = vpop.permute.xlu0 %6545
        %6547 = vrot.lane.b32.xlu0 %v6256, 127
        %v6548 = vpop.permute.xlu0 %6547
        %6549 = vrot.lane.b32.xlu0 %v6259, 127
        %v6550 = vpop.permute.xlu0 %6549
        %6551 = vrot.lane.b32.xlu0 %v6262, 127
        %v6552 = vpop.permute.xlu0 %6551
        %6553 = vrot.lane.b32.xlu0 %v6265, 127
        %v6554 = vpop.permute.xlu0 %6553
        %6555 = vrot.lane.b32.xlu0 %v6268, 127
        %v6556 = vpop.permute.xlu0 %6555
        %v6557 = vsel %vm860, %v6494, %v6526
        %v6558 = vsel %vm860, %v6496, %v6528
        %v6559 = vsel %vm860, %v6498, %v6530
        %v6560 = vsel %vm860, %v6500, %v6532
        %v6561 = vsel %vm860, %v6502, %v6534
        %v6562 = vsel %vm860, %v6504, %v6536
        %v6563 = vsel %vm860, %v6506, %v6538
        %v6564 = vsel %vm860, %v6508, %v6540
        %v6565 = vsel %vm860, %v6510, %v6542
        %v6566 = vsel %vm860, %v6512, %v6544
        %v6567 = vsel %vm860, %v6514, %v6546
        %v6568 = vsel %vm860, %v6516, %v6548
        %v6569 = vsel %vm860, %v6518, %v6550
        %v6570 = vsel %vm860, %v6520, %v6552
        %v6571 = vsel %vm860, %v6522, %v6554
        %v6572 = vsel %vm860, %v6524, %v6556
        %v6573 = vsel %vm860, %v6462, %v6494
        %v6574 = vsel %vm860, %v6464, %v6496
        %v6575 = vsel %vm860, %v6466, %v6498
        %v6576 = vsel %vm860, %v6468, %v6500
        %v6577 = vsel %vm860, %v6470, %v6502
        %v6578 = vsel %vm860, %v6472, %v6504
        %v6579 = vsel %vm860, %v6474, %v6506
        %v6580 = vsel %vm860, %v6476, %v6508
        %v6581 = vsel %vm860, %v6478, %v6510
        %v6582 = vsel %vm860, %v6480, %v6512
        %v6583 = vsel %vm860, %v6482, %v6514
        %v6584 = vsel %vm860, %v6484, %v6516
        %v6585 = vsel %vm860, %v6486, %v6518
        %v6586 = vsel %vm860, %v6488, %v6520
        %v6587 = vsel %vm860, %v6490, %v6522
        %v6588 = vsel %vm860, %v6492, %v6524
        %v6589 = vsel %vm860, %v6526, %v6462
        %v6590 = vsel %vm860, %v6528, %v6464
        %v6591 = vsel %vm860, %v6530, %v6466
        %v6592 = vsel %vm860, %v6532, %v6468
        %v6593 = vsel %vm860, %v6534, %v6470
        %v6594 = vsel %vm860, %v6536, %v6472
        %v6595 = vsel %vm860, %v6538, %v6474
        %v6596 = vsel %vm860, %v6540, %v6476
        %v6597 = vsel %vm860, %v6542, %v6478
        %v6598 = vsel %vm860, %v6544, %v6480
        %v6599 = vsel %vm860, %v6546, %v6482
        %v6600 = vsel %vm860, %v6548, %v6484
        %v6601 = vsel %vm860, %v6550, %v6486
        %v6602 = vsel %vm860, %v6552, %v6488
        %v6603 = vsel %vm860, %v6554, %v6490
        %v6604 = vsel %vm860, %v6556, %v6492
        %v6605 = vsel %vm922, %v6573, 0.0
        %v6606 = vsel %vm923, %v6557, 0.0
        %v6607 = vsel %vm924, %v6589, 0.0
        %v6608 = vsel %vm922, %v6574, 0.0
        %v6609 = vsel %vm923, %v6558, 0.0
        %v6610 = vsel %vm924, %v6590, 0.0
        %v6611 = vsel %vm922, %v6575, 0.0
        %v6612 = vsel %vm923, %v6559, 0.0
        %v6613 = vsel %vm924, %v6591, 0.0
        %v6614 = vsel %vm922, %v6576, 0.0
        %v6615 = vsel %vm923, %v6560, 0.0
        %v6616 = vsel %vm924, %v6592, 0.0
        %v6617 = vsel %vm922, %v6577, 0.0
        %v6618 = vsel %vm923, %v6561, 0.0
        %v6619 = vsel %vm924, %v6593, 0.0
        %v6620 = vsel %vm922, %v6578, 0.0
        %v6621 = vsel %vm923, %v6562, 0.0
        %v6622 = vsel %vm924, %v6594, 0.0
        %v6623 = vsel %vm922, %v6579, 0.0
        %v6624 = vsel %vm923, %v6563, 0.0
        %v6625 = vsel %vm924, %v6595, 0.0
        %v6626 = vsel %vm922, %v6580, 0.0
        %v6627 = vsel %vm923, %v6564, 0.0
        %v6628 = vsel %vm924, %v6596, 0.0
        %v6629 = vsel %vm922, %v6581, 0.0
        %v6630 = vsel %vm923, %v6565, 0.0
        %v6631 = vsel %vm924, %v6597, 0.0
        %v6632 = vsel %vm922, %v6582, 0.0
        %v6633 = vsel %vm923, %v6566, 0.0
        %v6634 = vsel %vm924, %v6598, 0.0
        %v6635 = vsel %vm922, %v6583, 0.0
        %v6636 = vsel %vm923, %v6567, 0.0
        %v6637 = vsel %vm924, %v6599, 0.0
        %v6638 = vsel %vm922, %v6584, 0.0
        %v6639 = vsel %vm923, %v6568, 0.0
        %v6640 = vsel %vm924, %v6600, 0.0
        %v6641 = vsel %vm922, %v6585, 0.0
        %v6642 = vsel %vm923, %v6569, 0.0
        %v6643 = vsel %vm924, %v6601, 0.0
        %v6644 = vsel %vm922, %v6586, 0.0
        %v6645 = vsel %vm923, %v6570, 0.0
        %v6646 = vsel %vm924, %v6602, 0.0
        %v6647 = vsel %vm922, %v6587, 0.0
        %v6648 = vsel %vm923, %v6571, 0.0
        %v6649 = vsel %vm924, %v6603, 0.0
        %v6650 = vsel %vm922, %v6588, 0.0
        %v6651 = vsel %vm923, %v6572, 0.0
        %v6652 = vsel %vm924, %v6604, 0.0
        %v6653 = vld [vmem:[#allocation6] sm:$0xff]
        %v6654 = vld [vmem:[#allocation6 + $0x8] sm:$0xff]
        %v6655 = vld [vmem:[#allocation6 + $0x10] sm:$0xff]
        %v6656 = vld [vmem:[#allocation6 + $0x18] sm:$0xff]
        %v6657 = vld [vmem:[#allocation6 + $0x20] sm:$0xff]
        %v6658 = vld [vmem:[#allocation6 + $0x28] sm:$0xff]
        %v6659 = vld [vmem:[#allocation6 + $0x30] sm:$0xff]
        %v6660 = vld [vmem:[#allocation6 + $0x38] sm:$0xff]
        %v6661 = vld [vmem:[#allocation6 + $0x40] sm:$0xff]
        %v6662 = vld [vmem:[#allocation6 + $0x48] sm:$0xff]
        %v6663 = vld [vmem:[#allocation6 + $0x50] sm:$0xff]
        %v6664 = vld [vmem:[#allocation6 + $0x58] sm:$0xff]
        %v6665 = vld [vmem:[#allocation6 + $0x60] sm:$0xff]
        %v6666 = vld [vmem:[#allocation6 + $0x68] sm:$0xff]
        %v6667 = vld [vmem:[#allocation6 + $0x70] sm:$0xff]
        %v6668 = vld [vmem:[#allocation6 + $0x78] sm:$0xff]
        %s6669 = scalar_lea.vmem [#allocation6], 128
        %v6670 = vld [vmem:[%s6669] sm:$0xff]
        %v6671 = vld [vmem:[%s6669 + $0x8] sm:$0xff]
        %v6672 = vld [vmem:[%s6669 + $0x10] sm:$0xff]
        %v6673 = vld [vmem:[%s6669 + $0x18] sm:$0xff]
        %v6674 = vld [vmem:[%s6669 + $0x20] sm:$0xff]
        %v6675 = vld [vmem:[%s6669 + $0x28] sm:$0xff]
        %v6676 = vld [vmem:[%s6669 + $0x30] sm:$0xff]
        %v6677 = vld [vmem:[%s6669 + $0x38] sm:$0xff]
        %v6678 = vld [vmem:[%s6669 + $0x40] sm:$0xff]
        %v6679 = vld [vmem:[%s6669 + $0x48] sm:$0xff]
        %v6680 = vld [vmem:[%s6669 + $0x50] sm:$0xff]
        %v6681 = vld [vmem:[%s6669 + $0x58] sm:$0xff]
        %v6682 = vld [vmem:[%s6669 + $0x60] sm:$0xff]
        %v6683 = vld [vmem:[%s6669 + $0x68] sm:$0xff]
        %v6684 = vld [vmem:[%s6669 + $0x70] sm:$0xff]
        %v6685 = vld [vmem:[%s6669 + $0x78] sm:$0xff]
        %6686 = vmatprep.subr.mxu0 %v6222
        %6687 = vmatpush1.msra.mxu0 %v6221
        %6688 = vmatprep.subr.mxu0 %v6225
        %6689 = vmatpush1.msra.mxu0 %v6224
        %6690 = vmatprep.subr.mxu0 %v6228
        %6691 = vmatpush1.msra.mxu0 %v6227
        %6692 = vmatprep.subr.mxu0 %v6231
        %6693 = vmatpush1.msra.mxu0 %v6230
        %6694 = vmatprep.subr.mxu0 %v6234
        %6695 = vmatpush1.msra.mxu0 %v6233
        %6696 = vmatprep.subr.mxu0 %v6237
        %6697 = vmatpush1.msra.mxu0 %v6236
        %6698 = vmatprep.subr.mxu0 %v6240
        %6699 = vmatpush1.msra.mxu0 %v6239
        %6700 = vmatprep.subr.mxu0 %v6243
        %6701 = vmatpush1.msra.mxu0 %v6242
        %6702 = vmatprep.subr.mxu0 %v6246
        %6703 = vmatpush1.msra.mxu0 %v6245
        %6704 = vmatprep.subr.mxu0 %v6249
        %6705 = vmatpush1.msra.mxu0 %v6248
        %6706 = vmatprep.subr.mxu0 %v6252
        %6707 = vmatpush1.msra.mxu0 %v6251
        %6708 = vmatprep.subr.mxu0 %v6255
        %6709 = vmatpush1.msra.mxu0 %v6254
        %6710 = vmatprep.subr.mxu0 %v6258
        %6711 = vmatpush1.msra.mxu0 %v6257
        %6712 = vmatprep.subr.mxu0 %v6261
        %6713 = vmatpush1.msra.mxu0 %v6260
        %6714 = vmatprep.subr.mxu0 %v6264
        %6715 = vmatpush1.msra.mxu0 %v6263
        %6716 = vmatprep.subr.mxu0 %v6267
        %6717 = vmatpush1.msra.mxu0 %v6266
        %6718 = vmatprep.subr.mxu0 0.0
        %6719 = vmatpush1.msra.mxu0 0.0
        %6720 = vmatprep.subr.mxu0 0.0
        %6721 = vmatpush1.msra.mxu0 0.0
        %6722 = vmatprep.subr.mxu0 0.0
        %6723 = vmatpush1.msra.mxu0 0.0
        %6724 = vmatprep.subr.mxu0 0.0
        %6725 = vmatpush1.msra.mxu0 0.0
        %6726 = vmatprep.subr.mxu0 0.0
        %6727 = vmatpush1.msra.mxu0 0.0
        %6728 = vmatprep.subr.mxu0 0.0
        %6729 = vmatpush1.msra.mxu0 0.0
        %6730 = vmatprep.subr.mxu0 0.0
        %6731 = vmatpush1.msra.mxu0 0.0
        %6732 = vmatprep.subr.mxu0 0.0
        %6733 = vmatpush1.msra.mxu0 0.0
        %6734 = vmatprep.subr.mxu0 0.0
        %6735 = vmatpush1.msra.mxu0 0.0
        %6736 = vmatprep.subr.mxu0 0.0
        %6737 = vmatpush1.msra.mxu0 0.0
        %6738 = vmatprep.subr.mxu0 0.0
        %6739 = vmatpush1.msra.mxu0 0.0
        %6740 = vmatprep.subr.mxu0 0.0
        %6741 = vmatpush1.msra.mxu0 0.0
        %6742 = vmatprep.subr.mxu0 0.0
        %6743 = vmatpush1.msra.mxu0 0.0
        %6744 = vmatprep.subr.mxu0 0.0
        %6745 = vmatpush1.msra.mxu0 0.0
        %6746 = vmatprep.subr.mxu0 0.0
        %6747 = vmatpush1.msra.mxu0 0.0
        %6748 = vmatprep.subr.mxu0 0.0
        %6749 = vmatpush1.msra.mxu0 0.0
        %6750 = vmatprep.mubr.f32.mxu0 0.0
        %6751 = vmatmul.mubr.f32.gmra.mrb[0].mxu0 %v6670
        %v6752 = vpop.f32.mrb[0].mxu0
        %v6753 = vadd.f32 0.0, %v6752
        %v6754 = vpop.f32.mrb[0].mxu0
        %v6755 = vadd.f32 0.0, %v6754
        %6756 = vmatprep.mubr.f32.mxu0 0.0
        %6757 = vmatmul.mubr.f32.gmra.mrb[0].mxu0 %v6671
        %v6758 = vpop.f32.mrb[0].mxu0
        %v6759 = vadd.f32 0.0, %v6758
        %v6760 = vpop.f32.mrb[0].mxu0
        %v6761 = vadd.f32 0.0, %v6760
        %6762 = vmatprep.mubr.f32.mxu0 0.0
        %6763 = vmatmul.mubr.f32.gmra.mrb[0].mxu0 %v6672
        %v6764 = vpop.f32.mrb[0].mxu0
        %v6765 = vadd.f32 0.0, %v6764
        %v6766 = vpop.f32.mrb[0].mxu0
        %v6767 = vadd.f32 0.0, %v6766
        %6768 = vmatprep.mubr.f32.mxu0 0.0
        %6769 = vmatmul.mubr.f32.gmra.mrb[0].mxu0 %v6673
        %v6770 = vpop.f32.mrb[0].mxu0
        %v6771 = vadd.f32 0.0, %v6770
        %v6772 = vpop.f32.mrb[0].mxu0
        %v6773 = vadd.f32 0.0, %v6772
        %6774 = vmatprep.mubr.f32.mxu0 0.0
        %6775 = vmatmul.mubr.f32.gmra.mrb[0].mxu0 %v6674
        %v6776 = vpop.f32.mrb[0].mxu0
        %v6777 = vadd.f32 0.0, %v6776
        %v6778 = vpop.f32.mrb[0].mxu0
        %v6779 = vadd.f32 0.0, %v6778
        %6780 = vmatprep.mubr.f32.mxu0 0.0
        %6781 = vmatmul.mubr.f32.gmra.mrb[0].mxu0 %v6675
        %v6782 = vpop.f32.mrb[0].mxu0
        %v6783 = vadd.f32 0.0, %v6782
        %v6784 = vpop.f32.mrb[0].mxu0
        %v6785 = vadd.f32 0.0, %v6784
        %6786 = vmatprep.mubr.f32.mxu0 0.0
        %6787 = vmatmul.mubr.f32.gmra.mrb[0].mxu0 %v6676
        %v6788 = vpop.f32.mrb[0].mxu0
        %v6789 = vadd.f32 0.0, %v6788
        %v6790 = vpop.f32.mrb[0].mxu0
        %v6791 = vadd.f32 0.0, %v6790
        %6792 = vmatprep.mubr.f32.mxu0 0.0
        %6793 = vmatmul.mubr.f32.gmra.mrb[0].mxu0 %v6677
        %v6794 = vpop.f32.mrb[0].mxu0
        %v6795 = vadd.f32 0.0, %v6794
        %v6796 = vpop.f32.mrb[0].mxu0
        %v6797 = vadd.f32 0.0, %v6796
        %6798 = vmatprep.mubr.f32.mxu0 0.0
        %6799 = vmatmul.mubr.f32.gmra.mrb[0].mxu0 %v6678
        %v6800 = vpop.f32.mrb[0].mxu0
        %v6801 = vadd.f32 0.0, %v6800
        %v6802 = vpop.f32.mrb[0].mxu0
        %v6803 = vadd.f32 0.0, %v6802
        %6804 = vmatprep.mubr.f32.mxu0 0.0
        %6805 = vmatmul.mubr.f32.gmra.mrb[0].mxu0 %v6679
        %v6806 = vpop.f32.mrb[0].mxu0
        %v6807 = vadd.f32 0.0, %v6806
        %v6808 = vpop.f32.mrb[0].mxu0
        %v6809 = vadd.f32 0.0, %v6808
        %6810 = vmatprep.mubr.f32.mxu0 0.0
        %6811 = vmatmul.mubr.f32.gmra.mrb[0].mxu0 %v6680
        %v6812 = vpop.f32.mrb[0].mxu0
        %v6813 = vadd.f32 0.0, %v6812
        %v6814 = vpop.f32.mrb[0].mxu0
        %v6815 = vadd.f32 0.0, %v6814
        %6816 = vmatprep.mubr.f32.mxu0 0.0
        %6817 = vmatmul.mubr.f32.gmra.mrb[0].mxu0 %v6681
        %v6818 = vpop.f32.mrb[0].mxu0
        %v6819 = vadd.f32 0.0, %v6818
        %v6820 = vpop.f32.mrb[0].mxu0
        %v6821 = vadd.f32 0.0, %v6820
        %6822 = vmatprep.mubr.f32.mxu0 0.0
        %6823 = vmatmul.mubr.f32.gmra.mrb[0].mxu0 %v6682
        %v6824 = vpop.f32.mrb[0].mxu0
        %v6825 = vadd.f32 0.0, %v6824
        %v6826 = vpop.f32.mrb[0].mxu0
        %v6827 = vadd.f32 0.0, %v6826
        %6828 = vmatprep.mubr.f32.mxu0 0.0
        %6829 = vmatmul.mubr.f32.gmra.mrb[0].mxu0 %v6683
        %v6830 = vpop.f32.mrb[0].mxu0
        %v6831 = vadd.f32 0.0, %v6830
        %v6832 = vpop.f32.mrb[0].mxu0
        %v6833 = vadd.f32 0.0, %v6832
        %6834 = vmatprep.mubr.f32.mxu0 0.0
        %6835 = vmatmul.mubr.f32.gmra.mrb[0].mxu0 %v6684
        %v6836 = vpop.f32.mrb[0].mxu0
        %v6837 = vadd.f32 0.0, %v6836
        %v6838 = vpop.f32.mrb[0].mxu0
        %v6839 = vadd.f32 0.0, %v6838
        %6840 = vmatprep.mubr.f32.mxu0 0.0
        %6841 = vmatmul.mubr.f32.gmra.mrb[0].mxu0 %v6685
        %v6842 = vpop.f32.mrb[0].mxu0
        %v6843 = vadd.f32 0.0, %v6842
        %v6844 = vpop.f32.mrb[0].mxu0
        %v6845 = vadd.f32 0.0, %v6844
        %6846 = vdwg.mxu0
        %6847 = vmatprep.subr.mxu0 0.0
        %6848 = vmatpush1.msra.mxu0 %v6223
        %6849 = vmatprep.subr.mxu0 0.0
        %6850 = vmatpush1.msra.mxu0 %v6226
        %6851 = vmatprep.subr.mxu0 0.0
        %6852 = vmatpush1.msra.mxu0 %v6229
        %6853 = vmatprep.subr.mxu0 0.0
        %6854 = vmatpush1.msra.mxu0 %v6232
        %6855 = vmatprep.subr.mxu0 0.0
        %6856 = vmatpush1.msra.mxu0 %v6235
        %6857 = vmatprep.subr.mxu0 0.0
        %6858 = vmatpush1.msra.mxu0 %v6238
        %6859 = vmatprep.subr.mxu0 0.0
        %6860 = vmatpush1.msra.mxu0 %v6241
        %6861 = vmatprep.subr.mxu0 0.0
        %6862 = vmatpush1.msra.mxu0 %v6244
        %6863 = vmatprep.subr.mxu0 0.0
        %6864 = vmatpush1.msra.mxu0 %v6247
        %6865 = vmatprep.subr.mxu0 0.0
        %6866 = vmatpush1.msra.mxu0 %v6250
        %6867 = vmatprep.subr.mxu0 0.0
        %6868 = vmatpush1.msra.mxu0 %v6253
        %6869 = vmatprep.subr.mxu0 0.0
        %6870 = vmatpush1.msra.mxu0 %v6256
        %6871 = vmatprep.subr.mxu0 0.0
        %6872 = vmatpush1.msra.mxu0 %v6259
        %6873 = vmatprep.subr.mxu0 0.0
        %6874 = vmatpush1.msra.mxu0 %v6262
        %6875 = vmatprep.subr.mxu0 0.0
        %6876 = vmatpush1.msra.mxu0 %v6265
        %6877 = vmatprep.subr.mxu0 0.0
        %6878 = vmatpush1.msra.mxu0 %v6268
        %6879 = vmatprep.subr.mxu0 0.0
        %6880 = vmatpush1.msra.mxu0 0.0
        %6881 = vmatprep.subr.mxu0 0.0
        %6882 = vmatpush1.msra.mxu0 0.0
        %6883 = vmatprep.subr.mxu0 0.0
        %6884 = vmatpush1.msra.mxu0 0.0
        %6885 = vmatprep.subr.mxu0 0.0
        %6886 = vmatpush1.msra.mxu0 0.0
        %6887 = vmatprep.subr.mxu0 0.0
        %6888 = vmatpush1.msra.mxu0 0.0
        %6889 = vmatprep.subr.mxu0 0.0
        %6890 = vmatpush1.msra.mxu0 0.0
        %6891 = vmatprep.subr.mxu0 0.0
        %6892 = vmatpush1.msra.mxu0 0.0
        %6893 = vmatprep.subr.mxu0 0.0
        %6894 = vmatpush1.msra.mxu0 0.0
        %6895 = vmatprep.subr.mxu0 0.0
        %6896 = vmatpush1.msra.mxu0 0.0
        %6897 = vmatprep.subr.mxu0 0.0
        %6898 = vmatpush1.msra.mxu0 0.0
        %6899 = vmatprep.subr.mxu0 0.0
        %6900 = vmatpush1.msra.mxu0 0.0
        %6901 = vmatprep.subr.mxu0 0.0
        %6902 = vmatpush1.msra.mxu0 0.0
        %6903 = vmatprep.subr.mxu0 0.0
        %6904 = vmatpush1.msra.mxu0 0.0
        %6905 = vmatprep.subr.mxu0 0.0
        %6906 = vmatpush1.msra.mxu0 0.0
        %6907 = vmatprep.subr.mxu0 0.0
        %6908 = vmatpush1.msra.mxu0 0.0
        %6909 = vmatprep.subr.mxu0 0.0
        %6910 = vmatpush1.msra.mxu0 0.0
        %6911 = vmatprep.mubr.f32.mxu0 0.0
        %6912 = vmatmul.mubr.f32.gmra.mrb[0].mxu0 %v6670
        %v6913 = vpop.f32.mrb[0].mxu0
        %v6914 = vadd.f32 0.0, %v6913
        %v6915 = vpop.f32.mrb[0].mxu0
        %6916 = vmatprep.mubr.f32.mxu0 0.0
        %6917 = vmatmul.mubr.f32.gmra.mrb[0].mxu0 %v6671
        %v6918 = vpop.f32.mrb[0].mxu0
        %v6919 = vadd.f32 0.0, %v6918
        %v6920 = vpop.f32.mrb[0].mxu0
        %6921 = vmatprep.mubr.f32.mxu0 0.0
        %6922 = vmatmul.mubr.f32.gmra.mrb[0].mxu0 %v6672
        %v6923 = vpop.f32.mrb[0].mxu0
        %v6924 = vadd.f32 0.0, %v6923
        %v6925 = vpop.f32.mrb[0].mxu0
        %6926 = vmatprep.mubr.f32.mxu0 0.0
        %6927 = vmatmul.mubr.f32.gmra.mrb[0].mxu0 %v6673
        %v6928 = vpop.f32.mrb[0].mxu0
        %v6929 = vadd.f32 0.0, %v6928
        %v6930 = vpop.f32.mrb[0].mxu0
        %6931 = vmatprep.mubr.f32.mxu0 0.0
        %6932 = vmatmul.mubr.f32.gmra.mrb[0].mxu0 %v6674
        %v6933 = vpop.f32.mrb[0].mxu0
        %v6934 = vadd.f32 0.0, %v6933
        %v6935 = vpop.f32.mrb[0].mxu0
        %6936 = vmatprep.mubr.f32.mxu0 0.0
        %6937 = vmatmul.mubr.f32.gmra.mrb[0].mxu0 %v6675
        %v6938 = vpop.f32.mrb[0].mxu0
        %v6939 = vadd.f32 0.0, %v6938
        %v6940 = vpop.f32.mrb[0].mxu0
        %6941 = vmatprep.mubr.f32.mxu0 0.0
        %6942 = vmatmul.mubr.f32.gmra.mrb[0].mxu0 %v6676
        %v6943 = vpop.f32.mrb[0].mxu0
        %v6944 = vadd.f32 0.0, %v6943
        %v6945 = vpop.f32.mrb[0].mxu0
        %6946 = vmatprep.mubr.f32.mxu0 0.0
        %6947 = vmatmul.mubr.f32.gmra.mrb[0].mxu0 %v6677
        %v6948 = vpop.f32.mrb[0].mxu0
        %v6949 = vadd.f32 0.0, %v6948
        %v6950 = vpop.f32.mrb[0].mxu0
        %6951 = vmatprep.mubr.f32.mxu0 0.0
        %6952 = vmatmul.mubr.f32.gmra.mrb[0].mxu0 %v6678
        %v6953 = vpop.f32.mrb[0].mxu0
        %v6954 = vadd.f32 0.0, %v6953
        %v6955 = vpop.f32.mrb[0].mxu0
        %6956 = vmatprep.mubr.f32.mxu0 0.0
        %6957 = vmatmul.mubr.f32.gmra.mrb[0].mxu0 %v6679
        %v6958 = vpop.f32.mrb[0].mxu0
        %v6959 = vadd.f32 0.0, %v6958
        %v6960 = vpop.f32.mrb[0].mxu0
        %6961 = vmatprep.mubr.f32.mxu0 0.0
        %6962 = vmatmul.mubr.f32.gmra.mrb[0].mxu0 %v6680
        %v6963 = vpop.f32.mrb[0].mxu0
        %v6964 = vadd.f32 0.0, %v6963
        %v6965 = vpop.f32.mrb[0].mxu0
        %6966 = vmatprep.mubr.f32.mxu0 0.0
        %6967 = vmatmul.mubr.f32.gmra.mrb[0].mxu0 %v6681
        %v6968 = vpop.f32.mrb[0].mxu0
        %v6969 = vadd.f32 0.0, %v6968
        %v6970 = vpop.f32.mrb[0].mxu0
        %6971 = vmatprep.mubr.f32.mxu0 0.0
        %6972 = vmatmul.mubr.f32.gmra.mrb[0].mxu0 %v6682
        %v6973 = vpop.f32.mrb[0].mxu0
        %v6974 = vadd.f32 0.0, %v6973
        %v6975 = vpop.f32.mrb[0].mxu0
        %6976 = vmatprep.mubr.f32.mxu0 0.0
        %6977 = vmatmul.mubr.f32.gmra.mrb[0].mxu0 %v6683
        %v6978 = vpop.f32.mrb[0].mxu0
        %v6979 = vadd.f32 0.0, %v6978
        %v6980 = vpop.f32.mrb[0].mxu0
        %6981 = vmatprep.mubr.f32.mxu0 0.0
        %6982 = vmatmul.mubr.f32.gmra.mrb[0].mxu0 %v6684
        %v6983 = vpop.f32.mrb[0].mxu0
        %v6984 = vadd.f32 0.0, %v6983
        %v6985 = vpop.f32.mrb[0].mxu0
        %6986 = vmatprep.mubr.f32.mxu0 0.0
        %6987 = vmatmul.mubr.f32.gmra.mrb[0].mxu0 %v6685
        %v6988 = vpop.f32.mrb[0].mxu0
        %v6989 = vadd.f32 0.0, %v6988
        %v6990 = vpop.f32.mrb[0].mxu0
        %6991 = vdwg.mxu0
        %6992 = vmatprep.subr.mxu0 %v6414
        %6993 = vmatpush1.msra.mxu0 %v6413
        %6994 = vmatprep.subr.mxu0 %v6417
        %6995 = vmatpush1.msra.mxu0 %v6416
        %6996 = vmatprep.subr.mxu0 %v6420
        %6997 = vmatpush1.msra.mxu0 %v6419
        %6998 = vmatprep.subr.mxu0 %v6423
        %6999 = vmatpush1.msra.mxu0 %v6422
        %7000 = vmatprep.subr.mxu0 %v6426
        %7001 = vmatpush1.msra.mxu0 %v6425
        %7002 = vmatprep.subr.mxu0 %v6429
        %7003 = vmatpush1.msra.mxu0 %v6428
        %7004 = vmatprep.subr.mxu0 %v6432
        %7005 = vmatpush1.msra.mxu0 %v6431
        %7006 = vmatprep.subr.mxu0 %v6435
        %7007 = vmatpush1.msra.mxu0 %v6434
        %7008 = vmatprep.subr.mxu0 %v6438
        %7009 = vmatpush1.msra.mxu0 %v6437
        %7010 = vmatprep.subr.mxu0 %v6441
        %7011 = vmatpush1.msra.mxu0 %v6440
        %7012 = vmatprep.subr.mxu0 %v6444
        %7013 = vmatpush1.msra.mxu0 %v6443
        %7014 = vmatprep.subr.mxu0 %v6447
        %7015 = vmatpush1.msra.mxu0 %v6446
        %7016 = vmatprep.subr.mxu0 %v6450
        %7017 = vmatpush1.msra.mxu0 %v6449
        %7018 = vmatprep.subr.mxu0 %v6453
        %7019 = vmatpush1.msra.mxu0 %v6452
        %7020 = vmatprep.subr.mxu0 %v6456
        %7021 = vmatpush1.msra.mxu0 %v6455
        %7022 = vmatprep.subr.mxu0 %v6459
        %7023 = vmatpush1.msra.mxu0 %v6458
        %7024 = vmatprep.subr.mxu0 0.0
        %7025 = vmatpush1.msra.mxu0 0.0
        %7026 = vmatprep.subr.mxu0 0.0
        %7027 = vmatpush1.msra.mxu0 0.0
        %7028 = vmatprep.subr.mxu0 0.0
        %7029 = vmatpush1.msra.mxu0 0.0
        %7030 = vmatprep.subr.mxu0 0.0
        %7031 = vmatpush1.msra.mxu0 0.0
        %7032 = vmatprep.subr.mxu0 0.0
        %7033 = vmatpush1.msra.mxu0 0.0
        %7034 = vmatprep.subr.mxu0 0.0
        %7035 = vmatpush1.msra.mxu0 0.0
        %7036 = vmatprep.subr.mxu0 0.0
        %7037 = vmatpush1.msra.mxu0 0.0
        %7038 = vmatprep.subr.mxu0 0.0
        %7039 = vmatpush1.msra.mxu0 0.0
        %7040 = vmatprep.subr.mxu0 0.0
        %7041 = vmatpush1.msra.mxu0 0.0
        %7042 = vmatprep.subr.mxu0 0.0
        %7043 = vmatpush1.msra.mxu0 0.0
        %7044 = vmatprep.subr.mxu0 0.0
        %7045 = vmatpush1.msra.mxu0 0.0
        %7046 = vmatprep.subr.mxu0 0.0
        %7047 = vmatpush1.msra.mxu0 0.0
        %7048 = vmatprep.subr.mxu0 0.0
        %7049 = vmatpush1.msra.mxu0 0.0
        %7050 = vmatprep.subr.mxu0 0.0
        %7051 = vmatpush1.msra.mxu0 0.0
        %7052 = vmatprep.subr.mxu0 0.0
        %7053 = vmatpush1.msra.mxu0 0.0
        %7054 = vmatprep.subr.mxu0 0.0
        %7055 = vmatpush1.msra.mxu0 0.0
        %7056 = vmatprep.mubr.f32.mxu0 0.0
        %7057 = vmatmul.mubr.f32.gmra.mrb[0].mxu0 %v6653
        %v7058 = vpop.f32.mrb[0].mxu0
        %v7059 = vadd.f32 %v6753, %v7058
        %v7060 = vpop.f32.mrb[0].mxu0
        %v7061 = vadd.f32 %v6755, %v7060
        %7062 = vmatprep.mubr.f32.mxu0 0.0
        %7063 = vmatmul.mubr.f32.gmra.mrb[0].mxu0 %v6654
        %v7064 = vpop.f32.mrb[0].mxu0
        %v7065 = vadd.f32 %v6759, %v7064
        %v7066 = vpop.f32.mrb[0].mxu0
        %v7067 = vadd.f32 %v6761, %v7066
        %7068 = vmatprep.mubr.f32.mxu0 0.0
        %7069 = vmatmul.mubr.f32.gmra.mrb[0].mxu0 %v6655
        %v7070 = vpop.f32.mrb[0].mxu0
        %v7071 = vadd.f32 %v6765, %v7070
        %v7072 = vpop.f32.mrb[0].mxu0
        %v7073 = vadd.f32 %v6767, %v7072
        %7074 = vmatprep.mubr.f32.mxu0 0.0
        %7075 = vmatmul.mubr.f32.gmra.mrb[0].mxu0 %v6656
        %v7076 = vpop.f32.mrb[0].mxu0
        %v7077 = vadd.f32 %v6771, %v7076
        %v7078 = vpop.f32.mrb[0].mxu0
        %v7079 = vadd.f32 %v6773, %v7078
        %7080 = vmatprep.mubr.f32.mxu0 0.0
        %7081 = vmatmul.mubr.f32.gmra.mrb[0].mxu0 %v6657
        %v7082 = vpop.f32.mrb[0].mxu0
        %v7083 = vadd.f32 %v6777, %v7082
        %v7084 = vpop.f32.mrb[0].mxu0
        %v7085 = vadd.f32 %v6779, %v7084
        %7086 = vmatprep.mubr.f32.mxu0 0.0
        %7087 = vmatmul.mubr.f32.gmra.mrb[0].mxu0 %v6658
        %v7088 = vpop.f32.mrb[0].mxu0
        %v7089 = vadd.f32 %v6783, %v7088
        %v7090 = vpop.f32.mrb[0].mxu0
        %v7091 = vadd.f32 %v6785, %v7090
        %7092 = vmatprep.mubr.f32.mxu0 0.0
        %7093 = vmatmul.mubr.f32.gmra.mrb[0].mxu0 %v6659
        %v7094 = vpop.f32.mrb[0].mxu0
        %v7095 = vadd.f32 %v6789, %v7094
        %v7096 = vpop.f32.mrb[0].mxu0
        %v7097 = vadd.f32 %v6791, %v7096
        %7098 = vmatprep.mubr.f32.mxu0 0.0
        %7099 = vmatmul.mubr.f32.gmra.mrb[0].mxu0 %v6660
        %v7100 = vpop.f32.mrb[0].mxu0
        %v7101 = vadd.f32 %v6795, %v7100
        %v7102 = vpop.f32.mrb[0].mxu0
        %v7103 = vadd.f32 %v6797, %v7102
        %7104 = vmatprep.mubr.f32.mxu0 0.0
        %7105 = vmatmul.mubr.f32.gmra.mrb[0].mxu0 %v6661
        %v7106 = vpop.f32.mrb[0].mxu0
        %v7107 = vadd.f32 %v6801, %v7106
        %v7108 = vpop.f32.mrb[0].mxu0
        %v7109 = vadd.f32 %v6803, %v7108
        %7110 = vmatprep.mubr.f32.mxu0 0.0
        %7111 = vmatmul.mubr.f32.gmra.mrb[0].mxu0 %v6662
        %v7112 = vpop.f32.mrb[0].mxu0
        %v7113 = vadd.f32 %v6807, %v7112
        %v7114 = vpop.f32.mrb[0].mxu0
        %v7115 = vadd.f32 %v6809, %v7114
        %7116 = vmatprep.mubr.f32.mxu0 0.0
        %7117 = vmatmul.mubr.f32.gmra.mrb[0].mxu0 %v6663
        %v7118 = vpop.f32.mrb[0].mxu0
        %v7119 = vadd.f32 %v6813, %v7118
        %v7120 = vpop.f32.mrb[0].mxu0
        %v7121 = vadd.f32 %v6815, %v7120
        %7122 = vmatprep.mubr.f32.mxu0 0.0
        %7123 = vmatmul.mubr.f32.gmra.mrb[0].mxu0 %v6664
        %v7124 = vpop.f32.mrb[0].mxu0
        %v7125 = vadd.f32 %v6819, %v7124
        %v7126 = vpop.f32.mrb[0].mxu0
        %v7127 = vadd.f32 %v6821, %v7126
        %7128 = vmatprep.mubr.f32.mxu0 0.0
        %7129 = vmatmul.mubr.f32.gmra.mrb[0].mxu0 %v6665
        %v7130 = vpop.f32.mrb[0].mxu0
        %v7131 = vadd.f32 %v6825, %v7130
        %v7132 = vpop.f32.mrb[0].mxu0
        %v7133 = vadd.f32 %v6827, %v7132
        %7134 = vmatprep.mubr.f32.mxu0 0.0
        %7135 = vmatmul.mubr.f32.gmra.mrb[0].mxu0 %v6666
        %v7136 = vpop.f32.mrb[0].mxu0
        %v7137 = vadd.f32 %v6831, %v7136
        %v7138 = vpop.f32.mrb[0].mxu0
        %v7139 = vadd.f32 %v6833, %v7138
        %7140 = vmatprep.mubr.f32.mxu0 0.0
        %7141 = vmatmul.mubr.f32.gmra.mrb[0].mxu0 %v6667
        %v7142 = vpop.f32.mrb[0].mxu0
        %v7143 = vadd.f32 %v6837, %v7142
        %v7144 = vpop.f32.mrb[0].mxu0
        %v7145 = vadd.f32 %v6839, %v7144
        %7146 = vmatprep.mubr.f32.mxu0 0.0
        %7147 = vmatmul.mubr.f32.gmra.mrb[0].mxu0 %v6668
        %v7148 = vpop.f32.mrb[0].mxu0
        %v7149 = vadd.f32 %v6843, %v7148
        %v7150 = vpop.f32.mrb[0].mxu0
        %v7151 = vadd.f32 %v6845, %v7150
        %7152 = vdwg.mxu0
        %7153 = vmatprep.subr.mxu0 0.0
        %7154 = vmatpush1.msra.mxu0 %v6415
        %7155 = vmatprep.subr.mxu0 0.0
        %7156 = vmatpush1.msra.mxu0 %v6418
        %7157 = vmatprep.subr.mxu0 0.0
        %7158 = vmatpush1.msra.mxu0 %v6421
        %7159 = vmatprep.subr.mxu0 0.0
        %7160 = vmatpush1.msra.mxu0 %v6424
        %7161 = vmatprep.subr.mxu0 0.0
        %7162 = vmatpush1.msra.mxu0 %v6427
        %7163 = vmatprep.subr.mxu0 0.0
        %7164 = vmatpush1.msra.mxu0 %v6430
        %7165 = vmatprep.subr.mxu0 0.0
        %7166 = vmatpush1.msra.mxu0 %v6433
        %7167 = vmatprep.subr.mxu0 0.0
        %7168 = vmatpush1.msra.mxu0 %v6436
        %7169 = vmatprep.subr.mxu0 0.0
        %7170 = vmatpush1.msra.mxu0 %v6439
        %7171 = vmatprep.subr.mxu0 0.0
        %7172 = vmatpush1.msra.mxu0 %v6442
        %7173 = vmatprep.subr.mxu0 0.0
        %7174 = vmatpush1.msra.mxu0 %v6445
        %7175 = vmatprep.subr.mxu0 0.0
        %7176 = vmatpush1.msra.mxu0 %v6448
        %7177 = vmatprep.subr.mxu0 0.0
        %7178 = vmatpush1.msra.mxu0 %v6451
        %7179 = vmatprep.subr.mxu0 0.0
        %7180 = vmatpush1.msra.mxu0 %v6454
        %7181 = vmatprep.subr.mxu0 0.0
        %7182 = vmatpush1.msra.mxu0 %v6457
        %7183 = vmatprep.subr.mxu0 0.0
        %7184 = vmatpush1.msra.mxu0 %v6460
        %7185 = vmatprep.subr.mxu0 0.0
        %7186 = vmatpush1.msra.mxu0 0.0
        %7187 = vmatprep.subr.mxu0 0.0
        %7188 = vmatpush1.msra.mxu0 0.0
        %7189 = vmatprep.subr.mxu0 0.0
        %7190 = vmatpush1.msra.mxu0 0.0
        %7191 = vmatprep.subr.mxu0 0.0
        %7192 = vmatpush1.msra.mxu0 0.0
        %7193 = vmatprep.subr.mxu0 0.0
        %7194 = vmatpush1.msra.mxu0 0.0
        %7195 = vmatprep.subr.mxu0 0.0
        %7196 = vmatpush1.msra.mxu0 0.0
        %7197 = vmatprep.subr.mxu0 0.0
        %7198 = vmatpush1.msra.mxu0 0.0
        %7199 = vmatprep.subr.mxu0 0.0
        %7200 = vmatpush1.msra.mxu0 0.0
        %7201 = vmatprep.subr.mxu0 0.0
        %7202 = vmatpush1.msra.mxu0 0.0
        %7203 = vmatprep.subr.mxu0 0.0
        %7204 = vmatpush1.msra.mxu0 0.0
        %7205 = vmatprep.subr.mxu0 0.0
        %7206 = vmatpush1.msra.mxu0 0.0
        %7207 = vmatprep.subr.mxu0 0.0
        %7208 = vmatpush1.msra.mxu0 0.0
        %7209 = vmatprep.subr.mxu0 0.0
        %7210 = vmatpush1.msra.mxu0 0.0
        %7211 = vmatprep.subr.mxu0 0.0
        %7212 = vmatpush1.msra.mxu0 0.0
        %7213 = vmatprep.subr.mxu0 0.0
        %7214 = vmatpush1.msra.mxu0 0.0
        %7215 = vmatprep.subr.mxu0 0.0
        %7216 = vmatpush1.msra.mxu0 0.0
        %7217 = vmatprep.mubr.f32.mxu0 0.0
        %7218 = vmatmul.mubr.f32.gmra.mrb[0].mxu0 %v6653
        %v7219 = vpop.f32.mrb[0].mxu0
        %v7220 = vadd.f32 %v6914, %v7219
        %v7221 = vpop.f32.mrb[0].mxu0
        %7222 = vmatprep.mubr.f32.mxu0 0.0
        %7223 = vmatmul.mubr.f32.gmra.mrb[0].mxu0 %v6654
        %v7224 = vpop.f32.mrb[0].mxu0
        %v7225 = vadd.f32 %v6919, %v7224
        %v7226 = vpop.f32.mrb[0].mxu0
        %7227 = vmatprep.mubr.f32.mxu0 0.0
        %7228 = vmatmul.mubr.f32.gmra.mrb[0].mxu0 %v6655
        %v7229 = vpop.f32.mrb[0].mxu0
        %v7230 = vadd.f32 %v6924, %v7229
        %v7231 = vpop.f32.mrb[0].mxu0
        %7232 = vmatprep.mubr.f32.mxu0 0.0
        %7233 = vmatmul.mubr.f32.gmra.mrb[0].mxu0 %v6656
        %v7234 = vpop.f32.mrb[0].mxu0
        %v7235 = vadd.f32 %v6929, %v7234
        %v7236 = vpop.f32.mrb[0].mxu0
        %7237 = vmatprep.mubr.f32.mxu0 0.0
        %7238 = vmatmul.mubr.f32.gmra.mrb[0].mxu0 %v6657
        %v7239 = vpop.f32.mrb[0].mxu0
        %v7240 = vadd.f32 %v6934, %v7239
        %v7241 = vpop.f32.mrb[0].mxu0
        %7242 = vmatprep.mubr.f32.mxu0 0.0
        %7243 = vmatmul.mubr.f32.gmra.mrb[0].mxu0 %v6658
        %v7244 = vpop.f32.mrb[0].mxu0
        %v7245 = vadd.f32 %v6939, %v7244
        %v7246 = vpop.f32.mrb[0].mxu0
        %7247 = vmatprep.mubr.f32.mxu0 0.0
        %7248 = vmatmul.mubr.f32.gmra.mrb[0].mxu0 %v6659
        %v7249 = vpop.f32.mrb[0].mxu0
        %v7250 = vadd.f32 %v6944, %v7249
        %v7251 = vpop.f32.mrb[0].mxu0
        %7252 = vmatprep.mubr.f32.mxu0 0.0
        %7253 = vmatmul.mubr.f32.gmra.mrb[0].mxu0 %v6660
        %v7254 = vpop.f32.mrb[0].mxu0
        %v7255 = vadd.f32 %v6949, %v7254
        %v7256 = vpop.f32.mrb[0].mxu0
        %7257 = vmatprep.mubr.f32.mxu0 0.0
        %7258 = vmatmul.mubr.f32.gmra.mrb[0].mxu0 %v6661
        %v7259 = vpop.f32.mrb[0].mxu0
        %v7260 = vadd.f32 %v6954, %v7259
        %v7261 = vpop.f32.mrb[0].mxu0
        %7262 = vmatprep.mubr.f32.mxu0 0.0
        %7263 = vmatmul.mubr.f32.gmra.mrb[0].mxu0 %v6662
        %v7264 = vpop.f32.mrb[0].mxu0
        %v7265 = vadd.f32 %v6959, %v7264
        %v7266 = vpop.f32.mrb[0].mxu0
        %7267 = vmatprep.mubr.f32.mxu0 0.0
        %7268 = vmatmul.mubr.f32.gmra.mrb[0].mxu0 %v6663
        %v7269 = vpop.f32.mrb[0].mxu0
        %v7270 = vadd.f32 %v6964, %v7269
        %v7271 = vpop.f32.mrb[0].mxu0
        %7272 = vmatprep.mubr.f32.mxu0 0.0
        %7273 = vmatmul.mubr.f32.gmra.mrb[0].mxu0 %v6664
        %v7274 = vpop.f32.mrb[0].mxu0
        %v7275 = vadd.f32 %v6969, %v7274
        %v7276 = vpop.f32.mrb[0].mxu0
        %7277 = vmatprep.mubr.f32.mxu0 0.0
        %7278 = vmatmul.mubr.f32.gmra.mrb[0].mxu0 %v6665
        %v7279 = vpop.f32.mrb[0].mxu0
        %v7280 = vadd.f32 %v6974, %v7279
        %v7281 = vpop.f32.mrb[0].mxu0
        %7282 = vmatprep.mubr.f32.mxu0 0.0
        %7283 = vmatmul.mubr.f32.gmra.mrb[0].mxu0 %v6666
        %v7284 = vpop.f32.mrb[0].mxu0
        %v7285 = vadd.f32 %v6979, %v7284
        %v7286 = vpop.f32.mrb[0].mxu0
        %7287 = vmatprep.mubr.f32.mxu0 0.0
        %7288 = vmatmul.mubr.f32.gmra.mrb[0].mxu0 %v6667
        %v7289 = vpop.f32.mrb[0].mxu0
        %v7290 = vadd.f32 %v6984, %v7289
        %v7291 = vpop.f32.mrb[0].mxu0
        %7292 = vmatprep.mubr.f32.mxu0 0.0
        %7293 = vmatmul.mubr.f32.gmra.mrb[0].mxu0 %v6668
        %v7294 = vpop.f32.mrb[0].mxu0
        %v7295 = vadd.f32 %v6989, %v7294
        %v7296 = vpop.f32.mrb[0].mxu0
        %7297 = vdwg.mxu0
        %s7298 = scalar_lea.vmem [#allocation6], 256
        %v7299 = vld [vmem:[%s7298] sm:$0xff]
        %v7300 = vld [vmem:[%s7298 + $0x8] sm:$0xff]
        %v7301 = vld [vmem:[%s7298 + $0x10] sm:$0xff]
        %v7302 = vld [vmem:[%s7298 + $0x18] sm:$0xff]
        %v7303 = vld [vmem:[%s7298 + $0x20] sm:$0xff]
        %v7304 = vld [vmem:[%s7298 + $0x28] sm:$0xff]
        %v7305 = vld [vmem:[%s7298 + $0x30] sm:$0xff]
        %v7306 = vld [vmem:[%s7298 + $0x38] sm:$0xff]
        %v7307 = vld [vmem:[%s7298 + $0x40] sm:$0xff]
        %v7308 = vld [vmem:[%s7298 + $0x48] sm:$0xff]
        %v7309 = vld [vmem:[%s7298 + $0x50] sm:$0xff]
        %v7310 = vld [vmem:[%s7298 + $0x58] sm:$0xff]
        %v7311 = vld [vmem:[%s7298 + $0x60] sm:$0xff]
        %v7312 = vld [vmem:[%s7298 + $0x68] sm:$0xff]
        %v7313 = vld [vmem:[%s7298 + $0x70] sm:$0xff]
        %v7314 = vld [vmem:[%s7298 + $0x78] sm:$0xff]
        %7315 = vmatprep.subr.mxu0 %v6606
        %7316 = vmatpush1.msra.mxu0 %v6605
        %7317 = vmatprep.subr.mxu0 %v6609
        %7318 = vmatpush1.msra.mxu0 %v6608
        %7319 = vmatprep.subr.mxu0 %v6612
        %7320 = vmatpush1.msra.mxu0 %v6611
        %7321 = vmatprep.subr.mxu0 %v6615
        %7322 = vmatpush1.msra.mxu0 %v6614
        %7323 = vmatprep.subr.mxu0 %v6618
        %7324 = vmatpush1.msra.mxu0 %v6617
        %7325 = vmatprep.subr.mxu0 %v6621
        %7326 = vmatpush1.msra.mxu0 %v6620
        %7327 = vmatprep.subr.mxu0 %v6624
        %7328 = vmatpush1.msra.mxu0 %v6623
        %7329 = vmatprep.subr.mxu0 %v6627
        %7330 = vmatpush1.msra.mxu0 %v6626
        %7331 = vmatprep.subr.mxu0 %v6630
        %7332 = vmatpush1.msra.mxu0 %v6629
        %7333 = vmatprep.subr.mxu0 %v6633
        %7334 = vmatpush1.msra.mxu0 %v6632
        %7335 = vmatprep.subr.mxu0 %v6636
        %7336 = vmatpush1.msra.mxu0 %v6635
        %7337 = vmatprep.subr.mxu0 %v6639
        %7338 = vmatpush1.msra.mxu0 %v6638
        %7339 = vmatprep.subr.mxu0 %v6642
        %7340 = vmatpush1.msra.mxu0 %v6641
        %7341 = vmatprep.subr.mxu0 %v6645
        %7342 = vmatpush1.msra.mxu0 %v6644
        %7343 = vmatprep.subr.mxu0 %v6648
        %7344 = vmatpush1.msra.mxu0 %v6647
        %7345 = vmatprep.subr.mxu0 %v6651
        %7346 = vmatpush1.msra.mxu0 %v6650
        %7347 = vmatprep.subr.mxu0 0.0
        %7348 = vmatpush1.msra.mxu0 0.0
        %7349 = vmatprep.subr.mxu0 0.0
        %7350 = vmatpush1.msra.mxu0 0.0
        %7351 = vmatprep.subr.mxu0 0.0
        %7352 = vmatpush1.msra.mxu0 0.0
        %7353 = vmatprep.subr.mxu0 0.0
        %7354 = vmatpush1.msra.mxu0 0.0
        %7355 = vmatprep.subr.mxu0 0.0
        %7356 = vmatpush1.msra.mxu0 0.0
        %7357 = vmatprep.subr.mxu0 0.0
        %7358 = vmatpush1.msra.mxu0 0.0
        %7359 = vmatprep.subr.mxu0 0.0
        %7360 = vmatpush1.msra.mxu0 0.0
        %7361 = vmatprep.subr.mxu0 0.0
        %7362 = vmatpush1.msra.mxu0 0.0
        %7363 = vmatprep.subr.mxu0 0.0
        %7364 = vmatpush1.msra.mxu0 0.0
        %7365 = vmatprep.subr.mxu0 0.0
        %7366 = vmatpush1.msra.mxu0 0.0
        %7367 = vmatprep.subr.mxu0 0.0
        %7368 = vmatpush1.msra.mxu0 0.0
        %7369 = vmatprep.subr.mxu0 0.0
        %7370 = vmatpush1.msra.mxu0 0.0
        %7371 = vmatprep.subr.mxu0 0.0
        %7372 = vmatpush1.msra.mxu0 0.0
        %7373 = vmatprep.subr.mxu0 0.0
        %7374 = vmatpush1.msra.mxu0 0.0
        %7375 = vmatprep.subr.mxu0 0.0
        %7376 = vmatpush1.msra.mxu0 0.0
        %7377 = vmatprep.subr.mxu0 0.0
        %7378 = vmatpush1.msra.mxu0 0.0
        %7379 = vmatprep.mubr.f32.mxu0 0.0
        %7380 = vmatmul.mubr.f32.gmra.mrb[0].mxu0 %v7299
        %v7381 = vpop.f32.mrb[0].mxu0
        %v7382 = vadd.f32 0.0, %v7381
        %v7383 = vpop.f32.mrb[0].mxu0
        %v7384 = vadd.f32 0.0, %v7383
        %7385 = vmatprep.mubr.f32.mxu0 0.0
        %7386 = vmatmul.mubr.f32.gmra.mrb[0].mxu0 %v7300
        %v7387 = vpop.f32.mrb[0].mxu0
        %v7388 = vadd.f32 0.0, %v7387
        %v7389 = vpop.f32.mrb[0].mxu0
        %v7390 = vadd.f32 0.0, %v7389
        %7391 = vmatprep.mubr.f32.mxu0 0.0
        %7392 = vmatmul.mubr.f32.gmra.mrb[0].mxu0 %v7301
        %v7393 = vpop.f32.mrb[0].mxu0
        %v7394 = vadd.f32 0.0, %v7393
        %v7395 = vpop.f32.mrb[0].mxu0
        %v7396 = vadd.f32 0.0, %v7395
        %7397 = vmatprep.mubr.f32.mxu0 0.0
        %7398 = vmatmul.mubr.f32.gmra.mrb[0].mxu0 %v7302
        %v7399 = vpop.f32.mrb[0].mxu0
        %v7400 = vadd.f32 0.0, %v7399
        %v7401 = vpop.f32.mrb[0].mxu0
        %v7402 = vadd.f32 0.0, %v7401
        %7403 = vmatprep.mubr.f32.mxu0 0.0
        %7404 = vmatmul.mubr.f32.gmra.mrb[0].mxu0 %v7303
        %v7405 = vpop.f32.mrb[0].mxu0
        %v7406 = vadd.f32 0.0, %v7405
        %v7407 = vpop.f32.mrb[0].mxu0
        %v7408 = vadd.f32 0.0, %v7407
        %7409 = vmatprep.mubr.f32.mxu0 0.0
        %7410 = vmatmul.mubr.f32.gmra.mrb[0].mxu0 %v7304
        %v7411 = vpop.f32.mrb[0].mxu0
        %v7412 = vadd.f32 0.0, %v7411
        %v7413 = vpop.f32.mrb[0].mxu0
        %v7414 = vadd.f32 0.0, %v7413
        %7415 = vmatprep.mubr.f32.mxu0 0.0
        %7416 = vmatmul.mubr.f32.gmra.mrb[0].mxu0 %v7305
        %v7417 = vpop.f32.mrb[0].mxu0
        %v7418 = vadd.f32 0.0, %v7417
        %v7419 = vpop.f32.mrb[0].mxu0
        %v7420 = vadd.f32 0.0, %v7419
        %7421 = vmatprep.mubr.f32.mxu0 0.0
        %7422 = vmatmul.mubr.f32.gmra.mrb[0].mxu0 %v7306
        %v7423 = vpop.f32.mrb[0].mxu0
        %v7424 = vadd.f32 0.0, %v7423
        %v7425 = vpop.f32.mrb[0].mxu0
        %v7426 = vadd.f32 0.0, %v7425
        %7427 = vmatprep.mubr.f32.mxu0 0.0
        %7428 = vmatmul.mubr.f32.gmra.mrb[0].mxu0 %v7307
        %v7429 = vpop.f32.mrb[0].mxu0
        %v7430 = vadd.f32 0.0, %v7429
        %v7431 = vpop.f32.mrb[0].mxu0
        %v7432 = vadd.f32 0.0, %v7431
        %7433 = vmatprep.mubr.f32.mxu0 0.0
        %7434 = vmatmul.mubr.f32.gmra.mrb[0].mxu0 %v7308
        %v7435 = vpop.f32.mrb[0].mxu0
        %v7436 = vadd.f32 0.0, %v7435
        %v7437 = vpop.f32.mrb[0].mxu0
        %v7438 = vadd.f32 0.0, %v7437
        %7439 = vmatprep.mubr.f32.mxu0 0.0
        %7440 = vmatmul.mubr.f32.gmra.mrb[0].mxu0 %v7309
        %v7441 = vpop.f32.mrb[0].mxu0
        %v7442 = vadd.f32 0.0, %v7441
        %v7443 = vpop.f32.mrb[0].mxu0
        %v7444 = vadd.f32 0.0, %v7443
        %7445 = vmatprep.mubr.f32.mxu0 0.0
        %7446 = vmatmul.mubr.f32.gmra.mrb[0].mxu0 %v7310
        %v7447 = vpop.f32.mrb[0].mxu0
        %v7448 = vadd.f32 0.0, %v7447
        %v7449 = vpop.f32.mrb[0].mxu0
        %v7450 = vadd.f32 0.0, %v7449
        %7451 = vmatprep.mubr.f32.mxu0 0.0
        %7452 = vmatmul.mubr.f32.gmra.mrb[0].mxu0 %v7311
        %v7453 = vpop.f32.mrb[0].mxu0
        %v7454 = vadd.f32 0.0, %v7453
        %v7455 = vpop.f32.mrb[0].mxu0
        %v7456 = vadd.f32 0.0, %v7455
        %7457 = vmatprep.mubr.f32.mxu0 0.0
        %7458 = vmatmul.mubr.f32.gmra.mrb[0].mxu0 %v7312
        %v7459 = vpop.f32.mrb[0].mxu0
        %v7460 = vadd.f32 0.0, %v7459
        %v7461 = vpop.f32.mrb[0].mxu0
        %v7462 = vadd.f32 0.0, %v7461
        %7463 = vmatprep.mubr.f32.mxu0 0.0
        %7464 = vmatmul.mubr.f32.gmra.mrb[0].mxu0 %v7313
        %v7465 = vpop.f32.mrb[0].mxu0
        %v7466 = vadd.f32 0.0, %v7465
        %v7467 = vpop.f32.mrb[0].mxu0
        %v7468 = vadd.f32 0.0, %v7467
        %7469 = vmatprep.mubr.f32.mxu0 0.0
        %7470 = vmatmul.mubr.f32.gmra.mrb[0].mxu0 %v7314
        %v7471 = vpop.f32.mrb[0].mxu0
        %v7472 = vadd.f32 0.0, %v7471
        %v7473 = vpop.f32.mrb[0].mxu0
        %v7474 = vadd.f32 0.0, %v7473
        %7475 = vdwg.mxu0
        %7476 = vmatprep.subr.mxu0 0.0
        %7477 = vmatpush1.msra.mxu0 %v6607
        %7478 = vmatprep.subr.mxu0 0.0
        %7479 = vmatpush1.msra.mxu0 %v6610
        %7480 = vmatprep.subr.mxu0 0.0
        %7481 = vmatpush1.msra.mxu0 %v6613
        %7482 = vmatprep.subr.mxu0 0.0
        %7483 = vmatpush1.msra.mxu0 %v6616
        %7484 = vmatprep.subr.mxu0 0.0
        %7485 = vmatpush1.msra.mxu0 %v6619
        %7486 = vmatprep.subr.mxu0 0.0
        %7487 = vmatpush1.msra.mxu0 %v6622
        %7488 = vmatprep.subr.mxu0 0.0
        %7489 = vmatpush1.msra.mxu0 %v6625
        %7490 = vmatprep.subr.mxu0 0.0
        %7491 = vmatpush1.msra.mxu0 %v6628
        %7492 = vmatprep.subr.mxu0 0.0
        %7493 = vmatpush1.msra.mxu0 %v6631
        %7494 = vmatprep.subr.mxu0 0.0
        %7495 = vmatpush1.msra.mxu0 %v6634
        %7496 = vmatprep.subr.mxu0 0.0
        %7497 = vmatpush1.msra.mxu0 %v6637
        %7498 = vmatprep.subr.mxu0 0.0
        %7499 = vmatpush1.msra.mxu0 %v6640
        %7500 = vmatprep.subr.mxu0 0.0
        %7501 = vmatpush1.msra.mxu0 %v6643
        %7502 = vmatprep.subr.mxu0 0.0
        %7503 = vmatpush1.msra.mxu0 %v6646
        %7504 = vmatprep.subr.mxu0 0.0
        %7505 = vmatpush1.msra.mxu0 %v6649
        %7506 = vmatprep.subr.mxu0 0.0
        %7507 = vmatpush1.msra.mxu0 %v6652
        %7508 = vmatprep.subr.mxu0 0.0
        %7509 = vmatpush1.msra.mxu0 0.0
        %7510 = vmatprep.subr.mxu0 0.0
        %7511 = vmatpush1.msra.mxu0 0.0
        %7512 = vmatprep.subr.mxu0 0.0
        %7513 = vmatpush1.msra.mxu0 0.0
        %7514 = vmatprep.subr.mxu0 0.0
        %7515 = vmatpush1.msra.mxu0 0.0
        %7516 = vmatprep.subr.mxu0 0.0
        %7517 = vmatpush1.msra.mxu0 0.0
        %7518 = vmatprep.subr.mxu0 0.0
        %7519 = vmatpush1.msra.mxu0 0.0
        %7520 = vmatprep.subr.mxu0 0.0
        %7521 = vmatpush1.msra.mxu0 0.0
        %7522 = vmatprep.subr.mxu0 0.0
        %7523 = vmatpush1.msra.mxu0 0.0
        %7524 = vmatprep.subr.mxu0 0.0
        %7525 = vmatpush1.msra.mxu0 0.0
        %7526 = vmatprep.subr.mxu0 0.0
        %7527 = vmatpush1.msra.mxu0 0.0
        %7528 = vmatprep.subr.mxu0 0.0
        %7529 = vmatpush1.msra.mxu0 0.0
        %7530 = vmatprep.subr.mxu0 0.0
        %7531 = vmatpush1.msra.mxu0 0.0
        %7532 = vmatprep.subr.mxu0 0.0
        %7533 = vmatpush1.msra.mxu0 0.0
        %7534 = vmatprep.subr.mxu0 0.0
        %7535 = vmatpush1.msra.mxu0 0.0
        %7536 = vmatprep.subr.mxu0 0.0
        %7537 = vmatpush1.msra.mxu0 0.0
        %7538 = vmatprep.subr.mxu0 0.0
        %7539 = vmatpush1.msra.mxu0 0.0
        %7540 = vmatprep.mubr.f32.mxu0 0.0
        %7541 = vmatmul.mubr.f32.gmra.mrb[0].mxu0 %v7299
        %v7542 = vpop.f32.mrb[0].mxu0
        %v7543 = vadd.f32 0.0, %v7542
        %v7544 = vpop.f32.mrb[0].mxu0
        %7545 = vmatprep.mubr.f32.mxu0 0.0
        %7546 = vmatmul.mubr.f32.gmra.mrb[0].mxu0 %v7300
        %v7547 = vpop.f32.mrb[0].mxu0
        %v7548 = vadd.f32 0.0, %v7547
        %v7549 = vpop.f32.mrb[0].mxu0
        %7550 = vmatprep.mubr.f32.mxu0 0.0
        %7551 = vmatmul.mubr.f32.gmra.mrb[0].mxu0 %v7301
        %v7552 = vpop.f32.mrb[0].mxu0
        %v7553 = vadd.f32 0.0, %v7552
        %v7554 = vpop.f32.mrb[0].mxu0
        %7555 = vmatprep.mubr.f32.mxu0 0.0
        %7556 = vmatmul.mubr.f32.gmra.mrb[0].mxu0 %v7302
        %v7557 = vpop.f32.mrb[0].mxu0
        %v7558 = vadd.f32 0.0, %v7557
        %v7559 = vpop.f32.mrb[0].mxu0
        %7560 = vmatprep.mubr.f32.mxu0 0.0
        %7561 = vmatmul.mubr.f32.gmra.mrb[0].mxu0 %v7303
        %v7562 = vpop.f32.mrb[0].mxu0
        %v7563 = vadd.f32 0.0, %v7562
        %v7564 = vpop.f32.mrb[0].mxu0
        %7565 = vmatprep.mubr.f32.mxu0 0.0
        %7566 = vmatmul.mubr.f32.gmra.mrb[0].mxu0 %v7304
        %v7567 = vpop.f32.mrb[0].mxu0
        %v7568 = vadd.f32 0.0, %v7567
        %v7569 = vpop.f32.mrb[0].mxu0
        %7570 = vmatprep.mubr.f32.mxu0 0.0
        %7571 = vmatmul.mubr.f32.gmra.mrb[0].mxu0 %v7305
        %v7572 = vpop.f32.mrb[0].mxu0
        %v7573 = vadd.f32 0.0, %v7572
        %v7574 = vpop.f32.mrb[0].mxu0
        %7575 = vmatprep.mubr.f32.mxu0 0.0
        %7576 = vmatmul.mubr.f32.gmra.mrb[0].mxu0 %v7306
        %v7577 = vpop.f32.mrb[0].mxu0
        %v7578 = vadd.f32 0.0, %v7577
        %v7579 = vpop.f32.mrb[0].mxu0
        %7580 = vmatprep.mubr.f32.mxu0 0.0
        %7581 = vmatmul.mubr.f32.gmra.mrb[0].mxu0 %v7307
        %v7582 = vpop.f32.mrb[0].mxu0
        %v7583 = vadd.f32 0.0, %v7582
        %v7584 = vpop.f32.mrb[0].mxu0
        %7585 = vmatprep.mubr.f32.mxu0 0.0
        %7586 = vmatmul.mubr.f32.gmra.mrb[0].mxu0 %v7308
        %v7587 = vpop.f32.mrb[0].mxu0
        %v7588 = vadd.f32 0.0, %v7587
        %v7589 = vpop.f32.mrb[0].mxu0
        %7590 = vmatprep.mubr.f32.mxu0 0.0
        %7591 = vmatmul.mubr.f32.gmra.mrb[0].mxu0 %v7309
        %v7592 = vpop.f32.mrb[0].mxu0
        %v7593 = vadd.f32 0.0, %v7592
        %v7594 = vpop.f32.mrb[0].mxu0
        %7595 = vmatprep.mubr.f32.mxu0 0.0
        %7596 = vmatmul.mubr.f32.gmra.mrb[0].mxu0 %v7310
        %v7597 = vpop.f32.mrb[0].mxu0
        %v7598 = vadd.f32 0.0, %v7597
        %v7599 = vpop.f32.mrb[0].mxu0
        %7600 = vmatprep.mubr.f32.mxu0 0.0
        %7601 = vmatmul.mubr.f32.gmra.mrb[0].mxu0 %v7311
        %v7602 = vpop.f32.mrb[0].mxu0
        %v7603 = vadd.f32 0.0, %v7602
        %v7604 = vpop.f32.mrb[0].mxu0
        %7605 = vmatprep.mubr.f32.mxu0 0.0
        %7606 = vmatmul.mubr.f32.gmra.mrb[0].mxu0 %v7312
        %v7607 = vpop.f32.mrb[0].mxu0
        %v7608 = vadd.f32 0.0, %v7607
        %v7609 = vpop.f32.mrb[0].mxu0
        %7610 = vmatprep.mubr.f32.mxu0 0.0
        %7611 = vmatmul.mubr.f32.gmra.mrb[0].mxu0 %v7313
        %v7612 = vpop.f32.mrb[0].mxu0
        %v7613 = vadd.f32 0.0, %v7612
        %v7614 = vpop.f32.mrb[0].mxu0
        %7615 = vmatprep.mubr.f32.mxu0 0.0
        %7616 = vmatmul.mubr.f32.gmra.mrb[0].mxu0 %v7314
        %v7617 = vpop.f32.mrb[0].mxu0
        %v7618 = vadd.f32 0.0, %v7617
        %v7619 = vpop.f32.mrb[0].mxu0
        %7620 = vdwg.mxu0
        %v7621 = vadd.f32 %v7059, %v7382
        %v7622 = vadd.f32 %v7061, %v7384
        %v7623 = vadd.f32 %v7220, %v7543
        %v7624 = vadd.f32 %v7065, %v7388
        %v7625 = vadd.f32 %v7067, %v7390
        %v7626 = vadd.f32 %v7225, %v7548
        %v7627 = vadd.f32 %v7071, %v7394
        %v7628 = vadd.f32 %v7073, %v7396
        %v7629 = vadd.f32 %v7230, %v7553
        %v7630 = vadd.f32 %v7077, %v7400
        %v7631 = vadd.f32 %v7079, %v7402
        %v7632 = vadd.f32 %v7235, %v7558
        %v7633 = vadd.f32 %v7083, %v7406
        %v7634 = vadd.f32 %v7085, %v7408
        %v7635 = vadd.f32 %v7240, %v7563
        %v7636 = vadd.f32 %v7089, %v7412
        %v7637 = vadd.f32 %v7091, %v7414
        %v7638 = vadd.f32 %v7245, %v7568
        %v7639 = vadd.f32 %v7095, %v7418
        %v7640 = vadd.f32 %v7097, %v7420
        %v7641 = vadd.f32 %v7250, %v7573
        %v7642 = vadd.f32 %v7101, %v7424
        %v7643 = vadd.f32 %v7103, %v7426
        %v7644 = vadd.f32 %v7255, %v7578
        %v7645 = vadd.f32 %v7107, %v7430
        %v7646 = vadd.f32 %v7109, %v7432
        %v7647 = vadd.f32 %v7260, %v7583
        %v7648 = vadd.f32 %v7113, %v7436
        %v7649 = vadd.f32 %v7115, %v7438
        %v7650 = vadd.f32 %v7265, %v7588
        %v7651 = vadd.f32 %v7119, %v7442
        %v7652 = vadd.f32 %v7121, %v7444
        %v7653 = vadd.f32 %v7270, %v7593
        %v7654 = vadd.f32 %v7125, %v7448
        %v7655 = vadd.f32 %v7127, %v7450
        %v7656 = vadd.f32 %v7275, %v7598
        %v7657 = vadd.f32 %v7131, %v7454
        %v7658 = vadd.f32 %v7133, %v7456
        %v7659 = vadd.f32 %v7280, %v7603
        %v7660 = vadd.f32 %v7137, %v7460
        %v7661 = vadd.f32 %v7139, %v7462
        %v7662 = vadd.f32 %v7285, %v7608
        %v7663 = vadd.f32 %v7143, %v7466
        %v7664 = vadd.f32 %v7145, %v7468
        %v7665 = vadd.f32 %v7290, %v7613
        %v7666 = vadd.f32 %v7149, %v7472
        %v7667 = vadd.f32 %v7151, %v7474
        %v7668 = vadd.f32 %v7295, %v7618
        %7669 = vset.pattern.permute.xlu0 2
        %7670 = vperm.xlu0 %7669, %v537
        %v7671 = vpop.permute.xlu0 %7670
        %7673 = vset.pattern.permute.xlu0 2
        %7674 = vperm.xlu0 %7673, %v538
        %v7675 = vpop.permute.xlu0 %7674
        %7677 = vset.pattern.permute.xlu0 2
        %7678 = vperm.xlu0 %7677, %v539
        %v7679 = vpop.permute.xlu0 %7678
        %7681 = vset.pattern.permute.xlu0 2
        %7682 = vperm.xlu0 %7681, %v540
        %v7683 = vpop.permute.xlu0 %7682
        %7685 = vset.pattern.permute.xlu0 2
        %7686 = vperm.xlu0 %7685, %v541
        %v7687 = vpop.permute.xlu0 %7686
        %7689 = vset.pattern.permute.xlu0 2
        %7690 = vperm.xlu0 %7689, %v542
        %v7691 = vpop.permute.xlu0 %7690
        %7693 = vset.pattern.permute.xlu0 2
        %7694 = vperm.xlu0 %7693, %v543
        %v7695 = vpop.permute.xlu0 %7694
        %7697 = vset.pattern.permute.xlu0 2
        %7698 = vperm.xlu0 %7697, %v544
        %v7699 = vpop.permute.xlu0 %7698
        %7701 = vset.pattern.permute.xlu0 2
        %7702 = vperm.xlu0 %7701, %v545
        %v7703 = vpop.permute.xlu0 %7702
        %7705 = vset.pattern.permute.xlu0 2
        %7706 = vperm.xlu0 %7705, %v546
        %v7707 = vpop.permute.xlu0 %7706
        %7709 = vset.pattern.permute.xlu0 2
        %7710 = vperm.xlu0 %7709, %v547
        %v7711 = vpop.permute.xlu0 %7710
        %7713 = vset.pattern.permute.xlu0 2
        %7714 = vperm.xlu0 %7713, %v548
        %v7715 = vpop.permute.xlu0 %7714
        %7717 = vset.pattern.permute.xlu0 2
        %7718 = vperm.xlu0 %7717, %v549
        %v7719 = vpop.permute.xlu0 %7718
        %7721 = vset.pattern.permute.xlu0 2
        %7722 = vperm.xlu0 %7721, %v550
        %v7723 = vpop.permute.xlu0 %7722
        %7725 = vset.pattern.permute.xlu0 2
        %7726 = vperm.xlu0 %7725, %v551
        %v7727 = vpop.permute.xlu0 %7726
        %7729 = vset.pattern.permute.xlu0 2
        %7730 = vperm.xlu0 %7729, %v552
        %v7731 = vpop.permute.xlu0 %7730
        %v7733 = vadd.f32 %v7621, %v7671
        %v7734 = vadd.f32 %v7622, %v7671
        %v7735 = vadd.f32 %v7623, %v7671
        %v7736 = vadd.f32 %v7624, %v7675
        %v7737 = vadd.f32 %v7625, %v7675
        %v7738 = vadd.f32 %v7626, %v7675
        %v7739 = vadd.f32 %v7627, %v7679
        %v7740 = vadd.f32 %v7628, %v7679
        %v7741 = vadd.f32 %v7629, %v7679
        %v7742 = vadd.f32 %v7630, %v7683
        %v7743 = vadd.f32 %v7631, %v7683
        %v7744 = vadd.f32 %v7632, %v7683
        %v7745 = vadd.f32 %v7633, %v7687
        %v7746 = vadd.f32 %v7634, %v7687
        %v7747 = vadd.f32 %v7635, %v7687
        %v7748 = vadd.f32 %v7636, %v7691
        %v7749 = vadd.f32 %v7637, %v7691
        %v7750 = vadd.f32 %v7638, %v7691
        %v7751 = vadd.f32 %v7639, %v7695
        %v7752 = vadd.f32 %v7640, %v7695
        %v7753 = vadd.f32 %v7641, %v7695
        %v7754 = vadd.f32 %v7642, %v7699
        %v7755 = vadd.f32 %v7643, %v7699
        %v7756 = vadd.f32 %v7644, %v7699
        %v7757 = vadd.f32 %v7645, %v7703
        %v7758 = vadd.f32 %v7646, %v7703
        %v7759 = vadd.f32 %v7647, %v7703
        %v7760 = vadd.f32 %v7648, %v7707
        %v7761 = vadd.f32 %v7649, %v7707
        %v7762 = vadd.f32 %v7650, %v7707
        %v7763 = vadd.f32 %v7651, %v7711
        %v7764 = vadd.f32 %v7652, %v7711
        %v7765 = vadd.f32 %v7653, %v7711
        %v7766 = vadd.f32 %v7654, %v7715
        %v7767 = vadd.f32 %v7655, %v7715
        %v7768 = vadd.f32 %v7656, %v7715
        %v7769 = vadd.f32 %v7657, %v7719
        %v7770 = vadd.f32 %v7658, %v7719
        %v7771 = vadd.f32 %v7659, %v7719
        %v7772 = vadd.f32 %v7660, %v7723
        %v7773 = vadd.f32 %v7661, %v7723
        %v7774 = vadd.f32 %v7662, %v7723
        %v7775 = vadd.f32 %v7663, %v7727
        %v7776 = vadd.f32 %v7664, %v7727
        %v7777 = vadd.f32 %v7665, %v7727
        %v7778 = vadd.f32 %v7666, %v7731
        %v7779 = vadd.f32 %v7667, %v7731
        %v7780 = vadd.f32 %v7668, %v7731
        %v7781 = vld [vmem:[%s7] sm:$0xff]
        %v7782 = vld [vmem:[%s7 + $0x8] sm:$0xff]
        %v7783 = vld [vmem:[%s7 + $0x10] sm:$0xff]
        %v7784 = vld [vmem:[%s7 + $0x18] sm:$0xff]
        %v7785 = vld [vmem:[%s7 + $0x20] sm:$0xff]
        %v7786 = vld [vmem:[%s7 + $0x28] sm:$0xff]
        %v7787 = vld [vmem:[%s7 + $0x30] sm:$0xff]
        %v7788 = vld [vmem:[%s7 + $0x38] sm:$0xff]
        %v7789 = vld [vmem:[%s7 + $0x40] sm:$0xff]
        %v7790 = vld [vmem:[%s7 + $0x48] sm:$0xff]
        %v7791 = vld [vmem:[%s7 + $0x50] sm:$0xff]
        %v7792 = vld [vmem:[%s7 + $0x58] sm:$0xff]
        %v7793 = vld [vmem:[%s7 + $0x60] sm:$0xff]
        %v7794 = vld [vmem:[%s7 + $0x68] sm:$0xff]
        %v7795 = vld [vmem:[%s7 + $0x70] sm:$0xff]
        %v7796 = vld [vmem:[%s7 + $0x78] sm:$0xff]
        %v7797 = vld [vmem:[%s7 + $0x80] sm:$0xff]
        %v7798 = vld [vmem:[%s7 + $0x88] sm:$0xff]
        %v7799 = vld [vmem:[%s7 + $0x90] sm:$0xff]
        %v7800 = vld [vmem:[%s7 + $0x98] sm:$0xff]
        %v7801 = vld [vmem:[%s7 + $0xa0] sm:$0xff]
        %v7802 = vld [vmem:[%s7 + $0xa8] sm:$0xff]
        %v7803 = vld [vmem:[%s7 + $0xb0] sm:$0xff]
        %v7804 = vld [vmem:[%s7 + $0xb8] sm:$0xff]
        %v7805 = vld [vmem:[%s7 + $0xc0] sm:$0xff]
        %v7806 = vld [vmem:[%s7 + $0xc8] sm:$0xff]
        %v7807 = vld [vmem:[%s7 + $0xd0] sm:$0xff]
        %v7808 = vld [vmem:[%s7 + $0xd8] sm:$0xff]
        %v7809 = vld [vmem:[%s7 + $0xe0] sm:$0xff]
        %v7810 = vld [vmem:[%s7 + $0xe8] sm:$0xff]
        %v7811 = vld [vmem:[%s7 + $0xf0] sm:$0xff]
        %v7812 = vld [vmem:[%s7 + $0xf8] sm:$0xff]
        %v7813 = vld [vmem:[%s7 + $0x100] sm:$0xff]
        %v7814 = vld [vmem:[%s7 + $0x108] sm:$0xff]
        %v7815 = vld [vmem:[%s7 + $0x110] sm:$0xff]
        %v7816 = vld [vmem:[%s7 + $0x118] sm:$0xff]
        %v7817 = vld [vmem:[%s7 + $0x120] sm:$0xff]
        %v7818 = vld [vmem:[%s7 + $0x128] sm:$0xff]
        %v7819 = vld [vmem:[%s7 + $0x130] sm:$0xff]
        %v7820 = vld [vmem:[%s7 + $0x138] sm:$0xff]
        %v7821 = vld [vmem:[%s7 + $0x140] sm:$0xff]
        %v7822 = vld [vmem:[%s7 + $0x148] sm:$0xff]
        %v7823 = vld [vmem:[%s7 + $0x150] sm:$0xff]
        %v7824 = vld [vmem:[%s7 + $0x158] sm:$0xff]
        %v7825 = vld [vmem:[%s7 + $0x160] sm:$0xff]
        %v7826 = vld [vmem:[%s7 + $0x168] sm:$0xff]
        %v7827 = vld [vmem:[%s7 + $0x170] sm:$0xff]
        %v7828 = vld [vmem:[%s7 + $0x178] sm:$0xff]
        %7829 = vmatprep.subr.mxu0 0.0
        %7830 = vmatpush1.msra.mxu0 %v7781
        %7831 = vmatprep.subr.mxu0 0.0
        %7832 = vmatpush1.msra.mxu0 %v7782
        %7833 = vmatprep.subr.mxu0 0.0
        %7834 = vmatpush1.msra.mxu0 %v7783
        %7835 = vmatprep.subr.mxu0 0.0
        %7836 = vmatpush1.msra.mxu0 %v7784
        %7837 = vmatprep.subr.mxu0 0.0
        %7838 = vmatpush1.msra.mxu0 %v7785
        %7839 = vmatprep.subr.mxu0 0.0
        %7840 = vmatpush1.msra.mxu0 %v7786
        %7841 = vmatprep.subr.mxu0 0.0
        %7842 = vmatpush1.msra.mxu0 %v7787
        %7843 = vmatprep.subr.mxu0 0.0
        %7844 = vmatpush1.msra.mxu0 %v7788
        %7845 = vmatprep.subr.mxu0 0.0
        %7846 = vmatpush1.msra.mxu0 %v7789
        %7847 = vmatprep.subr.mxu0 0.0
        %7848 = vmatpush1.msra.mxu0 %v7790
        %7849 = vmatprep.subr.mxu0 0.0
        %7850 = vmatpush1.msra.mxu0 %v7791
        %7851 = vmatprep.subr.mxu0 0.0
        %7852 = vmatpush1.msra.mxu0 %v7792
        %7853 = vmatprep.subr.mxu0 0.0
        %7854 = vmatpush1.msra.mxu0 %v7793
        %7855 = vmatprep.subr.mxu0 0.0
        %7856 = vmatpush1.msra.mxu0 %v7794
        %7857 = vmatprep.subr.mxu0 0.0
        %7858 = vmatpush1.msra.mxu0 %v7795
        %7859 = vmatprep.subr.mxu0 0.0
        %7860 = vmatpush1.msra.mxu0 %v7796
        %7861 = vmatprep.subr.mxu0 0.0
        %7862 = vmatpush1.msra.mxu0 %v7797
        %7863 = vmatprep.subr.mxu0 0.0
        %7864 = vmatpush1.msra.mxu0 %v7798
        %7865 = vmatprep.subr.mxu0 0.0
        %7866 = vmatpush1.msra.mxu0 %v7799
        %7867 = vmatprep.subr.mxu0 0.0
        %7868 = vmatpush1.msra.mxu0 %v7800
        %7869 = vmatprep.subr.mxu0 0.0
        %7870 = vmatpush1.msra.mxu0 %v7801
        %7871 = vmatprep.subr.mxu0 0.0
        %7872 = vmatpush1.msra.mxu0 %v7802
        %7873 = vmatprep.subr.mxu0 0.0
        %7874 = vmatpush1.msra.mxu0 %v7803
        %7875 = vmatprep.subr.mxu0 0.0
        %7876 = vmatpush1.msra.mxu0 %v7804
        %7877 = vmatprep.subr.mxu0 0.0
        %7878 = vmatpush1.msra.mxu0 %v7805
        %7879 = vmatprep.subr.mxu0 0.0
        %7880 = vmatpush1.msra.mxu0 %v7806
        %7881 = vmatprep.subr.mxu0 0.0
        %7882 = vmatpush1.msra.mxu0 %v7807
        %7883 = vmatprep.subr.mxu0 0.0
        %7884 = vmatpush1.msra.mxu0 %v7808
        %7885 = vmatprep.subr.mxu0 0.0
        %7886 = vmatpush1.msra.mxu0 %v7809
        %7887 = vmatprep.subr.mxu0 0.0
        %7888 = vmatpush1.msra.mxu0 %v7810
        %7889 = vmatprep.subr.mxu0 0.0
        %7890 = vmatpush1.msra.mxu0 %v7811
        %7891 = vmatprep.subr.mxu0 0.0
        %7892 = vmatpush1.msra.mxu0 %v7812
        %7893 = vmatprep.mubr.f32.mxu0 %v7734
        %7894 = vmatmul.mubr.f32.gmra.mrb[0].mxu0 %v7733
        %v7895 = vpop.f32.mrb[0].mxu0
        %v7896 = vadd.f32 0.0, %v7895
        %v7897 = vpop.f32.mrb[0].mxu0
        %7898 = vmatprep.mubr.f32.mxu0 %v7737
        %7899 = vmatmul.mubr.f32.gmra.mrb[0].mxu0 %v7736
        %v7900 = vpop.f32.mrb[0].mxu0
        %v7901 = vadd.f32 0.0, %v7900
        %v7902 = vpop.f32.mrb[0].mxu0
        %7903 = vmatprep.mubr.f32.mxu0 %v7740
        %7904 = vmatmul.mubr.f32.gmra.mrb[0].mxu0 %v7739
        %v7905 = vpop.f32.mrb[0].mxu0
        %v7906 = vadd.f32 0.0, %v7905
        %v7907 = vpop.f32.mrb[0].mxu0
        %7908 = vmatprep.mubr.f32.mxu0 %v7743
        %7909 = vmatmul.mubr.f32.gmra.mrb[0].mxu0 %v7742
        %v7910 = vpop.f32.mrb[0].mxu0
        %v7911 = vadd.f32 0.0, %v7910
        %v7912 = vpop.f32.mrb[0].mxu0
        %7913 = vmatprep.mubr.f32.mxu0 %v7746
        %7914 = vmatmul.mubr.f32.gmra.mrb[0].mxu0 %v7745
        %v7915 = vpop.f32.mrb[0].mxu0
        %v7916 = vadd.f32 0.0, %v7915
        %v7917 = vpop.f32.mrb[0].mxu0
        %7918 = vmatprep.mubr.f32.mxu0 %v7749
        %7919 = vmatmul.mubr.f32.gmra.mrb[0].mxu0 %v7748
        %v7920 = vpop.f32.mrb[0].mxu0
        %v7921 = vadd.f32 0.0, %v7920
        %v7922 = vpop.f32.mrb[0].mxu0
        %7923 = vmatprep.mubr.f32.mxu0 %v7752
        %7924 = vmatmul.mubr.f32.gmra.mrb[0].mxu0 %v7751
        %v7925 = vpop.f32.mrb[0].mxu0
        %v7926 = vadd.f32 0.0, %v7925
        %v7927 = vpop.f32.mrb[0].mxu0
        %7928 = vmatprep.mubr.f32.mxu0 %v7755
        %7929 = vmatmul.mubr.f32.gmra.mrb[0].mxu0 %v7754
        %v7930 = vpop.f32.mrb[0].mxu0
        %v7931 = vadd.f32 0.0, %v7930
        %v7932 = vpop.f32.mrb[0].mxu0
        %7933 = vmatprep.mubr.f32.mxu0 %v7758
        %7934 = vmatmul.mubr.f32.gmra.mrb[0].mxu0 %v7757
        %v7935 = vpop.f32.mrb[0].mxu0
        %v7936 = vadd.f32 0.0, %v7935
        %v7937 = vpop.f32.mrb[0].mxu0
        %7938 = vmatprep.mubr.f32.mxu0 %v7761
        %7939 = vmatmul.mubr.f32.gmra.mrb[0].mxu0 %v7760
        %v7940 = vpop.f32.mrb[0].mxu0
        %v7941 = vadd.f32 0.0, %v7940
        %v7942 = vpop.f32.mrb[0].mxu0
        %7943 = vmatprep.mubr.f32.mxu0 %v7764
        %7944 = vmatmul.mubr.f32.gmra.mrb[0].mxu0 %v7763
        %v7945 = vpop.f32.mrb[0].mxu0
        %v7946 = vadd.f32 0.0, %v7945
        %v7947 = vpop.f32.mrb[0].mxu0
        %7948 = vmatprep.mubr.f32.mxu0 %v7767
        %7949 = vmatmul.mubr.f32.gmra.mrb[0].mxu0 %v7766
        %v7950 = vpop.f32.mrb[0].mxu0
        %v7951 = vadd.f32 0.0, %v7950
        %v7952 = vpop.f32.mrb[0].mxu0
        %7953 = vmatprep.mubr.f32.mxu0 %v7770
        %7954 = vmatmul.mubr.f32.gmra.mrb[0].mxu0 %v7769
        %v7955 = vpop.f32.mrb[0].mxu0
        %v7956 = vadd.f32 0.0, %v7955
        %v7957 = vpop.f32.mrb[0].mxu0
        %7958 = vmatprep.mubr.f32.mxu0 %v7773
        %7959 = vmatmul.mubr.f32.gmra.mrb[0].mxu0 %v7772
        %v7960 = vpop.f32.mrb[0].mxu0
        %v7961 = vadd.f32 0.0, %v7960
        %v7962 = vpop.f32.mrb[0].mxu0
        %7963 = vmatprep.mubr.f32.mxu0 %v7776
        %7964 = vmatmul.mubr.f32.gmra.mrb[0].mxu0 %v7775
        %v7965 = vpop.f32.mrb[0].mxu0
        %v7966 = vadd.f32 0.0, %v7965
        %v7967 = vpop.f32.mrb[0].mxu0
        %7968 = vmatprep.mubr.f32.mxu0 %v7779
        %7969 = vmatmul.mubr.f32.gmra.mrb[0].mxu0 %v7778
        %v7970 = vpop.f32.mrb[0].mxu0
        %v7971 = vadd.f32 0.0, %v7970
        %v7972 = vpop.f32.mrb[0].mxu0
        %7973 = vdwg.mxu0
        %7974 = vmatprep.subr.mxu0 0.0
        %7975 = vmatpush1.msra.mxu0 %v7813
        %7976 = vmatprep.subr.mxu0 0.0
        %7977 = vmatpush1.msra.mxu0 %v7814
        %7978 = vmatprep.subr.mxu0 0.0
        %7979 = vmatpush1.msra.mxu0 %v7815
        %7980 = vmatprep.subr.mxu0 0.0
        %7981 = vmatpush1.msra.mxu0 %v7816
        %7982 = vmatprep.subr.mxu0 0.0
        %7983 = vmatpush1.msra.mxu0 %v7817
        %7984 = vmatprep.subr.mxu0 0.0
        %7985 = vmatpush1.msra.mxu0 %v7818
        %7986 = vmatprep.subr.mxu0 0.0
        %7987 = vmatpush1.msra.mxu0 %v7819
        %7988 = vmatprep.subr.mxu0 0.0
        %7989 = vmatpush1.msra.mxu0 %v7820
        %7990 = vmatprep.subr.mxu0 0.0
        %7991 = vmatpush1.msra.mxu0 %v7821
        %7992 = vmatprep.subr.mxu0 0.0
        %7993 = vmatpush1.msra.mxu0 %v7822
        %7994 = vmatprep.subr.mxu0 0.0
        %7995 = vmatpush1.msra.mxu0 %v7823
        %7996 = vmatprep.subr.mxu0 0.0
        %7997 = vmatpush1.msra.mxu0 %v7824
        %7998 = vmatprep.subr.mxu0 0.0
        %7999 = vmatpush1.msra.mxu0 %v7825
        %8000 = vmatprep.subr.mxu0 0.0
        %8001 = vmatpush1.msra.mxu0 %v7826
        %8002 = vmatprep.subr.mxu0 0.0
        %8003 = vmatpush1.msra.mxu0 %v7827
        %8004 = vmatprep.subr.mxu0 0.0
        %8005 = vmatpush1.msra.mxu0 %v7828
        %8006 = vmatprep.subr.mxu0 0.0
        %8007 = vmatpush1.msra.mxu0 0.0
        %8008 = vmatprep.subr.mxu0 0.0
        %8009 = vmatpush1.msra.mxu0 0.0
        %8010 = vmatprep.subr.mxu0 0.0
        %8011 = vmatpush1.msra.mxu0 0.0
        %8012 = vmatprep.subr.mxu0 0.0
        %8013 = vmatpush1.msra.mxu0 0.0
        %8014 = vmatprep.subr.mxu0 0.0
        %8015 = vmatpush1.msra.mxu0 0.0
        %8016 = vmatprep.subr.mxu0 0.0
        %8017 = vmatpush1.msra.mxu0 0.0
        %8018 = vmatprep.subr.mxu0 0.0
        %8019 = vmatpush1.msra.mxu0 0.0
        %8020 = vmatprep.subr.mxu0 0.0
        %8021 = vmatpush1.msra.mxu0 0.0
        %8022 = vmatprep.subr.mxu0 0.0
        %8023 = vmatpush1.msra.mxu0 0.0
        %8024 = vmatprep.subr.mxu0 0.0
        %8025 = vmatpush1.msra.mxu0 0.0
        %8026 = vmatprep.subr.mxu0 0.0
        %8027 = vmatpush1.msra.mxu0 0.0
        %8028 = vmatprep.subr.mxu0 0.0
        %8029 = vmatpush1.msra.mxu0 0.0
        %8030 = vmatprep.subr.mxu0 0.0
        %8031 = vmatpush1.msra.mxu0 0.0
        %8032 = vmatprep.subr.mxu0 0.0
        %8033 = vmatpush1.msra.mxu0 0.0
        %8034 = vmatprep.subr.mxu0 0.0
        %8035 = vmatpush1.msra.mxu0 0.0
        %8036 = vmatprep.subr.mxu0 0.0
        %8037 = vmatpush1.msra.mxu0 0.0
        %8038 = vmatprep.mubr.f32.mxu0 0.0
        %8039 = vmatmul.mubr.f32.gmra.mrb[0].mxu0 %v7735
        %v8040 = vpop.f32.mrb[0].mxu0
        %v8041 = vadd.f32 %v7896, %v8040
        %v8042 = vpop.f32.mrb[0].mxu0
        %8043 = vmatprep.mubr.f32.mxu0 0.0
        %8044 = vmatmul.mubr.f32.gmra.mrb[0].mxu0 %v7738
        %v8045 = vpop.f32.mrb[0].mxu0
        %v8046 = vadd.f32 %v7901, %v8045
        %v8047 = vpop.f32.mrb[0].mxu0
        %8048 = vmatprep.mubr.f32.mxu0 0.0
        %8049 = vmatmul.mubr.f32.gmra.mrb[0].mxu0 %v7741
        %v8050 = vpop.f32.mrb[0].mxu0
        %v8051 = vadd.f32 %v7906, %v8050
        %v8052 = vpop.f32.mrb[0].mxu0
        %8053 = vmatprep.mubr.f32.mxu0 0.0
        %8054 = vmatmul.mubr.f32.gmra.mrb[0].mxu0 %v7744
        %v8055 = vpop.f32.mrb[0].mxu0
        %v8056 = vadd.f32 %v7911, %v8055
        %v8057 = vpop.f32.mrb[0].mxu0
        %8058 = vmatprep.mubr.f32.mxu0 0.0
        %8059 = vmatmul.mubr.f32.gmra.mrb[0].mxu0 %v7747
        %v8060 = vpop.f32.mrb[0].mxu0
        %v8061 = vadd.f32 %v7916, %v8060
        %v8062 = vpop.f32.mrb[0].mxu0
        %8063 = vmatprep.mubr.f32.mxu0 0.0
        %8064 = vmatmul.mubr.f32.gmra.mrb[0].mxu0 %v7750
        %v8065 = vpop.f32.mrb[0].mxu0
        %v8066 = vadd.f32 %v7921, %v8065
        %v8067 = vpop.f32.mrb[0].mxu0
        %8068 = vmatprep.mubr.f32.mxu0 0.0
        %8069 = vmatmul.mubr.f32.gmra.mrb[0].mxu0 %v7753
        %v8070 = vpop.f32.mrb[0].mxu0
        %v8071 = vadd.f32 %v7926, %v8070
        %v8072 = vpop.f32.mrb[0].mxu0
        %8073 = vmatprep.mubr.f32.mxu0 0.0
        %8074 = vmatmul.mubr.f32.gmra.mrb[0].mxu0 %v7756
        %v8075 = vpop.f32.mrb[0].mxu0
        %v8076 = vadd.f32 %v7931, %v8075
        %v8077 = vpop.f32.mrb[0].mxu0
        %8078 = vmatprep.mubr.f32.mxu0 0.0
        %8079 = vmatmul.mubr.f32.gmra.mrb[0].mxu0 %v7759
        %v8080 = vpop.f32.mrb[0].mxu0
        %v8081 = vadd.f32 %v7936, %v8080
        %v8082 = vpop.f32.mrb[0].mxu0
        %8083 = vmatprep.mubr.f32.mxu0 0.0
        %8084 = vmatmul.mubr.f32.gmra.mrb[0].mxu0 %v7762
        %v8085 = vpop.f32.mrb[0].mxu0
        %v8086 = vadd.f32 %v7941, %v8085
        %v8087 = vpop.f32.mrb[0].mxu0
        %8088 = vmatprep.mubr.f32.mxu0 0.0
        %8089 = vmatmul.mubr.f32.gmra.mrb[0].mxu0 %v7765
        %v8090 = vpop.f32.mrb[0].mxu0
        %v8091 = vadd.f32 %v7946, %v8090
        %v8092 = vpop.f32.mrb[0].mxu0
        %8093 = vmatprep.mubr.f32.mxu0 0.0
        %8094 = vmatmul.mubr.f32.gmra.mrb[0].mxu0 %v7768
        %v8095 = vpop.f32.mrb[0].mxu0
        %v8096 = vadd.f32 %v7951, %v8095
        %v8097 = vpop.f32.mrb[0].mxu0
        %8098 = vmatprep.mubr.f32.mxu0 0.0
        %8099 = vmatmul.mubr.f32.gmra.mrb[0].mxu0 %v7771
        %v8100 = vpop.f32.mrb[0].mxu0
        %v8101 = vadd.f32 %v7956, %v8100
        %v8102 = vpop.f32.mrb[0].mxu0
        %8103 = vmatprep.mubr.f32.mxu0 0.0
        %8104 = vmatmul.mubr.f32.gmra.mrb[0].mxu0 %v7774
        %v8105 = vpop.f32.mrb[0].mxu0
        %v8106 = vadd.f32 %v7961, %v8105
        %v8107 = vpop.f32.mrb[0].mxu0
        %8108 = vmatprep.mubr.f32.mxu0 0.0
        %8109 = vmatmul.mubr.f32.gmra.mrb[0].mxu0 %v7777
        %v8110 = vpop.f32.mrb[0].mxu0
        %v8111 = vadd.f32 %v7966, %v8110
        %v8112 = vpop.f32.mrb[0].mxu0
        %8113 = vmatprep.mubr.f32.mxu0 0.0
        %8114 = vmatmul.mubr.f32.gmra.mrb[0].mxu0 %v7780
        %v8115 = vpop.f32.mrb[0].mxu0
        %v8116 = vadd.f32 %v7971, %v8115
        %v8117 = vpop.f32.mrb[0].mxu0
        %8118 = vdwg.mxu0
        %v8119 = vld [vmem:[#allocation7] sm:$0xff]
        %v8120 = vld [vmem:[#allocation7 + $0x8] sm:$0xff]
        %v8121 = vld [vmem:[#allocation7 + $0x10] sm:$0xff]
        %v8122 = vld [vmem:[#allocation7 + $0x18] sm:$0xff]
        %v8123 = vld [vmem:[#allocation7 + $0x20] sm:$0xff]
        %v8124 = vld [vmem:[#allocation7 + $0x28] sm:$0xff]
        %v8125 = vld [vmem:[#allocation7 + $0x30] sm:$0xff]
        %v8126 = vld [vmem:[#allocation7 + $0x38] sm:$0xff]
        %s8127 = scalar_lea.vmem [#allocation7], 64
        %v8128 = vld [vmem:[%s8127] sm:$0xff]
        %v8129 = vld [vmem:[%s8127 + $0x8] sm:$0xff]
        %v8130 = vld [vmem:[%s8127 + $0x10] sm:$0xff]
        %v8131 = vld [vmem:[%s8127 + $0x18] sm:$0xff]
        %v8132 = vld [vmem:[%s8127 + $0x20] sm:$0xff]
        %v8133 = vld [vmem:[%s8127 + $0x28] sm:$0xff]
        %v8134 = vld [vmem:[%s8127 + $0x30] sm:$0xff]
        %v8135 = vld [vmem:[%s8127 + $0x38] sm:$0xff]
        %8152 = vrot.lane.b32.xlu0 %v8041, 68
        %v8153 = vpop.permute.xlu0 %8152
        %8154 = vrot.lane.b32.xlu0 %v8046, 68
        %v8155 = vpop.permute.xlu0 %8154
        %8156 = vrot.lane.b32.xlu0 %v8051, 68
        %v8157 = vpop.permute.xlu0 %8156
        %8158 = vrot.lane.b32.xlu0 %v8056, 68
        %v8159 = vpop.permute.xlu0 %8158
        %8160 = vrot.lane.b32.xlu0 %v8061, 68
        %v8161 = vpop.permute.xlu0 %8160
        %8162 = vrot.lane.b32.xlu0 %v8066, 68
        %v8163 = vpop.permute.xlu0 %8162
        %8164 = vrot.lane.b32.xlu0 %v8071, 68
        %v8165 = vpop.permute.xlu0 %8164
        %8166 = vrot.lane.b32.xlu0 %v8076, 68
        %v8167 = vpop.permute.xlu0 %8166
        %8168 = vrot.lane.b32.xlu0 %v8081, 68
        %v8169 = vpop.permute.xlu0 %8168
        %8170 = vrot.lane.b32.xlu0 %v8086, 68
        %v8171 = vpop.permute.xlu0 %8170
        %8172 = vrot.lane.b32.xlu0 %v8091, 68
        %v8173 = vpop.permute.xlu0 %8172
        %8174 = vrot.lane.b32.xlu0 %v8096, 68
        %v8175 = vpop.permute.xlu0 %8174
        %8176 = vrot.lane.b32.xlu0 %v8101, 68
        %v8177 = vpop.permute.xlu0 %8176
        %8178 = vrot.lane.b32.xlu0 %v8106, 68
        %v8179 = vpop.permute.xlu0 %8178
        %8180 = vrot.lane.b32.xlu0 %v8111, 68
        %v8181 = vpop.permute.xlu0 %8180
        %8182 = vrot.lane.b32.xlu0 %v8116, 68
        %v8183 = vpop.permute.xlu0 %8182
        %8200 = vmatprep.subr.mxu0 0.0
        %8201 = vmatpush1.msra.mxu0 %v8153
        %8202 = vmatprep.subr.mxu0 0.0
        %8203 = vmatpush1.msra.mxu0 %v8155
        %8204 = vmatprep.subr.mxu0 0.0
        %8205 = vmatpush1.msra.mxu0 %v8157
        %8206 = vmatprep.subr.mxu0 0.0
        %8207 = vmatpush1.msra.mxu0 %v8159
        %8208 = vmatprep.subr.mxu0 0.0
        %8209 = vmatpush1.msra.mxu0 %v8161
        %8210 = vmatprep.subr.mxu0 0.0
        %8211 = vmatpush1.msra.mxu0 %v8163
        %8212 = vmatprep.subr.mxu0 0.0
        %8213 = vmatpush1.msra.mxu0 %v8165
        %8214 = vmatprep.subr.mxu0 0.0
        %8215 = vmatpush1.msra.mxu0 %v8167
        %8216 = vmatprep.subr.mxu0 0.0
        %8217 = vmatpush1.msra.mxu0 %v8169
        %8218 = vmatprep.subr.mxu0 0.0
        %8219 = vmatpush1.msra.mxu0 %v8171
        %8220 = vmatprep.subr.mxu0 0.0
        %8221 = vmatpush1.msra.mxu0 %v8173
        %8222 = vmatprep.subr.mxu0 0.0
        %8223 = vmatpush1.msra.mxu0 %v8175
        %8224 = vmatprep.subr.mxu0 0.0
        %8225 = vmatpush1.msra.mxu0 %v8177
        %8226 = vmatprep.subr.mxu0 0.0
        %8227 = vmatpush1.msra.mxu0 %v8179
        %8228 = vmatprep.subr.mxu0 0.0
        %8229 = vmatpush1.msra.mxu0 %v8181
        %8230 = vmatprep.subr.mxu0 0.0
        %8231 = vmatpush1.msra.mxu0 %v8183
        %8232 = vmatprep.subr.mxu0 0.0
        %8233 = vmatpush1.msra.mxu0 0.0
        %8234 = vmatprep.subr.mxu0 0.0
        %8235 = vmatpush1.msra.mxu0 0.0
        %8236 = vmatprep.subr.mxu0 0.0
        %8237 = vmatpush1.msra.mxu0 0.0
        %8238 = vmatprep.subr.mxu0 0.0
        %8239 = vmatpush1.msra.mxu0 0.0
        %8240 = vmatprep.subr.mxu0 0.0
        %8241 = vmatpush1.msra.mxu0 0.0
        %8242 = vmatprep.subr.mxu0 0.0
        %8243 = vmatpush1.msra.mxu0 0.0
        %8244 = vmatprep.subr.mxu0 0.0
        %8245 = vmatpush1.msra.mxu0 0.0
        %8246 = vmatprep.subr.mxu0 0.0
        %8247 = vmatpush1.msra.mxu0 0.0
        %8248 = vmatprep.subr.mxu0 0.0
        %8249 = vmatpush1.msra.mxu0 0.0
        %8250 = vmatprep.subr.mxu0 0.0
        %8251 = vmatpush1.msra.mxu0 0.0
        %8252 = vmatprep.subr.mxu0 0.0
        %8253 = vmatpush1.msra.mxu0 0.0
        %8254 = vmatprep.subr.mxu0 0.0
        %8255 = vmatpush1.msra.mxu0 0.0
        %8256 = vmatprep.subr.mxu0 0.0
        %8257 = vmatpush1.msra.mxu0 0.0
        %8258 = vmatprep.subr.mxu0 0.0
        %8259 = vmatpush1.msra.mxu0 0.0
        %8260 = vmatprep.subr.mxu0 0.0
        %8261 = vmatpush1.msra.mxu0 0.0
        %8262 = vmatprep.subr.mxu0 0.0
        %8263 = vmatpush1.msra.mxu0 0.0
        %8264 = vmatprep.mubr.f32.mxu0 0.0
        %8265 = vmatmul.mubr.f32.gmra.mrb[0].mxu0 %v8128
        %v8266 = vpop.f32.mrb[0].mxu0
        %v8267 = vadd.f32 0.0, %v8266
        %v8268 = vpop.f32.mrb[0].mxu0
        %8269 = vmatprep.mubr.f32.mxu0 0.0
        %8270 = vmatmul.mubr.f32.gmra.mrb[0].mxu0 %v8129
        %v8271 = vpop.f32.mrb[0].mxu0
        %v8272 = vadd.f32 0.0, %v8271
        %v8273 = vpop.f32.mrb[0].mxu0
        %8274 = vmatprep.mubr.f32.mxu0 0.0
        %8275 = vmatmul.mubr.f32.gmra.mrb[0].mxu0 %v8130
        %v8276 = vpop.f32.mrb[0].mxu0
        %v8277 = vadd.f32 0.0, %v8276
        %v8278 = vpop.f32.mrb[0].mxu0
        %8279 = vmatprep.mubr.f32.mxu0 0.0
        %8280 = vmatmul.mubr.f32.gmra.mrb[0].mxu0 %v8131
        %v8281 = vpop.f32.mrb[0].mxu0
        %v8282 = vadd.f32 0.0, %v8281
        %v8283 = vpop.f32.mrb[0].mxu0
        %8284 = vmatprep.mubr.f32.mxu0 0.0
        %8285 = vmatmul.mubr.f32.gmra.mrb[0].mxu0 %v8132
        %v8286 = vpop.f32.mrb[0].mxu0
        %v8287 = vadd.f32 0.0, %v8286
        %v8288 = vpop.f32.mrb[0].mxu0
        %8289 = vmatprep.mubr.f32.mxu0 0.0
        %8290 = vmatmul.mubr.f32.gmra.mrb[0].mxu0 %v8133
        %v8291 = vpop.f32.mrb[0].mxu0
        %v8292 = vadd.f32 0.0, %v8291
        %v8293 = vpop.f32.mrb[0].mxu0
        %8294 = vmatprep.mubr.f32.mxu0 0.0
        %8295 = vmatmul.mubr.f32.gmra.mrb[0].mxu0 %v8134
        %v8296 = vpop.f32.mrb[0].mxu0
        %v8297 = vadd.f32 0.0, %v8296
        %v8298 = vpop.f32.mrb[0].mxu0
        %8299 = vmatprep.mubr.f32.mxu0 0.0
        %8300 = vmatmul.mubr.f32.gmra.mrb[0].mxu0 %v8135
        %v8301 = vpop.f32.mrb[0].mxu0
        %v8302 = vadd.f32 0.0, %v8301
        %v8303 = vpop.f32.mrb[0].mxu0
        %8304 = vdwg.mxu0
        %8305 = vmatprep.subr.mxu0 0.0
        %8306 = vmatpush1.msra.mxu0 %v8041
        %8307 = vmatprep.subr.mxu0 0.0
        %8308 = vmatpush1.msra.mxu0 %v8046
        %8309 = vmatprep.subr.mxu0 0.0
        %8310 = vmatpush1.msra.mxu0 %v8051
        %8311 = vmatprep.subr.mxu0 0.0
        %8312 = vmatpush1.msra.mxu0 %v8056
        %8313 = vmatprep.subr.mxu0 0.0
        %8314 = vmatpush1.msra.mxu0 %v8061
        %8315 = vmatprep.subr.mxu0 0.0
        %8316 = vmatpush1.msra.mxu0 %v8066
        %8317 = vmatprep.subr.mxu0 0.0
        %8318 = vmatpush1.msra.mxu0 %v8071
        %8319 = vmatprep.subr.mxu0 0.0
        %8320 = vmatpush1.msra.mxu0 %v8076
        %8321 = vmatprep.subr.mxu0 0.0
        %8322 = vmatpush1.msra.mxu0 %v8081
        %8323 = vmatprep.subr.mxu0 0.0
        %8324 = vmatpush1.msra.mxu0 %v8086
        %8325 = vmatprep.subr.mxu0 0.0
        %8326 = vmatpush1.msra.mxu0 %v8091
        %8327 = vmatprep.subr.mxu0 0.0
        %8328 = vmatpush1.msra.mxu0 %v8096
        %8329 = vmatprep.subr.mxu0 0.0
        %8330 = vmatpush1.msra.mxu0 %v8101
        %8331 = vmatprep.subr.mxu0 0.0
        %8332 = vmatpush1.msra.mxu0 %v8106
        %8333 = vmatprep.subr.mxu0 0.0
        %8334 = vmatpush1.msra.mxu0 %v8111
        %8335 = vmatprep.subr.mxu0 0.0
        %8336 = vmatpush1.msra.mxu0 %v8116
        %8337 = vmatprep.subr.mxu0 0.0
        %8338 = vmatpush1.msra.mxu0 0.0
        %8339 = vmatprep.subr.mxu0 0.0
        %8340 = vmatpush1.msra.mxu0 0.0
        %8341 = vmatprep.subr.mxu0 0.0
        %8342 = vmatpush1.msra.mxu0 0.0
        %8343 = vmatprep.subr.mxu0 0.0
        %8344 = vmatpush1.msra.mxu0 0.0
        %8345 = vmatprep.subr.mxu0 0.0
        %8346 = vmatpush1.msra.mxu0 0.0
        %8347 = vmatprep.subr.mxu0 0.0
        %8348 = vmatpush1.msra.mxu0 0.0
        %8349 = vmatprep.subr.mxu0 0.0
        %8350 = vmatpush1.msra.mxu0 0.0
        %8351 = vmatprep.subr.mxu0 0.0
        %8352 = vmatpush1.msra.mxu0 0.0
        %8353 = vmatprep.subr.mxu0 0.0
        %8354 = vmatpush1.msra.mxu0 0.0
        %8355 = vmatprep.subr.mxu0 0.0
        %8356 = vmatpush1.msra.mxu0 0.0
        %8357 = vmatprep.subr.mxu0 0.0
        %8358 = vmatpush1.msra.mxu0 0.0
        %8359 = vmatprep.subr.mxu0 0.0
        %8360 = vmatpush1.msra.mxu0 0.0
        %8361 = vmatprep.subr.mxu0 0.0
        %8362 = vmatpush1.msra.mxu0 0.0
        %8363 = vmatprep.subr.mxu0 0.0
        %8364 = vmatpush1.msra.mxu0 0.0
        %8365 = vmatprep.subr.mxu0 0.0
        %8366 = vmatpush1.msra.mxu0 0.0
        %8367 = vmatprep.subr.mxu0 0.0
        %8368 = vmatpush1.msra.mxu0 0.0
        %8369 = vmatprep.mubr.f32.mxu0 0.0
        %8370 = vmatmul.mubr.f32.gmra.mrb[0].mxu0 %v8119
        %v8371 = vpop.f32.mrb[0].mxu0
        %v8372 = vadd.f32 %v8267, %v8371
        %v8373 = vpop.f32.mrb[0].mxu0
        %8374 = vmatprep.mubr.f32.mxu0 0.0
        %8375 = vmatmul.mubr.f32.gmra.mrb[0].mxu0 %v8120
        %v8376 = vpop.f32.mrb[0].mxu0
        %v8377 = vadd.f32 %v8272, %v8376
        %v8378 = vpop.f32.mrb[0].mxu0
        %8379 = vmatprep.mubr.f32.mxu0 0.0
        %8380 = vmatmul.mubr.f32.gmra.mrb[0].mxu0 %v8121
        %v8381 = vpop.f32.mrb[0].mxu0
        %v8382 = vadd.f32 %v8277, %v8381
        %v8383 = vpop.f32.mrb[0].mxu0
        %8384 = vmatprep.mubr.f32.mxu0 0.0
        %8385 = vmatmul.mubr.f32.gmra.mrb[0].mxu0 %v8122
        %v8386 = vpop.f32.mrb[0].mxu0
        %v8387 = vadd.f32 %v8282, %v8386
        %v8388 = vpop.f32.mrb[0].mxu0
        %8389 = vmatprep.mubr.f32.mxu0 0.0
        %8390 = vmatmul.mubr.f32.gmra.mrb[0].mxu0 %v8123
        %v8391 = vpop.f32.mrb[0].mxu0
        %v8392 = vadd.f32 %v8287, %v8391
        %v8393 = vpop.f32.mrb[0].mxu0
        %8394 = vmatprep.mubr.f32.mxu0 0.0
        %8395 = vmatmul.mubr.f32.gmra.mrb[0].mxu0 %v8124
        %v8396 = vpop.f32.mrb[0].mxu0
        %v8397 = vadd.f32 %v8292, %v8396
        %v8398 = vpop.f32.mrb[0].mxu0
        %8399 = vmatprep.mubr.f32.mxu0 0.0
        %8400 = vmatmul.mubr.f32.gmra.mrb[0].mxu0 %v8125
        %v8401 = vpop.f32.mrb[0].mxu0
        %v8402 = vadd.f32 %v8297, %v8401
        %v8403 = vpop.f32.mrb[0].mxu0
        %8404 = vmatprep.mubr.f32.mxu0 0.0
        %8405 = vmatmul.mubr.f32.gmra.mrb[0].mxu0 %v8126
        %v8406 = vpop.f32.mrb[0].mxu0
        %v8407 = vadd.f32 %v8302, %v8406
        %v8408 = vpop.f32.mrb[0].mxu0
        %8409 = vdwg.mxu0
        %8410 = vset.pattern.permute.xlu0 3
        %8411 = vperm.xlu0 %8410, %v537
        %v8412 = vpop.permute.xlu0 %8411
        %8414 = vset.pattern.permute.xlu0 3
        %8415 = vperm.xlu0 %8414, %v538
        %v8416 = vpop.permute.xlu0 %8415
        %8418 = vset.pattern.permute.xlu0 3
        %8419 = vperm.xlu0 %8418, %v539
        %v8420 = vpop.permute.xlu0 %8419
        %8422 = vset.pattern.permute.xlu0 3
        %8423 = vperm.xlu0 %8422, %v540
        %v8424 = vpop.permute.xlu0 %8423
        %8426 = vset.pattern.permute.xlu0 3
        %8427 = vperm.xlu0 %8426, %v541
        %v8428 = vpop.permute.xlu0 %8427
        %8430 = vset.pattern.permute.xlu0 3
        %8431 = vperm.xlu0 %8430, %v542
        %v8432 = vpop.permute.xlu0 %8431
        %8434 = vset.pattern.permute.xlu0 3
        %8435 = vperm.xlu0 %8434, %v543
        %v8436 = vpop.permute.xlu0 %8435
        %8438 = vset.pattern.permute.xlu0 3
        %8439 = vperm.xlu0 %8438, %v544
        %v8440 = vpop.permute.xlu0 %8439
        %v8442 = vadd.f32 %v8372, %v8412
        %v8443 = vadd.f32 %v8377, %v8416
        %v8444 = vadd.f32 %v8382, %v8420
        %v8445 = vadd.f32 %v8387, %v8424
        %v8446 = vadd.f32 %v8392, %v8428
        %v8447 = vadd.f32 %v8397, %v8432
        %v8448 = vadd.f32 %v8402, %v8436
        %v8449 = vadd.f32 %v8407, %v8440
        %v8450 = vmul.f32 %v8442, 0.5
        %v8451 = vmul.f32 %v8443, 0.5
        %v8452 = vmul.f32 %v8444, 0.5
        %v8453 = vmul.f32 %v8445, 0.5
        %v8454 = vmul.f32 %v8446, 0.5
        %v8455 = vmul.f32 %v8447, 0.5
        %v8456 = vmul.f32 %v8448, 0.5
        %v8457 = vmul.f32 %v8449, 0.5
        %v8458 = vmul.f32 %v8442, 0.70710677
        %v8459 = vmul.f32 %v8443, 0.70710677
        %v8460 = vmul.f32 %v8444, 0.70710677
        %v8461 = vmul.f32 %v8445, 0.70710677
        %v8462 = vmul.f32 %v8446, 0.70710677
        %v8463 = vmul.f32 %v8447, 0.70710677
        %v8464 = vmul.f32 %v8448, 0.70710677
        %v8465 = vmul.f32 %v8449, 0.70710677
        %vm8466 = vcmp.ge.f32.partialorder %v8458, 0.0
        %vm8467 = vcmp.ge.f32.partialorder %v8459, 0.0
        %vm8468 = vcmp.ge.f32.partialorder %v8460, 0.0
        %vm8469 = vcmp.ge.f32.partialorder %v8461, 0.0
        %vm8470 = vcmp.ge.f32.partialorder %v8462, 0.0
        %vm8471 = vcmp.ge.f32.partialorder %v8463, 0.0
        %vm8472 = vcmp.ge.f32.partialorder %v8464, 0.0
        %vm8473 = vcmp.ge.f32.partialorder %v8465, 0.0
        %v8474 = vsel %vm8466, 1.0, -1.0
        %v8475 = vsel %vm8467, 1.0, -1.0
        %v8476 = vsel %vm8468, 1.0, -1.0
        %v8477 = vsel %vm8469, 1.0, -1.0
        %v8478 = vsel %vm8470, 1.0, -1.0
        %v8479 = vsel %vm8471, 1.0, -1.0
        %v8480 = vsel %vm8472, 1.0, -1.0
        %v8481 = vsel %vm8473, 1.0, -1.0
        %v8482 = vand.u32 2147483647, %v8458
        %v8483 = vand.u32 2147483647, %v8459
        %v8484 = vand.u32 2147483647, %v8460
        %v8485 = vand.u32 2147483647, %v8461
        %v8486 = vand.u32 2147483647, %v8462
        %v8487 = vand.u32 2147483647, %v8463
        %v8488 = vand.u32 2147483647, %v8464
        %v8489 = vand.u32 2147483647, %v8465
        %v8490 = vmul.f32 %v8482, 0.3275911
        %v8491 = vmul.f32 %v8483, 0.3275911
        %v8492 = vmul.f32 %v8484, 0.3275911
        %v8493 = vmul.f32 %v8485, 0.3275911
        %v8494 = vmul.f32 %v8486, 0.3275911
        %v8495 = vmul.f32 %v8487, 0.3275911
        %v8496 = vmul.f32 %v8488, 0.3275911
        %v8497 = vmul.f32 %v8489, 0.3275911
        %v8498 = vadd.f32 %v8490, 1.0
        %v8499 = vadd.f32 %v8491, 1.0
        %v8500 = vadd.f32 %v8492, 1.0
        %v8501 = vadd.f32 %v8493, 1.0
        %v8502 = vadd.f32 %v8494, 1.0
        %v8503 = vadd.f32 %v8495, 1.0
        %v8504 = vadd.f32 %v8496, 1.0
        %v8505 = vadd.f32 %v8497, 1.0
        %v8506 = vrcp.pop %v8498
        %v8507 = vmul.f32 1.0, %v8506
        %v8508 = vrcp.pop %v8499
        %v8509 = vmul.f32 1.0, %v8508
        %v8510 = vrcp.pop %v8500
        %v8511 = vmul.f32 1.0, %v8510
        %v8512 = vrcp.pop %v8501
        %v8513 = vmul.f32 1.0, %v8512
        %v8514 = vrcp.pop %v8502
        %v8515 = vmul.f32 1.0, %v8514
        %v8516 = vrcp.pop %v8503
        %v8517 = vmul.f32 1.0, %v8516
        %v8518 = vrcp.pop %v8504
        %v8519 = vmul.f32 1.0, %v8518
        %v8520 = vrcp.pop %v8505
        %v8521 = vmul.f32 1.0, %v8520
        %v8522 = vmul.f32 %v8507, 1.0614054
        %v8523 = vmul.f32 %v8509, 1.0614054
        %v8524 = vmul.f32 %v8511, 1.0614054
        %v8525 = vmul.f32 %v8513, 1.0614054
        %v8526 = vmul.f32 %v8515, 1.0614054
        %v8527 = vmul.f32 %v8517, 1.0614054
        %v8528 = vmul.f32 %v8519, 1.0614054
        %v8529 = vmul.f32 %v8521, 1.0614054
        %v8530 = vsub.f32 %v8522, 1.4531521
        %v8531 = vsub.f32 %v8523, 1.4531521
        %v8532 = vsub.f32 %v8524, 1.4531521
        %v8533 = vsub.f32 %v8525, 1.4531521
        %v8534 = vsub.f32 %v8526, 1.4531521
        %v8535 = vsub.f32 %v8527, 1.4531521
        %v8536 = vsub.f32 %v8528, 1.4531521
        %v8537 = vsub.f32 %v8529, 1.4531521
        %v8538 = vmul.f32 %v8530, %v8507
        %v8539 = vmul.f32 %v8531, %v8509
        %v8540 = vmul.f32 %v8532, %v8511
        %v8541 = vmul.f32 %v8533, %v8513
        %v8542 = vmul.f32 %v8534, %v8515
        %v8543 = vmul.f32 %v8535, %v8517
        %v8544 = vmul.f32 %v8536, %v8519
        %v8545 = vmul.f32 %v8537, %v8521
        %v8546 = vadd.f32 %v8538, 1.4214138
        %v8547 = vadd.f32 %v8539, 1.4214138
        %v8548 = vadd.f32 %v8540, 1.4214138
        %v8549 = vadd.f32 %v8541, 1.4214138
        %v8550 = vadd.f32 %v8542, 1.4214138
        %v8551 = vadd.f32 %v8543, 1.4214138
        %v8552 = vadd.f32 %v8544, 1.4214138
        %v8553 = vadd.f32 %v8545, 1.4214138
        %v8554 = vmul.f32 %v8546, %v8507
        %v8555 = vmul.f32 %v8547, %v8509
        %v8556 = vmul.f32 %v8548, %v8511
        %v8557 = vmul.f32 %v8549, %v8513
        %v8558 = vmul.f32 %v8550, %v8515
        %v8559 = vmul.f32 %v8551, %v8517
        %v8560 = vmul.f32 %v8552, %v8519
        %v8561 = vmul.f32 %v8553, %v8521
        %v8562 = vsub.f32 %v8554, 0.28449672
        %v8563 = vsub.f32 %v8555, 0.28449672
        %v8564 = vsub.f32 %v8556, 0.28449672
        %v8565 = vsub.f32 %v8557, 0.28449672
        %v8566 = vsub.f32 %v8558, 0.28449672
        %v8567 = vsub.f32 %v8559, 0.28449672
        %v8568 = vsub.f32 %v8560, 0.28449672
        %v8569 = vsub.f32 %v8561, 0.28449672
        %v8570 = vmul.f32 %v8562, %v8507
        %v8571 = vmul.f32 %v8563, %v8509
        %v8572 = vmul.f32 %v8564, %v8511
        %v8573 = vmul.f32 %v8565, %v8513
        %v8574 = vmul.f32 %v8566, %v8515
        %v8575 = vmul.f32 %v8567, %v8517
        %v8576 = vmul.f32 %v8568, %v8519
        %v8577 = vmul.f32 %v8569, %v8521
        %v8578 = vadd.f32 %v8570, 0.2548296
        %v8579 = vadd.f32 %v8571, 0.2548296
        %v8580 = vadd.f32 %v8572, 0.2548296
        %v8581 = vadd.f32 %v8573, 0.2548296
        %v8582 = vadd.f32 %v8574, 0.2548296
        %v8583 = vadd.f32 %v8575, 0.2548296
        %v8584 = vadd.f32 %v8576, 0.2548296
        %v8585 = vadd.f32 %v8577, 0.2548296
        %v8586 = vmul.f32 %v8578, %v8507
        %v8587 = vmul.f32 %v8579, %v8509
        %v8588 = vmul.f32 %v8580, %v8511
        %v8589 = vmul.f32 %v8581, %v8513
        %v8590 = vmul.f32 %v8582, %v8515
        %v8591 = vmul.f32 %v8583, %v8517
        %v8592 = vmul.f32 %v8584, %v8519
        %v8593 = vmul.f32 %v8585, %v8521
        %v8594 = vsub.f32 0.0, %v8482
        %v8595 = vsub.f32 0.0, %v8483
        %v8596 = vsub.f32 0.0, %v8484
        %v8597 = vsub.f32 0.0, %v8485
        %v8598 = vsub.f32 0.0, %v8486
        %v8599 = vsub.f32 0.0, %v8487
        %v8600 = vsub.f32 0.0, %v8488
        %v8601 = vsub.f32 0.0, %v8489
        %v8602 = vmul.f32 %v8594, %v8482
        %v8603 = vmul.f32 %v8595, %v8483
        %v8604 = vmul.f32 %v8596, %v8484
        %v8605 = vmul.f32 %v8597, %v8485
        %v8606 = vmul.f32 %v8598, %v8486
        %v8607 = vmul.f32 %v8599, %v8487
        %v8608 = vmul.f32 %v8600, %v8488
        %v8609 = vmul.f32 %v8601, %v8489
        %v8610 = vmul.f32 %v8602, 1.442695
        %v8611 = vpow.pop %v8610
        %v8612 = vmul.f32 %v8603, 1.442695
        %v8613 = vpow.pop %v8612
        %v8614 = vmul.f32 %v8604, 1.442695
        %v8615 = vpow.pop %v8614
        %v8616 = vmul.f32 %v8605, 1.442695
        %v8617 = vpow.pop %v8616
        %v8618 = vmul.f32 %v8606, 1.442695
        %v8619 = vpow.pop %v8618
        %v8620 = vmul.f32 %v8607, 1.442695
        %v8621 = vpow.pop %v8620
        %v8622 = vmul.f32 %v8608, 1.442695
        %v8623 = vpow.pop %v8622
        %v8624 = vmul.f32 %v8609, 1.442695
        %v8625 = vpow.pop %v8624
        %v8626 = vmul.f32 %v8586, %v8611
        %v8627 = vmul.f32 %v8587, %v8613
        %v8628 = vmul.f32 %v8588, %v8615
        %v8629 = vmul.f32 %v8589, %v8617
        %v8630 = vmul.f32 %v8590, %v8619
        %v8631 = vmul.f32 %v8591, %v8621
        %v8632 = vmul.f32 %v8592, %v8623
        %v8633 = vmul.f32 %v8593, %v8625
        %v8634 = vsub.f32 1.0, %v8626
        %v8635 = vsub.f32 1.0, %v8627
        %v8636 = vsub.f32 1.0, %v8628
        %v8637 = vsub.f32 1.0, %v8629
        %v8638 = vsub.f32 1.0, %v8630
        %v8639 = vsub.f32 1.0, %v8631
        %v8640 = vsub.f32 1.0, %v8632
        %v8641 = vsub.f32 1.0, %v8633
        %v8642 = vmul.f32 %v8474, %v8634
        %v8643 = vmul.f32 %v8475, %v8635
        %v8644 = vmul.f32 %v8476, %v8636
        %v8645 = vmul.f32 %v8477, %v8637
        %v8646 = vmul.f32 %v8478, %v8638
        %v8647 = vmul.f32 %v8479, %v8639
        %v8648 = vmul.f32 %v8480, %v8640
        %v8649 = vmul.f32 %v8481, %v8641
        %v8650 = vadd.f32 %v8642, 1.0
        %v8651 = vadd.f32 %v8643, 1.0
        %v8652 = vadd.f32 %v8644, 1.0
        %v8653 = vadd.f32 %v8645, 1.0
        %v8654 = vadd.f32 %v8646, 1.0
        %v8655 = vadd.f32 %v8647, 1.0
        %v8656 = vadd.f32 %v8648, 1.0
        %v8657 = vadd.f32 %v8649, 1.0
        %v8658 = vmul.f32 %v8450, %v8650
        %v8659 = vmul.f32 %v8451, %v8651
        %v8660 = vmul.f32 %v8452, %v8652
        %v8661 = vmul.f32 %v8453, %v8653
        %v8662 = vmul.f32 %v8454, %v8654
        %v8663 = vmul.f32 %v8455, %v8655
        %v8664 = vmul.f32 %v8456, %v8656
        %v8665 = vmul.f32 %v8457, %v8657
        %vm8666 = vcmask 490496
        %8667 = vst.msk [vmem:[%s479] sm:$0xff] %vm8666, %v8658
        %8668 = vst.msk [vmem:[%s479 + $0x8] sm:$0xff] %vm8666, %v8659
        %8669 = vst.msk [vmem:[%s479 + $0x10] sm:$0xff] %vm8666, %v8660
        %8670 = vst.msk [vmem:[%s479 + $0x18] sm:$0xff] %vm8666, %v8661
        %8671 = vst.msk [vmem:[%s479 + $0x20] sm:$0xff] %vm8666, %v8662
        %8672 = vst.msk [vmem:[%s479 + $0x28] sm:$0xff] %vm8666, %v8663
        %8673 = vst.msk [vmem:[%s479 + $0x30] sm:$0xff] %vm8666, %v8664
        %8674 = vst.msk [vmem:[%s479 + $0x38] sm:$0xff] %vm8666, %v8665
        %v8675 = vld [vmem:[%s8] sm:$0xff]
        %v8676 = vld [vmem:[%s8 + $0x8] sm:$0xff]
        %v8677 = vld [vmem:[%s8 + $0x10] sm:$0xff]
        %v8678 = vld [vmem:[%s8 + $0x18] sm:$0xff]
        %v8679 = vld [vmem:[%s8 + $0x20] sm:$0xff]
        %v8680 = vld [vmem:[%s8 + $0x28] sm:$0xff]
        %v8681 = vld [vmem:[%s8 + $0x30] sm:$0xff]
        %v8682 = vld [vmem:[%s8 + $0x38] sm:$0xff]
        %v8683 = vmul.f32 %v8675, %v8658
        %v8684 = vmul.f32 %v8676, %v8659
        %v8685 = vmul.f32 %v8677, %v8660
        %v8686 = vmul.f32 %v8678, %v8661
        %v8687 = vmul.f32 %v8679, %v8662
        %v8688 = vmul.f32 %v8680, %v8663
        %v8689 = vmul.f32 %v8681, %v8664
        %v8690 = vmul.f32 %v8682, %v8665
        %v8691 = vsel %vm8666, %v8683, 0.0
        %v8692 = vsel %vm8666, %v8684, 0.0
        %v8693 = vadd.f32 %v8691, %v8692
        %v8694 = vsel %vm8666, %v8685, 0.0
        %v8695 = vadd.f32 %v8693, %v8694
        %v8696 = vsel %vm8666, %v8686, 0.0
        %v8697 = vadd.f32 %v8695, %v8696
        %v8698 = vsel %vm8666, %v8687, 0.0
        %v8699 = vadd.f32 %v8697, %v8698
        %v8700 = vsel %vm8666, %v8688, 0.0
        %v8701 = vadd.f32 %v8699, %v8700
        %v8702 = vsel %vm8666, %v8689, 0.0
        %v8703 = vadd.f32 %v8701, %v8702
        %v8704 = vsel %vm8666, %v8690, 0.0
        %v8705 = vadd.f32 %v8703, %v8704
        %v8706 = vrot.slane %v8705, 4
        %v8707 = vadd.f32 %v8705, %v8706
        %v8708 = vrot.slane %v8707, 2
        %v8709 = vadd.f32 %v8707, %v8708
        %v8710 = vrot.slane %v8709, 1
        %v8711 = vadd.f32 %v8709, %v8710
        %s8712 = scalar_lea.vmem %s8, 64
        %v8713 = vld [vmem:[%s8712] sm:$0xff]
        %v8714 = vld [vmem:[%s8712 + $0x8] sm:$0xff]
        %v8715 = vld [vmem:[%s8712 + $0x10] sm:$0xff]
        %v8716 = vld [vmem:[%s8712 + $0x18] sm:$0xff]
        %v8717 = vld [vmem:[%s8712 + $0x20] sm:$0xff]
        %v8718 = vld [vmem:[%s8712 + $0x28] sm:$0xff]
        %v8719 = vld [vmem:[%s8712 + $0x30] sm:$0xff]
        %v8720 = vld [vmem:[%s8712 + $0x38] sm:$0xff]
        %v8721 = vmul.f32 %v8713, %v8658
        %v8722 = vmul.f32 %v8714, %v8659
        %v8723 = vmul.f32 %v8715, %v8660
        %v8724 = vmul.f32 %v8716, %v8661
        %v8725 = vmul.f32 %v8717, %v8662
        %v8726 = vmul.f32 %v8718, %v8663
        %v8727 = vmul.f32 %v8719, %v8664
        %v8728 = vmul.f32 %v8720, %v8665
        %v8729 = vsel %vm8666, %v8721, 0.0
        %v8730 = vsel %vm8666, %v8722, 0.0
        %v8731 = vadd.f32 %v8729, %v8730
        %v8732 = vsel %vm8666, %v8723, 0.0
        %v8733 = vadd.f32 %v8731, %v8732
        %v8734 = vsel %vm8666, %v8724, 0.0
        %v8735 = vadd.f32 %v8733, %v8734
        %v8736 = vsel %vm8666, %v8725, 0.0
        %v8737 = vadd.f32 %v8735, %v8736
        %v8738 = vsel %vm8666, %v8726, 0.0
        %v8739 = vadd.f32 %v8737, %v8738
        %v8740 = vsel %vm8666, %v8727, 0.0
        %v8741 = vadd.f32 %v8739, %v8740
        %v8742 = vsel %vm8666, %v8728, 0.0
        %v8743 = vadd.f32 %v8741, %v8742
        %v8744 = vrot.slane %v8743, 4
        %v8745 = vadd.f32 %v8743, %v8744
        %v8746 = vrot.slane %v8745, 2
        %v8747 = vadd.f32 %v8745, %v8746
        %v8748 = vrot.slane %v8747, 1
        %v8749 = vadd.f32 %v8747, %v8748
        %s8750 = scalar_lea.vmem %s8, 128
        %v8751 = vld [vmem:[%s8750] sm:$0xff]
        %v8752 = vld [vmem:[%s8750 + $0x8] sm:$0xff]
        %v8753 = vld [vmem:[%s8750 + $0x10] sm:$0xff]
        %v8754 = vld [vmem:[%s8750 + $0x18] sm:$0xff]
        %v8755 = vld [vmem:[%s8750 + $0x20] sm:$0xff]
        %v8756 = vld [vmem:[%s8750 + $0x28] sm:$0xff]
        %v8757 = vld [vmem:[%s8750 + $0x30] sm:$0xff]
        %v8758 = vld [vmem:[%s8750 + $0x38] sm:$0xff]
        %v8759 = vmul.f32 %v8751, %v8658
        %v8760 = vmul.f32 %v8752, %v8659
        %v8761 = vmul.f32 %v8753, %v8660
        %v8762 = vmul.f32 %v8754, %v8661
        %v8763 = vmul.f32 %v8755, %v8662
        %v8764 = vmul.f32 %v8756, %v8663
        %v8765 = vmul.f32 %v8757, %v8664
        %v8766 = vmul.f32 %v8758, %v8665
        %v8767 = vsel %vm8666, %v8759, 0.0
        %v8768 = vsel %vm8666, %v8760, 0.0
        %v8769 = vadd.f32 %v8767, %v8768
        %v8770 = vsel %vm8666, %v8761, 0.0
        %v8771 = vadd.f32 %v8769, %v8770
        %v8772 = vsel %vm8666, %v8762, 0.0
        %v8773 = vadd.f32 %v8771, %v8772
        %v8774 = vsel %vm8666, %v8763, 0.0
        %v8775 = vadd.f32 %v8773, %v8774
        %v8776 = vsel %vm8666, %v8764, 0.0
        %v8777 = vadd.f32 %v8775, %v8776
        %v8778 = vsel %vm8666, %v8765, 0.0
        %v8779 = vadd.f32 %v8777, %v8778
        %v8780 = vsel %vm8666, %v8766, 0.0
        %v8781 = vadd.f32 %v8779, %v8780
        %v8782 = vrot.slane %v8781, 4
        %v8783 = vadd.f32 %v8781, %v8782
        %v8784 = vrot.slane %v8783, 2
        %v8785 = vadd.f32 %v8783, %v8784
        %v8786 = vrot.slane %v8785, 1
        %v8787 = vadd.f32 %v8785, %v8786
        %vm8788 = vcmask 1040384
        %v8789 = vsel %vm8788, %v8711, %v8749
        %vm8790 = vcmask 1041408
        %v8791 = vsel %vm8790, %v8789, %v8787
        %v8792 = vld [vmem:[%s9] sm:$0xff]
        %v8793 = vld [vmem:[%s9 + $0x8] sm:$0xff]
        %v8794 = vld [vmem:[%s9 + $0x10] sm:$0xff]
        %v8795 = vld [vmem:[%s9 + $0x18] sm:$0xff]
        %v8796 = vld [vmem:[%s9 + $0x20] sm:$0xff]
        %v8797 = vld [vmem:[%s9 + $0x28] sm:$0xff]
        %v8798 = vld [vmem:[%s9 + $0x30] sm:$0xff]
        %v8799 = vld [vmem:[%s9 + $0x38] sm:$0xf]
        %v8800 = vld [vmem:[%s10] sm:$0x7]
        %8802 = vset.pattern.permute.xlu0 0
        %8803 = vperm.xlu0 %8802, %v8800
        %v8804 = vpop.permute.xlu0 %8803
        %v8807 = vsel %vm8666, %v8791, 0
        %vm8809 = vcmask 1043456
        %v8811 = vsel %vm8809, %v8799, 0
        %8813 = vmatprep.subr.mxu0 0.0
        %8814 = vmatpush1.msra.mxu0 %v8792
        %8815 = vmatprep.subr.mxu0 0.0
        %8816 = vmatpush1.msra.mxu0 %v8793
        %8817 = vmatprep.subr.mxu0 0.0
        %8818 = vmatpush1.msra.mxu0 %v8794
        %8819 = vmatprep.subr.mxu0 0.0
        %8820 = vmatpush1.msra.mxu0 %v8795
        %8821 = vmatprep.subr.mxu0 0.0
        %8822 = vmatpush1.msra.mxu0 %v8796
        %8823 = vmatprep.subr.mxu0 0.0
        %8824 = vmatpush1.msra.mxu0 %v8797
        %8825 = vmatprep.subr.mxu0 0.0
        %8826 = vmatpush1.msra.mxu0 %v8798
        %8827 = vmatprep.subr.mxu0 0.0
        %8828 = vmatpush1.msra.mxu0 %v8811
        %8829 = vmatprep.subr.mxu0 0.0
        %8830 = vmatpush1.msra.mxu0 0.0
        %8831 = vmatprep.subr.mxu0 0.0
        %8832 = vmatpush1.msra.mxu0 0.0
        %8833 = vmatprep.subr.mxu0 0.0
        %8834 = vmatpush1.msra.mxu0 0.0
        %8835 = vmatprep.subr.mxu0 0.0
        %8836 = vmatpush1.msra.mxu0 0.0
        %8837 = vmatprep.subr.mxu0 0.0
        %8838 = vmatpush1.msra.mxu0 0.0
        %8839 = vmatprep.subr.mxu0 0.0
        %8840 = vmatpush1.msra.mxu0 0.0
        %8841 = vmatprep.subr.mxu0 0.0
        %8842 = vmatpush1.msra.mxu0 0.0
        %8843 = vmatprep.subr.mxu0 0.0
        %8844 = vmatpush1.msra.mxu0 0.0
        %8845 = vmatprep.subr.mxu0 0.0
        %8846 = vmatpush1.msra.mxu0 0.0
        %8847 = vmatprep.subr.mxu0 0.0
        %8848 = vmatpush1.msra.mxu0 0.0
        %8849 = vmatprep.subr.mxu0 0.0
        %8850 = vmatpush1.msra.mxu0 0.0
        %8851 = vmatprep.subr.mxu0 0.0
        %8852 = vmatpush1.msra.mxu0 0.0
        %8853 = vmatprep.subr.mxu0 0.0
        %8854 = vmatpush1.msra.mxu0 0.0
        %8855 = vmatprep.subr.mxu0 0.0
        %8856 = vmatpush1.msra.mxu0 0.0
        %8857 = vmatprep.subr.mxu0 0.0
        %8858 = vmatpush1.msra.mxu0 0.0
        %8859 = vmatprep.subr.mxu0 0.0
        %8860 = vmatpush1.msra.mxu0 0.0
        %8861 = vmatprep.subr.mxu0 0.0
        %8862 = vmatpush1.msra.mxu0 0.0
        %8863 = vmatprep.subr.mxu0 0.0
        %8864 = vmatpush1.msra.mxu0 0.0
        %8865 = vmatprep.subr.mxu0 0.0
        %8866 = vmatpush1.msra.mxu0 0.0
        %8867 = vmatprep.subr.mxu0 0.0
        %8868 = vmatpush1.msra.mxu0 0.0
        %8869 = vmatprep.subr.mxu0 0.0
        %8870 = vmatpush1.msra.mxu0 0.0
        %8871 = vmatprep.subr.mxu0 0.0
        %8872 = vmatpush1.msra.mxu0 0.0
        %8873 = vmatprep.subr.mxu0 0.0
        %8874 = vmatpush1.msra.mxu0 0.0
        %8875 = vmatprep.subr.mxu0 0.0
        %8876 = vmatpush1.msra.mxu0 0.0
        %8877 = vmatprep.mubr.f32.mxu0 0.0
        %8878 = vmatmul.mubr.f32.gmra.mrb[0].mxu0 %v8807
        %v8879 = vpop.f32.mrb[0].mxu0
        %v8880 = vadd.f32 %v8804, %v8879
        %v8881 = vpop.f32.mrb[0].mxu0
        %8882 = vdwg.mxu0
        %vm8883 = vcmask 26624
        %8884 = vst.msk [vmem:[%s483] sm:$0x7] %vm8883, %v8880
        %p8885 = scmp.lt.s32.totalorder %s27, 1
        %s8886 = scalar_select %p8885, %s27, 1
        %s8887 = smul.addr %s8886, 8
        %s8888 = smul.addr %s8887, 8
        %s8889 = scalar_lea.vmem %s11, %s8888
        %p8890 = scmp.lt.s32.totalorder %s27, 1
        %s8891 = scalar_select %p8890, %s27, 1
        %s8892 = smul.addr %s8891, 4
        %s8893 = scalar_lea.vmem %s12, %s8892
        // Predicated region
        $region81: #{tpu_custom_call.1} parent=63 // pred_check
          %p8894 = pneg %p281
        $region82: #{tpu_custom_call.1} parent=63 // pred_check_branch
          %8896 = sbr.rel (%p8894) target = $region84
        $region83: #{tpu_custom_call.1} parent=63 // pred_region
          _
        $region84: #{tpu_custom_call.1} parent=63 // pred_fallthru
          _
        // Predicated region
        $region85: #{tpu_custom_call.1} parent=63 // pred_check
          %p8897 = pneg %p307
        $region86: #{tpu_custom_call.1} parent=63 // pred_check_branch
          %8899 = sbr.rel (%p8897) target = $region88
        $region87: #{tpu_custom_call.1} parent=63 // pred_region
          _
        $region88: #{tpu_custom_call.1} parent=63 // pred_fallthru
          _
      $region64: #{tpu_custom_call.1} parent=5 // pred_fallthru
        _
      %p8900 = scmp.le.s32.totalorder 2, %s22
      // Predicated region
      $region89: #{tpu_custom_call.1} parent=5 // pred_check
        %p8901 = pneg %p8900
      $region90: #{tpu_custom_call.1} parent=5 // pred_check_branch
        %8903 = sbr.rel (%p8901) target = $region92
      $region91: #{tpu_custom_call.1} parent=5 // pred_region
        %s8904 = ssub.s32 %s22, 2
        // Predicated region
        $region93: #{tpu_custom_call.1} parent=91 // pred_check
          %p8905 = pneg %p287
        $region94: #{tpu_custom_call.1} parent=91 // pred_check_branch
          %8907 = sbr.rel (%p8905) target = $region96
        $region95: #{tpu_custom_call.1} parent=91 // pred_region
          %p8908 = scmp.lt.s32.totalorder %s28, 1
          %s8909 = scalar_select %p8908, %s28, 1
          %s8910 = smul.addr %s8909, 8
          %s8911 = smul.addr %s8910, 8
          %s8912 = scalar_lea.vmem %s11, %s8911
        $region96: #{tpu_custom_call.1} parent=91 // pred_fallthru
          _
        // Predicated region
        $region97: #{tpu_custom_call.1} parent=91 // pred_check
          %p8913 = pneg %p313
        $region98: #{tpu_custom_call.1} parent=91 // pred_check_branch
          %8915 = sbr.rel (%p8913) target = $region100
        $region99: #{tpu_custom_call.1} parent=91 // pred_region
          %p8916 = scmp.lt.s32.totalorder %s28, 1
          %s8917 = scalar_select %p8916, %s28, 1
          %s8918 = smul.addr %s8917, 4
          %s8919 = scalar_lea.vmem %s12, %s8918
        $region100: #{tpu_custom_call.1} parent=91 // pred_fallthru
          _
      $region92: #{tpu_custom_call.1} parent=5 // pred_fallthru
        _
    $region6: #{tpu_custom_call.1} parent=1 // loop_footer
      %s26 = sadd.s32 1, %s22
    $region7: #{tpu_custom_call.1} parent=1 // loop_footer_branch
      %21 = sbr.rel target = $region3
    $region8: #{tpu_custom_call.1} parent=1 // loop_exit
      _
    %8920 = vsyncpa [#allocation3], 1
    %s8921 = scalar_lea.sflag [#allocation3], 1
    %8922 = vsyncpa %s8921, 1
    %8923 = vsyncpa [#allocation5], 1
    %8924 = vsyncpa [#allocation8], 1

</llo_original>
